<compile_context>
chip_gen: v7x
topology: tpu7x:2x2x1
jax: 0.10.0
libtpu: 0.0.40
codegen_flags: <defaults>
</compile_context>

<pallas_src>
import jax
import jax.numpy as jnp
from jax.experimental import pallas as pl
from jax.experimental.pallas import tpu as pltpu


LRELU_SLOPE = 0.2


def _round_up(x, m):
    return (x + m - 1) // m * m


def _quantize_int8(w):
    """Per-output-channel symmetric int8 quantization: returns (q int8, scale (1,N) f32)."""
    amax = jnp.max(jnp.abs(w), axis=0, keepdims=True)
    scale = jnp.where(amax > 0, amax / 127.0, 1.0).astype(jnp.float32)
    q = jnp.clip(jnp.round(w / scale), -127, 127).astype(jnp.int8)
    return q, scale


def _generator_fused_kernel(x_ref,
                            s1_ref, b1_ref, s2_ref, b2_ref,
                            s3_ref, b3_ref, s4_ref, b4_ref,
                            w1_hbm, w2_hbm, w3_hbm, w4_hbm,
                            o_ref,
                            w1_q, w2_q, w3_q, w4_q,
                            w1_bf, w2_bf, w3_bf, w4_bf,
                            dma_sems):
    """One batch tile through all four layers.

    int8 weights are streamed from HBM per layer; on the first grid step each
    layer waits only for its own weights, dequantizes them into persistent bf16
    VMEM scratch, and later grid steps reuse the resident bf16 copies.
    """
    first = pl.program_id(0) == 0
    w_hbm = (w1_hbm, w2_hbm, w3_hbm, w4_hbm)
    w_q = (w1_q, w2_q, w3_q, w4_q)
    w_bf = (w1_bf, w2_bf, w3_bf, w4_bf)

    # Kick off all four weight DMAs up front (first grid step only) so the big
    # w3/w4 transfers overlap with layer-1/2 compute and dequant.
    @pl.when(first)
    def _start_weight_dmas():
        for layer_idx in range(4):
            pltpu.make_async_copy(w_hbm[layer_idx], w_q[layer_idx],
                                  dma_sems.at[layer_idx]).start()

    def layer(h, layer_idx, scale_ref, bias_ref, *, leaky):
        @pl.when(first)
        def _wait_and_dequant():
            pltpu.make_async_copy(w_hbm[layer_idx], w_q[layer_idx],
                                  dma_sems.at[layer_idx]).wait()
            w_bf[layer_idx][...] = w_q[layer_idx][...].astype(jnp.bfloat16)

        y = jnp.dot(h, w_bf[layer_idx][...], preferred_element_type=jnp.float32)
        # Fold the per-output-channel int8 scale into the bias epilogue (f32).
        y = y * scale_ref[...] + bias_ref[...]
        if leaky:
            y = jnp.where(y > 0, y, LRELU_SLOPE * y)
        return y

    h = x_ref[...].astype(jnp.bfloat16)
    h = layer(h, 0, s1_ref, b1_ref, leaky=True).astype(jnp.bfloat16)
    h = layer(h, 1, s2_ref, b2_ref, leaky=True).astype(jnp.bfloat16)
    h = layer(h, 2, s3_ref, b3_ref, leaky=True).astype(jnp.bfloat16)
    y = layer(h, 3, s4_ref, b4_ref, leaky=False)     # final layer, no activation
    o_ref[...] = y.astype(o_ref.dtype)


def init_generator_params(key, latent_dim, seq_length, dtype=jnp.float32):
    """Synthetic init matching nn.Linear shapes; weights stored as (in, out)."""
    dims = [latent_dim, 512, 1024, 2048, seq_length]
    params = []
    for i in range(len(dims) - 1):
        key, kw, kb = jax.random.split(key, 3)
        bound = 1.0 / float(dims[i]) ** 0.5
        w = jax.random.uniform(kw, (dims[i], dims[i + 1]), dtype,
                               minval=-bound, maxval=bound)
        b = jax.random.uniform(kb, (dims[i + 1],), dtype,
                               minval=-bound, maxval=bound)
        params.append((w, b))
    return params


def pack_generator_params(params, *, out_pad=128, in_pad=32):
    """Kernel layout per layer: (int8 weight (K, N), f32 scale (1, N), f32 bias (1, N)).

    First-layer K is zero-padded to a multiple of `in_pad` (int8 sublane tile);
    the final layer's N is lane-padded to a multiple of 128 so the output store
    is lane-dense (no masked vst).
    """
    packed = []
    n_layers = len(params)
    for i, (w, b) in enumerate(params):
        if i == 0:
            kp = _round_up(w.shape[0], in_pad)
            if kp != w.shape[0]:
                w = jnp.pad(w, ((0, kp - w.shape[0]), (0, 0)))
        if i == n_layers - 1:
            np_ = _round_up(max(w.shape[1], out_pad), 128)
            if np_ != w.shape[1]:
                pad = np_ - w.shape[1]
                w = jnp.pad(w, ((0, 0), (0, pad)))
                b = jnp.pad(b, ((0, pad),))
        q, scale = _quantize_int8(w)
        packed.append((q, scale, b.astype(jnp.float32).reshape(1, -1)))
    return packed


def generator_forward(packed_params, z, *, seq_length, tm_max=256):
    """Fused forward pass: z (M, latent) -> (M, seq_length) f32."""
    (w1q, s1, b1), (w2q, s2, b2), (w3q, s3, b3), (w4q, s4, b4) = packed_params
    M, K0 = z.shape
    K0p = w1q.shape[0]                         # padded latent dim
    n_out = w4q.shape[1]                       # lane-padded output width (>= 128)

    # Even-split batch tiling: avoids up-to-2x padding waste for M just above tm_max.
    num_tiles = pl.cdiv(M, tm_max)
    tm = _round_up(pl.cdiv(M, num_tiles), 8)
    Mp = tm * num_tiles
    z_p = z
    if Mp != M or K0p != K0:
        z_p = jnp.pad(z, ((0, Mp - M), (0, K0p - K0)))
    grid = (num_tiles,)

    def vmem_full_spec(arr):
        return pl.BlockSpec(arr.shape, lambda i: (0, 0))

    def hbm_spec():
        return pl.BlockSpec(memory_space=pl.ANY)

    weights = [w1q, w2q, w3q, w4q]
    flops = 2 * Mp * sum(int(w.shape[0]) * int(w.shape[1]) for w in weights)
    bytes_accessed = (
        sum(int(w.size) for w in weights)                                  # int8 weights
        + sum(int(a.size) * 4 for a in (s1, b1, s2, b2, s3, b3, s4, b4))   # f32 scales/biases
        + int(z_p.size) * 4                                                # f32 activations in
        + Mp * n_out * 2)                                                  # bf16 out

    out = pl.pallas_call(
        _generator_fused_kernel,
        out_shape=jax.ShapeDtypeStruct((Mp, n_out), jnp.bfloat16),
        grid_spec=pltpu.PrefetchScalarGridSpec(
            num_scalar_prefetch=0,
            grid=grid,
            in_specs=[
                pl.BlockSpec((tm, K0p), lambda i: (i, 0)),   # activation tile
                vmem_full_spec(s1), vmem_full_spec(b1),
                vmem_full_spec(s2), vmem_full_spec(b2),
                vmem_full_spec(s3), vmem_full_spec(b3),
                vmem_full_spec(s4), vmem_full_spec(b4),
                hbm_spec(), hbm_spec(), hbm_spec(), hbm_spec(),   # int8 weights, manual DMA
            ],
            out_specs=pl.BlockSpec((tm, n_out), lambda i: (i, 0)),
            scratch_shapes=[
                pltpu.VMEM(w1q.shape, jnp.int8),
                pltpu.VMEM(w2q.shape, jnp.int8),
                pltpu.VMEM(w3q.shape, jnp.int8),
                pltpu.VMEM(w4q.shape, jnp.int8),
                pltpu.VMEM(w1q.shape, jnp.bfloat16),
                pltpu.VMEM(w2q.shape, jnp.bfloat16),
                pltpu.VMEM(w3q.shape, jnp.bfloat16),
                pltpu.VMEM(w4q.shape, jnp.bfloat16),
                pltpu.SemaphoreType.DMA((4,)),
            ],
        ),
        compiler_params=pltpu.CompilerParams(
            dimension_semantics=("arbitrary",),
            vmem_limit_bytes=32 * 1024 * 1024,
        ),
        cost_estimate=pl.CostEstimate(
            flops=flops, transcendentals=0, bytes_accessed=bytes_accessed),
    )(z_p, s1, b1, s2, b2, s3, b3, s4, b4, w1q, w2q, w3q, w4q)

    return out[:M, :seq_length].astype(jnp.float32)


def generator_forward_ref(params, z):
    """Pure-JAX reference replicating the kernel numerics exactly:
    per-channel int8 weights, bf16 activations, f32 accumulate + f32 epilogue."""
    h = z.astype(jnp.float32)
    n = len(params)
    for i, (w, b) in enumerate(params):
        q, scale = _quantize_int8(w)
        y = jnp.dot(h.astype(jnp.bfloat16), q.astype(jnp.bfloat16),
                    preferred_element_type=jnp.float32)
        y = y * scale + b.astype(jnp.float32)
        if i < n - 1:
            y = jnp.where(y > 0, y, LRELU_SLOPE * y)
        h = y
    return h


if __name__ == "__main__":
    latent_dim = 32
    seq_length = 8
    batch = 2

    key = jax.random.PRNGKey(0)
    key, kz = jax.random.split(key)
    params = init_generator_params(key, latent_dim, seq_length)
    z = jax.random.normal(kz, (batch, latent_dim), jnp.float32)

    packed = pack_generator_params(params)
    out = generator_forward(packed, z, seq_length=seq_length)
    out = jax.block_until_ready(out)

    ref = generator_forward_ref(params, z)
    assert out.shape == (batch, seq_length), out.shape
    max_err = float(jnp.max(jnp.abs(out - ref)))
    assert jnp.allclose(out, ref, atol=3e-2, rtol=3e-2), f"max abs err {max_err}"

    print("KERNEL_OK")
</pallas_src>

<mosaic_0001>
module attributes {stable_mosaic.version = 11 : i64} {
  func.func @_generator_fused_kernel(%arg0: i32, %arg1: memref<8x32xf32, #tpu.memory_space<vmem>>, %arg2: memref<1x512xf32, #tpu.memory_space<vmem>>, %arg3: memref<1x512xf32, #tpu.memory_space<vmem>>, %arg4: memref<1x1024xf32, #tpu.memory_space<vmem>>, %arg5: memref<1x1024xf32, #tpu.memory_space<vmem>>, %arg6: memref<1x2048xf32, #tpu.memory_space<vmem>>, %arg7: memref<1x2048xf32, #tpu.memory_space<vmem>>, %arg8: memref<1x128xf32, #tpu.memory_space<vmem>>, %arg9: memref<1x128xf32, #tpu.memory_space<vmem>>, %arg10: memref<32x512xi8, #tpu.memory_space<any>>, %arg11: memref<512x1024xi8, #tpu.memory_space<any>>, %arg12: memref<1024x2048xi8, #tpu.memory_space<any>>, %arg13: memref<2048x128xi8, #tpu.memory_space<any>>, %arg14: memref<8x128xbf16, #tpu.memory_space<vmem>>, %arg15: memref<32x512xi8, #tpu.memory_space<vmem>>, %arg16: memref<512x1024xi8, #tpu.memory_space<vmem>>, %arg17: memref<1024x2048xi8, #tpu.memory_space<vmem>>, %arg18: memref<2048x128xi8, #tpu.memory_space<vmem>>, %arg19: memref<32x512xbf16, #tpu.memory_space<vmem>>, %arg20: memref<512x1024xbf16, #tpu.memory_space<vmem>>, %arg21: memref<1024x2048xbf16, #tpu.memory_space<vmem>>, %arg22: memref<2048x128xbf16, #tpu.memory_space<vmem>>, %arg23: memref<4x!tpu.dma_semaphore, #tpu.memory_space<semaphore_mem>>) attributes {dimension_semantics = [#tpu.dimension_semantics<arbitrary>], iteration_bounds = array<i64: 1>, scalar_prefetch = 0 : i64, scratch_operands = 9 : i64, tpu.core_type = #tpu.core_type<tc>, window_params = [{transform_indices = @transform_0, window_bounds = array<i64: 8, 32>}, {pipeline_mode = #tpu.pipeline_mode<synchronous>, transform_indices = @transform_1, window_bounds = array<i64: 1, 512>}, {pipeline_mode = #tpu.pipeline_mode<synchronous>, transform_indices = @transform_2, window_bounds = array<i64: 1, 512>}, {pipeline_mode = #tpu.pipeline_mode<synchronous>, transform_indices = @transform_3, window_bounds = array<i64: 1, 1024>}, {pipeline_mode = #tpu.pipeline_mode<synchronous>, transform_indices = @transform_4, window_bounds = array<i64: 1, 1024>}, {pipeline_mode = #tpu.pipeline_mode<synchronous>, transform_indices = @transform_5, window_bounds = array<i64: 1, 2048>}, {pipeline_mode = #tpu.pipeline_mode<synchronous>, transform_indices = @transform_6, window_bounds = array<i64: 1, 2048>}, {pipeline_mode = #tpu.pipeline_mode<synchronous>, transform_indices = @transform_7, window_bounds = array<i64: 1, 128>}, {pipeline_mode = #tpu.pipeline_mode<synchronous>, transform_indices = @transform_8, window_bounds = array<i64: 1, 128>}, {}, {}, {}, {}, {transform_indices = @transform_13, window_bounds = array<i64: 8, 128>}]} {
    %c0_i32 = arith.constant 0 : i32
    %0 = arith.cmpi eq, %arg0, %c0_i32 : i32
    %1 = arith.extui %0 : i1 to i32
    %c0_i32_0 = arith.constant 0 : i32
    %2 = arith.cmpi ne, %1, %c0_i32_0 : i32
    scf.if %2 {
      %c0_i32_41 = arith.constant 0 : i32
      %65 = tpu.memref_slice %arg23[%c0_i32_41] : memref<4x!tpu.dma_semaphore, #tpu.memory_space<semaphore_mem>> -> memref<1x!tpu.dma_semaphore, #tpu.memory_space<semaphore_mem>>
      %66 = tpu.memref_squeeze %65 : memref<1x!tpu.dma_semaphore, #tpu.memory_space<semaphore_mem>> -> memref<!tpu.dma_semaphore, #tpu.memory_space<semaphore_mem>>
      tpu.enqueue_dma source(%arg10 : memref<32x512xi8, #tpu.memory_space<any>>) target(%arg15 : memref<32x512xi8, #tpu.memory_space<vmem>>) target_semaphore(%66 : memref<!tpu.dma_semaphore, #tpu.memory_space<semaphore_mem>>)
      %c1_i32 = arith.constant 1 : i32
      %67 = tpu.memref_slice %arg23[%c1_i32] : memref<4x!tpu.dma_semaphore, #tpu.memory_space<semaphore_mem>> -> memref<1x!tpu.dma_semaphore, #tpu.memory_space<semaphore_mem>>
      %68 = tpu.memref_squeeze %67 : memref<1x!tpu.dma_semaphore, #tpu.memory_space<semaphore_mem>> -> memref<!tpu.dma_semaphore, #tpu.memory_space<semaphore_mem>>
      tpu.enqueue_dma source(%arg11 : memref<512x1024xi8, #tpu.memory_space<any>>) target(%arg16 : memref<512x1024xi8, #tpu.memory_space<vmem>>) target_semaphore(%68 : memref<!tpu.dma_semaphore, #tpu.memory_space<semaphore_mem>>)
      %c2_i32 = arith.constant 2 : i32
      %69 = tpu.memref_slice %arg23[%c2_i32] : memref<4x!tpu.dma_semaphore, #tpu.memory_space<semaphore_mem>> -> memref<1x!tpu.dma_semaphore, #tpu.memory_space<semaphore_mem>>
      %70 = tpu.memref_squeeze %69 : memref<1x!tpu.dma_semaphore, #tpu.memory_space<semaphore_mem>> -> memref<!tpu.dma_semaphore, #tpu.memory_space<semaphore_mem>>
      tpu.enqueue_dma source(%arg12 : memref<1024x2048xi8, #tpu.memory_space<any>>) target(%arg17 : memref<1024x2048xi8, #tpu.memory_space<vmem>>) target_semaphore(%70 : memref<!tpu.dma_semaphore, #tpu.memory_space<semaphore_mem>>)
      %c3_i32 = arith.constant 3 : i32
      %71 = tpu.memref_slice %arg23[%c3_i32] : memref<4x!tpu.dma_semaphore, #tpu.memory_space<semaphore_mem>> -> memref<1x!tpu.dma_semaphore, #tpu.memory_space<semaphore_mem>>
      %72 = tpu.memref_squeeze %71 : memref<1x!tpu.dma_semaphore, #tpu.memory_space<semaphore_mem>> -> memref<!tpu.dma_semaphore, #tpu.memory_space<semaphore_mem>>
      tpu.enqueue_dma source(%arg13 : memref<2048x128xi8, #tpu.memory_space<any>>) target(%arg18 : memref<2048x128xi8, #tpu.memory_space<vmem>>) target_semaphore(%72 : memref<!tpu.dma_semaphore, #tpu.memory_space<semaphore_mem>>)
    } else {
    }
    %c0 = arith.constant 0 : index
    %c0_1 = arith.constant 0 : index
    %3 = vector.load %arg1[%c0, %c0_1] : memref<8x32xf32, #tpu.memory_space<vmem>>, vector<8x32xf32>
    %4 = arith.truncf %3 : vector<8x32xf32> to vector<8x32xbf16>
    %5 = arith.extui %0 : i1 to i32
    %c0_i32_2 = arith.constant 0 : i32
    %6 = arith.cmpi ne, %5, %c0_i32_2 : i32
    scf.if %6 {
      %c0_i32_41 = arith.constant 0 : i32
      %65 = tpu.memref_slice %arg23[%c0_i32_41] : memref<4x!tpu.dma_semaphore, #tpu.memory_space<semaphore_mem>> -> memref<1x!tpu.dma_semaphore, #tpu.memory_space<semaphore_mem>>
      %66 = tpu.memref_squeeze %65 : memref<1x!tpu.dma_semaphore, #tpu.memory_space<semaphore_mem>> -> memref<!tpu.dma_semaphore, #tpu.memory_space<semaphore_mem>>
      tpu.wait_dma2 semaphore(%66 : memref<!tpu.dma_semaphore, #tpu.memory_space<semaphore_mem>>) src(%arg10 : memref<32x512xi8, #tpu.memory_space<any>>) dst(%arg15 : memref<32x512xi8, #tpu.memory_space<vmem>>)
      %c0_42 = arith.constant 0 : index
      %c0_43 = arith.constant 0 : index
      %67 = vector.load %arg15[%c0_42, %c0_43] : memref<32x512xi8, #tpu.memory_space<vmem>>, vector<32x512xi8>
      %68 = arith.sitofp %67 : vector<32x512xi8> to vector<32x512xbf16>
      %c0_44 = arith.constant 0 : index
      %c0_45 = arith.constant 0 : index
      %69 = vector.load %arg19[%c0_44, %c0_45] : memref<32x512xbf16, #tpu.memory_space<vmem>>, vector<32x512xbf16>
      tpu.vector_store %arg19[%c0_44, %c0_45], %68 {strides = array<i32>} : memref<32x512xbf16, #tpu.memory_space<vmem>>, vector<32x512xbf16>,
    } else {
    }
    %c0_3 = arith.constant 0 : index
    %c0_4 = arith.constant 0 : index
    %7 = vector.load %arg19[%c0_3, %c0_4] : memref<32x512xbf16, #tpu.memory_space<vmem>>, vector<32x512xbf16>
    %cst = arith.constant dense<0.000000e+00> : vector<8x512xf32>
    %8 = tpu.matmul %4, %7, %cst {dimension_numbers = #tpu.dot_dimension_numbers<[1], [0], [0], [1], [0, 0, 1, 1], [], []>} : vector<8x32xbf16>, vector<32x512xbf16>, vector<8x512xf32> -> vector<8x512xf32>
    %c0_5 = arith.constant 0 : index
    %c0_6 = arith.constant 0 : index
    %9 = vector.load %arg2[%c0_5, %c0_6] : memref<1x512xf32, #tpu.memory_space<vmem>>, vector<1x512xf32>
    %10 = vector.broadcast %9 : vector<1x512xf32> to vector<8x512xf32>
    %11 = arith.mulf %8, %10 : vector<8x512xf32>
    %c0_7 = arith.constant 0 : index
    %c0_8 = arith.constant 0 : index
    %12 = vector.load %arg3[%c0_7, %c0_8] : memref<1x512xf32, #tpu.memory_space<vmem>>, vector<1x512xf32>
    %13 = vector.broadcast %12 : vector<1x512xf32> to vector<8x512xf32>
    %14 = arith.addf %11, %13 : vector<8x512xf32>
    %cst_9 = arith.constant 0.000000e+00 : f32
    %15 = vector.broadcast %cst_9 : f32 to vector<8x512xf32>
    %16 = arith.cmpf ogt, %14, %15 : vector<8x512xf32>
    %cst_10 = arith.constant 2.000000e-01 : f32
    %17 = vector.broadcast %cst_10 : f32 to vector<8x512xf32>
    %18 = arith.mulf %17, %14 : vector<8x512xf32>
    %19 = arith.select %16, %14, %18 : vector<8x512xi1>, vector<8x512xf32>
    %20 = arith.truncf %19 : vector<8x512xf32> to vector<8x512xbf16>
    %21 = arith.extui %0 : i1 to i32
    %c0_i32_11 = arith.constant 0 : i32
    %22 = arith.cmpi ne, %21, %c0_i32_11 : i32
    scf.if %22 {
      %c1_i32 = arith.constant 1 : i32
      %65 = tpu.memref_slice %arg23[%c1_i32] : memref<4x!tpu.dma_semaphore, #tpu.memory_space<semaphore_mem>> -> memref<1x!tpu.dma_semaphore, #tpu.memory_space<semaphore_mem>>
      %66 = tpu.memref_squeeze %65 : memref<1x!tpu.dma_semaphore, #tpu.memory_space<semaphore_mem>> -> memref<!tpu.dma_semaphore, #tpu.memory_space<semaphore_mem>>
      tpu.wait_dma2 semaphore(%66 : memref<!tpu.dma_semaphore, #tpu.memory_space<semaphore_mem>>) src(%arg11 : memref<512x1024xi8, #tpu.memory_space<any>>) dst(%arg16 : memref<512x1024xi8, #tpu.memory_space<vmem>>)
      %c0_41 = arith.constant 0 : index
      %c0_42 = arith.constant 0 : index
      %67 = vector.load %arg16[%c0_41, %c0_42] : memref<512x1024xi8, #tpu.memory_space<vmem>>, vector<512x1024xi8>
      %68 = arith.sitofp %67 : vector<512x1024xi8> to vector<512x1024xbf16>
      %c0_43 = arith.constant 0 : index
      %c0_44 = arith.constant 0 : index
      %69 = vector.load %arg20[%c0_43, %c0_44] : memref<512x1024xbf16, #tpu.memory_space<vmem>>, vector<512x1024xbf16>
      tpu.vector_store %arg20[%c0_43, %c0_44], %68 {strides = array<i32>} : memref<512x1024xbf16, #tpu.memory_space<vmem>>, vector<512x1024xbf16>,
    } else {
    }
    %c0_12 = arith.constant 0 : index
    %c0_13 = arith.constant 0 : index
    %23 = vector.load %arg20[%c0_12, %c0_13] : memref<512x1024xbf16, #tpu.memory_space<vmem>>, vector<512x1024xbf16>
    %cst_14 = arith.constant dense<0.000000e+00> : vector<8x1024xf32>
    %24 = tpu.matmul %20, %23, %cst_14 {dimension_numbers = #tpu.dot_dimension_numbers<[1], [0], [0], [1], [0, 0, 1, 1], [], []>} : vector<8x512xbf16>, vector<512x1024xbf16>, vector<8x1024xf32> -> vector<8x1024xf32>
    %c0_15 = arith.constant 0 : index
    %c0_16 = arith.constant 0 : index
    %25 = vector.load %arg4[%c0_15, %c0_16] : memref<1x1024xf32, #tpu.memory_space<vmem>>, vector<1x1024xf32>
    %26 = vector.broadcast %25 : vector<1x1024xf32> to vector<8x1024xf32>
    %27 = arith.mulf %24, %26 : vector<8x1024xf32>
    %c0_17 = arith.constant 0 : index
    %c0_18 = arith.constant 0 : index
    %28 = vector.load %arg5[%c0_17, %c0_18] : memref<1x1024xf32, #tpu.memory_space<vmem>>, vector<1x1024xf32>
    %29 = vector.broadcast %28 : vector<1x1024xf32> to vector<8x1024xf32>
    %30 = arith.addf %27, %29 : vector<8x1024xf32>
    %cst_19 = arith.constant 0.000000e+00 : f32
    %31 = vector.broadcast %cst_19 : f32 to vector<8x1024xf32>
    %32 = arith.cmpf ogt, %30, %31 : vector<8x1024xf32>
    %cst_20 = arith.constant 2.000000e-01 : f32
    %33 = vector.broadcast %cst_20 : f32 to vector<8x1024xf32>
    %34 = arith.mulf %33, %30 : vector<8x1024xf32>
    %35 = arith.select %32, %30, %34 : vector<8x1024xi1>, vector<8x1024xf32>
    %36 = arith.truncf %35 : vector<8x1024xf32> to vector<8x1024xbf16>
    %37 = arith.extui %0 : i1 to i32
    %c0_i32_21 = arith.constant 0 : i32
    %38 = arith.cmpi ne, %37, %c0_i32_21 : i32
    scf.if %38 {
      %c2_i32 = arith.constant 2 : i32
      %65 = tpu.memref_slice %arg23[%c2_i32] : memref<4x!tpu.dma_semaphore, #tpu.memory_space<semaphore_mem>> -> memref<1x!tpu.dma_semaphore, #tpu.memory_space<semaphore_mem>>
      %66 = tpu.memref_squeeze %65 : memref<1x!tpu.dma_semaphore, #tpu.memory_space<semaphore_mem>> -> memref<!tpu.dma_semaphore, #tpu.memory_space<semaphore_mem>>
      tpu.wait_dma2 semaphore(%66 : memref<!tpu.dma_semaphore, #tpu.memory_space<semaphore_mem>>) src(%arg12 : memref<1024x2048xi8, #tpu.memory_space<any>>) dst(%arg17 : memref<1024x2048xi8, #tpu.memory_space<vmem>>)
      %c0_41 = arith.constant 0 : index
      %c0_42 = arith.constant 0 : index
      %67 = vector.load %arg17[%c0_41, %c0_42] : memref<1024x2048xi8, #tpu.memory_space<vmem>>, vector<1024x2048xi8>
      %68 = arith.sitofp %67 : vector<1024x2048xi8> to vector<1024x2048xbf16>
      %c0_43 = arith.constant 0 : index
      %c0_44 = arith.constant 0 : index
      %69 = vector.load %arg21[%c0_43, %c0_44] : memref<1024x2048xbf16, #tpu.memory_space<vmem>>, vector<1024x2048xbf16>
      tpu.vector_store %arg21[%c0_43, %c0_44], %68 {strides = array<i32>} : memref<1024x2048xbf16, #tpu.memory_space<vmem>>, vector<1024x2048xbf16>,
    } else {
    }
    %c0_22 = arith.constant 0 : index
    %c0_23 = arith.constant 0 : index
    %39 = vector.load %arg21[%c0_22, %c0_23] : memref<1024x2048xbf16, #tpu.memory_space<vmem>>, vector<1024x2048xbf16>
    %cst_24 = arith.constant dense<0.000000e+00> : vector<8x2048xf32>
    %40 = tpu.matmul %36, %39, %cst_24 {dimension_numbers = #tpu.dot_dimension_numbers<[1], [0], [0], [1], [0, 0, 1, 1], [], []>} : vector<8x1024xbf16>, vector<1024x2048xbf16>, vector<8x2048xf32> -> vector<8x2048xf32>
    %c0_25 = arith.constant 0 : index
    %c0_26 = arith.constant 0 : index
    %41 = vector.load %arg6[%c0_25, %c0_26] : memref<1x2048xf32, #tpu.memory_space<vmem>>, vector<1x2048xf32>
    %42 = vector.broadcast %41 : vector<1x2048xf32> to vector<8x2048xf32>
    %43 = arith.mulf %40, %42 : vector<8x2048xf32>
    %c0_27 = arith.constant 0 : index
    %c0_28 = arith.constant 0 : index
    %44 = vector.load %arg7[%c0_27, %c0_28] : memref<1x2048xf32, #tpu.memory_space<vmem>>, vector<1x2048xf32>
    %45 = vector.broadcast %44 : vector<1x2048xf32> to vector<8x2048xf32>
    %46 = arith.addf %43, %45 : vector<8x2048xf32>
    %cst_29 = arith.constant 0.000000e+00 : f32
    %47 = vector.broadcast %cst_29 : f32 to vector<8x2048xf32>
    %48 = arith.cmpf ogt, %46, %47 : vector<8x2048xf32>
    %cst_30 = arith.constant 2.000000e-01 : f32
    %49 = vector.broadcast %cst_30 : f32 to vector<8x2048xf32>
    %50 = arith.mulf %49, %46 : vector<8x2048xf32>
    %51 = arith.select %48, %46, %50 : vector<8x2048xi1>, vector<8x2048xf32>
    %52 = arith.truncf %51 : vector<8x2048xf32> to vector<8x2048xbf16>
    %53 = arith.extui %0 : i1 to i32
    %c0_i32_31 = arith.constant 0 : i32
    %54 = arith.cmpi ne, %53, %c0_i32_31 : i32
    scf.if %54 {
      %c3_i32 = arith.constant 3 : i32
      %65 = tpu.memref_slice %arg23[%c3_i32] : memref<4x!tpu.dma_semaphore, #tpu.memory_space<semaphore_mem>> -> memref<1x!tpu.dma_semaphore, #tpu.memory_space<semaphore_mem>>
      %66 = tpu.memref_squeeze %65 : memref<1x!tpu.dma_semaphore, #tpu.memory_space<semaphore_mem>> -> memref<!tpu.dma_semaphore, #tpu.memory_space<semaphore_mem>>
      tpu.wait_dma2 semaphore(%66 : memref<!tpu.dma_semaphore, #tpu.memory_space<semaphore_mem>>) src(%arg13 : memref<2048x128xi8, #tpu.memory_space<any>>) dst(%arg18 : memref<2048x128xi8, #tpu.memory_space<vmem>>)
      %c0_41 = arith.constant 0 : index
      %c0_42 = arith.constant 0 : index
      %67 = vector.load %arg18[%c0_41, %c0_42] : memref<2048x128xi8, #tpu.memory_space<vmem>>, vector<2048x128xi8>
      %68 = arith.sitofp %67 : vector<2048x128xi8> to vector<2048x128xbf16>
      %c0_43 = arith.constant 0 : index
      %c0_44 = arith.constant 0 : index
      %69 = vector.load %arg22[%c0_43, %c0_44] : memref<2048x128xbf16, #tpu.memory_space<vmem>>, vector<2048x128xbf16>
      tpu.vector_store %arg22[%c0_43, %c0_44], %68 {strides = array<i32>} : memref<2048x128xbf16, #tpu.memory_space<vmem>>, vector<2048x128xbf16>,
    } else {
    }
    %c0_32 = arith.constant 0 : index
    %c0_33 = arith.constant 0 : index
    %55 = vector.load %arg22[%c0_32, %c0_33] : memref<2048x128xbf16, #tpu.memory_space<vmem>>, vector<2048x128xbf16>
    %cst_34 = arith.constant dense<0.000000e+00> : vector<8x128xf32>
    %56 = tpu.matmul %52, %55, %cst_34 {dimension_numbers = #tpu.dot_dimension_numbers<[1], [0], [0], [1], [0, 0, 1, 1], [], []>} : vector<8x2048xbf16>, vector<2048x128xbf16>, vector<8x128xf32> -> vector<8x128xf32>
    %c0_35 = arith.constant 0 : index
    %c0_36 = arith.constant 0 : index
    %57 = vector.load %arg8[%c0_35, %c0_36] : memref<1x128xf32, #tpu.memory_space<vmem>>, vector<1x128xf32>
    %58 = vector.broadcast %57 : vector<1x128xf32> to vector<8x128xf32>
    %59 = arith.mulf %56, %58 : vector<8x128xf32>
    %c0_37 = arith.constant 0 : index
    %c0_38 = arith.constant 0 : index
    %60 = vector.load %arg9[%c0_37, %c0_38] : memref<1x128xf32, #tpu.memory_space<vmem>>, vector<1x128xf32>
    %61 = vector.broadcast %60 : vector<1x128xf32> to vector<8x128xf32>
    %62 = arith.addf %59, %61 : vector<8x128xf32>
    %63 = arith.truncf %62 : vector<8x128xf32> to vector<8x128xbf16>
    %c0_39 = arith.constant 0 : index
    %c0_40 = arith.constant 0 : index
    %64 = vector.load %arg14[%c0_39, %c0_40] : memref<8x128xbf16, #tpu.memory_space<vmem>>, vector<8x128xbf16>
    tpu.vector_store %arg14[%c0_39, %c0_40], %63 {strides = array<i32>} : memref<8x128xbf16, #tpu.memory_space<vmem>>, vector<8x128xbf16>,
    return
  }
  func.func @transform_0(%arg0: i32) -> (i32, i32) {
    %c0_i32 = arith.constant 0 : i32
    %c0_i32_0 = arith.constant 0 : i32
    return %arg0, %c0_i32 : i32, i32
  }
  func.func @transform_1(%arg0: i32) -> (i32, i32) {
    %c0_i32 = arith.constant 0 : i32
    %c0_i32_0 = arith.constant 0 : i32
    %c0_i32_1 = arith.constant 0 : i32
    return %c0_i32, %c0_i32_0 : i32, i32
  }
  func.func @transform_2(%arg0: i32) -> (i32, i32) {
    %c0_i32 = arith.constant 0 : i32
    %c0_i32_0 = arith.constant 0 : i32
    %c0_i32_1 = arith.constant 0 : i32
    return %c0_i32, %c0_i32_0 : i32, i32
  }
  func.func @transform_3(%arg0: i32) -> (i32, i32) {
    %c0_i32 = arith.constant 0 : i32
    %c0_i32_0 = arith.constant 0 : i32
    %c0_i32_1 = arith.constant 0 : i32
    return %c0_i32, %c0_i32_0 : i32, i32
  }
  func.func @transform_4(%arg0: i32) -> (i32, i32) {
    %c0_i32 = arith.constant 0 : i32
    %c0_i32_0 = arith.constant 0 : i32
    %c0_i32_1 = arith.constant 0 : i32
    return %c0_i32, %c0_i32_0 : i32, i32
  }
  func.func @transform_5(%arg0: i32) -> (i32, i32) {
    %c0_i32 = arith.constant 0 : i32
    %c0_i32_0 = arith.constant 0 : i32
    %c0_i32_1 = arith.constant 0 : i32
    return %c0_i32, %c0_i32_0 : i32, i32
  }
  func.func @transform_6(%arg0: i32) -> (i32, i32) {
    %c0_i32 = arith.constant 0 : i32
    %c0_i32_0 = arith.constant 0 : i32
    %c0_i32_1 = arith.constant 0 : i32
    return %c0_i32, %c0_i32_0 : i32, i32
  }
  func.func @transform_7(%arg0: i32) -> (i32, i32) {
    %c0_i32 = arith.constant 0 : i32
    %c0_i32_0 = arith.constant 0 : i32
    %c0_i32_1 = arith.constant 0 : i32
    return %c0_i32, %c0_i32_0 : i32, i32
  }
  func.func @transform_8(%arg0: i32) -> (i32, i32) {
    %c0_i32 = arith.constant 0 : i32
    %c0_i32_0 = arith.constant 0 : i32
    %c0_i32_1 = arith.constant 0 : i32
    return %c0_i32, %c0_i32_0 : i32, i32
  }
  func.func @transform_13(%arg0: i32) -> (i32, i32) {
    %c0_i32 = arith.constant 0 : i32
    %c0_i32_0 = arith.constant 0 : i32
    return %arg0, %c0_i32 : i32, i32
  }
}

</mosaic_0001>

<llo_original>
// kernel: tpu_custom_call.1
$region0: #{tpu_custom_call.1}
  #allocation0 [shape = 'u32[]', space=smem, size = 0x4, offset = 0x4, fixed_abs, tag = 'smem constant byte address 0x4 - core index']
  #allocation1 [shape = 'u32[144,128]{1,0:T(1,128)}', space=vmem, size = 0x12000, scoped, tag = 'internal scratch']
  #allocation2 [shape = 's8[32,512]{1,0:T(32,128)(4,1)}', space=vmem, size = 0x4000, scoped, tag = 'scratch operand']
  #allocation3 [shape = 's8[512,1024]{1,0:T(32,128)(4,1)}', space=vmem, size = 0x80000, scoped, tag = 'scratch operand']
  #allocation4 [shape = 's8[1024,2048]{1,0:T(32,128)(4,1)}', space=vmem, size = 0x200000, scoped, tag = 'scratch operand']
  #allocation5 [shape = 's8[2048,128]{1,0:T(32,128)(4,1)}', space=vmem, size = 0x40000, scoped, tag = 'scratch operand']
  #allocation6 [shape = 'bf16[32,512]{1,0:T(16,128)(2,1)}', space=vmem, size = 0x8000, scoped, tag = 'scratch operand']
  #allocation7 [shape = 'bf16[512,1024]{1,0:T(16,128)(2,1)}', space=vmem, size = 0x100000, scoped, tag = 'scratch operand']
  #allocation8 [shape = 'bf16[1024,2048]{1,0:T(16,128)(2,1)}', space=vmem, size = 0x400000, scoped, tag = 'scratch operand']
  #allocation9 [shape = 'bf16[2048,128]{1,0:T(16,128)(2,1)}', space=vmem, size = 0x80000, scoped, tag = 'scratch operand']
  #allocation10 [shape = 's32[4]{0}', space=sflag, size = 0x10, scoped, tag = 'scratch operand']
  #allocation27 [shape = 's32[]', space=sflag, size = 0x4, offset = 0, fixed_abs, tag = 'sflag constant byte address 0x0 - dummy sync flag']
  #allocation28 [shape = 's32[]', space=sflag, size = 0x4, offset = 0, fixed_abs, tag = 'sflag constant byte address 0x0 - dummy sync flag']
  #allocation29 [shape = 'u32[]', space=smem, size = 0x4, offset = 0x44, fixed_abs, tag = 'smem constant byte address 0x44 - assertion arg 0']
  #allocation30 [shape = 'u32[]', space=smem, size = 0x4, offset = 0x48, fixed_abs, tag = 'smem constant byte address 0x48 - assertion arg 1']
  #allocation31 [shape = 's32[]', space=sflag, size = 0x4, offset = 0, fixed_abs, tag = 'sflag constant byte address 0x0 - dummy sync flag']
  #allocation32 [shape = 's32[]', space=sflag, size = 0x4, offset = 0, fixed_abs, tag = 'sflag constant byte address 0x0 - dummy sync flag']
  #allocation33 [shape = 's32[]', space=sflag, size = 0x4, offset = 0, fixed_abs, tag = 'sflag constant byte address 0x0 - dummy sync flag']
  #allocation34 [shape = 's32[]', space=sflag, size = 0x4, offset = 0, fixed_abs, tag = 'sflag constant byte address 0x0 - dummy sync flag']
  #allocation35 [shape = 's32[]', space=sflag, size = 0x4, offset = 0, fixed_abs, tag = 'sflag constant byte address 0x0 - dummy sync flag']
  #allocation36 [shape = 's32[]', space=sflag, size = 0x4, offset = 0, fixed_abs, tag = 'sflag constant byte address 0x0 - dummy sync flag']
  %s0 = inlined_call_operand.hbm [shape: f32[8,32], index: 0, kind: input, shape index: {}]
  %s1 = inlined_call_operand.hbm [shape: f32[1,512], index: 1, kind: input, shape index: {}]
  %s2 = inlined_call_operand.hbm [shape: f32[1,512], index: 2, kind: input, shape index: {}]
  %s3 = inlined_call_operand.hbm [shape: f32[1,1024], index: 3, kind: input, shape index: {}]
  %s4 = inlined_call_operand.hbm [shape: f32[1,1024], index: 4, kind: input, shape index: {}]
  %s5 = inlined_call_operand.hbm [shape: f32[1,2048], index: 5, kind: input, shape index: {}]
  %s6 = inlined_call_operand.hbm [shape: f32[1,2048], index: 6, kind: input, shape index: {}]
  %s7 = inlined_call_operand.hbm [shape: f32[1,128], index: 7, kind: input, shape index: {}]
  %s8 = inlined_call_operand.hbm [shape: f32[1,128], index: 8, kind: input, shape index: {}]
  %s9 = inlined_call_operand.hbm [shape: s8[32,512], index: 9, kind: input, shape index: {}]
  %s10 = inlined_call_operand.hbm [shape: s8[512,1024], index: 10, kind: input, shape index: {}]
  %s11 = inlined_call_operand.hbm [shape: s8[1024,2048], index: 11, kind: input, shape index: {}]
  %s12 = inlined_call_operand.hbm [shape: s8[2048,128], index: 12, kind: input, shape index: {}]
  %s13 = inlined_call_operand.hbm [shape: bf16[8,128], index: 13, kind: output, shape index: {}]
  %s14 = sld [smem:[#allocation0]]
  $region118: #{tpu_custom_call.1} parent=0
    _
  %s16 = ssub.s32 1, %s14
  %s17 = scalar_select 0, %s16, %s14
  $region1: #{tpu_custom_call.1} parent=0
    #allocation11 [shape = 'u8[4096]{0}', space=vmem, size = 0x1000, scoped, tag = 'input window, operand 0, single buffered']
    #allocation12 [shape = 's32[1]{0}', space=sflag, size = 0x4, scoped, tag = 'scoped memory for tpu_custom_call.1']
    #allocation13 [shape = 's32[1]{0}', space=sflag, size = 0x4, scoped, tag = 'scoped memory for tpu_custom_call.1']
    #allocation14 [shape = 'u8[2048]{0}', space=vmem, size = 0x800, scoped, tag = 'input window, operand 1, single buffered']
    #allocation15 [shape = 's32[1]{0}', space=sflag, size = 0x4, scoped, tag = 'scoped memory for tpu_custom_call.1']
    #allocation16 [shape = 'u8[2048]{0}', space=vmem, size = 0x800, scoped, tag = 'input window, operand 2, single buffered']
    #allocation17 [shape = 'u8[4096]{0}', space=vmem, size = 0x1000, scoped, tag = 'input window, operand 3, single buffered']
    #allocation18 [shape = 's32[1]{0}', space=sflag, size = 0x4, scoped, tag = 'scoped memory for tpu_custom_call.1']
    #allocation19 [shape = 'u8[4096]{0}', space=vmem, size = 0x1000, scoped, tag = 'input window, operand 4, single buffered']
    #allocation20 [shape = 'u8[8192]{0}', space=vmem, size = 0x2000, scoped, tag = 'input window, operand 5, single buffered']
    #allocation21 [shape = 's32[1]{0}', space=sflag, size = 0x4, scoped, tag = 'scoped memory for tpu_custom_call.1']
    #allocation22 [shape = 'u8[8192]{0}', space=vmem, size = 0x2000, scoped, tag = 'input window, operand 6, single buffered']
    #allocation23 [shape = 'u8[512]{0}', space=vmem, size = 0x400, scoped, tag = 'input window, operand 7, single buffered']
    #allocation24 [shape = 's32[1]{0}', space=sflag, size = 0x4, scoped, tag = 'scoped memory for tpu_custom_call.1']
    #allocation25 [shape = 'u8[512]{0}', space=vmem, size = 0x400, scoped, tag = 'input window, operand 8, single buffered']
    #allocation26 [shape = 'u8[2048]{0}', space=vmem, size = 0x800, scoped, tag = 'output window, operand 0, single buffered']
    %18 = vsyncpa [#allocation12], 0
    %19 = vsyncpa [#allocation15], 0
    %20 = vsyncpa [#allocation18], 0
    %21 = vsyncpa [#allocation21], 0
    %22 = vsyncpa [#allocation24], 0
    %23 = vsyncpa [#allocation13], 0
    // Predicated region
    $region2: #{tpu_custom_call.1} parent=1 // pred_check
      _
    $region3: #{tpu_custom_call.1} parent=1 // pred_check_branch
      %25 = sbr.rel (0) target = $region5
    $region4: #{tpu_custom_call.1} parent=1 // pred_region
      %s27 = ssub.s32 128, 128
      %28 = vsyncadd [#allocation12], %s27
      %s30 = sshll.u32 [#allocation11], 4
      %s31 = int_to_ptr.vmem [resolvable:$true] %s30
      %33 = dma.hbm_to_vmem [thread:$0]  %s0, 128, %s31, [#allocation12]
    $region5: #{tpu_custom_call.1} parent=1 // pred_fallthru
      _
    // Predicated region
    $region6: #{tpu_custom_call.1} parent=1 // pred_check
      _
    $region7: #{tpu_custom_call.1} parent=1 // pred_check_branch
      %35 = sbr.rel (0) target = $region9
    $region8: #{tpu_custom_call.1} parent=1 // pred_region
      %s37 = ssub.s32 64, 64
      %38 = vsyncadd [#allocation15], %s37
      %s40 = sshll.u32 [#allocation14], 4
      %s41 = int_to_ptr.vmem [resolvable:$true] %s40
      %43 = dma.hbm_to_vmem [thread:$0]  %s1, 64, %s41, [#allocation15]
    $region9: #{tpu_custom_call.1} parent=1 // pred_fallthru
      _
    // Predicated region
    $region10: #{tpu_custom_call.1} parent=1 // pred_check
      _
    $region11: #{tpu_custom_call.1} parent=1 // pred_check_branch
      %45 = sbr.rel (0) target = $region13
    $region12: #{tpu_custom_call.1} parent=1 // pred_region
      %s47 = ssub.s32 64, 64
      %48 = vsyncadd [#allocation15], %s47
      %s50 = sshll.u32 [#allocation16], 4
      %s51 = int_to_ptr.vmem [resolvable:$true] %s50
      %53 = dma.hbm_to_vmem [thread:$0]  %s2, 64, %s51, [#allocation15]
    $region13: #{tpu_custom_call.1} parent=1 // pred_fallthru
      _
    // Predicated region
    $region14: #{tpu_custom_call.1} parent=1 // pred_check
      _
    $region15: #{tpu_custom_call.1} parent=1 // pred_check_branch
      %55 = sbr.rel (0) target = $region17
    $region16: #{tpu_custom_call.1} parent=1 // pred_region
      %s57 = ssub.s32 128, 128
      %58 = vsyncadd [#allocation18], %s57
      %s60 = sshll.u32 [#allocation17], 4
      %s61 = int_to_ptr.vmem [resolvable:$true] %s60
      %63 = dma.hbm_to_vmem [thread:$0]  %s3, 128, %s61, [#allocation18]
    $region17: #{tpu_custom_call.1} parent=1 // pred_fallthru
      _
    // Predicated region
    $region18: #{tpu_custom_call.1} parent=1 // pred_check
      _
    $region19: #{tpu_custom_call.1} parent=1 // pred_check_branch
      %65 = sbr.rel (0) target = $region21
    $region20: #{tpu_custom_call.1} parent=1 // pred_region
      %s67 = ssub.s32 128, 128
      %68 = vsyncadd [#allocation18], %s67
      %s70 = sshll.u32 [#allocation19], 4
      %s71 = int_to_ptr.vmem [resolvable:$true] %s70
      %73 = dma.hbm_to_vmem [thread:$0]  %s4, 128, %s71, [#allocation18]
    $region21: #{tpu_custom_call.1} parent=1 // pred_fallthru
      _
    // Predicated region
    $region22: #{tpu_custom_call.1} parent=1 // pred_check
      _
    $region23: #{tpu_custom_call.1} parent=1 // pred_check_branch
      %75 = sbr.rel (0) target = $region25
    $region24: #{tpu_custom_call.1} parent=1 // pred_region
      %s77 = ssub.s32 256, 256
      %78 = vsyncadd [#allocation21], %s77
      %s80 = sshll.u32 [#allocation20], 4
      %s81 = int_to_ptr.vmem [resolvable:$true] %s80
      %83 = dma.hbm_to_vmem [thread:$0]  %s5, 256, %s81, [#allocation21]
    $region25: #{tpu_custom_call.1} parent=1 // pred_fallthru
      _
    // Predicated region
    $region26: #{tpu_custom_call.1} parent=1 // pred_check
      _
    $region27: #{tpu_custom_call.1} parent=1 // pred_check_branch
      %85 = sbr.rel (0) target = $region29
    $region28: #{tpu_custom_call.1} parent=1 // pred_region
      %s87 = ssub.s32 256, 256
      %88 = vsyncadd [#allocation21], %s87
      %s90 = sshll.u32 [#allocation22], 4
      %s91 = int_to_ptr.vmem [resolvable:$true] %s90
      %93 = dma.hbm_to_vmem [thread:$0]  %s6, 256, %s91, [#allocation21]
    $region29: #{tpu_custom_call.1} parent=1 // pred_fallthru
      _
    // Predicated region
    $region30: #{tpu_custom_call.1} parent=1 // pred_check
      _
    $region31: #{tpu_custom_call.1} parent=1 // pred_check_branch
      %95 = sbr.rel (0) target = $region33
    $region32: #{tpu_custom_call.1} parent=1 // pred_region
      %s97 = ssub.s32 16, 16
      %98 = vsyncadd [#allocation24], %s97
      %s100 = sshll.u32 [#allocation23], 4
      %s101 = int_to_ptr.vmem [resolvable:$true] %s100
      %103 = dma.hbm_to_vmem [thread:$0]  %s7, 16, %s101, [#allocation24]
    $region33: #{tpu_custom_call.1} parent=1 // pred_fallthru
      _
    // Predicated region
    $region34: #{tpu_custom_call.1} parent=1 // pred_check
      _
    $region35: #{tpu_custom_call.1} parent=1 // pred_check_branch
      %105 = sbr.rel (0) target = $region37
    $region36: #{tpu_custom_call.1} parent=1 // pred_region
      %s107 = ssub.s32 16, 16
      %108 = vsyncadd [#allocation24], %s107
      %s110 = sshll.u32 [#allocation25], 4
      %s111 = int_to_ptr.vmem [resolvable:$true] %s110
      %113 = dma.hbm_to_vmem [thread:$0]  %s8, 16, %s111, [#allocation24]
    $region37: #{tpu_custom_call.1} parent=1 // pred_fallthru
      _
    // Predicated region
    $region38: #{tpu_custom_call.1} parent=1 // pred_check
      _
    $region39: #{tpu_custom_call.1} parent=1 // pred_check_branch
      %115 = sbr.rel (0) target = $region41
    $region40: #{tpu_custom_call.1} parent=1 // pred_region
      %116 = dma.done [#allocation12], 128
    $region41: #{tpu_custom_call.1} parent=1 // pred_fallthru
      _
    // Predicated region
    $region42: #{tpu_custom_call.1} parent=1 // pred_check
      _
    $region43: #{tpu_custom_call.1} parent=1 // pred_check_branch
      %118 = sbr.rel (0) target = $region45
    $region44: #{tpu_custom_call.1} parent=1 // pred_region
      %119 = dma.done [#allocation15], 64
    $region45: #{tpu_custom_call.1} parent=1 // pred_fallthru
      _
    // Predicated region
    $region46: #{tpu_custom_call.1} parent=1 // pred_check
      _
    $region47: #{tpu_custom_call.1} parent=1 // pred_check_branch
      %121 = sbr.rel (0) target = $region49
    $region48: #{tpu_custom_call.1} parent=1 // pred_region
      %122 = dma.done [#allocation15], 64
    $region49: #{tpu_custom_call.1} parent=1 // pred_fallthru
      _
    // Predicated region
    $region50: #{tpu_custom_call.1} parent=1 // pred_check
      _
    $region51: #{tpu_custom_call.1} parent=1 // pred_check_branch
      %124 = sbr.rel (0) target = $region53
    $region52: #{tpu_custom_call.1} parent=1 // pred_region
      %125 = dma.done [#allocation18], 128
    $region53: #{tpu_custom_call.1} parent=1 // pred_fallthru
      _
    // Predicated region
    $region54: #{tpu_custom_call.1} parent=1 // pred_check
      _
    $region55: #{tpu_custom_call.1} parent=1 // pred_check_branch
      %127 = sbr.rel (0) target = $region57
    $region56: #{tpu_custom_call.1} parent=1 // pred_region
      %128 = dma.done [#allocation18], 128
    $region57: #{tpu_custom_call.1} parent=1 // pred_fallthru
      _
    // Predicated region
    $region58: #{tpu_custom_call.1} parent=1 // pred_check
      _
    $region59: #{tpu_custom_call.1} parent=1 // pred_check_branch
      %130 = sbr.rel (0) target = $region61
    $region60: #{tpu_custom_call.1} parent=1 // pred_region
      %131 = dma.done [#allocation21], 256
    $region61: #{tpu_custom_call.1} parent=1 // pred_fallthru
      _
    // Predicated region
    $region62: #{tpu_custom_call.1} parent=1 // pred_check
      _
    $region63: #{tpu_custom_call.1} parent=1 // pred_check_branch
      %133 = sbr.rel (0) target = $region65
    $region64: #{tpu_custom_call.1} parent=1 // pred_region
      %134 = dma.done [#allocation21], 256
    $region65: #{tpu_custom_call.1} parent=1 // pred_fallthru
      _
    // Predicated region
    $region66: #{tpu_custom_call.1} parent=1 // pred_check
      _
    $region67: #{tpu_custom_call.1} parent=1 // pred_check_branch
      %136 = sbr.rel (0) target = $region69
    $region68: #{tpu_custom_call.1} parent=1 // pred_region
      %137 = dma.done [#allocation24], 16
    $region69: #{tpu_custom_call.1} parent=1 // pred_fallthru
      _
    // Predicated region
    $region70: #{tpu_custom_call.1} parent=1 // pred_check
      _
    $region71: #{tpu_custom_call.1} parent=1 // pred_check_branch
      %139 = sbr.rel (0) target = $region73
    $region72: #{tpu_custom_call.1} parent=1 // pred_region
      %140 = dma.done [#allocation24], 16
    $region73: #{tpu_custom_call.1} parent=1 // pred_fallthru
      _
    %p142 = scmp.eq.s32.totalorder 0, 0
    // Predicated region
    $region74: #{tpu_custom_call.1} parent=1 // pred_check
      %p143 = pneg %p142
    $region75: #{tpu_custom_call.1} parent=1 // pred_check_branch
      %145 = sbr.rel (%p143) target = $region77
    $region76: #{tpu_custom_call.1} parent=1 // pred_region
      // Predicated region
      $region78: #{tpu_custom_call.1} parent=76 // pred_check
        _
      $region79: #{tpu_custom_call.1} parent=76 // pred_check_branch
        %147 = sbr.rel target = $region81
      $region80: #{tpu_custom_call.1} parent=76 // pred_region
        %148 = sst [smem:[#allocation29]] [#allocation28]
        %149 = sst [smem:[#allocation30]] [#allocation27]
      $region81: #{tpu_custom_call.1} parent=76 // pred_fallthru
        _
      %151 = shalt.err (0)
      %s153 = sshll.u32 [#allocation2], 4
      %s154 = int_to_ptr.vmem [resolvable:$true] %s153
      %156 = dma.hbm_to_vmem [thread:$0]  %s9, 512, %s154, [#allocation10]
      %s157 = scalar_lea.sflag [#allocation10], 1
      // Predicated region
      $region82: #{tpu_custom_call.1} parent=76 // pred_check
        _
      $region83: #{tpu_custom_call.1} parent=76 // pred_check_branch
        %159 = sbr.rel target = $region85
      $region84: #{tpu_custom_call.1} parent=76 // pred_region
        %160 = sst [smem:[#allocation29]] [#allocation32]
        %161 = sst [smem:[#allocation30]] [#allocation31]
      $region85: #{tpu_custom_call.1} parent=76 // pred_fallthru
        _
      %163 = shalt.err (0)
      %s165 = sshll.u32 [#allocation3], 4
      %s166 = int_to_ptr.vmem [resolvable:$true] %s165
      %168 = dma.hbm_to_vmem [thread:$0]  %s10, 16384, %s166, %s157
      %s169 = scalar_lea.sflag [#allocation10], 2
      // Predicated region
      $region86: #{tpu_custom_call.1} parent=76 // pred_check
        _
      $region87: #{tpu_custom_call.1} parent=76 // pred_check_branch
        %171 = sbr.rel target = $region89
      $region88: #{tpu_custom_call.1} parent=76 // pred_region
        %172 = sst [smem:[#allocation29]] [#allocation34]
        %173 = sst [smem:[#allocation30]] [#allocation33]
      $region89: #{tpu_custom_call.1} parent=76 // pred_fallthru
        _
      %175 = shalt.err (0)
      %s177 = sshll.u32 [#allocation4], 4
      %s178 = int_to_ptr.vmem [resolvable:$true] %s177
      %180 = dma.hbm_to_vmem [thread:$0]  %s11, 65536, %s178, %s169
      %s181 = scalar_lea.sflag [#allocation10], 3
      // Predicated region
      $region90: #{tpu_custom_call.1} parent=76 // pred_check
        _
      $region91: #{tpu_custom_call.1} parent=76 // pred_check_branch
        %183 = sbr.rel target = $region93
      $region92: #{tpu_custom_call.1} parent=76 // pred_region
        %184 = sst [smem:[#allocation29]] [#allocation36]
        %185 = sst [smem:[#allocation30]] [#allocation35]
      $region93: #{tpu_custom_call.1} parent=76 // pred_fallthru
        _
      %187 = shalt.err (0)
      %s189 = sshll.u32 [#allocation5], 4
      %s190 = int_to_ptr.vmem [resolvable:$true] %s189
      %192 = dma.hbm_to_vmem [thread:$0]  %s12, 8192, %s190, %s181
    $region77: #{tpu_custom_call.1} parent=1 // pred_fallthru
      _
    %v193 = vld [vmem:[#allocation11] sm:$0xff]
    %v194 = vpack.c.bf16 %v193, %v193
    // Predicated region
    $region94: #{tpu_custom_call.1} parent=1 // pred_check
      %p195 = pneg %p142
    $region95: #{tpu_custom_call.1} parent=1 // pred_check_branch
      %197 = sbr.rel (%p195) target = $region97
    $region96: #{tpu_custom_call.1} parent=1 // pred_region
      %s198 = smul.u32 2, 4
      %s199 = smul.u32 %s198, 4
      %s200 = sshll.u32 %s199, 4
      %201 = dma.done [#allocation10], %s200
      %v202 = vld [vmem:[#allocation2] sm:$0xff]
      %v203 = vld [vmem:[#allocation2 + $0x8] sm:$0xff]
      %v204 = vld [vmem:[#allocation2 + $0x10] sm:$0xff]
      %v205 = vld [vmem:[#allocation2 + $0x18] sm:$0xff]
      %v206 = vunpack.c.l.s8.bf16 %v202
      %v207 = vunpack.c.l.s8.bf16 %v203
      %v208 = vunpack.c.l.s8.bf16 %v204
      %v209 = vunpack.c.l.s8.bf16 %v205
      %v210 = vunpack.c.h.s8.bf16 %v202
      %v211 = vunpack.c.h.s8.bf16 %v203
      %v212 = vunpack.c.h.s8.bf16 %v204
      %v213 = vunpack.c.h.s8.bf16 %v205
      %214 = vst [vmem:[#allocation6] sm:$0xff] %v206
      %215 = vst [vmem:[#allocation6 + $0x8] sm:$0xff] %v207
      %216 = vst [vmem:[#allocation6 + $0x10] sm:$0xff] %v208
      %217 = vst [vmem:[#allocation6 + $0x18] sm:$0xff] %v209
      %218 = vst [vmem:[#allocation6 + $0x20] sm:$0xff] %v210
      %219 = vst [vmem:[#allocation6 + $0x28] sm:$0xff] %v211
      %220 = vst [vmem:[#allocation6 + $0x30] sm:$0xff] %v212
      %221 = vst [vmem:[#allocation6 + $0x38] sm:$0xff] %v213
    $region97: #{tpu_custom_call.1} parent=1 // pred_fallthru
      _
    %v222 = vld [vmem:[#allocation6] sm:$0xff]
    %v223 = vld [vmem:[#allocation6 + $0x8] sm:$0xff]
    %v224 = vld [vmem:[#allocation6 + $0x10] sm:$0xff]
    %v225 = vld [vmem:[#allocation6 + $0x18] sm:$0xff]
    %v226 = vld [vmem:[#allocation6 + $0x20] sm:$0xff]
    %v227 = vld [vmem:[#allocation6 + $0x28] sm:$0xff]
    %v228 = vld [vmem:[#allocation6 + $0x30] sm:$0xff]
    %v229 = vld [vmem:[#allocation6 + $0x38] sm:$0xff]
    %vm230 = vcmask 261120
    %v232 = vsel %vm230, %v194, 0
    %234 = vmatprep.subr.bf16.mxu0 %v223
    %235 = vmatpush1.bf16.msra.mxu0 %v222
    %236 = vmatprep.subr.bf16.mxu0 %v227
    %237 = vmatpush1.bf16.msra.mxu0 %v226
    %238 = vmatprep.subr.bf16.mxu0 0
    %239 = vmatpush1.bf16.msra.mxu0 0
    %240 = vmatprep.subr.bf16.mxu0 0
    %241 = vmatpush1.bf16.msra.mxu0 0
    %242 = vmatprep.subr.bf16.mxu0 0
    %243 = vmatpush1.bf16.msra.mxu0 0
    %244 = vmatprep.subr.bf16.mxu0 0
    %245 = vmatpush1.bf16.msra.mxu0 0
    %246 = vmatprep.subr.bf16.mxu0 0
    %247 = vmatpush1.bf16.msra.mxu0 0
    %248 = vmatprep.subr.bf16.mxu0 0
    %249 = vmatpush1.bf16.msra.mxu0 0
    %250 = vmatprep.subr.bf16.mxu0 0
    %251 = vmatpush1.bf16.msra.mxu0 0
    %252 = vmatprep.subr.bf16.mxu0 0
    %253 = vmatpush1.bf16.msra.mxu0 0
    %254 = vmatprep.subr.bf16.mxu0 0
    %255 = vmatpush1.bf16.msra.mxu0 0
    %256 = vmatprep.subr.bf16.mxu0 0
    %257 = vmatpush1.bf16.msra.mxu0 0
    %258 = vmatprep.subr.bf16.mxu0 0
    %259 = vmatpush1.bf16.msra.mxu0 0
    %260 = vmatprep.subr.bf16.mxu0 0
    %261 = vmatpush1.bf16.msra.mxu0 0
    %262 = vmatprep.subr.bf16.mxu0 0
    %263 = vmatpush1.bf16.msra.mxu0 0
    %264 = vmatprep.subr.bf16.mxu0 0
    %265 = vmatpush1.bf16.msra.mxu0 0
    %266 = vmatprep.mubr.bf16.mxu0 0
    %267 = vmatmul.mubr.bf16.gmra.mrb[0].mxu0 %v232
    %v268 = vpop.f32.mrb[0].mxu0
    %v269 = vadd.f32 0.0, %v268
    %v270 = vpop.f32.mrb[0].mxu0
    %v271 = vadd.f32 0.0, %v270
    %v272 = vpop.f32.mrb[0].mxu0
    %v273 = vpop.f32.mrb[0].mxu0
    %274 = vdwg.mxu0
    %275 = vmatprep.subr.bf16.mxu0 %v225
    %276 = vmatpush1.bf16.msra.mxu0 %v224
    %277 = vmatprep.subr.bf16.mxu0 %v229
    %278 = vmatpush1.bf16.msra.mxu0 %v228
    %279 = vmatprep.subr.bf16.mxu0 0
    %280 = vmatpush1.bf16.msra.mxu0 0
    %281 = vmatprep.subr.bf16.mxu0 0
    %282 = vmatpush1.bf16.msra.mxu0 0
    %283 = vmatprep.subr.bf16.mxu0 0
    %284 = vmatpush1.bf16.msra.mxu0 0
    %285 = vmatprep.subr.bf16.mxu0 0
    %286 = vmatpush1.bf16.msra.mxu0 0
    %287 = vmatprep.subr.bf16.mxu0 0
    %288 = vmatpush1.bf16.msra.mxu0 0
    %289 = vmatprep.subr.bf16.mxu0 0
    %290 = vmatpush1.bf16.msra.mxu0 0
    %291 = vmatprep.subr.bf16.mxu0 0
    %292 = vmatpush1.bf16.msra.mxu0 0
    %293 = vmatprep.subr.bf16.mxu0 0
    %294 = vmatpush1.bf16.msra.mxu0 0
    %295 = vmatprep.subr.bf16.mxu0 0
    %296 = vmatpush1.bf16.msra.mxu0 0
    %297 = vmatprep.subr.bf16.mxu0 0
    %298 = vmatpush1.bf16.msra.mxu0 0
    %299 = vmatprep.subr.bf16.mxu0 0
    %300 = vmatpush1.bf16.msra.mxu0 0
    %301 = vmatprep.subr.bf16.mxu0 0
    %302 = vmatpush1.bf16.msra.mxu0 0
    %303 = vmatprep.subr.bf16.mxu0 0
    %304 = vmatpush1.bf16.msra.mxu0 0
    %305 = vmatprep.subr.bf16.mxu0 0
    %306 = vmatpush1.bf16.msra.mxu0 0
    %307 = vmatprep.mubr.bf16.mxu0 0
    %308 = vmatmul.mubr.bf16.gmra.mrb[0].mxu0 %v232
    %v309 = vpop.f32.mrb[0].mxu0
    %v310 = vadd.f32 0.0, %v309
    %v311 = vpop.f32.mrb[0].mxu0
    %v312 = vadd.f32 0.0, %v311
    %v313 = vpop.f32.mrb[0].mxu0
    %v314 = vpop.f32.mrb[0].mxu0
    %315 = vdwg.mxu0
    %v316 = vld [vmem:[#allocation14] sm:$0xf]
    %v318 = vlaneseq
    %v319 = vshrl.u32 %v318, 7
    %v320 = vsub.s32 0, %v319
    %v321 = vrot.slane %v316, %v320
    %v322 = vlaneseq
    %v323 = vshrl.u32 %v322, 7
    %v324 = vsub.s32 1, %v323
    %v325 = vrot.slane %v316, %v324
    %v326 = vlaneseq
    %v327 = vshrl.u32 %v326, 7
    %v328 = vsub.s32 2, %v327
    %v329 = vrot.slane %v316, %v328
    %v330 = vlaneseq
    %v331 = vshrl.u32 %v330, 7
    %v332 = vsub.s32 3, %v331
    %v333 = vrot.slane %v316, %v332
    %v338 = vmul.f32 %v269, %v321
    %v339 = vmul.f32 %v271, %v325
    %v340 = vmul.f32 %v310, %v329
    %v341 = vmul.f32 %v312, %v333
    %v342 = vld [vmem:[#allocation16] sm:$0xf]
    %v344 = vlaneseq
    %v345 = vshrl.u32 %v344, 7
    %v346 = vsub.s32 0, %v345
    %v347 = vrot.slane %v342, %v346
    %v348 = vlaneseq
    %v349 = vshrl.u32 %v348, 7
    %v350 = vsub.s32 1, %v349
    %v351 = vrot.slane %v342, %v350
    %v352 = vlaneseq
    %v353 = vshrl.u32 %v352, 7
    %v354 = vsub.s32 2, %v353
    %v355 = vrot.slane %v342, %v354
    %v356 = vlaneseq
    %v357 = vshrl.u32 %v356, 7
    %v358 = vsub.s32 3, %v357
    %v359 = vrot.slane %v342, %v358
    %v364 = vadd.f32 %v338, %v347
    %v365 = vadd.f32 %v339, %v351
    %v366 = vadd.f32 %v340, %v355
    %v367 = vadd.f32 %v341, %v359
    %vm368 = vcmp.gt.f32.partialorder %v364, 0.0
    %vm369 = vcmp.gt.f32.partialorder %v365, 0.0
    %vm370 = vcmp.gt.f32.partialorder %v366, 0.0
    %vm371 = vcmp.gt.f32.partialorder %v367, 0.0
    %v372 = vmul.f32 %v364, 0.2
    %v373 = vmul.f32 %v365, 0.2
    %v374 = vmul.f32 %v366, 0.2
    %v375 = vmul.f32 %v367, 0.2
    %v376 = vsel %vm368, %v364, %v372
    %v377 = vsel %vm369, %v365, %v373
    %v378 = vsel %vm370, %v366, %v374
    %v379 = vsel %vm371, %v367, %v375
    %v380 = vpack.c.bf16 %v376, %v376
    %v381 = vpack.c.bf16 %v377, %v377
    %v382 = vpack.c.bf16 %v378, %v378
    %v383 = vpack.c.bf16 %v379, %v379
    // Predicated region
    $region98: #{tpu_custom_call.1} parent=1 // pred_check
      %p384 = pneg %p142
    $region99: #{tpu_custom_call.1} parent=1 // pred_check_branch
      %386 = sbr.rel (%p384) target = $region101
    $region100: #{tpu_custom_call.1} parent=1 // pred_region
      %s387 = scalar_lea.sflag [#allocation10], 1
      %s388 = smul.u32 2, 64
      %s389 = smul.u32 %s388, 8
      %s390 = sshll.u32 %s389, 4
      %391 = dma.done %s387, %s390
      %v392 = vld [vmem:[#allocation3] sm:$0xff]
      %v393 = vld [vmem:[#allocation3 + $0x8] sm:$0xff]
      %v394 = vld [vmem:[#allocation3 + $0x10] sm:$0xff]
      %v395 = vld [vmem:[#allocation3 + $0x18] sm:$0xff]
      %v396 = vld [vmem:[#allocation3 + $0x20] sm:$0xff]
      %v397 = vld [vmem:[#allocation3 + $0x28] sm:$0xff]
      %v398 = vld [vmem:[#allocation3 + $0x30] sm:$0xff]
      %v399 = vld [vmem:[#allocation3 + $0x38] sm:$0xff]
      %v400 = vld [vmem:[#allocation3 + $0x40] sm:$0xff]
      %v401 = vld [vmem:[#allocation3 + $0x48] sm:$0xff]
      %v402 = vld [vmem:[#allocation3 + $0x50] sm:$0xff]
      %v403 = vld [vmem:[#allocation3 + $0x58] sm:$0xff]
      %v404 = vld [vmem:[#allocation3 + $0x60] sm:$0xff]
      %v405 = vld [vmem:[#allocation3 + $0x68] sm:$0xff]
      %v406 = vld [vmem:[#allocation3 + $0x70] sm:$0xff]
      %v407 = vld [vmem:[#allocation3 + $0x78] sm:$0xff]
      %v408 = vld [vmem:[#allocation3 + $0x80] sm:$0xff]
      %v409 = vld [vmem:[#allocation3 + $0x88] sm:$0xff]
      %v410 = vld [vmem:[#allocation3 + $0x90] sm:$0xff]
      %v411 = vld [vmem:[#allocation3 + $0x98] sm:$0xff]
      %v412 = vld [vmem:[#allocation3 + $0xa0] sm:$0xff]
      %v413 = vld [vmem:[#allocation3 + $0xa8] sm:$0xff]
      %v414 = vld [vmem:[#allocation3 + $0xb0] sm:$0xff]
      %v415 = vld [vmem:[#allocation3 + $0xb8] sm:$0xff]
      %v416 = vld [vmem:[#allocation3 + $0xc0] sm:$0xff]
      %v417 = vld [vmem:[#allocation3 + $0xc8] sm:$0xff]
      %v418 = vld [vmem:[#allocation3 + $0xd0] sm:$0xff]
      %v419 = vld [vmem:[#allocation3 + $0xd8] sm:$0xff]
      %v420 = vld [vmem:[#allocation3 + $0xe0] sm:$0xff]
      %v421 = vld [vmem:[#allocation3 + $0xe8] sm:$0xff]
      %v422 = vld [vmem:[#allocation3 + $0xf0] sm:$0xff]
      %v423 = vld [vmem:[#allocation3 + $0xf8] sm:$0xff]
      %v424 = vld [vmem:[#allocation3 + $0x100] sm:$0xff]
      %v425 = vld [vmem:[#allocation3 + $0x108] sm:$0xff]
      %v426 = vld [vmem:[#allocation3 + $0x110] sm:$0xff]
      %v427 = vld [vmem:[#allocation3 + $0x118] sm:$0xff]
      %v428 = vld [vmem:[#allocation3 + $0x120] sm:$0xff]
      %v429 = vld [vmem:[#allocation3 + $0x128] sm:$0xff]
      %v430 = vld [vmem:[#allocation3 + $0x130] sm:$0xff]
      %v431 = vld [vmem:[#allocation3 + $0x138] sm:$0xff]
      %v432 = vld [vmem:[#allocation3 + $0x140] sm:$0xff]
      %v433 = vld [vmem:[#allocation3 + $0x148] sm:$0xff]
      %v434 = vld [vmem:[#allocation3 + $0x150] sm:$0xff]
      %v435 = vld [vmem:[#allocation3 + $0x158] sm:$0xff]
      %v436 = vld [vmem:[#allocation3 + $0x160] sm:$0xff]
      %v437 = vld [vmem:[#allocation3 + $0x168] sm:$0xff]
      %v438 = vld [vmem:[#allocation3 + $0x170] sm:$0xff]
      %v439 = vld [vmem:[#allocation3 + $0x178] sm:$0xff]
      %v440 = vld [vmem:[#allocation3 + $0x180] sm:$0xff]
      %v441 = vld [vmem:[#allocation3 + $0x188] sm:$0xff]
      %v442 = vld [vmem:[#allocation3 + $0x190] sm:$0xff]
      %v443 = vld [vmem:[#allocation3 + $0x198] sm:$0xff]
      %v444 = vld [vmem:[#allocation3 + $0x1a0] sm:$0xff]
      %v445 = vld [vmem:[#allocation3 + $0x1a8] sm:$0xff]
      %v446 = vld [vmem:[#allocation3 + $0x1b0] sm:$0xff]
      %v447 = vld [vmem:[#allocation3 + $0x1b8] sm:$0xff]
      %v448 = vld [vmem:[#allocation3 + $0x1c0] sm:$0xff]
      %v449 = vld [vmem:[#allocation3 + $0x1c8] sm:$0xff]
      %v450 = vld [vmem:[#allocation3 + $0x1d0] sm:$0xff]
      %v451 = vld [vmem:[#allocation3 + $0x1d8] sm:$0xff]
      %v452 = vld [vmem:[#allocation3 + $0x1e0] sm:$0xff]
      %v453 = vld [vmem:[#allocation3 + $0x1e8] sm:$0xff]
      %v454 = vld [vmem:[#allocation3 + $0x1f0] sm:$0xff]
      %v455 = vld [vmem:[#allocation3 + $0x1f8] sm:$0xff]
      %v456 = vld [vmem:[#allocation3 + $0x200] sm:$0xff]
      %v457 = vld [vmem:[#allocation3 + $0x208] sm:$0xff]
      %v458 = vld [vmem:[#allocation3 + $0x210] sm:$0xff]
      %v459 = vld [vmem:[#allocation3 + $0x218] sm:$0xff]
      %v460 = vld [vmem:[#allocation3 + $0x220] sm:$0xff]
      %v461 = vld [vmem:[#allocation3 + $0x228] sm:$0xff]
      %v462 = vld [vmem:[#allocation3 + $0x230] sm:$0xff]
      %v463 = vld [vmem:[#allocation3 + $0x238] sm:$0xff]
      %v464 = vld [vmem:[#allocation3 + $0x240] sm:$0xff]
      %v465 = vld [vmem:[#allocation3 + $0x248] sm:$0xff]
      %v466 = vld [vmem:[#allocation3 + $0x250] sm:$0xff]
      %v467 = vld [vmem:[#allocation3 + $0x258] sm:$0xff]
      %v468 = vld [vmem:[#allocation3 + $0x260] sm:$0xff]
      %v469 = vld [vmem:[#allocation3 + $0x268] sm:$0xff]
      %v470 = vld [vmem:[#allocation3 + $0x270] sm:$0xff]
      %v471 = vld [vmem:[#allocation3 + $0x278] sm:$0xff]
      %v472 = vld [vmem:[#allocation3 + $0x280] sm:$0xff]
      %v473 = vld [vmem:[#allocation3 + $0x288] sm:$0xff]
      %v474 = vld [vmem:[#allocation3 + $0x290] sm:$0xff]
      %v475 = vld [vmem:[#allocation3 + $0x298] sm:$0xff]
      %v476 = vld [vmem:[#allocation3 + $0x2a0] sm:$0xff]
      %v477 = vld [vmem:[#allocation3 + $0x2a8] sm:$0xff]
      %v478 = vld [vmem:[#allocation3 + $0x2b0] sm:$0xff]
      %v479 = vld [vmem:[#allocation3 + $0x2b8] sm:$0xff]
      %v480 = vld [vmem:[#allocation3 + $0x2c0] sm:$0xff]
      %v481 = vld [vmem:[#allocation3 + $0x2c8] sm:$0xff]
      %v482 = vld [vmem:[#allocation3 + $0x2d0] sm:$0xff]
      %v483 = vld [vmem:[#allocation3 + $0x2d8] sm:$0xff]
      %v484 = vld [vmem:[#allocation3 + $0x2e0] sm:$0xff]
      %v485 = vld [vmem:[#allocation3 + $0x2e8] sm:$0xff]
      %v486 = vld [vmem:[#allocation3 + $0x2f0] sm:$0xff]
      %v487 = vld [vmem:[#allocation3 + $0x2f8] sm:$0xff]
      %v488 = vld [vmem:[#allocation3 + $0x300] sm:$0xff]
      %v489 = vld [vmem:[#allocation3 + $0x308] sm:$0xff]
      %v490 = vld [vmem:[#allocation3 + $0x310] sm:$0xff]
      %v491 = vld [vmem:[#allocation3 + $0x318] sm:$0xff]
      %v492 = vld [vmem:[#allocation3 + $0x320] sm:$0xff]
      %v493 = vld [vmem:[#allocation3 + $0x328] sm:$0xff]
      %v494 = vld [vmem:[#allocation3 + $0x330] sm:$0xff]
      %v495 = vld [vmem:[#allocation3 + $0x338] sm:$0xff]
      %v496 = vld [vmem:[#allocation3 + $0x340] sm:$0xff]
      %v497 = vld [vmem:[#allocation3 + $0x348] sm:$0xff]
      %v498 = vld [vmem:[#allocation3 + $0x350] sm:$0xff]
      %v499 = vld [vmem:[#allocation3 + $0x358] sm:$0xff]
      %v500 = vld [vmem:[#allocation3 + $0x360] sm:$0xff]
      %v501 = vld [vmem:[#allocation3 + $0x368] sm:$0xff]
      %v502 = vld [vmem:[#allocation3 + $0x370] sm:$0xff]
      %v503 = vld [vmem:[#allocation3 + $0x378] sm:$0xff]
      %v504 = vld [vmem:[#allocation3 + $0x380] sm:$0xff]
      %v505 = vld [vmem:[#allocation3 + $0x388] sm:$0xff]
      %v506 = vld [vmem:[#allocation3 + $0x390] sm:$0xff]
      %v507 = vld [vmem:[#allocation3 + $0x398] sm:$0xff]
      %v508 = vld [vmem:[#allocation3 + $0x3a0] sm:$0xff]
      %v509 = vld [vmem:[#allocation3 + $0x3a8] sm:$0xff]
      %v510 = vld [vmem:[#allocation3 + $0x3b0] sm:$0xff]
      %v511 = vld [vmem:[#allocation3 + $0x3b8] sm:$0xff]
      %v512 = vld [vmem:[#allocation3 + $0x3c0] sm:$0xff]
      %v513 = vld [vmem:[#allocation3 + $0x3c8] sm:$0xff]
      %v514 = vld [vmem:[#allocation3 + $0x3d0] sm:$0xff]
      %v515 = vld [vmem:[#allocation3 + $0x3d8] sm:$0xff]
      %v516 = vld [vmem:[#allocation3 + $0x3e0] sm:$0xff]
      %v517 = vld [vmem:[#allocation3 + $0x3e8] sm:$0xff]
      %v518 = vld [vmem:[#allocation3 + $0x3f0] sm:$0xff]
      %v519 = vld [vmem:[#allocation3 + $0x3f8] sm:$0xff]
      %v520 = vunpack.c.l.s8.bf16 %v392
      %v521 = vunpack.c.l.s8.bf16 %v393
      %v522 = vunpack.c.l.s8.bf16 %v394
      %v523 = vunpack.c.l.s8.bf16 %v395
      %v524 = vunpack.c.l.s8.bf16 %v396
      %v525 = vunpack.c.l.s8.bf16 %v397
      %v526 = vunpack.c.l.s8.bf16 %v398
      %v527 = vunpack.c.l.s8.bf16 %v399
      %v528 = vunpack.c.h.s8.bf16 %v392
      %v529 = vunpack.c.h.s8.bf16 %v393
      %v530 = vunpack.c.h.s8.bf16 %v394
      %v531 = vunpack.c.h.s8.bf16 %v395
      %v532 = vunpack.c.h.s8.bf16 %v396
      %v533 = vunpack.c.h.s8.bf16 %v397
      %v534 = vunpack.c.h.s8.bf16 %v398
      %v535 = vunpack.c.h.s8.bf16 %v399
      %v536 = vunpack.c.l.s8.bf16 %v400
      %v537 = vunpack.c.l.s8.bf16 %v401
      %v538 = vunpack.c.l.s8.bf16 %v402
      %v539 = vunpack.c.l.s8.bf16 %v403
      %v540 = vunpack.c.l.s8.bf16 %v404
      %v541 = vunpack.c.l.s8.bf16 %v405
      %v542 = vunpack.c.l.s8.bf16 %v406
      %v543 = vunpack.c.l.s8.bf16 %v407
      %v544 = vunpack.c.h.s8.bf16 %v400
      %v545 = vunpack.c.h.s8.bf16 %v401
      %v546 = vunpack.c.h.s8.bf16 %v402
      %v547 = vunpack.c.h.s8.bf16 %v403
      %v548 = vunpack.c.h.s8.bf16 %v404
      %v549 = vunpack.c.h.s8.bf16 %v405
      %v550 = vunpack.c.h.s8.bf16 %v406
      %v551 = vunpack.c.h.s8.bf16 %v407
      %v552 = vunpack.c.l.s8.bf16 %v408
      %v553 = vunpack.c.l.s8.bf16 %v409
      %v554 = vunpack.c.l.s8.bf16 %v410
      %v555 = vunpack.c.l.s8.bf16 %v411
      %v556 = vunpack.c.l.s8.bf16 %v412
      %v557 = vunpack.c.l.s8.bf16 %v413
      %v558 = vunpack.c.l.s8.bf16 %v414
      %v559 = vunpack.c.l.s8.bf16 %v415
      %v560 = vunpack.c.h.s8.bf16 %v408
      %v561 = vunpack.c.h.s8.bf16 %v409
      %v562 = vunpack.c.h.s8.bf16 %v410
      %v563 = vunpack.c.h.s8.bf16 %v411
      %v564 = vunpack.c.h.s8.bf16 %v412
      %v565 = vunpack.c.h.s8.bf16 %v413
      %v566 = vunpack.c.h.s8.bf16 %v414
      %v567 = vunpack.c.h.s8.bf16 %v415
      %v568 = vunpack.c.l.s8.bf16 %v416
      %v569 = vunpack.c.l.s8.bf16 %v417
      %v570 = vunpack.c.l.s8.bf16 %v418
      %v571 = vunpack.c.l.s8.bf16 %v419
      %v572 = vunpack.c.l.s8.bf16 %v420
      %v573 = vunpack.c.l.s8.bf16 %v421
      %v574 = vunpack.c.l.s8.bf16 %v422
      %v575 = vunpack.c.l.s8.bf16 %v423
      %v576 = vunpack.c.h.s8.bf16 %v416
      %v577 = vunpack.c.h.s8.bf16 %v417
      %v578 = vunpack.c.h.s8.bf16 %v418
      %v579 = vunpack.c.h.s8.bf16 %v419
      %v580 = vunpack.c.h.s8.bf16 %v420
      %v581 = vunpack.c.h.s8.bf16 %v421
      %v582 = vunpack.c.h.s8.bf16 %v422
      %v583 = vunpack.c.h.s8.bf16 %v423
      %v584 = vunpack.c.l.s8.bf16 %v424
      %v585 = vunpack.c.l.s8.bf16 %v425
      %v586 = vunpack.c.l.s8.bf16 %v426
      %v587 = vunpack.c.l.s8.bf16 %v427
      %v588 = vunpack.c.l.s8.bf16 %v428
      %v589 = vunpack.c.l.s8.bf16 %v429
      %v590 = vunpack.c.l.s8.bf16 %v430
      %v591 = vunpack.c.l.s8.bf16 %v431
      %v592 = vunpack.c.h.s8.bf16 %v424
      %v593 = vunpack.c.h.s8.bf16 %v425
      %v594 = vunpack.c.h.s8.bf16 %v426
      %v595 = vunpack.c.h.s8.bf16 %v427
      %v596 = vunpack.c.h.s8.bf16 %v428
      %v597 = vunpack.c.h.s8.bf16 %v429
      %v598 = vunpack.c.h.s8.bf16 %v430
      %v599 = vunpack.c.h.s8.bf16 %v431
      %v600 = vunpack.c.l.s8.bf16 %v432
      %v601 = vunpack.c.l.s8.bf16 %v433
      %v602 = vunpack.c.l.s8.bf16 %v434
      %v603 = vunpack.c.l.s8.bf16 %v435
      %v604 = vunpack.c.l.s8.bf16 %v436
      %v605 = vunpack.c.l.s8.bf16 %v437
      %v606 = vunpack.c.l.s8.bf16 %v438
      %v607 = vunpack.c.l.s8.bf16 %v439
      %v608 = vunpack.c.h.s8.bf16 %v432
      %v609 = vunpack.c.h.s8.bf16 %v433
      %v610 = vunpack.c.h.s8.bf16 %v434
      %v611 = vunpack.c.h.s8.bf16 %v435
      %v612 = vunpack.c.h.s8.bf16 %v436
      %v613 = vunpack.c.h.s8.bf16 %v437
      %v614 = vunpack.c.h.s8.bf16 %v438
      %v615 = vunpack.c.h.s8.bf16 %v439
      %v616 = vunpack.c.l.s8.bf16 %v440
      %v617 = vunpack.c.l.s8.bf16 %v441
      %v618 = vunpack.c.l.s8.bf16 %v442
      %v619 = vunpack.c.l.s8.bf16 %v443
      %v620 = vunpack.c.l.s8.bf16 %v444
      %v621 = vunpack.c.l.s8.bf16 %v445
      %v622 = vunpack.c.l.s8.bf16 %v446
      %v623 = vunpack.c.l.s8.bf16 %v447
      %v624 = vunpack.c.h.s8.bf16 %v440
      %v625 = vunpack.c.h.s8.bf16 %v441
      %v626 = vunpack.c.h.s8.bf16 %v442
      %v627 = vunpack.c.h.s8.bf16 %v443
      %v628 = vunpack.c.h.s8.bf16 %v444
      %v629 = vunpack.c.h.s8.bf16 %v445
      %v630 = vunpack.c.h.s8.bf16 %v446
      %v631 = vunpack.c.h.s8.bf16 %v447
      %v632 = vunpack.c.l.s8.bf16 %v448
      %v633 = vunpack.c.l.s8.bf16 %v449
      %v634 = vunpack.c.l.s8.bf16 %v450
      %v635 = vunpack.c.l.s8.bf16 %v451
      %v636 = vunpack.c.l.s8.bf16 %v452
      %v637 = vunpack.c.l.s8.bf16 %v453
      %v638 = vunpack.c.l.s8.bf16 %v454
      %v639 = vunpack.c.l.s8.bf16 %v455
      %v640 = vunpack.c.h.s8.bf16 %v448
      %v641 = vunpack.c.h.s8.bf16 %v449
      %v642 = vunpack.c.h.s8.bf16 %v450
      %v643 = vunpack.c.h.s8.bf16 %v451
      %v644 = vunpack.c.h.s8.bf16 %v452
      %v645 = vunpack.c.h.s8.bf16 %v453
      %v646 = vunpack.c.h.s8.bf16 %v454
      %v647 = vunpack.c.h.s8.bf16 %v455
      %v648 = vunpack.c.l.s8.bf16 %v456
      %v649 = vunpack.c.l.s8.bf16 %v457
      %v650 = vunpack.c.l.s8.bf16 %v458
      %v651 = vunpack.c.l.s8.bf16 %v459
      %v652 = vunpack.c.l.s8.bf16 %v460
      %v653 = vunpack.c.l.s8.bf16 %v461
      %v654 = vunpack.c.l.s8.bf16 %v462
      %v655 = vunpack.c.l.s8.bf16 %v463
      %v656 = vunpack.c.h.s8.bf16 %v456
      %v657 = vunpack.c.h.s8.bf16 %v457
      %v658 = vunpack.c.h.s8.bf16 %v458
      %v659 = vunpack.c.h.s8.bf16 %v459
      %v660 = vunpack.c.h.s8.bf16 %v460
      %v661 = vunpack.c.h.s8.bf16 %v461
      %v662 = vunpack.c.h.s8.bf16 %v462
      %v663 = vunpack.c.h.s8.bf16 %v463
      %v664 = vunpack.c.l.s8.bf16 %v464
      %v665 = vunpack.c.l.s8.bf16 %v465
      %v666 = vunpack.c.l.s8.bf16 %v466
      %v667 = vunpack.c.l.s8.bf16 %v467
      %v668 = vunpack.c.l.s8.bf16 %v468
      %v669 = vunpack.c.l.s8.bf16 %v469
      %v670 = vunpack.c.l.s8.bf16 %v470
      %v671 = vunpack.c.l.s8.bf16 %v471
      %v672 = vunpack.c.h.s8.bf16 %v464
      %v673 = vunpack.c.h.s8.bf16 %v465
      %v674 = vunpack.c.h.s8.bf16 %v466
      %v675 = vunpack.c.h.s8.bf16 %v467
      %v676 = vunpack.c.h.s8.bf16 %v468
      %v677 = vunpack.c.h.s8.bf16 %v469
      %v678 = vunpack.c.h.s8.bf16 %v470
      %v679 = vunpack.c.h.s8.bf16 %v471
      %v680 = vunpack.c.l.s8.bf16 %v472
      %v681 = vunpack.c.l.s8.bf16 %v473
      %v682 = vunpack.c.l.s8.bf16 %v474
      %v683 = vunpack.c.l.s8.bf16 %v475
      %v684 = vunpack.c.l.s8.bf16 %v476
      %v685 = vunpack.c.l.s8.bf16 %v477
      %v686 = vunpack.c.l.s8.bf16 %v478
      %v687 = vunpack.c.l.s8.bf16 %v479
      %v688 = vunpack.c.h.s8.bf16 %v472
      %v689 = vunpack.c.h.s8.bf16 %v473
      %v690 = vunpack.c.h.s8.bf16 %v474
      %v691 = vunpack.c.h.s8.bf16 %v475
      %v692 = vunpack.c.h.s8.bf16 %v476
      %v693 = vunpack.c.h.s8.bf16 %v477
      %v694 = vunpack.c.h.s8.bf16 %v478
      %v695 = vunpack.c.h.s8.bf16 %v479
      %v696 = vunpack.c.l.s8.bf16 %v480
      %v697 = vunpack.c.l.s8.bf16 %v481
      %v698 = vunpack.c.l.s8.bf16 %v482
      %v699 = vunpack.c.l.s8.bf16 %v483
      %v700 = vunpack.c.l.s8.bf16 %v484
      %v701 = vunpack.c.l.s8.bf16 %v485
      %v702 = vunpack.c.l.s8.bf16 %v486
      %v703 = vunpack.c.l.s8.bf16 %v487
      %v704 = vunpack.c.h.s8.bf16 %v480
      %v705 = vunpack.c.h.s8.bf16 %v481
      %v706 = vunpack.c.h.s8.bf16 %v482
      %v707 = vunpack.c.h.s8.bf16 %v483
      %v708 = vunpack.c.h.s8.bf16 %v484
      %v709 = vunpack.c.h.s8.bf16 %v485
      %v710 = vunpack.c.h.s8.bf16 %v486
      %v711 = vunpack.c.h.s8.bf16 %v487
      %v712 = vunpack.c.l.s8.bf16 %v488
      %v713 = vunpack.c.l.s8.bf16 %v489
      %v714 = vunpack.c.l.s8.bf16 %v490
      %v715 = vunpack.c.l.s8.bf16 %v491
      %v716 = vunpack.c.l.s8.bf16 %v492
      %v717 = vunpack.c.l.s8.bf16 %v493
      %v718 = vunpack.c.l.s8.bf16 %v494
      %v719 = vunpack.c.l.s8.bf16 %v495
      %v720 = vunpack.c.h.s8.bf16 %v488
      %v721 = vunpack.c.h.s8.bf16 %v489
      %v722 = vunpack.c.h.s8.bf16 %v490
      %v723 = vunpack.c.h.s8.bf16 %v491
      %v724 = vunpack.c.h.s8.bf16 %v492
      %v725 = vunpack.c.h.s8.bf16 %v493
      %v726 = vunpack.c.h.s8.bf16 %v494
      %v727 = vunpack.c.h.s8.bf16 %v495
      %v728 = vunpack.c.l.s8.bf16 %v496
      %v729 = vunpack.c.l.s8.bf16 %v497
      %v730 = vunpack.c.l.s8.bf16 %v498
      %v731 = vunpack.c.l.s8.bf16 %v499
      %v732 = vunpack.c.l.s8.bf16 %v500
      %v733 = vunpack.c.l.s8.bf16 %v501
      %v734 = vunpack.c.l.s8.bf16 %v502
      %v735 = vunpack.c.l.s8.bf16 %v503
      %v736 = vunpack.c.h.s8.bf16 %v496
      %v737 = vunpack.c.h.s8.bf16 %v497
      %v738 = vunpack.c.h.s8.bf16 %v498
      %v739 = vunpack.c.h.s8.bf16 %v499
      %v740 = vunpack.c.h.s8.bf16 %v500
      %v741 = vunpack.c.h.s8.bf16 %v501
      %v742 = vunpack.c.h.s8.bf16 %v502
      %v743 = vunpack.c.h.s8.bf16 %v503
      %v744 = vunpack.c.l.s8.bf16 %v504
      %v745 = vunpack.c.l.s8.bf16 %v505
      %v746 = vunpack.c.l.s8.bf16 %v506
      %v747 = vunpack.c.l.s8.bf16 %v507
      %v748 = vunpack.c.l.s8.bf16 %v508
      %v749 = vunpack.c.l.s8.bf16 %v509
      %v750 = vunpack.c.l.s8.bf16 %v510
      %v751 = vunpack.c.l.s8.bf16 %v511
      %v752 = vunpack.c.h.s8.bf16 %v504
      %v753 = vunpack.c.h.s8.bf16 %v505
      %v754 = vunpack.c.h.s8.bf16 %v506
      %v755 = vunpack.c.h.s8.bf16 %v507
      %v756 = vunpack.c.h.s8.bf16 %v508
      %v757 = vunpack.c.h.s8.bf16 %v509
      %v758 = vunpack.c.h.s8.bf16 %v510
      %v759 = vunpack.c.h.s8.bf16 %v511
      %v760 = vunpack.c.l.s8.bf16 %v512
      %v761 = vunpack.c.l.s8.bf16 %v513
      %v762 = vunpack.c.l.s8.bf16 %v514
      %v763 = vunpack.c.l.s8.bf16 %v515
      %v764 = vunpack.c.l.s8.bf16 %v516
      %v765 = vunpack.c.l.s8.bf16 %v517
      %v766 = vunpack.c.l.s8.bf16 %v518
      %v767 = vunpack.c.l.s8.bf16 %v519
      %v768 = vunpack.c.h.s8.bf16 %v512
      %v769 = vunpack.c.h.s8.bf16 %v513
      %v770 = vunpack.c.h.s8.bf16 %v514
      %v771 = vunpack.c.h.s8.bf16 %v515
      %v772 = vunpack.c.h.s8.bf16 %v516
      %v773 = vunpack.c.h.s8.bf16 %v517
      %v774 = vunpack.c.h.s8.bf16 %v518
      %v775 = vunpack.c.h.s8.bf16 %v519
      %776 = vst [vmem:[#allocation7] sm:$0xff] %v520
      %777 = vst [vmem:[#allocation7 + $0x8] sm:$0xff] %v521
      %778 = vst [vmem:[#allocation7 + $0x10] sm:$0xff] %v522
      %779 = vst [vmem:[#allocation7 + $0x18] sm:$0xff] %v523
      %780 = vst [vmem:[#allocation7 + $0x20] sm:$0xff] %v524
      %781 = vst [vmem:[#allocation7 + $0x28] sm:$0xff] %v525
      %782 = vst [vmem:[#allocation7 + $0x30] sm:$0xff] %v526
      %783 = vst [vmem:[#allocation7 + $0x38] sm:$0xff] %v527
      %784 = vst [vmem:[#allocation7 + $0x40] sm:$0xff] %v528
      %785 = vst [vmem:[#allocation7 + $0x48] sm:$0xff] %v529
      %786 = vst [vmem:[#allocation7 + $0x50] sm:$0xff] %v530
      %787 = vst [vmem:[#allocation7 + $0x58] sm:$0xff] %v531
      %788 = vst [vmem:[#allocation7 + $0x60] sm:$0xff] %v532
      %789 = vst [vmem:[#allocation7 + $0x68] sm:$0xff] %v533
      %790 = vst [vmem:[#allocation7 + $0x70] sm:$0xff] %v534
      %791 = vst [vmem:[#allocation7 + $0x78] sm:$0xff] %v535
      %792 = vst [vmem:[#allocation7 + $0x80] sm:$0xff] %v536
      %793 = vst [vmem:[#allocation7 + $0x88] sm:$0xff] %v537
      %794 = vst [vmem:[#allocation7 + $0x90] sm:$0xff] %v538
      %795 = vst [vmem:[#allocation7 + $0x98] sm:$0xff] %v539
      %796 = vst [vmem:[#allocation7 + $0xa0] sm:$0xff] %v540
      %797 = vst [vmem:[#allocation7 + $0xa8] sm:$0xff] %v541
      %798 = vst [vmem:[#allocation7 + $0xb0] sm:$0xff] %v542
      %799 = vst [vmem:[#allocation7 + $0xb8] sm:$0xff] %v543
      %800 = vst [vmem:[#allocation7 + $0xc0] sm:$0xff] %v544
      %801 = vst [vmem:[#allocation7 + $0xc8] sm:$0xff] %v545
      %802 = vst [vmem:[#allocation7 + $0xd0] sm:$0xff] %v546
      %803 = vst [vmem:[#allocation7 + $0xd8] sm:$0xff] %v547
      %804 = vst [vmem:[#allocation7 + $0xe0] sm:$0xff] %v548
      %805 = vst [vmem:[#allocation7 + $0xe8] sm:$0xff] %v549
      %806 = vst [vmem:[#allocation7 + $0xf0] sm:$0xff] %v550
      %807 = vst [vmem:[#allocation7 + $0xf8] sm:$0xff] %v551
      %808 = vst [vmem:[#allocation7 + $0x100] sm:$0xff] %v552
      %809 = vst [vmem:[#allocation7 + $0x108] sm:$0xff] %v553
      %810 = vst [vmem:[#allocation7 + $0x110] sm:$0xff] %v554
      %811 = vst [vmem:[#allocation7 + $0x118] sm:$0xff] %v555
      %812 = vst [vmem:[#allocation7 + $0x120] sm:$0xff] %v556
      %813 = vst [vmem:[#allocation7 + $0x128] sm:$0xff] %v557
      %814 = vst [vmem:[#allocation7 + $0x130] sm:$0xff] %v558
      %815 = vst [vmem:[#allocation7 + $0x138] sm:$0xff] %v559
      %816 = vst [vmem:[#allocation7 + $0x140] sm:$0xff] %v560
      %817 = vst [vmem:[#allocation7 + $0x148] sm:$0xff] %v561
      %818 = vst [vmem:[#allocation7 + $0x150] sm:$0xff] %v562
      %819 = vst [vmem:[#allocation7 + $0x158] sm:$0xff] %v563
      %820 = vst [vmem:[#allocation7 + $0x160] sm:$0xff] %v564
      %821 = vst [vmem:[#allocation7 + $0x168] sm:$0xff] %v565
      %822 = vst [vmem:[#allocation7 + $0x170] sm:$0xff] %v566
      %823 = vst [vmem:[#allocation7 + $0x178] sm:$0xff] %v567
      %824 = vst [vmem:[#allocation7 + $0x180] sm:$0xff] %v568
      %825 = vst [vmem:[#allocation7 + $0x188] sm:$0xff] %v569
      %826 = vst [vmem:[#allocation7 + $0x190] sm:$0xff] %v570
      %827 = vst [vmem:[#allocation7 + $0x198] sm:$0xff] %v571
      %828 = vst [vmem:[#allocation7 + $0x1a0] sm:$0xff] %v572
      %829 = vst [vmem:[#allocation7 + $0x1a8] sm:$0xff] %v573
      %830 = vst [vmem:[#allocation7 + $0x1b0] sm:$0xff] %v574
      %831 = vst [vmem:[#allocation7 + $0x1b8] sm:$0xff] %v575
      %832 = vst [vmem:[#allocation7 + $0x1c0] sm:$0xff] %v576
      %833 = vst [vmem:[#allocation7 + $0x1c8] sm:$0xff] %v577
      %834 = vst [vmem:[#allocation7 + $0x1d0] sm:$0xff] %v578
      %835 = vst [vmem:[#allocation7 + $0x1d8] sm:$0xff] %v579
      %836 = vst [vmem:[#allocation7 + $0x1e0] sm:$0xff] %v580
      %837 = vst [vmem:[#allocation7 + $0x1e8] sm:$0xff] %v581
      %838 = vst [vmem:[#allocation7 + $0x1f0] sm:$0xff] %v582
      %839 = vst [vmem:[#allocation7 + $0x1f8] sm:$0xff] %v583
      %840 = vst [vmem:[#allocation7 + $0x200] sm:$0xff] %v584
      %841 = vst [vmem:[#allocation7 + $0x208] sm:$0xff] %v585
      %842 = vst [vmem:[#allocation7 + $0x210] sm:$0xff] %v586
      %843 = vst [vmem:[#allocation7 + $0x218] sm:$0xff] %v587
      %844 = vst [vmem:[#allocation7 + $0x220] sm:$0xff] %v588
      %845 = vst [vmem:[#allocation7 + $0x228] sm:$0xff] %v589
      %846 = vst [vmem:[#allocation7 + $0x230] sm:$0xff] %v590
      %847 = vst [vmem:[#allocation7 + $0x238] sm:$0xff] %v591
      %848 = vst [vmem:[#allocation7 + $0x240] sm:$0xff] %v592
      %849 = vst [vmem:[#allocation7 + $0x248] sm:$0xff] %v593
      %850 = vst [vmem:[#allocation7 + $0x250] sm:$0xff] %v594
      %851 = vst [vmem:[#allocation7 + $0x258] sm:$0xff] %v595
      %852 = vst [vmem:[#allocation7 + $0x260] sm:$0xff] %v596
      %853 = vst [vmem:[#allocation7 + $0x268] sm:$0xff] %v597
      %854 = vst [vmem:[#allocation7 + $0x270] sm:$0xff] %v598
      %855 = vst [vmem:[#allocation7 + $0x278] sm:$0xff] %v599
      %856 = vst [vmem:[#allocation7 + $0x280] sm:$0xff] %v600
      %857 = vst [vmem:[#allocation7 + $0x288] sm:$0xff] %v601
      %858 = vst [vmem:[#allocation7 + $0x290] sm:$0xff] %v602
      %859 = vst [vmem:[#allocation7 + $0x298] sm:$0xff] %v603
      %860 = vst [vmem:[#allocation7 + $0x2a0] sm:$0xff] %v604
      %861 = vst [vmem:[#allocation7 + $0x2a8] sm:$0xff] %v605
      %862 = vst [vmem:[#allocation7 + $0x2b0] sm:$0xff] %v606
      %863 = vst [vmem:[#allocation7 + $0x2b8] sm:$0xff] %v607
      %864 = vst [vmem:[#allocation7 + $0x2c0] sm:$0xff] %v608
      %865 = vst [vmem:[#allocation7 + $0x2c8] sm:$0xff] %v609
      %866 = vst [vmem:[#allocation7 + $0x2d0] sm:$0xff] %v610
      %867 = vst [vmem:[#allocation7 + $0x2d8] sm:$0xff] %v611
      %868 = vst [vmem:[#allocation7 + $0x2e0] sm:$0xff] %v612
      %869 = vst [vmem:[#allocation7 + $0x2e8] sm:$0xff] %v613
      %870 = vst [vmem:[#allocation7 + $0x2f0] sm:$0xff] %v614
      %871 = vst [vmem:[#allocation7 + $0x2f8] sm:$0xff] %v615
      %872 = vst [vmem:[#allocation7 + $0x300] sm:$0xff] %v616
      %873 = vst [vmem:[#allocation7 + $0x308] sm:$0xff] %v617
      %874 = vst [vmem:[#allocation7 + $0x310] sm:$0xff] %v618
      %875 = vst [vmem:[#allocation7 + $0x318] sm:$0xff] %v619
      %876 = vst [vmem:[#allocation7 + $0x320] sm:$0xff] %v620
      %877 = vst [vmem:[#allocation7 + $0x328] sm:$0xff] %v621
      %878 = vst [vmem:[#allocation7 + $0x330] sm:$0xff] %v622
      %879 = vst [vmem:[#allocation7 + $0x338] sm:$0xff] %v623
      %880 = vst [vmem:[#allocation7 + $0x340] sm:$0xff] %v624
      %881 = vst [vmem:[#allocation7 + $0x348] sm:$0xff] %v625
      %882 = vst [vmem:[#allocation7 + $0x350] sm:$0xff] %v626
      %883 = vst [vmem:[#allocation7 + $0x358] sm:$0xff] %v627
      %884 = vst [vmem:[#allocation7 + $0x360] sm:$0xff] %v628
      %885 = vst [vmem:[#allocation7 + $0x368] sm:$0xff] %v629
      %886 = vst [vmem:[#allocation7 + $0x370] sm:$0xff] %v630
      %887 = vst [vmem:[#allocation7 + $0x378] sm:$0xff] %v631
      %888 = vst [vmem:[#allocation7 + $0x380] sm:$0xff] %v632
      %889 = vst [vmem:[#allocation7 + $0x388] sm:$0xff] %v633
      %890 = vst [vmem:[#allocation7 + $0x390] sm:$0xff] %v634
      %891 = vst [vmem:[#allocation7 + $0x398] sm:$0xff] %v635
      %892 = vst [vmem:[#allocation7 + $0x3a0] sm:$0xff] %v636
      %893 = vst [vmem:[#allocation7 + $0x3a8] sm:$0xff] %v637
      %894 = vst [vmem:[#allocation7 + $0x3b0] sm:$0xff] %v638
      %895 = vst [vmem:[#allocation7 + $0x3b8] sm:$0xff] %v639
      %896 = vst [vmem:[#allocation7 + $0x3c0] sm:$0xff] %v640
      %897 = vst [vmem:[#allocation7 + $0x3c8] sm:$0xff] %v641
      %898 = vst [vmem:[#allocation7 + $0x3d0] sm:$0xff] %v642
      %899 = vst [vmem:[#allocation7 + $0x3d8] sm:$0xff] %v643
      %900 = vst [vmem:[#allocation7 + $0x3e0] sm:$0xff] %v644
      %901 = vst [vmem:[#allocation7 + $0x3e8] sm:$0xff] %v645
      %902 = vst [vmem:[#allocation7 + $0x3f0] sm:$0xff] %v646
      %903 = vst [vmem:[#allocation7 + $0x3f8] sm:$0xff] %v647
      %904 = vst [vmem:[#allocation7 + $0x400] sm:$0xff] %v648
      %905 = vst [vmem:[#allocation7 + $0x408] sm:$0xff] %v649
      %906 = vst [vmem:[#allocation7 + $0x410] sm:$0xff] %v650
      %907 = vst [vmem:[#allocation7 + $0x418] sm:$0xff] %v651
      %908 = vst [vmem:[#allocation7 + $0x420] sm:$0xff] %v652
      %909 = vst [vmem:[#allocation7 + $0x428] sm:$0xff] %v653
      %910 = vst [vmem:[#allocation7 + $0x430] sm:$0xff] %v654
      %911 = vst [vmem:[#allocation7 + $0x438] sm:$0xff] %v655
      %912 = vst [vmem:[#allocation7 + $0x440] sm:$0xff] %v656
      %913 = vst [vmem:[#allocation7 + $0x448] sm:$0xff] %v657
      %914 = vst [vmem:[#allocation7 + $0x450] sm:$0xff] %v658
      %915 = vst [vmem:[#allocation7 + $0x458] sm:$0xff] %v659
      %916 = vst [vmem:[#allocation7 + $0x460] sm:$0xff] %v660
      %917 = vst [vmem:[#allocation7 + $0x468] sm:$0xff] %v661
      %918 = vst [vmem:[#allocation7 + $0x470] sm:$0xff] %v662
      %919 = vst [vmem:[#allocation7 + $0x478] sm:$0xff] %v663
      %920 = vst [vmem:[#allocation7 + $0x480] sm:$0xff] %v664
      %921 = vst [vmem:[#allocation7 + $0x488] sm:$0xff] %v665
      %922 = vst [vmem:[#allocation7 + $0x490] sm:$0xff] %v666
      %923 = vst [vmem:[#allocation7 + $0x498] sm:$0xff] %v667
      %924 = vst [vmem:[#allocation7 + $0x4a0] sm:$0xff] %v668
      %925 = vst [vmem:[#allocation7 + $0x4a8] sm:$0xff] %v669
      %926 = vst [vmem:[#allocation7 + $0x4b0] sm:$0xff] %v670
      %927 = vst [vmem:[#allocation7 + $0x4b8] sm:$0xff] %v671
      %928 = vst [vmem:[#allocation7 + $0x4c0] sm:$0xff] %v672
      %929 = vst [vmem:[#allocation7 + $0x4c8] sm:$0xff] %v673
      %930 = vst [vmem:[#allocation7 + $0x4d0] sm:$0xff] %v674
      %931 = vst [vmem:[#allocation7 + $0x4d8] sm:$0xff] %v675
      %932 = vst [vmem:[#allocation7 + $0x4e0] sm:$0xff] %v676
      %933 = vst [vmem:[#allocation7 + $0x4e8] sm:$0xff] %v677
      %934 = vst [vmem:[#allocation7 + $0x4f0] sm:$0xff] %v678
      %935 = vst [vmem:[#allocation7 + $0x4f8] sm:$0xff] %v679
      %936 = vst [vmem:[#allocation7 + $0x500] sm:$0xff] %v680
      %937 = vst [vmem:[#allocation7 + $0x508] sm:$0xff] %v681
      %938 = vst [vmem:[#allocation7 + $0x510] sm:$0xff] %v682
      %939 = vst [vmem:[#allocation7 + $0x518] sm:$0xff] %v683
      %940 = vst [vmem:[#allocation7 + $0x520] sm:$0xff] %v684
      %941 = vst [vmem:[#allocation7 + $0x528] sm:$0xff] %v685
      %942 = vst [vmem:[#allocation7 + $0x530] sm:$0xff] %v686
      %943 = vst [vmem:[#allocation7 + $0x538] sm:$0xff] %v687
      %944 = vst [vmem:[#allocation7 + $0x540] sm:$0xff] %v688
      %945 = vst [vmem:[#allocation7 + $0x548] sm:$0xff] %v689
      %946 = vst [vmem:[#allocation7 + $0x550] sm:$0xff] %v690
      %947 = vst [vmem:[#allocation7 + $0x558] sm:$0xff] %v691
      %948 = vst [vmem:[#allocation7 + $0x560] sm:$0xff] %v692
      %949 = vst [vmem:[#allocation7 + $0x568] sm:$0xff] %v693
      %950 = vst [vmem:[#allocation7 + $0x570] sm:$0xff] %v694
      %951 = vst [vmem:[#allocation7 + $0x578] sm:$0xff] %v695
      %952 = vst [vmem:[#allocation7 + $0x580] sm:$0xff] %v696
      %953 = vst [vmem:[#allocation7 + $0x588] sm:$0xff] %v697
      %954 = vst [vmem:[#allocation7 + $0x590] sm:$0xff] %v698
      %955 = vst [vmem:[#allocation7 + $0x598] sm:$0xff] %v699
      %956 = vst [vmem:[#allocation7 + $0x5a0] sm:$0xff] %v700
      %957 = vst [vmem:[#allocation7 + $0x5a8] sm:$0xff] %v701
      %958 = vst [vmem:[#allocation7 + $0x5b0] sm:$0xff] %v702
      %959 = vst [vmem:[#allocation7 + $0x5b8] sm:$0xff] %v703
      %960 = vst [vmem:[#allocation7 + $0x5c0] sm:$0xff] %v704
      %961 = vst [vmem:[#allocation7 + $0x5c8] sm:$0xff] %v705
      %962 = vst [vmem:[#allocation7 + $0x5d0] sm:$0xff] %v706
      %963 = vst [vmem:[#allocation7 + $0x5d8] sm:$0xff] %v707
      %964 = vst [vmem:[#allocation7 + $0x5e0] sm:$0xff] %v708
      %965 = vst [vmem:[#allocation7 + $0x5e8] sm:$0xff] %v709
      %966 = vst [vmem:[#allocation7 + $0x5f0] sm:$0xff] %v710
      %967 = vst [vmem:[#allocation7 + $0x5f8] sm:$0xff] %v711
      %968 = vst [vmem:[#allocation7 + $0x600] sm:$0xff] %v712
      %969 = vst [vmem:[#allocation7 + $0x608] sm:$0xff] %v713
      %970 = vst [vmem:[#allocation7 + $0x610] sm:$0xff] %v714
      %971 = vst [vmem:[#allocation7 + $0x618] sm:$0xff] %v715
      %972 = vst [vmem:[#allocation7 + $0x620] sm:$0xff] %v716
      %973 = vst [vmem:[#allocation7 + $0x628] sm:$0xff] %v717
      %974 = vst [vmem:[#allocation7 + $0x630] sm:$0xff] %v718
      %975 = vst [vmem:[#allocation7 + $0x638] sm:$0xff] %v719
      %976 = vst [vmem:[#allocation7 + $0x640] sm:$0xff] %v720
      %977 = vst [vmem:[#allocation7 + $0x648] sm:$0xff] %v721
      %978 = vst [vmem:[#allocation7 + $0x650] sm:$0xff] %v722
      %979 = vst [vmem:[#allocation7 + $0x658] sm:$0xff] %v723
      %980 = vst [vmem:[#allocation7 + $0x660] sm:$0xff] %v724
      %981 = vst [vmem:[#allocation7 + $0x668] sm:$0xff] %v725
      %982 = vst [vmem:[#allocation7 + $0x670] sm:$0xff] %v726
      %983 = vst [vmem:[#allocation7 + $0x678] sm:$0xff] %v727
      %984 = vst [vmem:[#allocation7 + $0x680] sm:$0xff] %v728
      %985 = vst [vmem:[#allocation7 + $0x688] sm:$0xff] %v729
      %986 = vst [vmem:[#allocation7 + $0x690] sm:$0xff] %v730
      %987 = vst [vmem:[#allocation7 + $0x698] sm:$0xff] %v731
      %988 = vst [vmem:[#allocation7 + $0x6a0] sm:$0xff] %v732
      %989 = vst [vmem:[#allocation7 + $0x6a8] sm:$0xff] %v733
      %990 = vst [vmem:[#allocation7 + $0x6b0] sm:$0xff] %v734
      %991 = vst [vmem:[#allocation7 + $0x6b8] sm:$0xff] %v735
      %992 = vst [vmem:[#allocation7 + $0x6c0] sm:$0xff] %v736
      %993 = vst [vmem:[#allocation7 + $0x6c8] sm:$0xff] %v737
      %994 = vst [vmem:[#allocation7 + $0x6d0] sm:$0xff] %v738
      %995 = vst [vmem:[#allocation7 + $0x6d8] sm:$0xff] %v739
      %996 = vst [vmem:[#allocation7 + $0x6e0] sm:$0xff] %v740
      %997 = vst [vmem:[#allocation7 + $0x6e8] sm:$0xff] %v741
      %998 = vst [vmem:[#allocation7 + $0x6f0] sm:$0xff] %v742
      %999 = vst [vmem:[#allocation7 + $0x6f8] sm:$0xff] %v743
      %1000 = vst [vmem:[#allocation7 + $0x700] sm:$0xff] %v744
      %1001 = vst [vmem:[#allocation7 + $0x708] sm:$0xff] %v745
      %1002 = vst [vmem:[#allocation7 + $0x710] sm:$0xff] %v746
      %1003 = vst [vmem:[#allocation7 + $0x718] sm:$0xff] %v747
      %1004 = vst [vmem:[#allocation7 + $0x720] sm:$0xff] %v748
      %1005 = vst [vmem:[#allocation7 + $0x728] sm:$0xff] %v749
      %1006 = vst [vmem:[#allocation7 + $0x730] sm:$0xff] %v750
      %1007 = vst [vmem:[#allocation7 + $0x738] sm:$0xff] %v751
      %1008 = vst [vmem:[#allocation7 + $0x740] sm:$0xff] %v752
      %1009 = vst [vmem:[#allocation7 + $0x748] sm:$0xff] %v753
      %1010 = vst [vmem:[#allocation7 + $0x750] sm:$0xff] %v754
      %1011 = vst [vmem:[#allocation7 + $0x758] sm:$0xff] %v755
      %1012 = vst [vmem:[#allocation7 + $0x760] sm:$0xff] %v756
      %1013 = vst [vmem:[#allocation7 + $0x768] sm:$0xff] %v757
      %1014 = vst [vmem:[#allocation7 + $0x770] sm:$0xff] %v758
      %1015 = vst [vmem:[#allocation7 + $0x778] sm:$0xff] %v759
      %1016 = vst [vmem:[#allocation7 + $0x780] sm:$0xff] %v760
      %1017 = vst [vmem:[#allocation7 + $0x788] sm:$0xff] %v761
      %1018 = vst [vmem:[#allocation7 + $0x790] sm:$0xff] %v762
      %1019 = vst [vmem:[#allocation7 + $0x798] sm:$0xff] %v763
      %1020 = vst [vmem:[#allocation7 + $0x7a0] sm:$0xff] %v764
      %1021 = vst [vmem:[#allocation7 + $0x7a8] sm:$0xff] %v765
      %1022 = vst [vmem:[#allocation7 + $0x7b0] sm:$0xff] %v766
      %1023 = vst [vmem:[#allocation7 + $0x7b8] sm:$0xff] %v767
      %1024 = vst [vmem:[#allocation7 + $0x7c0] sm:$0xff] %v768
      %1025 = vst [vmem:[#allocation7 + $0x7c8] sm:$0xff] %v769
      %1026 = vst [vmem:[#allocation7 + $0x7d0] sm:$0xff] %v770
      %1027 = vst [vmem:[#allocation7 + $0x7d8] sm:$0xff] %v771
      %1028 = vst [vmem:[#allocation7 + $0x7e0] sm:$0xff] %v772
      %1029 = vst [vmem:[#allocation7 + $0x7e8] sm:$0xff] %v773
      %1030 = vst [vmem:[#allocation7 + $0x7f0] sm:$0xff] %v774
      %1031 = vst [vmem:[#allocation7 + $0x7f8] sm:$0xff] %v775
    $region101: #{tpu_custom_call.1} parent=1 // pred_fallthru
      _
    %v1032 = vld [vmem:[#allocation7] sm:$0xff]
    %v1033 = vld [vmem:[#allocation7 + $0x8] sm:$0xff]
    %v1034 = vld [vmem:[#allocation7 + $0x10] sm:$0xff]
    %v1035 = vld [vmem:[#allocation7 + $0x18] sm:$0xff]
    %v1036 = vld [vmem:[#allocation7 + $0x20] sm:$0xff]
    %v1037 = vld [vmem:[#allocation7 + $0x28] sm:$0xff]
    %v1038 = vld [vmem:[#allocation7 + $0x30] sm:$0xff]
    %v1039 = vld [vmem:[#allocation7 + $0x38] sm:$0xff]
    %v1040 = vld [vmem:[#allocation7 + $0x40] sm:$0xff]
    %v1041 = vld [vmem:[#allocation7 + $0x48] sm:$0xff]
    %v1042 = vld [vmem:[#allocation7 + $0x50] sm:$0xff]
    %v1043 = vld [vmem:[#allocation7 + $0x58] sm:$0xff]
    %v1044 = vld [vmem:[#allocation7 + $0x60] sm:$0xff]
    %v1045 = vld [vmem:[#allocation7 + $0x68] sm:$0xff]
    %v1046 = vld [vmem:[#allocation7 + $0x70] sm:$0xff]
    %v1047 = vld [vmem:[#allocation7 + $0x78] sm:$0xff]
    %v1048 = vld [vmem:[#allocation7 + $0x80] sm:$0xff]
    %v1049 = vld [vmem:[#allocation7 + $0x88] sm:$0xff]
    %v1050 = vld [vmem:[#allocation7 + $0x90] sm:$0xff]
    %v1051 = vld [vmem:[#allocation7 + $0x98] sm:$0xff]
    %v1052 = vld [vmem:[#allocation7 + $0xa0] sm:$0xff]
    %v1053 = vld [vmem:[#allocation7 + $0xa8] sm:$0xff]
    %v1054 = vld [vmem:[#allocation7 + $0xb0] sm:$0xff]
    %v1055 = vld [vmem:[#allocation7 + $0xb8] sm:$0xff]
    %v1056 = vld [vmem:[#allocation7 + $0xc0] sm:$0xff]
    %v1057 = vld [vmem:[#allocation7 + $0xc8] sm:$0xff]
    %v1058 = vld [vmem:[#allocation7 + $0xd0] sm:$0xff]
    %v1059 = vld [vmem:[#allocation7 + $0xd8] sm:$0xff]
    %v1060 = vld [vmem:[#allocation7 + $0xe0] sm:$0xff]
    %v1061 = vld [vmem:[#allocation7 + $0xe8] sm:$0xff]
    %v1062 = vld [vmem:[#allocation7 + $0xf0] sm:$0xff]
    %v1063 = vld [vmem:[#allocation7 + $0xf8] sm:$0xff]
    %v1064 = vld [vmem:[#allocation7 + $0x100] sm:$0xff]
    %v1065 = vld [vmem:[#allocation7 + $0x108] sm:$0xff]
    %v1066 = vld [vmem:[#allocation7 + $0x110] sm:$0xff]
    %v1067 = vld [vmem:[#allocation7 + $0x118] sm:$0xff]
    %v1068 = vld [vmem:[#allocation7 + $0x120] sm:$0xff]
    %v1069 = vld [vmem:[#allocation7 + $0x128] sm:$0xff]
    %v1070 = vld [vmem:[#allocation7 + $0x130] sm:$0xff]
    %v1071 = vld [vmem:[#allocation7 + $0x138] sm:$0xff]
    %v1072 = vld [vmem:[#allocation7 + $0x140] sm:$0xff]
    %v1073 = vld [vmem:[#allocation7 + $0x148] sm:$0xff]
    %v1074 = vld [vmem:[#allocation7 + $0x150] sm:$0xff]
    %v1075 = vld [vmem:[#allocation7 + $0x158] sm:$0xff]
    %v1076 = vld [vmem:[#allocation7 + $0x160] sm:$0xff]
    %v1077 = vld [vmem:[#allocation7 + $0x168] sm:$0xff]
    %v1078 = vld [vmem:[#allocation7 + $0x170] sm:$0xff]
    %v1079 = vld [vmem:[#allocation7 + $0x178] sm:$0xff]
    %v1080 = vld [vmem:[#allocation7 + $0x180] sm:$0xff]
    %v1081 = vld [vmem:[#allocation7 + $0x188] sm:$0xff]
    %v1082 = vld [vmem:[#allocation7 + $0x190] sm:$0xff]
    %v1083 = vld [vmem:[#allocation7 + $0x198] sm:$0xff]
    %v1084 = vld [vmem:[#allocation7 + $0x1a0] sm:$0xff]
    %v1085 = vld [vmem:[#allocation7 + $0x1a8] sm:$0xff]
    %v1086 = vld [vmem:[#allocation7 + $0x1b0] sm:$0xff]
    %v1087 = vld [vmem:[#allocation7 + $0x1b8] sm:$0xff]
    %v1088 = vld [vmem:[#allocation7 + $0x1c0] sm:$0xff]
    %v1089 = vld [vmem:[#allocation7 + $0x1c8] sm:$0xff]
    %v1090 = vld [vmem:[#allocation7 + $0x1d0] sm:$0xff]
    %v1091 = vld [vmem:[#allocation7 + $0x1d8] sm:$0xff]
    %v1092 = vld [vmem:[#allocation7 + $0x1e0] sm:$0xff]
    %v1093 = vld [vmem:[#allocation7 + $0x1e8] sm:$0xff]
    %v1094 = vld [vmem:[#allocation7 + $0x1f0] sm:$0xff]
    %v1095 = vld [vmem:[#allocation7 + $0x1f8] sm:$0xff]
    %v1096 = vld [vmem:[#allocation7 + $0x200] sm:$0xff]
    %v1097 = vld [vmem:[#allocation7 + $0x208] sm:$0xff]
    %v1098 = vld [vmem:[#allocation7 + $0x210] sm:$0xff]
    %v1099 = vld [vmem:[#allocation7 + $0x218] sm:$0xff]
    %v1100 = vld [vmem:[#allocation7 + $0x220] sm:$0xff]
    %v1101 = vld [vmem:[#allocation7 + $0x228] sm:$0xff]
    %v1102 = vld [vmem:[#allocation7 + $0x230] sm:$0xff]
    %v1103 = vld [vmem:[#allocation7 + $0x238] sm:$0xff]
    %v1104 = vld [vmem:[#allocation7 + $0x240] sm:$0xff]
    %v1105 = vld [vmem:[#allocation7 + $0x248] sm:$0xff]
    %v1106 = vld [vmem:[#allocation7 + $0x250] sm:$0xff]
    %v1107 = vld [vmem:[#allocation7 + $0x258] sm:$0xff]
    %v1108 = vld [vmem:[#allocation7 + $0x260] sm:$0xff]
    %v1109 = vld [vmem:[#allocation7 + $0x268] sm:$0xff]
    %v1110 = vld [vmem:[#allocation7 + $0x270] sm:$0xff]
    %v1111 = vld [vmem:[#allocation7 + $0x278] sm:$0xff]
    %v1112 = vld [vmem:[#allocation7 + $0x280] sm:$0xff]
    %v1113 = vld [vmem:[#allocation7 + $0x288] sm:$0xff]
    %v1114 = vld [vmem:[#allocation7 + $0x290] sm:$0xff]
    %v1115 = vld [vmem:[#allocation7 + $0x298] sm:$0xff]
    %v1116 = vld [vmem:[#allocation7 + $0x2a0] sm:$0xff]
    %v1117 = vld [vmem:[#allocation7 + $0x2a8] sm:$0xff]
    %v1118 = vld [vmem:[#allocation7 + $0x2b0] sm:$0xff]
    %v1119 = vld [vmem:[#allocation7 + $0x2b8] sm:$0xff]
    %v1120 = vld [vmem:[#allocation7 + $0x2c0] sm:$0xff]
    %v1121 = vld [vmem:[#allocation7 + $0x2c8] sm:$0xff]
    %v1122 = vld [vmem:[#allocation7 + $0x2d0] sm:$0xff]
    %v1123 = vld [vmem:[#allocation7 + $0x2d8] sm:$0xff]
    %v1124 = vld [vmem:[#allocation7 + $0x2e0] sm:$0xff]
    %v1125 = vld [vmem:[#allocation7 + $0x2e8] sm:$0xff]
    %v1126 = vld [vmem:[#allocation7 + $0x2f0] sm:$0xff]
    %v1127 = vld [vmem:[#allocation7 + $0x2f8] sm:$0xff]
    %v1128 = vld [vmem:[#allocation7 + $0x300] sm:$0xff]
    %v1129 = vld [vmem:[#allocation7 + $0x308] sm:$0xff]
    %v1130 = vld [vmem:[#allocation7 + $0x310] sm:$0xff]
    %v1131 = vld [vmem:[#allocation7 + $0x318] sm:$0xff]
    %v1132 = vld [vmem:[#allocation7 + $0x320] sm:$0xff]
    %v1133 = vld [vmem:[#allocation7 + $0x328] sm:$0xff]
    %v1134 = vld [vmem:[#allocation7 + $0x330] sm:$0xff]
    %v1135 = vld [vmem:[#allocation7 + $0x338] sm:$0xff]
    %v1136 = vld [vmem:[#allocation7 + $0x340] sm:$0xff]
    %v1137 = vld [vmem:[#allocation7 + $0x348] sm:$0xff]
    %v1138 = vld [vmem:[#allocation7 + $0x350] sm:$0xff]
    %v1139 = vld [vmem:[#allocation7 + $0x358] sm:$0xff]
    %v1140 = vld [vmem:[#allocation7 + $0x360] sm:$0xff]
    %v1141 = vld [vmem:[#allocation7 + $0x368] sm:$0xff]
    %v1142 = vld [vmem:[#allocation7 + $0x370] sm:$0xff]
    %v1143 = vld [vmem:[#allocation7 + $0x378] sm:$0xff]
    %v1144 = vld [vmem:[#allocation7 + $0x380] sm:$0xff]
    %v1145 = vld [vmem:[#allocation7 + $0x388] sm:$0xff]
    %v1146 = vld [vmem:[#allocation7 + $0x390] sm:$0xff]
    %v1147 = vld [vmem:[#allocation7 + $0x398] sm:$0xff]
    %v1148 = vld [vmem:[#allocation7 + $0x3a0] sm:$0xff]
    %v1149 = vld [vmem:[#allocation7 + $0x3a8] sm:$0xff]
    %v1150 = vld [vmem:[#allocation7 + $0x3b0] sm:$0xff]
    %v1151 = vld [vmem:[#allocation7 + $0x3b8] sm:$0xff]
    %v1152 = vld [vmem:[#allocation7 + $0x3c0] sm:$0xff]
    %v1153 = vld [vmem:[#allocation7 + $0x3c8] sm:$0xff]
    %v1154 = vld [vmem:[#allocation7 + $0x3d0] sm:$0xff]
    %v1155 = vld [vmem:[#allocation7 + $0x3d8] sm:$0xff]
    %v1156 = vld [vmem:[#allocation7 + $0x3e0] sm:$0xff]
    %v1157 = vld [vmem:[#allocation7 + $0x3e8] sm:$0xff]
    %v1158 = vld [vmem:[#allocation7 + $0x3f0] sm:$0xff]
    %v1159 = vld [vmem:[#allocation7 + $0x3f8] sm:$0xff]
    %v1160 = vld [vmem:[#allocation7 + $0x400] sm:$0xff]
    %v1161 = vld [vmem:[#allocation7 + $0x408] sm:$0xff]
    %v1162 = vld [vmem:[#allocation7 + $0x410] sm:$0xff]
    %v1163 = vld [vmem:[#allocation7 + $0x418] sm:$0xff]
    %v1164 = vld [vmem:[#allocation7 + $0x420] sm:$0xff]
    %v1165 = vld [vmem:[#allocation7 + $0x428] sm:$0xff]
    %v1166 = vld [vmem:[#allocation7 + $0x430] sm:$0xff]
    %v1167 = vld [vmem:[#allocation7 + $0x438] sm:$0xff]
    %v1168 = vld [vmem:[#allocation7 + $0x440] sm:$0xff]
    %v1169 = vld [vmem:[#allocation7 + $0x448] sm:$0xff]
    %v1170 = vld [vmem:[#allocation7 + $0x450] sm:$0xff]
    %v1171 = vld [vmem:[#allocation7 + $0x458] sm:$0xff]
    %v1172 = vld [vmem:[#allocation7 + $0x460] sm:$0xff]
    %v1173 = vld [vmem:[#allocation7 + $0x468] sm:$0xff]
    %v1174 = vld [vmem:[#allocation7 + $0x470] sm:$0xff]
    %v1175 = vld [vmem:[#allocation7 + $0x478] sm:$0xff]
    %v1176 = vld [vmem:[#allocation7 + $0x480] sm:$0xff]
    %v1177 = vld [vmem:[#allocation7 + $0x488] sm:$0xff]
    %v1178 = vld [vmem:[#allocation7 + $0x490] sm:$0xff]
    %v1179 = vld [vmem:[#allocation7 + $0x498] sm:$0xff]
    %v1180 = vld [vmem:[#allocation7 + $0x4a0] sm:$0xff]
    %v1181 = vld [vmem:[#allocation7 + $0x4a8] sm:$0xff]
    %v1182 = vld [vmem:[#allocation7 + $0x4b0] sm:$0xff]
    %v1183 = vld [vmem:[#allocation7 + $0x4b8] sm:$0xff]
    %v1184 = vld [vmem:[#allocation7 + $0x4c0] sm:$0xff]
    %v1185 = vld [vmem:[#allocation7 + $0x4c8] sm:$0xff]
    %v1186 = vld [vmem:[#allocation7 + $0x4d0] sm:$0xff]
    %v1187 = vld [vmem:[#allocation7 + $0x4d8] sm:$0xff]
    %v1188 = vld [vmem:[#allocation7 + $0x4e0] sm:$0xff]
    %v1189 = vld [vmem:[#allocation7 + $0x4e8] sm:$0xff]
    %v1190 = vld [vmem:[#allocation7 + $0x4f0] sm:$0xff]
    %v1191 = vld [vmem:[#allocation7 + $0x4f8] sm:$0xff]
    %v1192 = vld [vmem:[#allocation7 + $0x500] sm:$0xff]
    %v1193 = vld [vmem:[#allocation7 + $0x508] sm:$0xff]
    %v1194 = vld [vmem:[#allocation7 + $0x510] sm:$0xff]
    %v1195 = vld [vmem:[#allocation7 + $0x518] sm:$0xff]
    %v1196 = vld [vmem:[#allocation7 + $0x520] sm:$0xff]
    %v1197 = vld [vmem:[#allocation7 + $0x528] sm:$0xff]
    %v1198 = vld [vmem:[#allocation7 + $0x530] sm:$0xff]
    %v1199 = vld [vmem:[#allocation7 + $0x538] sm:$0xff]
    %v1200 = vld [vmem:[#allocation7 + $0x540] sm:$0xff]
    %v1201 = vld [vmem:[#allocation7 + $0x548] sm:$0xff]
    %v1202 = vld [vmem:[#allocation7 + $0x550] sm:$0xff]
    %v1203 = vld [vmem:[#allocation7 + $0x558] sm:$0xff]
    %v1204 = vld [vmem:[#allocation7 + $0x560] sm:$0xff]
    %v1205 = vld [vmem:[#allocation7 + $0x568] sm:$0xff]
    %v1206 = vld [vmem:[#allocation7 + $0x570] sm:$0xff]
    %v1207 = vld [vmem:[#allocation7 + $0x578] sm:$0xff]
    %v1208 = vld [vmem:[#allocation7 + $0x580] sm:$0xff]
    %v1209 = vld [vmem:[#allocation7 + $0x588] sm:$0xff]
    %v1210 = vld [vmem:[#allocation7 + $0x590] sm:$0xff]
    %v1211 = vld [vmem:[#allocation7 + $0x598] sm:$0xff]
    %v1212 = vld [vmem:[#allocation7 + $0x5a0] sm:$0xff]
    %v1213 = vld [vmem:[#allocation7 + $0x5a8] sm:$0xff]
    %v1214 = vld [vmem:[#allocation7 + $0x5b0] sm:$0xff]
    %v1215 = vld [vmem:[#allocation7 + $0x5b8] sm:$0xff]
    %v1216 = vld [vmem:[#allocation7 + $0x5c0] sm:$0xff]
    %v1217 = vld [vmem:[#allocation7 + $0x5c8] sm:$0xff]
    %v1218 = vld [vmem:[#allocation7 + $0x5d0] sm:$0xff]
    %v1219 = vld [vmem:[#allocation7 + $0x5d8] sm:$0xff]
    %v1220 = vld [vmem:[#allocation7 + $0x5e0] sm:$0xff]
    %v1221 = vld [vmem:[#allocation7 + $0x5e8] sm:$0xff]
    %v1222 = vld [vmem:[#allocation7 + $0x5f0] sm:$0xff]
    %v1223 = vld [vmem:[#allocation7 + $0x5f8] sm:$0xff]
    %v1224 = vld [vmem:[#allocation7 + $0x600] sm:$0xff]
    %v1225 = vld [vmem:[#allocation7 + $0x608] sm:$0xff]
    %v1226 = vld [vmem:[#allocation7 + $0x610] sm:$0xff]
    %v1227 = vld [vmem:[#allocation7 + $0x618] sm:$0xff]
    %v1228 = vld [vmem:[#allocation7 + $0x620] sm:$0xff]
    %v1229 = vld [vmem:[#allocation7 + $0x628] sm:$0xff]
    %v1230 = vld [vmem:[#allocation7 + $0x630] sm:$0xff]
    %v1231 = vld [vmem:[#allocation7 + $0x638] sm:$0xff]
    %v1232 = vld [vmem:[#allocation7 + $0x640] sm:$0xff]
    %v1233 = vld [vmem:[#allocation7 + $0x648] sm:$0xff]
    %v1234 = vld [vmem:[#allocation7 + $0x650] sm:$0xff]
    %v1235 = vld [vmem:[#allocation7 + $0x658] sm:$0xff]
    %v1236 = vld [vmem:[#allocation7 + $0x660] sm:$0xff]
    %v1237 = vld [vmem:[#allocation7 + $0x668] sm:$0xff]
    %v1238 = vld [vmem:[#allocation7 + $0x670] sm:$0xff]
    %v1239 = vld [vmem:[#allocation7 + $0x678] sm:$0xff]
    %v1240 = vld [vmem:[#allocation7 + $0x680] sm:$0xff]
    %v1241 = vld [vmem:[#allocation7 + $0x688] sm:$0xff]
    %v1242 = vld [vmem:[#allocation7 + $0x690] sm:$0xff]
    %v1243 = vld [vmem:[#allocation7 + $0x698] sm:$0xff]
    %v1244 = vld [vmem:[#allocation7 + $0x6a0] sm:$0xff]
    %v1245 = vld [vmem:[#allocation7 + $0x6a8] sm:$0xff]
    %v1246 = vld [vmem:[#allocation7 + $0x6b0] sm:$0xff]
    %v1247 = vld [vmem:[#allocation7 + $0x6b8] sm:$0xff]
    %v1248 = vld [vmem:[#allocation7 + $0x6c0] sm:$0xff]
    %v1249 = vld [vmem:[#allocation7 + $0x6c8] sm:$0xff]
    %v1250 = vld [vmem:[#allocation7 + $0x6d0] sm:$0xff]
    %v1251 = vld [vmem:[#allocation7 + $0x6d8] sm:$0xff]
    %v1252 = vld [vmem:[#allocation7 + $0x6e0] sm:$0xff]
    %v1253 = vld [vmem:[#allocation7 + $0x6e8] sm:$0xff]
    %v1254 = vld [vmem:[#allocation7 + $0x6f0] sm:$0xff]
    %v1255 = vld [vmem:[#allocation7 + $0x6f8] sm:$0xff]
    %v1256 = vld [vmem:[#allocation7 + $0x700] sm:$0xff]
    %v1257 = vld [vmem:[#allocation7 + $0x708] sm:$0xff]
    %v1258 = vld [vmem:[#allocation7 + $0x710] sm:$0xff]
    %v1259 = vld [vmem:[#allocation7 + $0x718] sm:$0xff]
    %v1260 = vld [vmem:[#allocation7 + $0x720] sm:$0xff]
    %v1261 = vld [vmem:[#allocation7 + $0x728] sm:$0xff]
    %v1262 = vld [vmem:[#allocation7 + $0x730] sm:$0xff]
    %v1263 = vld [vmem:[#allocation7 + $0x738] sm:$0xff]
    %v1264 = vld [vmem:[#allocation7 + $0x740] sm:$0xff]
    %v1265 = vld [vmem:[#allocation7 + $0x748] sm:$0xff]
    %v1266 = vld [vmem:[#allocation7 + $0x750] sm:$0xff]
    %v1267 = vld [vmem:[#allocation7 + $0x758] sm:$0xff]
    %v1268 = vld [vmem:[#allocation7 + $0x760] sm:$0xff]
    %v1269 = vld [vmem:[#allocation7 + $0x768] sm:$0xff]
    %v1270 = vld [vmem:[#allocation7 + $0x770] sm:$0xff]
    %v1271 = vld [vmem:[#allocation7 + $0x778] sm:$0xff]
    %v1272 = vld [vmem:[#allocation7 + $0x780] sm:$0xff]
    %v1273 = vld [vmem:[#allocation7 + $0x788] sm:$0xff]
    %v1274 = vld [vmem:[#allocation7 + $0x790] sm:$0xff]
    %v1275 = vld [vmem:[#allocation7 + $0x798] sm:$0xff]
    %v1276 = vld [vmem:[#allocation7 + $0x7a0] sm:$0xff]
    %v1277 = vld [vmem:[#allocation7 + $0x7a8] sm:$0xff]
    %v1278 = vld [vmem:[#allocation7 + $0x7b0] sm:$0xff]
    %v1279 = vld [vmem:[#allocation7 + $0x7b8] sm:$0xff]
    %v1280 = vld [vmem:[#allocation7 + $0x7c0] sm:$0xff]
    %v1281 = vld [vmem:[#allocation7 + $0x7c8] sm:$0xff]
    %v1282 = vld [vmem:[#allocation7 + $0x7d0] sm:$0xff]
    %v1283 = vld [vmem:[#allocation7 + $0x7d8] sm:$0xff]
    %v1284 = vld [vmem:[#allocation7 + $0x7e0] sm:$0xff]
    %v1285 = vld [vmem:[#allocation7 + $0x7e8] sm:$0xff]
    %v1286 = vld [vmem:[#allocation7 + $0x7f0] sm:$0xff]
    %v1287 = vld [vmem:[#allocation7 + $0x7f8] sm:$0xff]
    %1288 = vmatprep.subr.bf16.mxu0 %v1033
    %1289 = vmatpush1.bf16.msra.mxu0 %v1032
    %1290 = vmatprep.subr.bf16.mxu0 %v1041
    %1291 = vmatpush1.bf16.msra.mxu0 %v1040
    %1292 = vmatprep.subr.bf16.mxu0 %v1049
    %1293 = vmatpush1.bf16.msra.mxu0 %v1048
    %1294 = vmatprep.subr.bf16.mxu0 %v1057
    %1295 = vmatpush1.bf16.msra.mxu0 %v1056
    %1296 = vmatprep.subr.bf16.mxu0 %v1065
    %1297 = vmatpush1.bf16.msra.mxu0 %v1064
    %1298 = vmatprep.subr.bf16.mxu0 %v1073
    %1299 = vmatpush1.bf16.msra.mxu0 %v1072
    %1300 = vmatprep.subr.bf16.mxu0 %v1081
    %1301 = vmatpush1.bf16.msra.mxu0 %v1080
    %1302 = vmatprep.subr.bf16.mxu0 %v1089
    %1303 = vmatpush1.bf16.msra.mxu0 %v1088
    %1304 = vmatprep.subr.bf16.mxu0 %v1097
    %1305 = vmatpush1.bf16.msra.mxu0 %v1096
    %1306 = vmatprep.subr.bf16.mxu0 %v1105
    %1307 = vmatpush1.bf16.msra.mxu0 %v1104
    %1308 = vmatprep.subr.bf16.mxu0 %v1113
    %1309 = vmatpush1.bf16.msra.mxu0 %v1112
    %1310 = vmatprep.subr.bf16.mxu0 %v1121
    %1311 = vmatpush1.bf16.msra.mxu0 %v1120
    %1312 = vmatprep.subr.bf16.mxu0 %v1129
    %1313 = vmatpush1.bf16.msra.mxu0 %v1128
    %1314 = vmatprep.subr.bf16.mxu0 %v1137
    %1315 = vmatpush1.bf16.msra.mxu0 %v1136
    %1316 = vmatprep.subr.bf16.mxu0 %v1145
    %1317 = vmatpush1.bf16.msra.mxu0 %v1144
    %1318 = vmatprep.subr.bf16.mxu0 %v1153
    %1319 = vmatpush1.bf16.msra.mxu0 %v1152
    %1320 = vmatprep.mubr.bf16.mxu0 %v381
    %1321 = vmatmul.mubr.bf16.gmra.mrb[0].mxu0 %v380
    %v1322 = vpop.f32.mrb[0].mxu0
    %v1323 = vadd.f32 0.0, %v1322
    %v1324 = vpop.f32.mrb[0].mxu0
    %v1325 = vadd.f32 0.0, %v1324
    %v1326 = vpop.f32.mrb[0].mxu0
    %v1327 = vpop.f32.mrb[0].mxu0
    %1328 = vdwg.mxu0
    %1329 = vmatprep.subr.bf16.mxu0 %v1161
    %1330 = vmatpush1.bf16.msra.mxu0 %v1160
    %1331 = vmatprep.subr.bf16.mxu0 %v1169
    %1332 = vmatpush1.bf16.msra.mxu0 %v1168
    %1333 = vmatprep.subr.bf16.mxu0 %v1177
    %1334 = vmatpush1.bf16.msra.mxu0 %v1176
    %1335 = vmatprep.subr.bf16.mxu0 %v1185
    %1336 = vmatpush1.bf16.msra.mxu0 %v1184
    %1337 = vmatprep.subr.bf16.mxu0 %v1193
    %1338 = vmatpush1.bf16.msra.mxu0 %v1192
    %1339 = vmatprep.subr.bf16.mxu0 %v1201
    %1340 = vmatpush1.bf16.msra.mxu0 %v1200
    %1341 = vmatprep.subr.bf16.mxu0 %v1209
    %1342 = vmatpush1.bf16.msra.mxu0 %v1208
    %1343 = vmatprep.subr.bf16.mxu0 %v1217
    %1344 = vmatpush1.bf16.msra.mxu0 %v1216
    %1345 = vmatprep.subr.bf16.mxu0 %v1225
    %1346 = vmatpush1.bf16.msra.mxu0 %v1224
    %1347 = vmatprep.subr.bf16.mxu0 %v1233
    %1348 = vmatpush1.bf16.msra.mxu0 %v1232
    %1349 = vmatprep.subr.bf16.mxu0 %v1241
    %1350 = vmatpush1.bf16.msra.mxu0 %v1240
    %1351 = vmatprep.subr.bf16.mxu0 %v1249
    %1352 = vmatpush1.bf16.msra.mxu0 %v1248
    %1353 = vmatprep.subr.bf16.mxu0 %v1257
    %1354 = vmatpush1.bf16.msra.mxu0 %v1256
    %1355 = vmatprep.subr.bf16.mxu0 %v1265
    %1356 = vmatpush1.bf16.msra.mxu0 %v1264
    %1357 = vmatprep.subr.bf16.mxu0 %v1273
    %1358 = vmatpush1.bf16.msra.mxu0 %v1272
    %1359 = vmatprep.subr.bf16.mxu0 %v1281
    %1360 = vmatpush1.bf16.msra.mxu0 %v1280
    %1361 = vmatprep.mubr.bf16.mxu0 %v383
    %1362 = vmatmul.mubr.bf16.gmra.mrb[0].mxu0 %v382
    %v1363 = vpop.f32.mrb[0].mxu0
    %v1364 = vadd.f32 %v1323, %v1363
    %v1365 = vpop.f32.mrb[0].mxu0
    %v1366 = vadd.f32 %v1325, %v1365
    %v1367 = vpop.f32.mrb[0].mxu0
    %v1368 = vpop.f32.mrb[0].mxu0
    %1369 = vdwg.mxu0
    %1370 = vmatprep.subr.bf16.mxu0 %v1035
    %1371 = vmatpush1.bf16.msra.mxu0 %v1034
    %1372 = vmatprep.subr.bf16.mxu0 %v1043
    %1373 = vmatpush1.bf16.msra.mxu0 %v1042
    %1374 = vmatprep.subr.bf16.mxu0 %v1051
    %1375 = vmatpush1.bf16.msra.mxu0 %v1050
    %1376 = vmatprep.subr.bf16.mxu0 %v1059
    %1377 = vmatpush1.bf16.msra.mxu0 %v1058
    %1378 = vmatprep.subr.bf16.mxu0 %v1067
    %1379 = vmatpush1.bf16.msra.mxu0 %v1066
    %1380 = vmatprep.subr.bf16.mxu0 %v1075
    %1381 = vmatpush1.bf16.msra.mxu0 %v1074
    %1382 = vmatprep.subr.bf16.mxu0 %v1083
    %1383 = vmatpush1.bf16.msra.mxu0 %v1082
    %1384 = vmatprep.subr.bf16.mxu0 %v1091
    %1385 = vmatpush1.bf16.msra.mxu0 %v1090
    %1386 = vmatprep.subr.bf16.mxu0 %v1099
    %1387 = vmatpush1.bf16.msra.mxu0 %v1098
    %1388 = vmatprep.subr.bf16.mxu0 %v1107
    %1389 = vmatpush1.bf16.msra.mxu0 %v1106
    %1390 = vmatprep.subr.bf16.mxu0 %v1115
    %1391 = vmatpush1.bf16.msra.mxu0 %v1114
    %1392 = vmatprep.subr.bf16.mxu0 %v1123
    %1393 = vmatpush1.bf16.msra.mxu0 %v1122
    %1394 = vmatprep.subr.bf16.mxu0 %v1131
    %1395 = vmatpush1.bf16.msra.mxu0 %v1130
    %1396 = vmatprep.subr.bf16.mxu0 %v1139
    %1397 = vmatpush1.bf16.msra.mxu0 %v1138
    %1398 = vmatprep.subr.bf16.mxu0 %v1147
    %1399 = vmatpush1.bf16.msra.mxu0 %v1146
    %1400 = vmatprep.subr.bf16.mxu0 %v1155
    %1401 = vmatpush1.bf16.msra.mxu0 %v1154
    %1402 = vmatprep.mubr.bf16.mxu0 %v381
    %1403 = vmatmul.mubr.bf16.gmra.mrb[0].mxu0 %v380
    %v1404 = vpop.f32.mrb[0].mxu0
    %v1405 = vadd.f32 0.0, %v1404
    %v1406 = vpop.f32.mrb[0].mxu0
    %v1407 = vadd.f32 0.0, %v1406
    %v1408 = vpop.f32.mrb[0].mxu0
    %v1409 = vpop.f32.mrb[0].mxu0
    %1410 = vdwg.mxu0
    %1411 = vmatprep.subr.bf16.mxu0 %v1163
    %1412 = vmatpush1.bf16.msra.mxu0 %v1162
    %1413 = vmatprep.subr.bf16.mxu0 %v1171
    %1414 = vmatpush1.bf16.msra.mxu0 %v1170
    %1415 = vmatprep.subr.bf16.mxu0 %v1179
    %1416 = vmatpush1.bf16.msra.mxu0 %v1178
    %1417 = vmatprep.subr.bf16.mxu0 %v1187
    %1418 = vmatpush1.bf16.msra.mxu0 %v1186
    %1419 = vmatprep.subr.bf16.mxu0 %v1195
    %1420 = vmatpush1.bf16.msra.mxu0 %v1194
    %1421 = vmatprep.subr.bf16.mxu0 %v1203
    %1422 = vmatpush1.bf16.msra.mxu0 %v1202
    %1423 = vmatprep.subr.bf16.mxu0 %v1211
    %1424 = vmatpush1.bf16.msra.mxu0 %v1210
    %1425 = vmatprep.subr.bf16.mxu0 %v1219
    %1426 = vmatpush1.bf16.msra.mxu0 %v1218
    %1427 = vmatprep.subr.bf16.mxu0 %v1227
    %1428 = vmatpush1.bf16.msra.mxu0 %v1226
    %1429 = vmatprep.subr.bf16.mxu0 %v1235
    %1430 = vmatpush1.bf16.msra.mxu0 %v1234
    %1431 = vmatprep.subr.bf16.mxu0 %v1243
    %1432 = vmatpush1.bf16.msra.mxu0 %v1242
    %1433 = vmatprep.subr.bf16.mxu0 %v1251
    %1434 = vmatpush1.bf16.msra.mxu0 %v1250
    %1435 = vmatprep.subr.bf16.mxu0 %v1259
    %1436 = vmatpush1.bf16.msra.mxu0 %v1258
    %1437 = vmatprep.subr.bf16.mxu0 %v1267
    %1438 = vmatpush1.bf16.msra.mxu0 %v1266
    %1439 = vmatprep.subr.bf16.mxu0 %v1275
    %1440 = vmatpush1.bf16.msra.mxu0 %v1274
    %1441 = vmatprep.subr.bf16.mxu0 %v1283
    %1442 = vmatpush1.bf16.msra.mxu0 %v1282
    %1443 = vmatprep.mubr.bf16.mxu0 %v383
    %1444 = vmatmul.mubr.bf16.gmra.mrb[0].mxu0 %v382
    %v1445 = vpop.f32.mrb[0].mxu0
    %v1446 = vadd.f32 %v1405, %v1445
    %v1447 = vpop.f32.mrb[0].mxu0
    %v1448 = vadd.f32 %v1407, %v1447
    %v1449 = vpop.f32.mrb[0].mxu0
    %v1450 = vpop.f32.mrb[0].mxu0
    %1451 = vdwg.mxu0
    %1452 = vmatprep.subr.bf16.mxu0 %v1037
    %1453 = vmatpush1.bf16.msra.mxu0 %v1036
    %1454 = vmatprep.subr.bf16.mxu0 %v1045
    %1455 = vmatpush1.bf16.msra.mxu0 %v1044
    %1456 = vmatprep.subr.bf16.mxu0 %v1053
    %1457 = vmatpush1.bf16.msra.mxu0 %v1052
    %1458 = vmatprep.subr.bf16.mxu0 %v1061
    %1459 = vmatpush1.bf16.msra.mxu0 %v1060
    %1460 = vmatprep.subr.bf16.mxu0 %v1069
    %1461 = vmatpush1.bf16.msra.mxu0 %v1068
    %1462 = vmatprep.subr.bf16.mxu0 %v1077
    %1463 = vmatpush1.bf16.msra.mxu0 %v1076
    %1464 = vmatprep.subr.bf16.mxu0 %v1085
    %1465 = vmatpush1.bf16.msra.mxu0 %v1084
    %1466 = vmatprep.subr.bf16.mxu0 %v1093
    %1467 = vmatpush1.bf16.msra.mxu0 %v1092
    %1468 = vmatprep.subr.bf16.mxu0 %v1101
    %1469 = vmatpush1.bf16.msra.mxu0 %v1100
    %1470 = vmatprep.subr.bf16.mxu0 %v1109
    %1471 = vmatpush1.bf16.msra.mxu0 %v1108
    %1472 = vmatprep.subr.bf16.mxu0 %v1117
    %1473 = vmatpush1.bf16.msra.mxu0 %v1116
    %1474 = vmatprep.subr.bf16.mxu0 %v1125
    %1475 = vmatpush1.bf16.msra.mxu0 %v1124
    %1476 = vmatprep.subr.bf16.mxu0 %v1133
    %1477 = vmatpush1.bf16.msra.mxu0 %v1132
    %1478 = vmatprep.subr.bf16.mxu0 %v1141
    %1479 = vmatpush1.bf16.msra.mxu0 %v1140
    %1480 = vmatprep.subr.bf16.mxu0 %v1149
    %1481 = vmatpush1.bf16.msra.mxu0 %v1148
    %1482 = vmatprep.subr.bf16.mxu0 %v1157
    %1483 = vmatpush1.bf16.msra.mxu0 %v1156
    %1484 = vmatprep.mubr.bf16.mxu0 %v381
    %1485 = vmatmul.mubr.bf16.gmra.mrb[0].mxu0 %v380
    %v1486 = vpop.f32.mrb[0].mxu0
    %v1487 = vadd.f32 0.0, %v1486
    %v1488 = vpop.f32.mrb[0].mxu0
    %v1489 = vadd.f32 0.0, %v1488
    %v1490 = vpop.f32.mrb[0].mxu0
    %v1491 = vpop.f32.mrb[0].mxu0
    %1492 = vdwg.mxu0
    %1493 = vmatprep.subr.bf16.mxu0 %v1165
    %1494 = vmatpush1.bf16.msra.mxu0 %v1164
    %1495 = vmatprep.subr.bf16.mxu0 %v1173
    %1496 = vmatpush1.bf16.msra.mxu0 %v1172
    %1497 = vmatprep.subr.bf16.mxu0 %v1181
    %1498 = vmatpush1.bf16.msra.mxu0 %v1180
    %1499 = vmatprep.subr.bf16.mxu0 %v1189
    %1500 = vmatpush1.bf16.msra.mxu0 %v1188
    %1501 = vmatprep.subr.bf16.mxu0 %v1197
    %1502 = vmatpush1.bf16.msra.mxu0 %v1196
    %1503 = vmatprep.subr.bf16.mxu0 %v1205
    %1504 = vmatpush1.bf16.msra.mxu0 %v1204
    %1505 = vmatprep.subr.bf16.mxu0 %v1213
    %1506 = vmatpush1.bf16.msra.mxu0 %v1212
    %1507 = vmatprep.subr.bf16.mxu0 %v1221
    %1508 = vmatpush1.bf16.msra.mxu0 %v1220
    %1509 = vmatprep.subr.bf16.mxu0 %v1229
    %1510 = vmatpush1.bf16.msra.mxu0 %v1228
    %1511 = vmatprep.subr.bf16.mxu0 %v1237
    %1512 = vmatpush1.bf16.msra.mxu0 %v1236
    %1513 = vmatprep.subr.bf16.mxu0 %v1245
    %1514 = vmatpush1.bf16.msra.mxu0 %v1244
    %1515 = vmatprep.subr.bf16.mxu0 %v1253
    %1516 = vmatpush1.bf16.msra.mxu0 %v1252
    %1517 = vmatprep.subr.bf16.mxu0 %v1261
    %1518 = vmatpush1.bf16.msra.mxu0 %v1260
    %1519 = vmatprep.subr.bf16.mxu0 %v1269
    %1520 = vmatpush1.bf16.msra.mxu0 %v1268
    %1521 = vmatprep.subr.bf16.mxu0 %v1277
    %1522 = vmatpush1.bf16.msra.mxu0 %v1276
    %1523 = vmatprep.subr.bf16.mxu0 %v1285
    %1524 = vmatpush1.bf16.msra.mxu0 %v1284
    %1525 = vmatprep.mubr.bf16.mxu0 %v383
    %1526 = vmatmul.mubr.bf16.gmra.mrb[0].mxu0 %v382
    %v1527 = vpop.f32.mrb[0].mxu0
    %v1528 = vadd.f32 %v1487, %v1527
    %v1529 = vpop.f32.mrb[0].mxu0
    %v1530 = vadd.f32 %v1489, %v1529
    %v1531 = vpop.f32.mrb[0].mxu0
    %v1532 = vpop.f32.mrb[0].mxu0
    %1533 = vdwg.mxu0
    %1534 = vmatprep.subr.bf16.mxu0 %v1039
    %1535 = vmatpush1.bf16.msra.mxu0 %v1038
    %1536 = vmatprep.subr.bf16.mxu0 %v1047
    %1537 = vmatpush1.bf16.msra.mxu0 %v1046
    %1538 = vmatprep.subr.bf16.mxu0 %v1055
    %1539 = vmatpush1.bf16.msra.mxu0 %v1054
    %1540 = vmatprep.subr.bf16.mxu0 %v1063
    %1541 = vmatpush1.bf16.msra.mxu0 %v1062
    %1542 = vmatprep.subr.bf16.mxu0 %v1071
    %1543 = vmatpush1.bf16.msra.mxu0 %v1070
    %1544 = vmatprep.subr.bf16.mxu0 %v1079
    %1545 = vmatpush1.bf16.msra.mxu0 %v1078
    %1546 = vmatprep.subr.bf16.mxu0 %v1087
    %1547 = vmatpush1.bf16.msra.mxu0 %v1086
    %1548 = vmatprep.subr.bf16.mxu0 %v1095
    %1549 = vmatpush1.bf16.msra.mxu0 %v1094
    %1550 = vmatprep.subr.bf16.mxu0 %v1103
    %1551 = vmatpush1.bf16.msra.mxu0 %v1102
    %1552 = vmatprep.subr.bf16.mxu0 %v1111
    %1553 = vmatpush1.bf16.msra.mxu0 %v1110
    %1554 = vmatprep.subr.bf16.mxu0 %v1119
    %1555 = vmatpush1.bf16.msra.mxu0 %v1118
    %1556 = vmatprep.subr.bf16.mxu0 %v1127
    %1557 = vmatpush1.bf16.msra.mxu0 %v1126
    %1558 = vmatprep.subr.bf16.mxu0 %v1135
    %1559 = vmatpush1.bf16.msra.mxu0 %v1134
    %1560 = vmatprep.subr.bf16.mxu0 %v1143
    %1561 = vmatpush1.bf16.msra.mxu0 %v1142
    %1562 = vmatprep.subr.bf16.mxu0 %v1151
    %1563 = vmatpush1.bf16.msra.mxu0 %v1150
    %1564 = vmatprep.subr.bf16.mxu0 %v1159
    %1565 = vmatpush1.bf16.msra.mxu0 %v1158
    %1566 = vmatprep.mubr.bf16.mxu0 %v381
    %1567 = vmatmul.mubr.bf16.gmra.mrb[0].mxu0 %v380
    %v1568 = vpop.f32.mrb[0].mxu0
    %v1569 = vadd.f32 0.0, %v1568
    %v1570 = vpop.f32.mrb[0].mxu0
    %v1571 = vadd.f32 0.0, %v1570
    %v1572 = vpop.f32.mrb[0].mxu0
    %v1573 = vpop.f32.mrb[0].mxu0
    %1574 = vdwg.mxu0
    %1575 = vmatprep.subr.bf16.mxu0 %v1167
    %1576 = vmatpush1.bf16.msra.mxu0 %v1166
    %1577 = vmatprep.subr.bf16.mxu0 %v1175
    %1578 = vmatpush1.bf16.msra.mxu0 %v1174
    %1579 = vmatprep.subr.bf16.mxu0 %v1183
    %1580 = vmatpush1.bf16.msra.mxu0 %v1182
    %1581 = vmatprep.subr.bf16.mxu0 %v1191
    %1582 = vmatpush1.bf16.msra.mxu0 %v1190
    %1583 = vmatprep.subr.bf16.mxu0 %v1199
    %1584 = vmatpush1.bf16.msra.mxu0 %v1198
    %1585 = vmatprep.subr.bf16.mxu0 %v1207
    %1586 = vmatpush1.bf16.msra.mxu0 %v1206
    %1587 = vmatprep.subr.bf16.mxu0 %v1215
    %1588 = vmatpush1.bf16.msra.mxu0 %v1214
    %1589 = vmatprep.subr.bf16.mxu0 %v1223
    %1590 = vmatpush1.bf16.msra.mxu0 %v1222
    %1591 = vmatprep.subr.bf16.mxu0 %v1231
    %1592 = vmatpush1.bf16.msra.mxu0 %v1230
    %1593 = vmatprep.subr.bf16.mxu0 %v1239
    %1594 = vmatpush1.bf16.msra.mxu0 %v1238
    %1595 = vmatprep.subr.bf16.mxu0 %v1247
    %1596 = vmatpush1.bf16.msra.mxu0 %v1246
    %1597 = vmatprep.subr.bf16.mxu0 %v1255
    %1598 = vmatpush1.bf16.msra.mxu0 %v1254
    %1599 = vmatprep.subr.bf16.mxu0 %v1263
    %1600 = vmatpush1.bf16.msra.mxu0 %v1262
    %1601 = vmatprep.subr.bf16.mxu0 %v1271
    %1602 = vmatpush1.bf16.msra.mxu0 %v1270
    %1603 = vmatprep.subr.bf16.mxu0 %v1279
    %1604 = vmatpush1.bf16.msra.mxu0 %v1278
    %1605 = vmatprep.subr.bf16.mxu0 %v1287
    %1606 = vmatpush1.bf16.msra.mxu0 %v1286
    %1607 = vmatprep.mubr.bf16.mxu0 %v383
    %1608 = vmatmul.mubr.bf16.gmra.mrb[0].mxu0 %v382
    %v1609 = vpop.f32.mrb[0].mxu0
    %v1610 = vadd.f32 %v1569, %v1609
    %v1611 = vpop.f32.mrb[0].mxu0
    %v1612 = vadd.f32 %v1571, %v1611
    %v1613 = vpop.f32.mrb[0].mxu0
    %v1614 = vpop.f32.mrb[0].mxu0
    %1615 = vdwg.mxu0
    %v1616 = vld [vmem:[#allocation17] sm:$0xff]
    %v1618 = vlaneseq
    %v1619 = vshrl.u32 %v1618, 7
    %v1620 = vsub.s32 0, %v1619
    %v1621 = vrot.slane %v1616, %v1620
    %v1622 = vlaneseq
    %v1623 = vshrl.u32 %v1622, 7
    %v1624 = vsub.s32 1, %v1623
    %v1625 = vrot.slane %v1616, %v1624
    %v1626 = vlaneseq
    %v1627 = vshrl.u32 %v1626, 7
    %v1628 = vsub.s32 2, %v1627
    %v1629 = vrot.slane %v1616, %v1628
    %v1630 = vlaneseq
    %v1631 = vshrl.u32 %v1630, 7
    %v1632 = vsub.s32 3, %v1631
    %v1633 = vrot.slane %v1616, %v1632
    %v1634 = vlaneseq
    %v1635 = vshrl.u32 %v1634, 7
    %v1636 = vsub.s32 4, %v1635
    %v1637 = vrot.slane %v1616, %v1636
    %v1638 = vlaneseq
    %v1639 = vshrl.u32 %v1638, 7
    %v1640 = vsub.s32 5, %v1639
    %v1641 = vrot.slane %v1616, %v1640
    %v1642 = vlaneseq
    %v1643 = vshrl.u32 %v1642, 7
    %v1644 = vsub.s32 6, %v1643
    %v1645 = vrot.slane %v1616, %v1644
    %v1646 = vlaneseq
    %v1647 = vshrl.u32 %v1646, 7
    %v1648 = vsub.s32 7, %v1647
    %v1649 = vrot.slane %v1616, %v1648
    %v1658 = vmul.f32 %v1364, %v1621
    %v1659 = vmul.f32 %v1366, %v1625
    %v1660 = vmul.f32 %v1446, %v1629
    %v1661 = vmul.f32 %v1448, %v1633
    %v1662 = vmul.f32 %v1528, %v1637
    %v1663 = vmul.f32 %v1530, %v1641
    %v1664 = vmul.f32 %v1610, %v1645
    %v1665 = vmul.f32 %v1612, %v1649
    %v1666 = vld [vmem:[#allocation19] sm:$0xff]
    %v1668 = vlaneseq
    %v1669 = vshrl.u32 %v1668, 7
    %v1670 = vsub.s32 0, %v1669
    %v1671 = vrot.slane %v1666, %v1670
    %v1672 = vlaneseq
    %v1673 = vshrl.u32 %v1672, 7
    %v1674 = vsub.s32 1, %v1673
    %v1675 = vrot.slane %v1666, %v1674
    %v1676 = vlaneseq
    %v1677 = vshrl.u32 %v1676, 7
    %v1678 = vsub.s32 2, %v1677
    %v1679 = vrot.slane %v1666, %v1678
    %v1680 = vlaneseq
    %v1681 = vshrl.u32 %v1680, 7
    %v1682 = vsub.s32 3, %v1681
    %v1683 = vrot.slane %v1666, %v1682
    %v1684 = vlaneseq
    %v1685 = vshrl.u32 %v1684, 7
    %v1686 = vsub.s32 4, %v1685
    %v1687 = vrot.slane %v1666, %v1686
    %v1688 = vlaneseq
    %v1689 = vshrl.u32 %v1688, 7
    %v1690 = vsub.s32 5, %v1689
    %v1691 = vrot.slane %v1666, %v1690
    %v1692 = vlaneseq
    %v1693 = vshrl.u32 %v1692, 7
    %v1694 = vsub.s32 6, %v1693
    %v1695 = vrot.slane %v1666, %v1694
    %v1696 = vlaneseq
    %v1697 = vshrl.u32 %v1696, 7
    %v1698 = vsub.s32 7, %v1697
    %v1699 = vrot.slane %v1666, %v1698
    %v1708 = vadd.f32 %v1658, %v1671
    %v1709 = vadd.f32 %v1659, %v1675
    %v1710 = vadd.f32 %v1660, %v1679
    %v1711 = vadd.f32 %v1661, %v1683
    %v1712 = vadd.f32 %v1662, %v1687
    %v1713 = vadd.f32 %v1663, %v1691
    %v1714 = vadd.f32 %v1664, %v1695
    %v1715 = vadd.f32 %v1665, %v1699
    %vm1716 = vcmp.gt.f32.partialorder %v1708, 0.0
    %vm1717 = vcmp.gt.f32.partialorder %v1709, 0.0
    %vm1718 = vcmp.gt.f32.partialorder %v1710, 0.0
    %vm1719 = vcmp.gt.f32.partialorder %v1711, 0.0
    %vm1720 = vcmp.gt.f32.partialorder %v1712, 0.0
    %vm1721 = vcmp.gt.f32.partialorder %v1713, 0.0
    %vm1722 = vcmp.gt.f32.partialorder %v1714, 0.0
    %vm1723 = vcmp.gt.f32.partialorder %v1715, 0.0
    %v1724 = vmul.f32 %v1708, 0.2
    %v1725 = vmul.f32 %v1709, 0.2
    %v1726 = vmul.f32 %v1710, 0.2
    %v1727 = vmul.f32 %v1711, 0.2
    %v1728 = vmul.f32 %v1712, 0.2
    %v1729 = vmul.f32 %v1713, 0.2
    %v1730 = vmul.f32 %v1714, 0.2
    %v1731 = vmul.f32 %v1715, 0.2
    %v1732 = vsel %vm1716, %v1708, %v1724
    %v1733 = vsel %vm1717, %v1709, %v1725
    %v1734 = vsel %vm1718, %v1710, %v1726
    %v1735 = vsel %vm1719, %v1711, %v1727
    %v1736 = vsel %vm1720, %v1712, %v1728
    %v1737 = vsel %vm1721, %v1713, %v1729
    %v1738 = vsel %vm1722, %v1714, %v1730
    %v1739 = vsel %vm1723, %v1715, %v1731
    %v1740 = vpack.c.bf16 %v1732, %v1732
    %v1741 = vpack.c.bf16 %v1733, %v1733
    %v1742 = vpack.c.bf16 %v1734, %v1734
    %v1743 = vpack.c.bf16 %v1735, %v1735
    %v1744 = vpack.c.bf16 %v1736, %v1736
    %v1745 = vpack.c.bf16 %v1737, %v1737
    %v1746 = vpack.c.bf16 %v1738, %v1738
    %v1747 = vpack.c.bf16 %v1739, %v1739
    // Predicated region
    $region102: #{tpu_custom_call.1} parent=1 // pred_check
      %p1748 = pneg %p142
    $region103: #{tpu_custom_call.1} parent=1 // pred_check_branch
      %1750 = sbr.rel (%p1748) target = $region105
    $region104: #{tpu_custom_call.1} parent=1 // pred_region
      %s1751 = scalar_lea.sflag [#allocation10], 2
      %s1752 = smul.u32 2, 128
      %s1753 = smul.u32 %s1752, 16
      %s1754 = sshll.u32 %s1753, 4
      %1755 = dma.done %s1751, %s1754
      %v1756 = vld [vmem:[#allocation4] sm:$0xff]
      %v1757 = vld [vmem:[#allocation4 + $0x8] sm:$0xff]
      %v1758 = vld [vmem:[#allocation4 + $0x10] sm:$0xff]
      %v1759 = vld [vmem:[#allocation4 + $0x18] sm:$0xff]
      %v1760 = vld [vmem:[#allocation4 + $0x20] sm:$0xff]
      %v1761 = vld [vmem:[#allocation4 + $0x28] sm:$0xff]
      %v1762 = vld [vmem:[#allocation4 + $0x30] sm:$0xff]
      %v1763 = vld [vmem:[#allocation4 + $0x38] sm:$0xff]
      %v1764 = vld [vmem:[#allocation4 + $0x40] sm:$0xff]
      %v1765 = vld [vmem:[#allocation4 + $0x48] sm:$0xff]
      %v1766 = vld [vmem:[#allocation4 + $0x50] sm:$0xff]
      %v1767 = vld [vmem:[#allocation4 + $0x58] sm:$0xff]
      %v1768 = vld [vmem:[#allocation4 + $0x60] sm:$0xff]
      %v1769 = vld [vmem:[#allocation4 + $0x68] sm:$0xff]
      %v1770 = vld [vmem:[#allocation4 + $0x70] sm:$0xff]
      %v1771 = vld [vmem:[#allocation4 + $0x78] sm:$0xff]
      %v1772 = vld [vmem:[#allocation4 + $0x80] sm:$0xff]
      %v1773 = vld [vmem:[#allocation4 + $0x88] sm:$0xff]
      %v1774 = vld [vmem:[#allocation4 + $0x90] sm:$0xff]
      %v1775 = vld [vmem:[#allocation4 + $0x98] sm:$0xff]
      %v1776 = vld [vmem:[#allocation4 + $0xa0] sm:$0xff]
      %v1777 = vld [vmem:[#allocation4 + $0xa8] sm:$0xff]
      %v1778 = vld [vmem:[#allocation4 + $0xb0] sm:$0xff]
      %v1779 = vld [vmem:[#allocation4 + $0xb8] sm:$0xff]
      %v1780 = vld [vmem:[#allocation4 + $0xc0] sm:$0xff]
      %v1781 = vld [vmem:[#allocation4 + $0xc8] sm:$0xff]
      %v1782 = vld [vmem:[#allocation4 + $0xd0] sm:$0xff]
      %v1783 = vld [vmem:[#allocation4 + $0xd8] sm:$0xff]
      %v1784 = vld [vmem:[#allocation4 + $0xe0] sm:$0xff]
      %v1785 = vld [vmem:[#allocation4 + $0xe8] sm:$0xff]
      %v1786 = vld [vmem:[#allocation4 + $0xf0] sm:$0xff]
      %v1787 = vld [vmem:[#allocation4 + $0xf8] sm:$0xff]
      %v1788 = vld [vmem:[#allocation4 + $0x100] sm:$0xff]
      %v1789 = vld [vmem:[#allocation4 + $0x108] sm:$0xff]
      %v1790 = vld [vmem:[#allocation4 + $0x110] sm:$0xff]
      %v1791 = vld [vmem:[#allocation4 + $0x118] sm:$0xff]
      %v1792 = vld [vmem:[#allocation4 + $0x120] sm:$0xff]
      %v1793 = vld [vmem:[#allocation4 + $0x128] sm:$0xff]
      %v1794 = vld [vmem:[#allocation4 + $0x130] sm:$0xff]
      %v1795 = vld [vmem:[#allocation4 + $0x138] sm:$0xff]
      %v1796 = vld [vmem:[#allocation4 + $0x140] sm:$0xff]
      %v1797 = vld [vmem:[#allocation4 + $0x148] sm:$0xff]
      %v1798 = vld [vmem:[#allocation4 + $0x150] sm:$0xff]
      %v1799 = vld [vmem:[#allocation4 + $0x158] sm:$0xff]
      %v1800 = vld [vmem:[#allocation4 + $0x160] sm:$0xff]
      %v1801 = vld [vmem:[#allocation4 + $0x168] sm:$0xff]
      %v1802 = vld [vmem:[#allocation4 + $0x170] sm:$0xff]
      %v1803 = vld [vmem:[#allocation4 + $0x178] sm:$0xff]
      %v1804 = vld [vmem:[#allocation4 + $0x180] sm:$0xff]
      %v1805 = vld [vmem:[#allocation4 + $0x188] sm:$0xff]
      %v1806 = vld [vmem:[#allocation4 + $0x190] sm:$0xff]
      %v1807 = vld [vmem:[#allocation4 + $0x198] sm:$0xff]
      %v1808 = vld [vmem:[#allocation4 + $0x1a0] sm:$0xff]
      %v1809 = vld [vmem:[#allocation4 + $0x1a8] sm:$0xff]
      %v1810 = vld [vmem:[#allocation4 + $0x1b0] sm:$0xff]
      %v1811 = vld [vmem:[#allocation4 + $0x1b8] sm:$0xff]
      %v1812 = vld [vmem:[#allocation4 + $0x1c0] sm:$0xff]
      %v1813 = vld [vmem:[#allocation4 + $0x1c8] sm:$0xff]
      %v1814 = vld [vmem:[#allocation4 + $0x1d0] sm:$0xff]
      %v1815 = vld [vmem:[#allocation4 + $0x1d8] sm:$0xff]
      %v1816 = vld [vmem:[#allocation4 + $0x1e0] sm:$0xff]
      %v1817 = vld [vmem:[#allocation4 + $0x1e8] sm:$0xff]
      %v1818 = vld [vmem:[#allocation4 + $0x1f0] sm:$0xff]
      %v1819 = vld [vmem:[#allocation4 + $0x1f8] sm:$0xff]
      %v1820 = vld [vmem:[#allocation4 + $0x200] sm:$0xff]
      %v1821 = vld [vmem:[#allocation4 + $0x208] sm:$0xff]
      %v1822 = vld [vmem:[#allocation4 + $0x210] sm:$0xff]
      %v1823 = vld [vmem:[#allocation4 + $0x218] sm:$0xff]
      %v1824 = vld [vmem:[#allocation4 + $0x220] sm:$0xff]
      %v1825 = vld [vmem:[#allocation4 + $0x228] sm:$0xff]
      %v1826 = vld [vmem:[#allocation4 + $0x230] sm:$0xff]
      %v1827 = vld [vmem:[#allocation4 + $0x238] sm:$0xff]
      %v1828 = vld [vmem:[#allocation4 + $0x240] sm:$0xff]
      %v1829 = vld [vmem:[#allocation4 + $0x248] sm:$0xff]
      %v1830 = vld [vmem:[#allocation4 + $0x250] sm:$0xff]
      %v1831 = vld [vmem:[#allocation4 + $0x258] sm:$0xff]
      %v1832 = vld [vmem:[#allocation4 + $0x260] sm:$0xff]
      %v1833 = vld [vmem:[#allocation4 + $0x268] sm:$0xff]
      %v1834 = vld [vmem:[#allocation4 + $0x270] sm:$0xff]
      %v1835 = vld [vmem:[#allocation4 + $0x278] sm:$0xff]
      %v1836 = vld [vmem:[#allocation4 + $0x280] sm:$0xff]
      %v1837 = vld [vmem:[#allocation4 + $0x288] sm:$0xff]
      %v1838 = vld [vmem:[#allocation4 + $0x290] sm:$0xff]
      %v1839 = vld [vmem:[#allocation4 + $0x298] sm:$0xff]
      %v1840 = vld [vmem:[#allocation4 + $0x2a0] sm:$0xff]
      %v1841 = vld [vmem:[#allocation4 + $0x2a8] sm:$0xff]
      %v1842 = vld [vmem:[#allocation4 + $0x2b0] sm:$0xff]
      %v1843 = vld [vmem:[#allocation4 + $0x2b8] sm:$0xff]
      %v1844 = vld [vmem:[#allocation4 + $0x2c0] sm:$0xff]
      %v1845 = vld [vmem:[#allocation4 + $0x2c8] sm:$0xff]
      %v1846 = vld [vmem:[#allocation4 + $0x2d0] sm:$0xff]
      %v1847 = vld [vmem:[#allocation4 + $0x2d8] sm:$0xff]
      %v1848 = vld [vmem:[#allocation4 + $0x2e0] sm:$0xff]
      %v1849 = vld [vmem:[#allocation4 + $0x2e8] sm:$0xff]
      %v1850 = vld [vmem:[#allocation4 + $0x2f0] sm:$0xff]
      %v1851 = vld [vmem:[#allocation4 + $0x2f8] sm:$0xff]
      %v1852 = vld [vmem:[#allocation4 + $0x300] sm:$0xff]
      %v1853 = vld [vmem:[#allocation4 + $0x308] sm:$0xff]
      %v1854 = vld [vmem:[#allocation4 + $0x310] sm:$0xff]
      %v1855 = vld [vmem:[#allocation4 + $0x318] sm:$0xff]
      %v1856 = vld [vmem:[#allocation4 + $0x320] sm:$0xff]
      %v1857 = vld [vmem:[#allocation4 + $0x328] sm:$0xff]
      %v1858 = vld [vmem:[#allocation4 + $0x330] sm:$0xff]
      %v1859 = vld [vmem:[#allocation4 + $0x338] sm:$0xff]
      %v1860 = vld [vmem:[#allocation4 + $0x340] sm:$0xff]
      %v1861 = vld [vmem:[#allocation4 + $0x348] sm:$0xff]
      %v1862 = vld [vmem:[#allocation4 + $0x350] sm:$0xff]
      %v1863 = vld [vmem:[#allocation4 + $0x358] sm:$0xff]
      %v1864 = vld [vmem:[#allocation4 + $0x360] sm:$0xff]
      %v1865 = vld [vmem:[#allocation4 + $0x368] sm:$0xff]
      %v1866 = vld [vmem:[#allocation4 + $0x370] sm:$0xff]
      %v1867 = vld [vmem:[#allocation4 + $0x378] sm:$0xff]
      %v1868 = vld [vmem:[#allocation4 + $0x380] sm:$0xff]
      %v1869 = vld [vmem:[#allocation4 + $0x388] sm:$0xff]
      %v1870 = vld [vmem:[#allocation4 + $0x390] sm:$0xff]
      %v1871 = vld [vmem:[#allocation4 + $0x398] sm:$0xff]
      %v1872 = vld [vmem:[#allocation4 + $0x3a0] sm:$0xff]
      %v1873 = vld [vmem:[#allocation4 + $0x3a8] sm:$0xff]
      %v1874 = vld [vmem:[#allocation4 + $0x3b0] sm:$0xff]
      %v1875 = vld [vmem:[#allocation4 + $0x3b8] sm:$0xff]
      %v1876 = vld [vmem:[#allocation4 + $0x3c0] sm:$0xff]
      %v1877 = vld [vmem:[#allocation4 + $0x3c8] sm:$0xff]
      %v1878 = vld [vmem:[#allocation4 + $0x3d0] sm:$0xff]
      %v1879 = vld [vmem:[#allocation4 + $0x3d8] sm:$0xff]
      %v1880 = vld [vmem:[#allocation4 + $0x3e0] sm:$0xff]
      %v1881 = vld [vmem:[#allocation4 + $0x3e8] sm:$0xff]
      %v1882 = vld [vmem:[#allocation4 + $0x3f0] sm:$0xff]
      %v1883 = vld [vmem:[#allocation4 + $0x3f8] sm:$0xff]
      %v1884 = vld [vmem:[#allocation4 + $0x400] sm:$0xff]
      %v1885 = vld [vmem:[#allocation4 + $0x408] sm:$0xff]
      %v1886 = vld [vmem:[#allocation4 + $0x410] sm:$0xff]
      %v1887 = vld [vmem:[#allocation4 + $0x418] sm:$0xff]
      %v1888 = vld [vmem:[#allocation4 + $0x420] sm:$0xff]
      %v1889 = vld [vmem:[#allocation4 + $0x428] sm:$0xff]
      %v1890 = vld [vmem:[#allocation4 + $0x430] sm:$0xff]
      %v1891 = vld [vmem:[#allocation4 + $0x438] sm:$0xff]
      %v1892 = vld [vmem:[#allocation4 + $0x440] sm:$0xff]
      %v1893 = vld [vmem:[#allocation4 + $0x448] sm:$0xff]
      %v1894 = vld [vmem:[#allocation4 + $0x450] sm:$0xff]
      %v1895 = vld [vmem:[#allocation4 + $0x458] sm:$0xff]
      %v1896 = vld [vmem:[#allocation4 + $0x460] sm:$0xff]
      %v1897 = vld [vmem:[#allocation4 + $0x468] sm:$0xff]
      %v1898 = vld [vmem:[#allocation4 + $0x470] sm:$0xff]
      %v1899 = vld [vmem:[#allocation4 + $0x478] sm:$0xff]
      %v1900 = vld [vmem:[#allocation4 + $0x480] sm:$0xff]
      %v1901 = vld [vmem:[#allocation4 + $0x488] sm:$0xff]
      %v1902 = vld [vmem:[#allocation4 + $0x490] sm:$0xff]
      %v1903 = vld [vmem:[#allocation4 + $0x498] sm:$0xff]
      %v1904 = vld [vmem:[#allocation4 + $0x4a0] sm:$0xff]
      %v1905 = vld [vmem:[#allocation4 + $0x4a8] sm:$0xff]
      %v1906 = vld [vmem:[#allocation4 + $0x4b0] sm:$0xff]
      %v1907 = vld [vmem:[#allocation4 + $0x4b8] sm:$0xff]
      %v1908 = vld [vmem:[#allocation4 + $0x4c0] sm:$0xff]
      %v1909 = vld [vmem:[#allocation4 + $0x4c8] sm:$0xff]
      %v1910 = vld [vmem:[#allocation4 + $0x4d0] sm:$0xff]
      %v1911 = vld [vmem:[#allocation4 + $0x4d8] sm:$0xff]
      %v1912 = vld [vmem:[#allocation4 + $0x4e0] sm:$0xff]
      %v1913 = vld [vmem:[#allocation4 + $0x4e8] sm:$0xff]
      %v1914 = vld [vmem:[#allocation4 + $0x4f0] sm:$0xff]
      %v1915 = vld [vmem:[#allocation4 + $0x4f8] sm:$0xff]
      %v1916 = vld [vmem:[#allocation4 + $0x500] sm:$0xff]
      %v1917 = vld [vmem:[#allocation4 + $0x508] sm:$0xff]
      %v1918 = vld [vmem:[#allocation4 + $0x510] sm:$0xff]
      %v1919 = vld [vmem:[#allocation4 + $0x518] sm:$0xff]
      %v1920 = vld [vmem:[#allocation4 + $0x520] sm:$0xff]
      %v1921 = vld [vmem:[#allocation4 + $0x528] sm:$0xff]
      %v1922 = vld [vmem:[#allocation4 + $0x530] sm:$0xff]
      %v1923 = vld [vmem:[#allocation4 + $0x538] sm:$0xff]
      %v1924 = vld [vmem:[#allocation4 + $0x540] sm:$0xff]
      %v1925 = vld [vmem:[#allocation4 + $0x548] sm:$0xff]
      %v1926 = vld [vmem:[#allocation4 + $0x550] sm:$0xff]
      %v1927 = vld [vmem:[#allocation4 + $0x558] sm:$0xff]
      %v1928 = vld [vmem:[#allocation4 + $0x560] sm:$0xff]
      %v1929 = vld [vmem:[#allocation4 + $0x568] sm:$0xff]
      %v1930 = vld [vmem:[#allocation4 + $0x570] sm:$0xff]
      %v1931 = vld [vmem:[#allocation4 + $0x578] sm:$0xff]
      %v1932 = vld [vmem:[#allocation4 + $0x580] sm:$0xff]
      %v1933 = vld [vmem:[#allocation4 + $0x588] sm:$0xff]
      %v1934 = vld [vmem:[#allocation4 + $0x590] sm:$0xff]
      %v1935 = vld [vmem:[#allocation4 + $0x598] sm:$0xff]
      %v1936 = vld [vmem:[#allocation4 + $0x5a0] sm:$0xff]
      %v1937 = vld [vmem:[#allocation4 + $0x5a8] sm:$0xff]
      %v1938 = vld [vmem:[#allocation4 + $0x5b0] sm:$0xff]
      %v1939 = vld [vmem:[#allocation4 + $0x5b8] sm:$0xff]
      %v1940 = vld [vmem:[#allocation4 + $0x5c0] sm:$0xff]
      %v1941 = vld [vmem:[#allocation4 + $0x5c8] sm:$0xff]
      %v1942 = vld [vmem:[#allocation4 + $0x5d0] sm:$0xff]
      %v1943 = vld [vmem:[#allocation4 + $0x5d8] sm:$0xff]
      %v1944 = vld [vmem:[#allocation4 + $0x5e0] sm:$0xff]
      %v1945 = vld [vmem:[#allocation4 + $0x5e8] sm:$0xff]
      %v1946 = vld [vmem:[#allocation4 + $0x5f0] sm:$0xff]
      %v1947 = vld [vmem:[#allocation4 + $0x5f8] sm:$0xff]
      %v1948 = vld [vmem:[#allocation4 + $0x600] sm:$0xff]
      %v1949 = vld [vmem:[#allocation4 + $0x608] sm:$0xff]
      %v1950 = vld [vmem:[#allocation4 + $0x610] sm:$0xff]
      %v1951 = vld [vmem:[#allocation4 + $0x618] sm:$0xff]
      %v1952 = vld [vmem:[#allocation4 + $0x620] sm:$0xff]
      %v1953 = vld [vmem:[#allocation4 + $0x628] sm:$0xff]
      %v1954 = vld [vmem:[#allocation4 + $0x630] sm:$0xff]
      %v1955 = vld [vmem:[#allocation4 + $0x638] sm:$0xff]
      %v1956 = vld [vmem:[#allocation4 + $0x640] sm:$0xff]
      %v1957 = vld [vmem:[#allocation4 + $0x648] sm:$0xff]
      %v1958 = vld [vmem:[#allocation4 + $0x650] sm:$0xff]
      %v1959 = vld [vmem:[#allocation4 + $0x658] sm:$0xff]
      %v1960 = vld [vmem:[#allocation4 + $0x660] sm:$0xff]
      %v1961 = vld [vmem:[#allocation4 + $0x668] sm:$0xff]
      %v1962 = vld [vmem:[#allocation4 + $0x670] sm:$0xff]
      %v1963 = vld [vmem:[#allocation4 + $0x678] sm:$0xff]
      %v1964 = vld [vmem:[#allocation4 + $0x680] sm:$0xff]
      %v1965 = vld [vmem:[#allocation4 + $0x688] sm:$0xff]
      %v1966 = vld [vmem:[#allocation4 + $0x690] sm:$0xff]
      %v1967 = vld [vmem:[#allocation4 + $0x698] sm:$0xff]
      %v1968 = vld [vmem:[#allocation4 + $0x6a0] sm:$0xff]
      %v1969 = vld [vmem:[#allocation4 + $0x6a8] sm:$0xff]
      %v1970 = vld [vmem:[#allocation4 + $0x6b0] sm:$0xff]
      %v1971 = vld [vmem:[#allocation4 + $0x6b8] sm:$0xff]
      %v1972 = vld [vmem:[#allocation4 + $0x6c0] sm:$0xff]
      %v1973 = vld [vmem:[#allocation4 + $0x6c8] sm:$0xff]
      %v1974 = vld [vmem:[#allocation4 + $0x6d0] sm:$0xff]
      %v1975 = vld [vmem:[#allocation4 + $0x6d8] sm:$0xff]
      %v1976 = vld [vmem:[#allocation4 + $0x6e0] sm:$0xff]
      %v1977 = vld [vmem:[#allocation4 + $0x6e8] sm:$0xff]
      %v1978 = vld [vmem:[#allocation4 + $0x6f0] sm:$0xff]
      %v1979 = vld [vmem:[#allocation4 + $0x6f8] sm:$0xff]
      %v1980 = vld [vmem:[#allocation4 + $0x700] sm:$0xff]
      %v1981 = vld [vmem:[#allocation4 + $0x708] sm:$0xff]
      %v1982 = vld [vmem:[#allocation4 + $0x710] sm:$0xff]
      %v1983 = vld [vmem:[#allocation4 + $0x718] sm:$0xff]
      %v1984 = vld [vmem:[#allocation4 + $0x720] sm:$0xff]
      %v1985 = vld [vmem:[#allocation4 + $0x728] sm:$0xff]
      %v1986 = vld [vmem:[#allocation4 + $0x730] sm:$0xff]
      %v1987 = vld [vmem:[#allocation4 + $0x738] sm:$0xff]
      %v1988 = vld [vmem:[#allocation4 + $0x740] sm:$0xff]
      %v1989 = vld [vmem:[#allocation4 + $0x748] sm:$0xff]
      %v1990 = vld [vmem:[#allocation4 + $0x750] sm:$0xff]
      %v1991 = vld [vmem:[#allocation4 + $0x758] sm:$0xff]
      %v1992 = vld [vmem:[#allocation4 + $0x760] sm:$0xff]
      %v1993 = vld [vmem:[#allocation4 + $0x768] sm:$0xff]
      %v1994 = vld [vmem:[#allocation4 + $0x770] sm:$0xff]
      %v1995 = vld [vmem:[#allocation4 + $0x778] sm:$0xff]
      %v1996 = vld [vmem:[#allocation4 + $0x780] sm:$0xff]
      %v1997 = vld [vmem:[#allocation4 + $0x788] sm:$0xff]
      %v1998 = vld [vmem:[#allocation4 + $0x790] sm:$0xff]
      %v1999 = vld [vmem:[#allocation4 + $0x798] sm:$0xff]
      %v2000 = vld [vmem:[#allocation4 + $0x7a0] sm:$0xff]
      %v2001 = vld [vmem:[#allocation4 + $0x7a8] sm:$0xff]
      %v2002 = vld [vmem:[#allocation4 + $0x7b0] sm:$0xff]
      %v2003 = vld [vmem:[#allocation4 + $0x7b8] sm:$0xff]
      %v2004 = vld [vmem:[#allocation4 + $0x7c0] sm:$0xff]
      %v2005 = vld [vmem:[#allocation4 + $0x7c8] sm:$0xff]
      %v2006 = vld [vmem:[#allocation4 + $0x7d0] sm:$0xff]
      %v2007 = vld [vmem:[#allocation4 + $0x7d8] sm:$0xff]
      %v2008 = vld [vmem:[#allocation4 + $0x7e0] sm:$0xff]
      %v2009 = vld [vmem:[#allocation4 + $0x7e8] sm:$0xff]
      %v2010 = vld [vmem:[#allocation4 + $0x7f0] sm:$0xff]
      %v2011 = vld [vmem:[#allocation4 + $0x7f8] sm:$0xff]
      %v2012 = vld [vmem:[#allocation4 + $0x800] sm:$0xff]
      %v2013 = vld [vmem:[#allocation4 + $0x808] sm:$0xff]
      %v2014 = vld [vmem:[#allocation4 + $0x810] sm:$0xff]
      %v2015 = vld [vmem:[#allocation4 + $0x818] sm:$0xff]
      %v2016 = vld [vmem:[#allocation4 + $0x820] sm:$0xff]
      %v2017 = vld [vmem:[#allocation4 + $0x828] sm:$0xff]
      %v2018 = vld [vmem:[#allocation4 + $0x830] sm:$0xff]
      %v2019 = vld [vmem:[#allocation4 + $0x838] sm:$0xff]
      %v2020 = vld [vmem:[#allocation4 + $0x840] sm:$0xff]
      %v2021 = vld [vmem:[#allocation4 + $0x848] sm:$0xff]
      %v2022 = vld [vmem:[#allocation4 + $0x850] sm:$0xff]
      %v2023 = vld [vmem:[#allocation4 + $0x858] sm:$0xff]
      %v2024 = vld [vmem:[#allocation4 + $0x860] sm:$0xff]
      %v2025 = vld [vmem:[#allocation4 + $0x868] sm:$0xff]
      %v2026 = vld [vmem:[#allocation4 + $0x870] sm:$0xff]
      %v2027 = vld [vmem:[#allocation4 + $0x878] sm:$0xff]
      %v2028 = vld [vmem:[#allocation4 + $0x880] sm:$0xff]
      %v2029 = vld [vmem:[#allocation4 + $0x888] sm:$0xff]
      %v2030 = vld [vmem:[#allocation4 + $0x890] sm:$0xff]
      %v2031 = vld [vmem:[#allocation4 + $0x898] sm:$0xff]
      %v2032 = vld [vmem:[#allocation4 + $0x8a0] sm:$0xff]
      %v2033 = vld [vmem:[#allocation4 + $0x8a8] sm:$0xff]
      %v2034 = vld [vmem:[#allocation4 + $0x8b0] sm:$0xff]
      %v2035 = vld [vmem:[#allocation4 + $0x8b8] sm:$0xff]
      %v2036 = vld [vmem:[#allocation4 + $0x8c0] sm:$0xff]
      %v2037 = vld [vmem:[#allocation4 + $0x8c8] sm:$0xff]
      %v2038 = vld [vmem:[#allocation4 + $0x8d0] sm:$0xff]
      %v2039 = vld [vmem:[#allocation4 + $0x8d8] sm:$0xff]
      %v2040 = vld [vmem:[#allocation4 + $0x8e0] sm:$0xff]
      %v2041 = vld [vmem:[#allocation4 + $0x8e8] sm:$0xff]
      %v2042 = vld [vmem:[#allocation4 + $0x8f0] sm:$0xff]
      %v2043 = vld [vmem:[#allocation4 + $0x8f8] sm:$0xff]
      %v2044 = vld [vmem:[#allocation4 + $0x900] sm:$0xff]
      %v2045 = vld [vmem:[#allocation4 + $0x908] sm:$0xff]
      %v2046 = vld [vmem:[#allocation4 + $0x910] sm:$0xff]
      %v2047 = vld [vmem:[#allocation4 + $0x918] sm:$0xff]
      %v2048 = vld [vmem:[#allocation4 + $0x920] sm:$0xff]
      %v2049 = vld [vmem:[#allocation4 + $0x928] sm:$0xff]
      %v2050 = vld [vmem:[#allocation4 + $0x930] sm:$0xff]
      %v2051 = vld [vmem:[#allocation4 + $0x938] sm:$0xff]
      %v2052 = vld [vmem:[#allocation4 + $0x940] sm:$0xff]
      %v2053 = vld [vmem:[#allocation4 + $0x948] sm:$0xff]
      %v2054 = vld [vmem:[#allocation4 + $0x950] sm:$0xff]
      %v2055 = vld [vmem:[#allocation4 + $0x958] sm:$0xff]
      %v2056 = vld [vmem:[#allocation4 + $0x960] sm:$0xff]
      %v2057 = vld [vmem:[#allocation4 + $0x968] sm:$0xff]
      %v2058 = vld [vmem:[#allocation4 + $0x970] sm:$0xff]
      %v2059 = vld [vmem:[#allocation4 + $0x978] sm:$0xff]
      %v2060 = vld [vmem:[#allocation4 + $0x980] sm:$0xff]
      %v2061 = vld [vmem:[#allocation4 + $0x988] sm:$0xff]
      %v2062 = vld [vmem:[#allocation4 + $0x990] sm:$0xff]
      %v2063 = vld [vmem:[#allocation4 + $0x998] sm:$0xff]
      %v2064 = vld [vmem:[#allocation4 + $0x9a0] sm:$0xff]
      %v2065 = vld [vmem:[#allocation4 + $0x9a8] sm:$0xff]
      %v2066 = vld [vmem:[#allocation4 + $0x9b0] sm:$0xff]
      %v2067 = vld [vmem:[#allocation4 + $0x9b8] sm:$0xff]
      %v2068 = vld [vmem:[#allocation4 + $0x9c0] sm:$0xff]
      %v2069 = vld [vmem:[#allocation4 + $0x9c8] sm:$0xff]
      %v2070 = vld [vmem:[#allocation4 + $0x9d0] sm:$0xff]
      %v2071 = vld [vmem:[#allocation4 + $0x9d8] sm:$0xff]
      %v2072 = vld [vmem:[#allocation4 + $0x9e0] sm:$0xff]
      %v2073 = vld [vmem:[#allocation4 + $0x9e8] sm:$0xff]
      %v2074 = vld [vmem:[#allocation4 + $0x9f0] sm:$0xff]
      %v2075 = vld [vmem:[#allocation4 + $0x9f8] sm:$0xff]
      %v2076 = vld [vmem:[#allocation4 + $0xa00] sm:$0xff]
      %v2077 = vld [vmem:[#allocation4 + $0xa08] sm:$0xff]
      %v2078 = vld [vmem:[#allocation4 + $0xa10] sm:$0xff]
      %v2079 = vld [vmem:[#allocation4 + $0xa18] sm:$0xff]
      %v2080 = vld [vmem:[#allocation4 + $0xa20] sm:$0xff]
      %v2081 = vld [vmem:[#allocation4 + $0xa28] sm:$0xff]
      %v2082 = vld [vmem:[#allocation4 + $0xa30] sm:$0xff]
      %v2083 = vld [vmem:[#allocation4 + $0xa38] sm:$0xff]
      %v2084 = vld [vmem:[#allocation4 + $0xa40] sm:$0xff]
      %v2085 = vld [vmem:[#allocation4 + $0xa48] sm:$0xff]
      %v2086 = vld [vmem:[#allocation4 + $0xa50] sm:$0xff]
      %v2087 = vld [vmem:[#allocation4 + $0xa58] sm:$0xff]
      %v2088 = vld [vmem:[#allocation4 + $0xa60] sm:$0xff]
      %v2089 = vld [vmem:[#allocation4 + $0xa68] sm:$0xff]
      %v2090 = vld [vmem:[#allocation4 + $0xa70] sm:$0xff]
      %v2091 = vld [vmem:[#allocation4 + $0xa78] sm:$0xff]
      %v2092 = vld [vmem:[#allocation4 + $0xa80] sm:$0xff]
      %v2093 = vld [vmem:[#allocation4 + $0xa88] sm:$0xff]
      %v2094 = vld [vmem:[#allocation4 + $0xa90] sm:$0xff]
      %v2095 = vld [vmem:[#allocation4 + $0xa98] sm:$0xff]
      %v2096 = vld [vmem:[#allocation4 + $0xaa0] sm:$0xff]
      %v2097 = vld [vmem:[#allocation4 + $0xaa8] sm:$0xff]
      %v2098 = vld [vmem:[#allocation4 + $0xab0] sm:$0xff]
      %v2099 = vld [vmem:[#allocation4 + $0xab8] sm:$0xff]
      %v2100 = vld [vmem:[#allocation4 + $0xac0] sm:$0xff]
      %v2101 = vld [vmem:[#allocation4 + $0xac8] sm:$0xff]
      %v2102 = vld [vmem:[#allocation4 + $0xad0] sm:$0xff]
      %v2103 = vld [vmem:[#allocation4 + $0xad8] sm:$0xff]
      %v2104 = vld [vmem:[#allocation4 + $0xae0] sm:$0xff]
      %v2105 = vld [vmem:[#allocation4 + $0xae8] sm:$0xff]
      %v2106 = vld [vmem:[#allocation4 + $0xaf0] sm:$0xff]
      %v2107 = vld [vmem:[#allocation4 + $0xaf8] sm:$0xff]
      %v2108 = vld [vmem:[#allocation4 + $0xb00] sm:$0xff]
      %v2109 = vld [vmem:[#allocation4 + $0xb08] sm:$0xff]
      %v2110 = vld [vmem:[#allocation4 + $0xb10] sm:$0xff]
      %v2111 = vld [vmem:[#allocation4 + $0xb18] sm:$0xff]
      %v2112 = vld [vmem:[#allocation4 + $0xb20] sm:$0xff]
      %v2113 = vld [vmem:[#allocation4 + $0xb28] sm:$0xff]
      %v2114 = vld [vmem:[#allocation4 + $0xb30] sm:$0xff]
      %v2115 = vld [vmem:[#allocation4 + $0xb38] sm:$0xff]
      %v2116 = vld [vmem:[#allocation4 + $0xb40] sm:$0xff]
      %v2117 = vld [vmem:[#allocation4 + $0xb48] sm:$0xff]
      %v2118 = vld [vmem:[#allocation4 + $0xb50] sm:$0xff]
      %v2119 = vld [vmem:[#allocation4 + $0xb58] sm:$0xff]
      %v2120 = vld [vmem:[#allocation4 + $0xb60] sm:$0xff]
      %v2121 = vld [vmem:[#allocation4 + $0xb68] sm:$0xff]
      %v2122 = vld [vmem:[#allocation4 + $0xb70] sm:$0xff]
      %v2123 = vld [vmem:[#allocation4 + $0xb78] sm:$0xff]
      %v2124 = vld [vmem:[#allocation4 + $0xb80] sm:$0xff]
      %v2125 = vld [vmem:[#allocation4 + $0xb88] sm:$0xff]
      %v2126 = vld [vmem:[#allocation4 + $0xb90] sm:$0xff]
      %v2127 = vld [vmem:[#allocation4 + $0xb98] sm:$0xff]
      %v2128 = vld [vmem:[#allocation4 + $0xba0] sm:$0xff]
      %v2129 = vld [vmem:[#allocation4 + $0xba8] sm:$0xff]
      %v2130 = vld [vmem:[#allocation4 + $0xbb0] sm:$0xff]
      %v2131 = vld [vmem:[#allocation4 + $0xbb8] sm:$0xff]
      %v2132 = vld [vmem:[#allocation4 + $0xbc0] sm:$0xff]
      %v2133 = vld [vmem:[#allocation4 + $0xbc8] sm:$0xff]
      %v2134 = vld [vmem:[#allocation4 + $0xbd0] sm:$0xff]
      %v2135 = vld [vmem:[#allocation4 + $0xbd8] sm:$0xff]
      %v2136 = vld [vmem:[#allocation4 + $0xbe0] sm:$0xff]
      %v2137 = vld [vmem:[#allocation4 + $0xbe8] sm:$0xff]
      %v2138 = vld [vmem:[#allocation4 + $0xbf0] sm:$0xff]
      %v2139 = vld [vmem:[#allocation4 + $0xbf8] sm:$0xff]
      %v2140 = vld [vmem:[#allocation4 + $0xc00] sm:$0xff]
      %v2141 = vld [vmem:[#allocation4 + $0xc08] sm:$0xff]
      %v2142 = vld [vmem:[#allocation4 + $0xc10] sm:$0xff]
      %v2143 = vld [vmem:[#allocation4 + $0xc18] sm:$0xff]
      %v2144 = vld [vmem:[#allocation4 + $0xc20] sm:$0xff]
      %v2145 = vld [vmem:[#allocation4 + $0xc28] sm:$0xff]
      %v2146 = vld [vmem:[#allocation4 + $0xc30] sm:$0xff]
      %v2147 = vld [vmem:[#allocation4 + $0xc38] sm:$0xff]
      %v2148 = vld [vmem:[#allocation4 + $0xc40] sm:$0xff]
      %v2149 = vld [vmem:[#allocation4 + $0xc48] sm:$0xff]
      %v2150 = vld [vmem:[#allocation4 + $0xc50] sm:$0xff]
      %v2151 = vld [vmem:[#allocation4 + $0xc58] sm:$0xff]
      %v2152 = vld [vmem:[#allocation4 + $0xc60] sm:$0xff]
      %v2153 = vld [vmem:[#allocation4 + $0xc68] sm:$0xff]
      %v2154 = vld [vmem:[#allocation4 + $0xc70] sm:$0xff]
      %v2155 = vld [vmem:[#allocation4 + $0xc78] sm:$0xff]
      %v2156 = vld [vmem:[#allocation4 + $0xc80] sm:$0xff]
      %v2157 = vld [vmem:[#allocation4 + $0xc88] sm:$0xff]
      %v2158 = vld [vmem:[#allocation4 + $0xc90] sm:$0xff]
      %v2159 = vld [vmem:[#allocation4 + $0xc98] sm:$0xff]
      %v2160 = vld [vmem:[#allocation4 + $0xca0] sm:$0xff]
      %v2161 = vld [vmem:[#allocation4 + $0xca8] sm:$0xff]
      %v2162 = vld [vmem:[#allocation4 + $0xcb0] sm:$0xff]
      %v2163 = vld [vmem:[#allocation4 + $0xcb8] sm:$0xff]
      %v2164 = vld [vmem:[#allocation4 + $0xcc0] sm:$0xff]
      %v2165 = vld [vmem:[#allocation4 + $0xcc8] sm:$0xff]
      %v2166 = vld [vmem:[#allocation4 + $0xcd0] sm:$0xff]
      %v2167 = vld [vmem:[#allocation4 + $0xcd8] sm:$0xff]
      %v2168 = vld [vmem:[#allocation4 + $0xce0] sm:$0xff]
      %v2169 = vld [vmem:[#allocation4 + $0xce8] sm:$0xff]
      %v2170 = vld [vmem:[#allocation4 + $0xcf0] sm:$0xff]
      %v2171 = vld [vmem:[#allocation4 + $0xcf8] sm:$0xff]
      %v2172 = vld [vmem:[#allocation4 + $0xd00] sm:$0xff]
      %v2173 = vld [vmem:[#allocation4 + $0xd08] sm:$0xff]
      %v2174 = vld [vmem:[#allocation4 + $0xd10] sm:$0xff]
      %v2175 = vld [vmem:[#allocation4 + $0xd18] sm:$0xff]
      %v2176 = vld [vmem:[#allocation4 + $0xd20] sm:$0xff]
      %v2177 = vld [vmem:[#allocation4 + $0xd28] sm:$0xff]
      %v2178 = vld [vmem:[#allocation4 + $0xd30] sm:$0xff]
      %v2179 = vld [vmem:[#allocation4 + $0xd38] sm:$0xff]
      %v2180 = vld [vmem:[#allocation4 + $0xd40] sm:$0xff]
      %v2181 = vld [vmem:[#allocation4 + $0xd48] sm:$0xff]
      %v2182 = vld [vmem:[#allocation4 + $0xd50] sm:$0xff]
      %v2183 = vld [vmem:[#allocation4 + $0xd58] sm:$0xff]
      %v2184 = vld [vmem:[#allocation4 + $0xd60] sm:$0xff]
      %v2185 = vld [vmem:[#allocation4 + $0xd68] sm:$0xff]
      %v2186 = vld [vmem:[#allocation4 + $0xd70] sm:$0xff]
      %v2187 = vld [vmem:[#allocation4 + $0xd78] sm:$0xff]
      %v2188 = vld [vmem:[#allocation4 + $0xd80] sm:$0xff]
      %v2189 = vld [vmem:[#allocation4 + $0xd88] sm:$0xff]
      %v2190 = vld [vmem:[#allocation4 + $0xd90] sm:$0xff]
      %v2191 = vld [vmem:[#allocation4 + $0xd98] sm:$0xff]
      %v2192 = vld [vmem:[#allocation4 + $0xda0] sm:$0xff]
      %v2193 = vld [vmem:[#allocation4 + $0xda8] sm:$0xff]
      %v2194 = vld [vmem:[#allocation4 + $0xdb0] sm:$0xff]
      %v2195 = vld [vmem:[#allocation4 + $0xdb8] sm:$0xff]
      %v2196 = vld [vmem:[#allocation4 + $0xdc0] sm:$0xff]
      %v2197 = vld [vmem:[#allocation4 + $0xdc8] sm:$0xff]
      %v2198 = vld [vmem:[#allocation4 + $0xdd0] sm:$0xff]
      %v2199 = vld [vmem:[#allocation4 + $0xdd8] sm:$0xff]
      %v2200 = vld [vmem:[#allocation4 + $0xde0] sm:$0xff]
      %v2201 = vld [vmem:[#allocation4 + $0xde8] sm:$0xff]
      %v2202 = vld [vmem:[#allocation4 + $0xdf0] sm:$0xff]
      %v2203 = vld [vmem:[#allocation4 + $0xdf8] sm:$0xff]
      %v2204 = vld [vmem:[#allocation4 + $0xe00] sm:$0xff]
      %v2205 = vld [vmem:[#allocation4 + $0xe08] sm:$0xff]
      %v2206 = vld [vmem:[#allocation4 + $0xe10] sm:$0xff]
      %v2207 = vld [vmem:[#allocation4 + $0xe18] sm:$0xff]
      %v2208 = vld [vmem:[#allocation4 + $0xe20] sm:$0xff]
      %v2209 = vld [vmem:[#allocation4 + $0xe28] sm:$0xff]
      %v2210 = vld [vmem:[#allocation4 + $0xe30] sm:$0xff]
      %v2211 = vld [vmem:[#allocation4 + $0xe38] sm:$0xff]
      %v2212 = vld [vmem:[#allocation4 + $0xe40] sm:$0xff]
      %v2213 = vld [vmem:[#allocation4 + $0xe48] sm:$0xff]
      %v2214 = vld [vmem:[#allocation4 + $0xe50] sm:$0xff]
      %v2215 = vld [vmem:[#allocation4 + $0xe58] sm:$0xff]
      %v2216 = vld [vmem:[#allocation4 + $0xe60] sm:$0xff]
      %v2217 = vld [vmem:[#allocation4 + $0xe68] sm:$0xff]
      %v2218 = vld [vmem:[#allocation4 + $0xe70] sm:$0xff]
      %v2219 = vld [vmem:[#allocation4 + $0xe78] sm:$0xff]
      %v2220 = vld [vmem:[#allocation4 + $0xe80] sm:$0xff]
      %v2221 = vld [vmem:[#allocation4 + $0xe88] sm:$0xff]
      %v2222 = vld [vmem:[#allocation4 + $0xe90] sm:$0xff]
      %v2223 = vld [vmem:[#allocation4 + $0xe98] sm:$0xff]
      %v2224 = vld [vmem:[#allocation4 + $0xea0] sm:$0xff]
      %v2225 = vld [vmem:[#allocation4 + $0xea8] sm:$0xff]
      %v2226 = vld [vmem:[#allocation4 + $0xeb0] sm:$0xff]
      %v2227 = vld [vmem:[#allocation4 + $0xeb8] sm:$0xff]
      %v2228 = vld [vmem:[#allocation4 + $0xec0] sm:$0xff]
      %v2229 = vld [vmem:[#allocation4 + $0xec8] sm:$0xff]
      %v2230 = vld [vmem:[#allocation4 + $0xed0] sm:$0xff]
      %v2231 = vld [vmem:[#allocation4 + $0xed8] sm:$0xff]
      %v2232 = vld [vmem:[#allocation4 + $0xee0] sm:$0xff]
      %v2233 = vld [vmem:[#allocation4 + $0xee8] sm:$0xff]
      %v2234 = vld [vmem:[#allocation4 + $0xef0] sm:$0xff]
      %v2235 = vld [vmem:[#allocation4 + $0xef8] sm:$0xff]
      %v2236 = vld [vmem:[#allocation4 + $0xf00] sm:$0xff]
      %v2237 = vld [vmem:[#allocation4 + $0xf08] sm:$0xff]
      %v2238 = vld [vmem:[#allocation4 + $0xf10] sm:$0xff]
      %v2239 = vld [vmem:[#allocation4 + $0xf18] sm:$0xff]
      %v2240 = vld [vmem:[#allocation4 + $0xf20] sm:$0xff]
      %v2241 = vld [vmem:[#allocation4 + $0xf28] sm:$0xff]
      %v2242 = vld [vmem:[#allocation4 + $0xf30] sm:$0xff]
      %v2243 = vld [vmem:[#allocation4 + $0xf38] sm:$0xff]
      %v2244 = vld [vmem:[#allocation4 + $0xf40] sm:$0xff]
      %v2245 = vld [vmem:[#allocation4 + $0xf48] sm:$0xff]
      %v2246 = vld [vmem:[#allocation4 + $0xf50] sm:$0xff]
      %v2247 = vld [vmem:[#allocation4 + $0xf58] sm:$0xff]
      %v2248 = vld [vmem:[#allocation4 + $0xf60] sm:$0xff]
      %v2249 = vld [vmem:[#allocation4 + $0xf68] sm:$0xff]
      %v2250 = vld [vmem:[#allocation4 + $0xf70] sm:$0xff]
      %v2251 = vld [vmem:[#allocation4 + $0xf78] sm:$0xff]
      %v2252 = vld [vmem:[#allocation4 + $0xf80] sm:$0xff]
      %v2253 = vld [vmem:[#allocation4 + $0xf88] sm:$0xff]
      %v2254 = vld [vmem:[#allocation4 + $0xf90] sm:$0xff]
      %v2255 = vld [vmem:[#allocation4 + $0xf98] sm:$0xff]
      %v2256 = vld [vmem:[#allocation4 + $0xfa0] sm:$0xff]
      %v2257 = vld [vmem:[#allocation4 + $0xfa8] sm:$0xff]
      %v2258 = vld [vmem:[#allocation4 + $0xfb0] sm:$0xff]
      %v2259 = vld [vmem:[#allocation4 + $0xfb8] sm:$0xff]
      %v2260 = vld [vmem:[#allocation4 + $0xfc0] sm:$0xff]
      %v2261 = vld [vmem:[#allocation4 + $0xfc8] sm:$0xff]
      %v2262 = vld [vmem:[#allocation4 + $0xfd0] sm:$0xff]
      %v2263 = vld [vmem:[#allocation4 + $0xfd8] sm:$0xff]
      %v2264 = vld [vmem:[#allocation4 + $0xfe0] sm:$0xff]
      %v2265 = vld [vmem:[#allocation4 + $0xfe8] sm:$0xff]
      %v2266 = vld [vmem:[#allocation4 + $0xff0] sm:$0xff]
      %v2267 = vld [vmem:[#allocation4 + $0xff8] sm:$0xff]
      %v2268 = vunpack.c.l.s8.bf16 %v1756
      %v2269 = vunpack.c.l.s8.bf16 %v1757
      %v2270 = vunpack.c.l.s8.bf16 %v1758
      %v2271 = vunpack.c.l.s8.bf16 %v1759
      %v2272 = vunpack.c.l.s8.bf16 %v1760
      %v2273 = vunpack.c.l.s8.bf16 %v1761
      %v2274 = vunpack.c.l.s8.bf16 %v1762
      %v2275 = vunpack.c.l.s8.bf16 %v1763
      %v2276 = vunpack.c.l.s8.bf16 %v1764
      %v2277 = vunpack.c.l.s8.bf16 %v1765
      %v2278 = vunpack.c.l.s8.bf16 %v1766
      %v2279 = vunpack.c.l.s8.bf16 %v1767
      %v2280 = vunpack.c.l.s8.bf16 %v1768
      %v2281 = vunpack.c.l.s8.bf16 %v1769
      %v2282 = vunpack.c.l.s8.bf16 %v1770
      %v2283 = vunpack.c.l.s8.bf16 %v1771
      %v2284 = vunpack.c.h.s8.bf16 %v1756
      %v2285 = vunpack.c.h.s8.bf16 %v1757
      %v2286 = vunpack.c.h.s8.bf16 %v1758
      %v2287 = vunpack.c.h.s8.bf16 %v1759
      %v2288 = vunpack.c.h.s8.bf16 %v1760
      %v2289 = vunpack.c.h.s8.bf16 %v1761
      %v2290 = vunpack.c.h.s8.bf16 %v1762
      %v2291 = vunpack.c.h.s8.bf16 %v1763
      %v2292 = vunpack.c.h.s8.bf16 %v1764
      %v2293 = vunpack.c.h.s8.bf16 %v1765
      %v2294 = vunpack.c.h.s8.bf16 %v1766
      %v2295 = vunpack.c.h.s8.bf16 %v1767
      %v2296 = vunpack.c.h.s8.bf16 %v1768
      %v2297 = vunpack.c.h.s8.bf16 %v1769
      %v2298 = vunpack.c.h.s8.bf16 %v1770
      %v2299 = vunpack.c.h.s8.bf16 %v1771
      %v2300 = vunpack.c.l.s8.bf16 %v1772
      %v2301 = vunpack.c.l.s8.bf16 %v1773
      %v2302 = vunpack.c.l.s8.bf16 %v1774
      %v2303 = vunpack.c.l.s8.bf16 %v1775
      %v2304 = vunpack.c.l.s8.bf16 %v1776
      %v2305 = vunpack.c.l.s8.bf16 %v1777
      %v2306 = vunpack.c.l.s8.bf16 %v1778
      %v2307 = vunpack.c.l.s8.bf16 %v1779
      %v2308 = vunpack.c.l.s8.bf16 %v1780
      %v2309 = vunpack.c.l.s8.bf16 %v1781
      %v2310 = vunpack.c.l.s8.bf16 %v1782
      %v2311 = vunpack.c.l.s8.bf16 %v1783
      %v2312 = vunpack.c.l.s8.bf16 %v1784
      %v2313 = vunpack.c.l.s8.bf16 %v1785
      %v2314 = vunpack.c.l.s8.bf16 %v1786
      %v2315 = vunpack.c.l.s8.bf16 %v1787
      %v2316 = vunpack.c.h.s8.bf16 %v1772
      %v2317 = vunpack.c.h.s8.bf16 %v1773
      %v2318 = vunpack.c.h.s8.bf16 %v1774
      %v2319 = vunpack.c.h.s8.bf16 %v1775
      %v2320 = vunpack.c.h.s8.bf16 %v1776
      %v2321 = vunpack.c.h.s8.bf16 %v1777
      %v2322 = vunpack.c.h.s8.bf16 %v1778
      %v2323 = vunpack.c.h.s8.bf16 %v1779
      %v2324 = vunpack.c.h.s8.bf16 %v1780
      %v2325 = vunpack.c.h.s8.bf16 %v1781
      %v2326 = vunpack.c.h.s8.bf16 %v1782
      %v2327 = vunpack.c.h.s8.bf16 %v1783
      %v2328 = vunpack.c.h.s8.bf16 %v1784
      %v2329 = vunpack.c.h.s8.bf16 %v1785
      %v2330 = vunpack.c.h.s8.bf16 %v1786
      %v2331 = vunpack.c.h.s8.bf16 %v1787
      %v2332 = vunpack.c.l.s8.bf16 %v1788
      %v2333 = vunpack.c.l.s8.bf16 %v1789
      %v2334 = vunpack.c.l.s8.bf16 %v1790
      %v2335 = vunpack.c.l.s8.bf16 %v1791
      %v2336 = vunpack.c.l.s8.bf16 %v1792
      %v2337 = vunpack.c.l.s8.bf16 %v1793
      %v2338 = vunpack.c.l.s8.bf16 %v1794
      %v2339 = vunpack.c.l.s8.bf16 %v1795
      %v2340 = vunpack.c.l.s8.bf16 %v1796
      %v2341 = vunpack.c.l.s8.bf16 %v1797
      %v2342 = vunpack.c.l.s8.bf16 %v1798
      %v2343 = vunpack.c.l.s8.bf16 %v1799
      %v2344 = vunpack.c.l.s8.bf16 %v1800
      %v2345 = vunpack.c.l.s8.bf16 %v1801
      %v2346 = vunpack.c.l.s8.bf16 %v1802
      %v2347 = vunpack.c.l.s8.bf16 %v1803
      %v2348 = vunpack.c.h.s8.bf16 %v1788
      %v2349 = vunpack.c.h.s8.bf16 %v1789
      %v2350 = vunpack.c.h.s8.bf16 %v1790
      %v2351 = vunpack.c.h.s8.bf16 %v1791
      %v2352 = vunpack.c.h.s8.bf16 %v1792
      %v2353 = vunpack.c.h.s8.bf16 %v1793
      %v2354 = vunpack.c.h.s8.bf16 %v1794
      %v2355 = vunpack.c.h.s8.bf16 %v1795
      %v2356 = vunpack.c.h.s8.bf16 %v1796
      %v2357 = vunpack.c.h.s8.bf16 %v1797
      %v2358 = vunpack.c.h.s8.bf16 %v1798
      %v2359 = vunpack.c.h.s8.bf16 %v1799
      %v2360 = vunpack.c.h.s8.bf16 %v1800
      %v2361 = vunpack.c.h.s8.bf16 %v1801
      %v2362 = vunpack.c.h.s8.bf16 %v1802
      %v2363 = vunpack.c.h.s8.bf16 %v1803
      %v2364 = vunpack.c.l.s8.bf16 %v1804
      %v2365 = vunpack.c.l.s8.bf16 %v1805
      %v2366 = vunpack.c.l.s8.bf16 %v1806
      %v2367 = vunpack.c.l.s8.bf16 %v1807
      %v2368 = vunpack.c.l.s8.bf16 %v1808
      %v2369 = vunpack.c.l.s8.bf16 %v1809
      %v2370 = vunpack.c.l.s8.bf16 %v1810
      %v2371 = vunpack.c.l.s8.bf16 %v1811
      %v2372 = vunpack.c.l.s8.bf16 %v1812
      %v2373 = vunpack.c.l.s8.bf16 %v1813
      %v2374 = vunpack.c.l.s8.bf16 %v1814
      %v2375 = vunpack.c.l.s8.bf16 %v1815
      %v2376 = vunpack.c.l.s8.bf16 %v1816
      %v2377 = vunpack.c.l.s8.bf16 %v1817
      %v2378 = vunpack.c.l.s8.bf16 %v1818
      %v2379 = vunpack.c.l.s8.bf16 %v1819
      %v2380 = vunpack.c.h.s8.bf16 %v1804
      %v2381 = vunpack.c.h.s8.bf16 %v1805
      %v2382 = vunpack.c.h.s8.bf16 %v1806
      %v2383 = vunpack.c.h.s8.bf16 %v1807
      %v2384 = vunpack.c.h.s8.bf16 %v1808
      %v2385 = vunpack.c.h.s8.bf16 %v1809
      %v2386 = vunpack.c.h.s8.bf16 %v1810
      %v2387 = vunpack.c.h.s8.bf16 %v1811
      %v2388 = vunpack.c.h.s8.bf16 %v1812
      %v2389 = vunpack.c.h.s8.bf16 %v1813
      %v2390 = vunpack.c.h.s8.bf16 %v1814
      %v2391 = vunpack.c.h.s8.bf16 %v1815
      %v2392 = vunpack.c.h.s8.bf16 %v1816
      %v2393 = vunpack.c.h.s8.bf16 %v1817
      %v2394 = vunpack.c.h.s8.bf16 %v1818
      %v2395 = vunpack.c.h.s8.bf16 %v1819
      %v2396 = vunpack.c.l.s8.bf16 %v1820
      %v2397 = vunpack.c.l.s8.bf16 %v1821
      %v2398 = vunpack.c.l.s8.bf16 %v1822
      %v2399 = vunpack.c.l.s8.bf16 %v1823
      %v2400 = vunpack.c.l.s8.bf16 %v1824
      %v2401 = vunpack.c.l.s8.bf16 %v1825
      %v2402 = vunpack.c.l.s8.bf16 %v1826
      %v2403 = vunpack.c.l.s8.bf16 %v1827
      %v2404 = vunpack.c.l.s8.bf16 %v1828
      %v2405 = vunpack.c.l.s8.bf16 %v1829
      %v2406 = vunpack.c.l.s8.bf16 %v1830
      %v2407 = vunpack.c.l.s8.bf16 %v1831
      %v2408 = vunpack.c.l.s8.bf16 %v1832
      %v2409 = vunpack.c.l.s8.bf16 %v1833
      %v2410 = vunpack.c.l.s8.bf16 %v1834
      %v2411 = vunpack.c.l.s8.bf16 %v1835
      %v2412 = vunpack.c.h.s8.bf16 %v1820
      %v2413 = vunpack.c.h.s8.bf16 %v1821
      %v2414 = vunpack.c.h.s8.bf16 %v1822
      %v2415 = vunpack.c.h.s8.bf16 %v1823
      %v2416 = vunpack.c.h.s8.bf16 %v1824
      %v2417 = vunpack.c.h.s8.bf16 %v1825
      %v2418 = vunpack.c.h.s8.bf16 %v1826
      %v2419 = vunpack.c.h.s8.bf16 %v1827
      %v2420 = vunpack.c.h.s8.bf16 %v1828
      %v2421 = vunpack.c.h.s8.bf16 %v1829
      %v2422 = vunpack.c.h.s8.bf16 %v1830
      %v2423 = vunpack.c.h.s8.bf16 %v1831
      %v2424 = vunpack.c.h.s8.bf16 %v1832
      %v2425 = vunpack.c.h.s8.bf16 %v1833
      %v2426 = vunpack.c.h.s8.bf16 %v1834
      %v2427 = vunpack.c.h.s8.bf16 %v1835
      %v2428 = vunpack.c.l.s8.bf16 %v1836
      %v2429 = vunpack.c.l.s8.bf16 %v1837
      %v2430 = vunpack.c.l.s8.bf16 %v1838
      %v2431 = vunpack.c.l.s8.bf16 %v1839
      %v2432 = vunpack.c.l.s8.bf16 %v1840
      %v2433 = vunpack.c.l.s8.bf16 %v1841
      %v2434 = vunpack.c.l.s8.bf16 %v1842
      %v2435 = vunpack.c.l.s8.bf16 %v1843
      %v2436 = vunpack.c.l.s8.bf16 %v1844
      %v2437 = vunpack.c.l.s8.bf16 %v1845
      %v2438 = vunpack.c.l.s8.bf16 %v1846
      %v2439 = vunpack.c.l.s8.bf16 %v1847
      %v2440 = vunpack.c.l.s8.bf16 %v1848
      %v2441 = vunpack.c.l.s8.bf16 %v1849
      %v2442 = vunpack.c.l.s8.bf16 %v1850
      %v2443 = vunpack.c.l.s8.bf16 %v1851
      %v2444 = vunpack.c.h.s8.bf16 %v1836
      %v2445 = vunpack.c.h.s8.bf16 %v1837
      %v2446 = vunpack.c.h.s8.bf16 %v1838
      %v2447 = vunpack.c.h.s8.bf16 %v1839
      %v2448 = vunpack.c.h.s8.bf16 %v1840
      %v2449 = vunpack.c.h.s8.bf16 %v1841
      %v2450 = vunpack.c.h.s8.bf16 %v1842
      %v2451 = vunpack.c.h.s8.bf16 %v1843
      %v2452 = vunpack.c.h.s8.bf16 %v1844
      %v2453 = vunpack.c.h.s8.bf16 %v1845
      %v2454 = vunpack.c.h.s8.bf16 %v1846
      %v2455 = vunpack.c.h.s8.bf16 %v1847
      %v2456 = vunpack.c.h.s8.bf16 %v1848
      %v2457 = vunpack.c.h.s8.bf16 %v1849
      %v2458 = vunpack.c.h.s8.bf16 %v1850
      %v2459 = vunpack.c.h.s8.bf16 %v1851
      %v2460 = vunpack.c.l.s8.bf16 %v1852
      %v2461 = vunpack.c.l.s8.bf16 %v1853
      %v2462 = vunpack.c.l.s8.bf16 %v1854
      %v2463 = vunpack.c.l.s8.bf16 %v1855
      %v2464 = vunpack.c.l.s8.bf16 %v1856
      %v2465 = vunpack.c.l.s8.bf16 %v1857
      %v2466 = vunpack.c.l.s8.bf16 %v1858
      %v2467 = vunpack.c.l.s8.bf16 %v1859
      %v2468 = vunpack.c.l.s8.bf16 %v1860
      %v2469 = vunpack.c.l.s8.bf16 %v1861
      %v2470 = vunpack.c.l.s8.bf16 %v1862
      %v2471 = vunpack.c.l.s8.bf16 %v1863
      %v2472 = vunpack.c.l.s8.bf16 %v1864
      %v2473 = vunpack.c.l.s8.bf16 %v1865
      %v2474 = vunpack.c.l.s8.bf16 %v1866
      %v2475 = vunpack.c.l.s8.bf16 %v1867
      %v2476 = vunpack.c.h.s8.bf16 %v1852
      %v2477 = vunpack.c.h.s8.bf16 %v1853
      %v2478 = vunpack.c.h.s8.bf16 %v1854
      %v2479 = vunpack.c.h.s8.bf16 %v1855
      %v2480 = vunpack.c.h.s8.bf16 %v1856
      %v2481 = vunpack.c.h.s8.bf16 %v1857
      %v2482 = vunpack.c.h.s8.bf16 %v1858
      %v2483 = vunpack.c.h.s8.bf16 %v1859
      %v2484 = vunpack.c.h.s8.bf16 %v1860
      %v2485 = vunpack.c.h.s8.bf16 %v1861
      %v2486 = vunpack.c.h.s8.bf16 %v1862
      %v2487 = vunpack.c.h.s8.bf16 %v1863
      %v2488 = vunpack.c.h.s8.bf16 %v1864
      %v2489 = vunpack.c.h.s8.bf16 %v1865
      %v2490 = vunpack.c.h.s8.bf16 %v1866
      %v2491 = vunpack.c.h.s8.bf16 %v1867
      %v2492 = vunpack.c.l.s8.bf16 %v1868
      %v2493 = vunpack.c.l.s8.bf16 %v1869
      %v2494 = vunpack.c.l.s8.bf16 %v1870
      %v2495 = vunpack.c.l.s8.bf16 %v1871
      %v2496 = vunpack.c.l.s8.bf16 %v1872
      %v2497 = vunpack.c.l.s8.bf16 %v1873
      %v2498 = vunpack.c.l.s8.bf16 %v1874
      %v2499 = vunpack.c.l.s8.bf16 %v1875
      %v2500 = vunpack.c.l.s8.bf16 %v1876
      %v2501 = vunpack.c.l.s8.bf16 %v1877
      %v2502 = vunpack.c.l.s8.bf16 %v1878
      %v2503 = vunpack.c.l.s8.bf16 %v1879
      %v2504 = vunpack.c.l.s8.bf16 %v1880
      %v2505 = vunpack.c.l.s8.bf16 %v1881
      %v2506 = vunpack.c.l.s8.bf16 %v1882
      %v2507 = vunpack.c.l.s8.bf16 %v1883
      %v2508 = vunpack.c.h.s8.bf16 %v1868
      %v2509 = vunpack.c.h.s8.bf16 %v1869
      %v2510 = vunpack.c.h.s8.bf16 %v1870
      %v2511 = vunpack.c.h.s8.bf16 %v1871
      %v2512 = vunpack.c.h.s8.bf16 %v1872
      %v2513 = vunpack.c.h.s8.bf16 %v1873
      %v2514 = vunpack.c.h.s8.bf16 %v1874
      %v2515 = vunpack.c.h.s8.bf16 %v1875
      %v2516 = vunpack.c.h.s8.bf16 %v1876
      %v2517 = vunpack.c.h.s8.bf16 %v1877
      %v2518 = vunpack.c.h.s8.bf16 %v1878
      %v2519 = vunpack.c.h.s8.bf16 %v1879
      %v2520 = vunpack.c.h.s8.bf16 %v1880
      %v2521 = vunpack.c.h.s8.bf16 %v1881
      %v2522 = vunpack.c.h.s8.bf16 %v1882
      %v2523 = vunpack.c.h.s8.bf16 %v1883
      %v2524 = vunpack.c.l.s8.bf16 %v1884
      %v2525 = vunpack.c.l.s8.bf16 %v1885
      %v2526 = vunpack.c.l.s8.bf16 %v1886
      %v2527 = vunpack.c.l.s8.bf16 %v1887
      %v2528 = vunpack.c.l.s8.bf16 %v1888
      %v2529 = vunpack.c.l.s8.bf16 %v1889
      %v2530 = vunpack.c.l.s8.bf16 %v1890
      %v2531 = vunpack.c.l.s8.bf16 %v1891
      %v2532 = vunpack.c.l.s8.bf16 %v1892
      %v2533 = vunpack.c.l.s8.bf16 %v1893
      %v2534 = vunpack.c.l.s8.bf16 %v1894
      %v2535 = vunpack.c.l.s8.bf16 %v1895
      %v2536 = vunpack.c.l.s8.bf16 %v1896
      %v2537 = vunpack.c.l.s8.bf16 %v1897
      %v2538 = vunpack.c.l.s8.bf16 %v1898
      %v2539 = vunpack.c.l.s8.bf16 %v1899
      %v2540 = vunpack.c.h.s8.bf16 %v1884
      %v2541 = vunpack.c.h.s8.bf16 %v1885
      %v2542 = vunpack.c.h.s8.bf16 %v1886
      %v2543 = vunpack.c.h.s8.bf16 %v1887
      %v2544 = vunpack.c.h.s8.bf16 %v1888
      %v2545 = vunpack.c.h.s8.bf16 %v1889
      %v2546 = vunpack.c.h.s8.bf16 %v1890
      %v2547 = vunpack.c.h.s8.bf16 %v1891
      %v2548 = vunpack.c.h.s8.bf16 %v1892
      %v2549 = vunpack.c.h.s8.bf16 %v1893
      %v2550 = vunpack.c.h.s8.bf16 %v1894
      %v2551 = vunpack.c.h.s8.bf16 %v1895
      %v2552 = vunpack.c.h.s8.bf16 %v1896
      %v2553 = vunpack.c.h.s8.bf16 %v1897
      %v2554 = vunpack.c.h.s8.bf16 %v1898
      %v2555 = vunpack.c.h.s8.bf16 %v1899
      %v2556 = vunpack.c.l.s8.bf16 %v1900
      %v2557 = vunpack.c.l.s8.bf16 %v1901
      %v2558 = vunpack.c.l.s8.bf16 %v1902
      %v2559 = vunpack.c.l.s8.bf16 %v1903
      %v2560 = vunpack.c.l.s8.bf16 %v1904
      %v2561 = vunpack.c.l.s8.bf16 %v1905
      %v2562 = vunpack.c.l.s8.bf16 %v1906
      %v2563 = vunpack.c.l.s8.bf16 %v1907
      %v2564 = vunpack.c.l.s8.bf16 %v1908
      %v2565 = vunpack.c.l.s8.bf16 %v1909
      %v2566 = vunpack.c.l.s8.bf16 %v1910
      %v2567 = vunpack.c.l.s8.bf16 %v1911
      %v2568 = vunpack.c.l.s8.bf16 %v1912
      %v2569 = vunpack.c.l.s8.bf16 %v1913
      %v2570 = vunpack.c.l.s8.bf16 %v1914
      %v2571 = vunpack.c.l.s8.bf16 %v1915
      %v2572 = vunpack.c.h.s8.bf16 %v1900
      %v2573 = vunpack.c.h.s8.bf16 %v1901
      %v2574 = vunpack.c.h.s8.bf16 %v1902
      %v2575 = vunpack.c.h.s8.bf16 %v1903
      %v2576 = vunpack.c.h.s8.bf16 %v1904
      %v2577 = vunpack.c.h.s8.bf16 %v1905
      %v2578 = vunpack.c.h.s8.bf16 %v1906
      %v2579 = vunpack.c.h.s8.bf16 %v1907
      %v2580 = vunpack.c.h.s8.bf16 %v1908
      %v2581 = vunpack.c.h.s8.bf16 %v1909
      %v2582 = vunpack.c.h.s8.bf16 %v1910
      %v2583 = vunpack.c.h.s8.bf16 %v1911
      %v2584 = vunpack.c.h.s8.bf16 %v1912
      %v2585 = vunpack.c.h.s8.bf16 %v1913
      %v2586 = vunpack.c.h.s8.bf16 %v1914
      %v2587 = vunpack.c.h.s8.bf16 %v1915
      %v2588 = vunpack.c.l.s8.bf16 %v1916
      %v2589 = vunpack.c.l.s8.bf16 %v1917
      %v2590 = vunpack.c.l.s8.bf16 %v1918
      %v2591 = vunpack.c.l.s8.bf16 %v1919
      %v2592 = vunpack.c.l.s8.bf16 %v1920
      %v2593 = vunpack.c.l.s8.bf16 %v1921
      %v2594 = vunpack.c.l.s8.bf16 %v1922
      %v2595 = vunpack.c.l.s8.bf16 %v1923
      %v2596 = vunpack.c.l.s8.bf16 %v1924
      %v2597 = vunpack.c.l.s8.bf16 %v1925
      %v2598 = vunpack.c.l.s8.bf16 %v1926
      %v2599 = vunpack.c.l.s8.bf16 %v1927
      %v2600 = vunpack.c.l.s8.bf16 %v1928
      %v2601 = vunpack.c.l.s8.bf16 %v1929
      %v2602 = vunpack.c.l.s8.bf16 %v1930
      %v2603 = vunpack.c.l.s8.bf16 %v1931
      %v2604 = vunpack.c.h.s8.bf16 %v1916
      %v2605 = vunpack.c.h.s8.bf16 %v1917
      %v2606 = vunpack.c.h.s8.bf16 %v1918
      %v2607 = vunpack.c.h.s8.bf16 %v1919
      %v2608 = vunpack.c.h.s8.bf16 %v1920
      %v2609 = vunpack.c.h.s8.bf16 %v1921
      %v2610 = vunpack.c.h.s8.bf16 %v1922
      %v2611 = vunpack.c.h.s8.bf16 %v1923
      %v2612 = vunpack.c.h.s8.bf16 %v1924
      %v2613 = vunpack.c.h.s8.bf16 %v1925
      %v2614 = vunpack.c.h.s8.bf16 %v1926
      %v2615 = vunpack.c.h.s8.bf16 %v1927
      %v2616 = vunpack.c.h.s8.bf16 %v1928
      %v2617 = vunpack.c.h.s8.bf16 %v1929
      %v2618 = vunpack.c.h.s8.bf16 %v1930
      %v2619 = vunpack.c.h.s8.bf16 %v1931
      %v2620 = vunpack.c.l.s8.bf16 %v1932
      %v2621 = vunpack.c.l.s8.bf16 %v1933
      %v2622 = vunpack.c.l.s8.bf16 %v1934
      %v2623 = vunpack.c.l.s8.bf16 %v1935
      %v2624 = vunpack.c.l.s8.bf16 %v1936
      %v2625 = vunpack.c.l.s8.bf16 %v1937
      %v2626 = vunpack.c.l.s8.bf16 %v1938
      %v2627 = vunpack.c.l.s8.bf16 %v1939
      %v2628 = vunpack.c.l.s8.bf16 %v1940
      %v2629 = vunpack.c.l.s8.bf16 %v1941
      %v2630 = vunpack.c.l.s8.bf16 %v1942
      %v2631 = vunpack.c.l.s8.bf16 %v1943
      %v2632 = vunpack.c.l.s8.bf16 %v1944
      %v2633 = vunpack.c.l.s8.bf16 %v1945
      %v2634 = vunpack.c.l.s8.bf16 %v1946
      %v2635 = vunpack.c.l.s8.bf16 %v1947
      %v2636 = vunpack.c.h.s8.bf16 %v1932
      %v2637 = vunpack.c.h.s8.bf16 %v1933
      %v2638 = vunpack.c.h.s8.bf16 %v1934
      %v2639 = vunpack.c.h.s8.bf16 %v1935
      %v2640 = vunpack.c.h.s8.bf16 %v1936
      %v2641 = vunpack.c.h.s8.bf16 %v1937
      %v2642 = vunpack.c.h.s8.bf16 %v1938
      %v2643 = vunpack.c.h.s8.bf16 %v1939
      %v2644 = vunpack.c.h.s8.bf16 %v1940
      %v2645 = vunpack.c.h.s8.bf16 %v1941
      %v2646 = vunpack.c.h.s8.bf16 %v1942
      %v2647 = vunpack.c.h.s8.bf16 %v1943
      %v2648 = vunpack.c.h.s8.bf16 %v1944
      %v2649 = vunpack.c.h.s8.bf16 %v1945
      %v2650 = vunpack.c.h.s8.bf16 %v1946
      %v2651 = vunpack.c.h.s8.bf16 %v1947
      %v2652 = vunpack.c.l.s8.bf16 %v1948
      %v2653 = vunpack.c.l.s8.bf16 %v1949
      %v2654 = vunpack.c.l.s8.bf16 %v1950
      %v2655 = vunpack.c.l.s8.bf16 %v1951
      %v2656 = vunpack.c.l.s8.bf16 %v1952
      %v2657 = vunpack.c.l.s8.bf16 %v1953
      %v2658 = vunpack.c.l.s8.bf16 %v1954
      %v2659 = vunpack.c.l.s8.bf16 %v1955
      %v2660 = vunpack.c.l.s8.bf16 %v1956
      %v2661 = vunpack.c.l.s8.bf16 %v1957
      %v2662 = vunpack.c.l.s8.bf16 %v1958
      %v2663 = vunpack.c.l.s8.bf16 %v1959
      %v2664 = vunpack.c.l.s8.bf16 %v1960
      %v2665 = vunpack.c.l.s8.bf16 %v1961
      %v2666 = vunpack.c.l.s8.bf16 %v1962
      %v2667 = vunpack.c.l.s8.bf16 %v1963
      %v2668 = vunpack.c.h.s8.bf16 %v1948
      %v2669 = vunpack.c.h.s8.bf16 %v1949
      %v2670 = vunpack.c.h.s8.bf16 %v1950
      %v2671 = vunpack.c.h.s8.bf16 %v1951
      %v2672 = vunpack.c.h.s8.bf16 %v1952
      %v2673 = vunpack.c.h.s8.bf16 %v1953
      %v2674 = vunpack.c.h.s8.bf16 %v1954
      %v2675 = vunpack.c.h.s8.bf16 %v1955
      %v2676 = vunpack.c.h.s8.bf16 %v1956
      %v2677 = vunpack.c.h.s8.bf16 %v1957
      %v2678 = vunpack.c.h.s8.bf16 %v1958
      %v2679 = vunpack.c.h.s8.bf16 %v1959
      %v2680 = vunpack.c.h.s8.bf16 %v1960
      %v2681 = vunpack.c.h.s8.bf16 %v1961
      %v2682 = vunpack.c.h.s8.bf16 %v1962
      %v2683 = vunpack.c.h.s8.bf16 %v1963
      %v2684 = vunpack.c.l.s8.bf16 %v1964
      %v2685 = vunpack.c.l.s8.bf16 %v1965
      %v2686 = vunpack.c.l.s8.bf16 %v1966
      %v2687 = vunpack.c.l.s8.bf16 %v1967
      %v2688 = vunpack.c.l.s8.bf16 %v1968
      %v2689 = vunpack.c.l.s8.bf16 %v1969
      %v2690 = vunpack.c.l.s8.bf16 %v1970
      %v2691 = vunpack.c.l.s8.bf16 %v1971
      %v2692 = vunpack.c.l.s8.bf16 %v1972
      %v2693 = vunpack.c.l.s8.bf16 %v1973
      %v2694 = vunpack.c.l.s8.bf16 %v1974
      %v2695 = vunpack.c.l.s8.bf16 %v1975
      %v2696 = vunpack.c.l.s8.bf16 %v1976
      %v2697 = vunpack.c.l.s8.bf16 %v1977
      %v2698 = vunpack.c.l.s8.bf16 %v1978
      %v2699 = vunpack.c.l.s8.bf16 %v1979
      %v2700 = vunpack.c.h.s8.bf16 %v1964
      %v2701 = vunpack.c.h.s8.bf16 %v1965
      %v2702 = vunpack.c.h.s8.bf16 %v1966
      %v2703 = vunpack.c.h.s8.bf16 %v1967
      %v2704 = vunpack.c.h.s8.bf16 %v1968
      %v2705 = vunpack.c.h.s8.bf16 %v1969
      %v2706 = vunpack.c.h.s8.bf16 %v1970
      %v2707 = vunpack.c.h.s8.bf16 %v1971
      %v2708 = vunpack.c.h.s8.bf16 %v1972
      %v2709 = vunpack.c.h.s8.bf16 %v1973
      %v2710 = vunpack.c.h.s8.bf16 %v1974
      %v2711 = vunpack.c.h.s8.bf16 %v1975
      %v2712 = vunpack.c.h.s8.bf16 %v1976
      %v2713 = vunpack.c.h.s8.bf16 %v1977
      %v2714 = vunpack.c.h.s8.bf16 %v1978
      %v2715 = vunpack.c.h.s8.bf16 %v1979
      %v2716 = vunpack.c.l.s8.bf16 %v1980
      %v2717 = vunpack.c.l.s8.bf16 %v1981
      %v2718 = vunpack.c.l.s8.bf16 %v1982
      %v2719 = vunpack.c.l.s8.bf16 %v1983
      %v2720 = vunpack.c.l.s8.bf16 %v1984
      %v2721 = vunpack.c.l.s8.bf16 %v1985
      %v2722 = vunpack.c.l.s8.bf16 %v1986
      %v2723 = vunpack.c.l.s8.bf16 %v1987
      %v2724 = vunpack.c.l.s8.bf16 %v1988
      %v2725 = vunpack.c.l.s8.bf16 %v1989
      %v2726 = vunpack.c.l.s8.bf16 %v1990
      %v2727 = vunpack.c.l.s8.bf16 %v1991
      %v2728 = vunpack.c.l.s8.bf16 %v1992
      %v2729 = vunpack.c.l.s8.bf16 %v1993
      %v2730 = vunpack.c.l.s8.bf16 %v1994
      %v2731 = vunpack.c.l.s8.bf16 %v1995
      %v2732 = vunpack.c.h.s8.bf16 %v1980
      %v2733 = vunpack.c.h.s8.bf16 %v1981
      %v2734 = vunpack.c.h.s8.bf16 %v1982
      %v2735 = vunpack.c.h.s8.bf16 %v1983
      %v2736 = vunpack.c.h.s8.bf16 %v1984
      %v2737 = vunpack.c.h.s8.bf16 %v1985
      %v2738 = vunpack.c.h.s8.bf16 %v1986
      %v2739 = vunpack.c.h.s8.bf16 %v1987
      %v2740 = vunpack.c.h.s8.bf16 %v1988
      %v2741 = vunpack.c.h.s8.bf16 %v1989
      %v2742 = vunpack.c.h.s8.bf16 %v1990
      %v2743 = vunpack.c.h.s8.bf16 %v1991
      %v2744 = vunpack.c.h.s8.bf16 %v1992
      %v2745 = vunpack.c.h.s8.bf16 %v1993
      %v2746 = vunpack.c.h.s8.bf16 %v1994
      %v2747 = vunpack.c.h.s8.bf16 %v1995
      %v2748 = vunpack.c.l.s8.bf16 %v1996
      %v2749 = vunpack.c.l.s8.bf16 %v1997
      %v2750 = vunpack.c.l.s8.bf16 %v1998
      %v2751 = vunpack.c.l.s8.bf16 %v1999
      %v2752 = vunpack.c.l.s8.bf16 %v2000
      %v2753 = vunpack.c.l.s8.bf16 %v2001
      %v2754 = vunpack.c.l.s8.bf16 %v2002
      %v2755 = vunpack.c.l.s8.bf16 %v2003
      %v2756 = vunpack.c.l.s8.bf16 %v2004
      %v2757 = vunpack.c.l.s8.bf16 %v2005
      %v2758 = vunpack.c.l.s8.bf16 %v2006
      %v2759 = vunpack.c.l.s8.bf16 %v2007
      %v2760 = vunpack.c.l.s8.bf16 %v2008
      %v2761 = vunpack.c.l.s8.bf16 %v2009
      %v2762 = vunpack.c.l.s8.bf16 %v2010
      %v2763 = vunpack.c.l.s8.bf16 %v2011
      %v2764 = vunpack.c.h.s8.bf16 %v1996
      %v2765 = vunpack.c.h.s8.bf16 %v1997
      %v2766 = vunpack.c.h.s8.bf16 %v1998
      %v2767 = vunpack.c.h.s8.bf16 %v1999
      %v2768 = vunpack.c.h.s8.bf16 %v2000
      %v2769 = vunpack.c.h.s8.bf16 %v2001
      %v2770 = vunpack.c.h.s8.bf16 %v2002
      %v2771 = vunpack.c.h.s8.bf16 %v2003
      %v2772 = vunpack.c.h.s8.bf16 %v2004
      %v2773 = vunpack.c.h.s8.bf16 %v2005
      %v2774 = vunpack.c.h.s8.bf16 %v2006
      %v2775 = vunpack.c.h.s8.bf16 %v2007
      %v2776 = vunpack.c.h.s8.bf16 %v2008
      %v2777 = vunpack.c.h.s8.bf16 %v2009
      %v2778 = vunpack.c.h.s8.bf16 %v2010
      %v2779 = vunpack.c.h.s8.bf16 %v2011
      %v2780 = vunpack.c.l.s8.bf16 %v2012
      %v2781 = vunpack.c.l.s8.bf16 %v2013
      %v2782 = vunpack.c.l.s8.bf16 %v2014
      %v2783 = vunpack.c.l.s8.bf16 %v2015
      %v2784 = vunpack.c.l.s8.bf16 %v2016
      %v2785 = vunpack.c.l.s8.bf16 %v2017
      %v2786 = vunpack.c.l.s8.bf16 %v2018
      %v2787 = vunpack.c.l.s8.bf16 %v2019
      %v2788 = vunpack.c.l.s8.bf16 %v2020
      %v2789 = vunpack.c.l.s8.bf16 %v2021
      %v2790 = vunpack.c.l.s8.bf16 %v2022
      %v2791 = vunpack.c.l.s8.bf16 %v2023
      %v2792 = vunpack.c.l.s8.bf16 %v2024
      %v2793 = vunpack.c.l.s8.bf16 %v2025
      %v2794 = vunpack.c.l.s8.bf16 %v2026
      %v2795 = vunpack.c.l.s8.bf16 %v2027
      %v2796 = vunpack.c.h.s8.bf16 %v2012
      %v2797 = vunpack.c.h.s8.bf16 %v2013
      %v2798 = vunpack.c.h.s8.bf16 %v2014
      %v2799 = vunpack.c.h.s8.bf16 %v2015
      %v2800 = vunpack.c.h.s8.bf16 %v2016
      %v2801 = vunpack.c.h.s8.bf16 %v2017
      %v2802 = vunpack.c.h.s8.bf16 %v2018
      %v2803 = vunpack.c.h.s8.bf16 %v2019
      %v2804 = vunpack.c.h.s8.bf16 %v2020
      %v2805 = vunpack.c.h.s8.bf16 %v2021
      %v2806 = vunpack.c.h.s8.bf16 %v2022
      %v2807 = vunpack.c.h.s8.bf16 %v2023
      %v2808 = vunpack.c.h.s8.bf16 %v2024
      %v2809 = vunpack.c.h.s8.bf16 %v2025
      %v2810 = vunpack.c.h.s8.bf16 %v2026
      %v2811 = vunpack.c.h.s8.bf16 %v2027
      %v2812 = vunpack.c.l.s8.bf16 %v2028
      %v2813 = vunpack.c.l.s8.bf16 %v2029
      %v2814 = vunpack.c.l.s8.bf16 %v2030
      %v2815 = vunpack.c.l.s8.bf16 %v2031
      %v2816 = vunpack.c.l.s8.bf16 %v2032
      %v2817 = vunpack.c.l.s8.bf16 %v2033
      %v2818 = vunpack.c.l.s8.bf16 %v2034
      %v2819 = vunpack.c.l.s8.bf16 %v2035
      %v2820 = vunpack.c.l.s8.bf16 %v2036
      %v2821 = vunpack.c.l.s8.bf16 %v2037
      %v2822 = vunpack.c.l.s8.bf16 %v2038
      %v2823 = vunpack.c.l.s8.bf16 %v2039
      %v2824 = vunpack.c.l.s8.bf16 %v2040
      %v2825 = vunpack.c.l.s8.bf16 %v2041
      %v2826 = vunpack.c.l.s8.bf16 %v2042
      %v2827 = vunpack.c.l.s8.bf16 %v2043
      %v2828 = vunpack.c.h.s8.bf16 %v2028
      %v2829 = vunpack.c.h.s8.bf16 %v2029
      %v2830 = vunpack.c.h.s8.bf16 %v2030
      %v2831 = vunpack.c.h.s8.bf16 %v2031
      %v2832 = vunpack.c.h.s8.bf16 %v2032
      %v2833 = vunpack.c.h.s8.bf16 %v2033
      %v2834 = vunpack.c.h.s8.bf16 %v2034
      %v2835 = vunpack.c.h.s8.bf16 %v2035
      %v2836 = vunpack.c.h.s8.bf16 %v2036
      %v2837 = vunpack.c.h.s8.bf16 %v2037
      %v2838 = vunpack.c.h.s8.bf16 %v2038
      %v2839 = vunpack.c.h.s8.bf16 %v2039
      %v2840 = vunpack.c.h.s8.bf16 %v2040
      %v2841 = vunpack.c.h.s8.bf16 %v2041
      %v2842 = vunpack.c.h.s8.bf16 %v2042
      %v2843 = vunpack.c.h.s8.bf16 %v2043
      %v2844 = vunpack.c.l.s8.bf16 %v2044
      %v2845 = vunpack.c.l.s8.bf16 %v2045
      %v2846 = vunpack.c.l.s8.bf16 %v2046
      %v2847 = vunpack.c.l.s8.bf16 %v2047
      %v2848 = vunpack.c.l.s8.bf16 %v2048
      %v2849 = vunpack.c.l.s8.bf16 %v2049
      %v2850 = vunpack.c.l.s8.bf16 %v2050
      %v2851 = vunpack.c.l.s8.bf16 %v2051
      %v2852 = vunpack.c.l.s8.bf16 %v2052
      %v2853 = vunpack.c.l.s8.bf16 %v2053
      %v2854 = vunpack.c.l.s8.bf16 %v2054
      %v2855 = vunpack.c.l.s8.bf16 %v2055
      %v2856 = vunpack.c.l.s8.bf16 %v2056
      %v2857 = vunpack.c.l.s8.bf16 %v2057
      %v2858 = vunpack.c.l.s8.bf16 %v2058
      %v2859 = vunpack.c.l.s8.bf16 %v2059
      %v2860 = vunpack.c.h.s8.bf16 %v2044
      %v2861 = vunpack.c.h.s8.bf16 %v2045
      %v2862 = vunpack.c.h.s8.bf16 %v2046
      %v2863 = vunpack.c.h.s8.bf16 %v2047
      %v2864 = vunpack.c.h.s8.bf16 %v2048
      %v2865 = vunpack.c.h.s8.bf16 %v2049
      %v2866 = vunpack.c.h.s8.bf16 %v2050
      %v2867 = vunpack.c.h.s8.bf16 %v2051
      %v2868 = vunpack.c.h.s8.bf16 %v2052
      %v2869 = vunpack.c.h.s8.bf16 %v2053
      %v2870 = vunpack.c.h.s8.bf16 %v2054
      %v2871 = vunpack.c.h.s8.bf16 %v2055
      %v2872 = vunpack.c.h.s8.bf16 %v2056
      %v2873 = vunpack.c.h.s8.bf16 %v2057
      %v2874 = vunpack.c.h.s8.bf16 %v2058
      %v2875 = vunpack.c.h.s8.bf16 %v2059
      %v2876 = vunpack.c.l.s8.bf16 %v2060
      %v2877 = vunpack.c.l.s8.bf16 %v2061
      %v2878 = vunpack.c.l.s8.bf16 %v2062
      %v2879 = vunpack.c.l.s8.bf16 %v2063
      %v2880 = vunpack.c.l.s8.bf16 %v2064
      %v2881 = vunpack.c.l.s8.bf16 %v2065
      %v2882 = vunpack.c.l.s8.bf16 %v2066
      %v2883 = vunpack.c.l.s8.bf16 %v2067
      %v2884 = vunpack.c.l.s8.bf16 %v2068
      %v2885 = vunpack.c.l.s8.bf16 %v2069
      %v2886 = vunpack.c.l.s8.bf16 %v2070
      %v2887 = vunpack.c.l.s8.bf16 %v2071
      %v2888 = vunpack.c.l.s8.bf16 %v2072
      %v2889 = vunpack.c.l.s8.bf16 %v2073
      %v2890 = vunpack.c.l.s8.bf16 %v2074
      %v2891 = vunpack.c.l.s8.bf16 %v2075
      %v2892 = vunpack.c.h.s8.bf16 %v2060
      %v2893 = vunpack.c.h.s8.bf16 %v2061
      %v2894 = vunpack.c.h.s8.bf16 %v2062
      %v2895 = vunpack.c.h.s8.bf16 %v2063
      %v2896 = vunpack.c.h.s8.bf16 %v2064
      %v2897 = vunpack.c.h.s8.bf16 %v2065
      %v2898 = vunpack.c.h.s8.bf16 %v2066
      %v2899 = vunpack.c.h.s8.bf16 %v2067
      %v2900 = vunpack.c.h.s8.bf16 %v2068
      %v2901 = vunpack.c.h.s8.bf16 %v2069
      %v2902 = vunpack.c.h.s8.bf16 %v2070
      %v2903 = vunpack.c.h.s8.bf16 %v2071
      %v2904 = vunpack.c.h.s8.bf16 %v2072
      %v2905 = vunpack.c.h.s8.bf16 %v2073
      %v2906 = vunpack.c.h.s8.bf16 %v2074
      %v2907 = vunpack.c.h.s8.bf16 %v2075
      %v2908 = vunpack.c.l.s8.bf16 %v2076
      %v2909 = vunpack.c.l.s8.bf16 %v2077
      %v2910 = vunpack.c.l.s8.bf16 %v2078
      %v2911 = vunpack.c.l.s8.bf16 %v2079
      %v2912 = vunpack.c.l.s8.bf16 %v2080
      %v2913 = vunpack.c.l.s8.bf16 %v2081
      %v2914 = vunpack.c.l.s8.bf16 %v2082
      %v2915 = vunpack.c.l.s8.bf16 %v2083
      %v2916 = vunpack.c.l.s8.bf16 %v2084
      %v2917 = vunpack.c.l.s8.bf16 %v2085
      %v2918 = vunpack.c.l.s8.bf16 %v2086
      %v2919 = vunpack.c.l.s8.bf16 %v2087
      %v2920 = vunpack.c.l.s8.bf16 %v2088
      %v2921 = vunpack.c.l.s8.bf16 %v2089
      %v2922 = vunpack.c.l.s8.bf16 %v2090
      %v2923 = vunpack.c.l.s8.bf16 %v2091
      %v2924 = vunpack.c.h.s8.bf16 %v2076
      %v2925 = vunpack.c.h.s8.bf16 %v2077
      %v2926 = vunpack.c.h.s8.bf16 %v2078
      %v2927 = vunpack.c.h.s8.bf16 %v2079
      %v2928 = vunpack.c.h.s8.bf16 %v2080
      %v2929 = vunpack.c.h.s8.bf16 %v2081
      %v2930 = vunpack.c.h.s8.bf16 %v2082
      %v2931 = vunpack.c.h.s8.bf16 %v2083
      %v2932 = vunpack.c.h.s8.bf16 %v2084
      %v2933 = vunpack.c.h.s8.bf16 %v2085
      %v2934 = vunpack.c.h.s8.bf16 %v2086
      %v2935 = vunpack.c.h.s8.bf16 %v2087
      %v2936 = vunpack.c.h.s8.bf16 %v2088
      %v2937 = vunpack.c.h.s8.bf16 %v2089
      %v2938 = vunpack.c.h.s8.bf16 %v2090
      %v2939 = vunpack.c.h.s8.bf16 %v2091
      %v2940 = vunpack.c.l.s8.bf16 %v2092
      %v2941 = vunpack.c.l.s8.bf16 %v2093
      %v2942 = vunpack.c.l.s8.bf16 %v2094
      %v2943 = vunpack.c.l.s8.bf16 %v2095
      %v2944 = vunpack.c.l.s8.bf16 %v2096
      %v2945 = vunpack.c.l.s8.bf16 %v2097
      %v2946 = vunpack.c.l.s8.bf16 %v2098
      %v2947 = vunpack.c.l.s8.bf16 %v2099
      %v2948 = vunpack.c.l.s8.bf16 %v2100
      %v2949 = vunpack.c.l.s8.bf16 %v2101
      %v2950 = vunpack.c.l.s8.bf16 %v2102
      %v2951 = vunpack.c.l.s8.bf16 %v2103
      %v2952 = vunpack.c.l.s8.bf16 %v2104
      %v2953 = vunpack.c.l.s8.bf16 %v2105
      %v2954 = vunpack.c.l.s8.bf16 %v2106
      %v2955 = vunpack.c.l.s8.bf16 %v2107
      %v2956 = vunpack.c.h.s8.bf16 %v2092
      %v2957 = vunpack.c.h.s8.bf16 %v2093
      %v2958 = vunpack.c.h.s8.bf16 %v2094
      %v2959 = vunpack.c.h.s8.bf16 %v2095
      %v2960 = vunpack.c.h.s8.bf16 %v2096
      %v2961 = vunpack.c.h.s8.bf16 %v2097
      %v2962 = vunpack.c.h.s8.bf16 %v2098
      %v2963 = vunpack.c.h.s8.bf16 %v2099
      %v2964 = vunpack.c.h.s8.bf16 %v2100
      %v2965 = vunpack.c.h.s8.bf16 %v2101
      %v2966 = vunpack.c.h.s8.bf16 %v2102
      %v2967 = vunpack.c.h.s8.bf16 %v2103
      %v2968 = vunpack.c.h.s8.bf16 %v2104
      %v2969 = vunpack.c.h.s8.bf16 %v2105
      %v2970 = vunpack.c.h.s8.bf16 %v2106
      %v2971 = vunpack.c.h.s8.bf16 %v2107
      %v2972 = vunpack.c.l.s8.bf16 %v2108
      %v2973 = vunpack.c.l.s8.bf16 %v2109
      %v2974 = vunpack.c.l.s8.bf16 %v2110
      %v2975 = vunpack.c.l.s8.bf16 %v2111
      %v2976 = vunpack.c.l.s8.bf16 %v2112
      %v2977 = vunpack.c.l.s8.bf16 %v2113
      %v2978 = vunpack.c.l.s8.bf16 %v2114
      %v2979 = vunpack.c.l.s8.bf16 %v2115
      %v2980 = vunpack.c.l.s8.bf16 %v2116
      %v2981 = vunpack.c.l.s8.bf16 %v2117
      %v2982 = vunpack.c.l.s8.bf16 %v2118
      %v2983 = vunpack.c.l.s8.bf16 %v2119
      %v2984 = vunpack.c.l.s8.bf16 %v2120
      %v2985 = vunpack.c.l.s8.bf16 %v2121
      %v2986 = vunpack.c.l.s8.bf16 %v2122
      %v2987 = vunpack.c.l.s8.bf16 %v2123
      %v2988 = vunpack.c.h.s8.bf16 %v2108
      %v2989 = vunpack.c.h.s8.bf16 %v2109
      %v2990 = vunpack.c.h.s8.bf16 %v2110
      %v2991 = vunpack.c.h.s8.bf16 %v2111
      %v2992 = vunpack.c.h.s8.bf16 %v2112
      %v2993 = vunpack.c.h.s8.bf16 %v2113
      %v2994 = vunpack.c.h.s8.bf16 %v2114
      %v2995 = vunpack.c.h.s8.bf16 %v2115
      %v2996 = vunpack.c.h.s8.bf16 %v2116
      %v2997 = vunpack.c.h.s8.bf16 %v2117
      %v2998 = vunpack.c.h.s8.bf16 %v2118
      %v2999 = vunpack.c.h.s8.bf16 %v2119
      %v3000 = vunpack.c.h.s8.bf16 %v2120
      %v3001 = vunpack.c.h.s8.bf16 %v2121
      %v3002 = vunpack.c.h.s8.bf16 %v2122
      %v3003 = vunpack.c.h.s8.bf16 %v2123
      %v3004 = vunpack.c.l.s8.bf16 %v2124
      %v3005 = vunpack.c.l.s8.bf16 %v2125
      %v3006 = vunpack.c.l.s8.bf16 %v2126
      %v3007 = vunpack.c.l.s8.bf16 %v2127
      %v3008 = vunpack.c.l.s8.bf16 %v2128
      %v3009 = vunpack.c.l.s8.bf16 %v2129
      %v3010 = vunpack.c.l.s8.bf16 %v2130
      %v3011 = vunpack.c.l.s8.bf16 %v2131
      %v3012 = vunpack.c.l.s8.bf16 %v2132
      %v3013 = vunpack.c.l.s8.bf16 %v2133
      %v3014 = vunpack.c.l.s8.bf16 %v2134
      %v3015 = vunpack.c.l.s8.bf16 %v2135
      %v3016 = vunpack.c.l.s8.bf16 %v2136
      %v3017 = vunpack.c.l.s8.bf16 %v2137
      %v3018 = vunpack.c.l.s8.bf16 %v2138
      %v3019 = vunpack.c.l.s8.bf16 %v2139
      %v3020 = vunpack.c.h.s8.bf16 %v2124
      %v3021 = vunpack.c.h.s8.bf16 %v2125
      %v3022 = vunpack.c.h.s8.bf16 %v2126
      %v3023 = vunpack.c.h.s8.bf16 %v2127
      %v3024 = vunpack.c.h.s8.bf16 %v2128
      %v3025 = vunpack.c.h.s8.bf16 %v2129
      %v3026 = vunpack.c.h.s8.bf16 %v2130
      %v3027 = vunpack.c.h.s8.bf16 %v2131
      %v3028 = vunpack.c.h.s8.bf16 %v2132
      %v3029 = vunpack.c.h.s8.bf16 %v2133
      %v3030 = vunpack.c.h.s8.bf16 %v2134
      %v3031 = vunpack.c.h.s8.bf16 %v2135
      %v3032 = vunpack.c.h.s8.bf16 %v2136
      %v3033 = vunpack.c.h.s8.bf16 %v2137
      %v3034 = vunpack.c.h.s8.bf16 %v2138
      %v3035 = vunpack.c.h.s8.bf16 %v2139
      %v3036 = vunpack.c.l.s8.bf16 %v2140
      %v3037 = vunpack.c.l.s8.bf16 %v2141
      %v3038 = vunpack.c.l.s8.bf16 %v2142
      %v3039 = vunpack.c.l.s8.bf16 %v2143
      %v3040 = vunpack.c.l.s8.bf16 %v2144
      %v3041 = vunpack.c.l.s8.bf16 %v2145
      %v3042 = vunpack.c.l.s8.bf16 %v2146
      %v3043 = vunpack.c.l.s8.bf16 %v2147
      %v3044 = vunpack.c.l.s8.bf16 %v2148
      %v3045 = vunpack.c.l.s8.bf16 %v2149
      %v3046 = vunpack.c.l.s8.bf16 %v2150
      %v3047 = vunpack.c.l.s8.bf16 %v2151
      %v3048 = vunpack.c.l.s8.bf16 %v2152
      %v3049 = vunpack.c.l.s8.bf16 %v2153
      %v3050 = vunpack.c.l.s8.bf16 %v2154
      %v3051 = vunpack.c.l.s8.bf16 %v2155
      %v3052 = vunpack.c.h.s8.bf16 %v2140
      %v3053 = vunpack.c.h.s8.bf16 %v2141
      %v3054 = vunpack.c.h.s8.bf16 %v2142
      %v3055 = vunpack.c.h.s8.bf16 %v2143
      %v3056 = vunpack.c.h.s8.bf16 %v2144
      %v3057 = vunpack.c.h.s8.bf16 %v2145
      %v3058 = vunpack.c.h.s8.bf16 %v2146
      %v3059 = vunpack.c.h.s8.bf16 %v2147
      %v3060 = vunpack.c.h.s8.bf16 %v2148
      %v3061 = vunpack.c.h.s8.bf16 %v2149
      %v3062 = vunpack.c.h.s8.bf16 %v2150
      %v3063 = vunpack.c.h.s8.bf16 %v2151
      %v3064 = vunpack.c.h.s8.bf16 %v2152
      %v3065 = vunpack.c.h.s8.bf16 %v2153
      %v3066 = vunpack.c.h.s8.bf16 %v2154
      %v3067 = vunpack.c.h.s8.bf16 %v2155
      %v3068 = vunpack.c.l.s8.bf16 %v2156
      %v3069 = vunpack.c.l.s8.bf16 %v2157
      %v3070 = vunpack.c.l.s8.bf16 %v2158
      %v3071 = vunpack.c.l.s8.bf16 %v2159
      %v3072 = vunpack.c.l.s8.bf16 %v2160
      %v3073 = vunpack.c.l.s8.bf16 %v2161
      %v3074 = vunpack.c.l.s8.bf16 %v2162
      %v3075 = vunpack.c.l.s8.bf16 %v2163
      %v3076 = vunpack.c.l.s8.bf16 %v2164
      %v3077 = vunpack.c.l.s8.bf16 %v2165
      %v3078 = vunpack.c.l.s8.bf16 %v2166
      %v3079 = vunpack.c.l.s8.bf16 %v2167
      %v3080 = vunpack.c.l.s8.bf16 %v2168
      %v3081 = vunpack.c.l.s8.bf16 %v2169
      %v3082 = vunpack.c.l.s8.bf16 %v2170
      %v3083 = vunpack.c.l.s8.bf16 %v2171
      %v3084 = vunpack.c.h.s8.bf16 %v2156
      %v3085 = vunpack.c.h.s8.bf16 %v2157
      %v3086 = vunpack.c.h.s8.bf16 %v2158
      %v3087 = vunpack.c.h.s8.bf16 %v2159
      %v3088 = vunpack.c.h.s8.bf16 %v2160
      %v3089 = vunpack.c.h.s8.bf16 %v2161
      %v3090 = vunpack.c.h.s8.bf16 %v2162
      %v3091 = vunpack.c.h.s8.bf16 %v2163
      %v3092 = vunpack.c.h.s8.bf16 %v2164
      %v3093 = vunpack.c.h.s8.bf16 %v2165
      %v3094 = vunpack.c.h.s8.bf16 %v2166
      %v3095 = vunpack.c.h.s8.bf16 %v2167
      %v3096 = vunpack.c.h.s8.bf16 %v2168
      %v3097 = vunpack.c.h.s8.bf16 %v2169
      %v3098 = vunpack.c.h.s8.bf16 %v2170
      %v3099 = vunpack.c.h.s8.bf16 %v2171
      %v3100 = vunpack.c.l.s8.bf16 %v2172
      %v3101 = vunpack.c.l.s8.bf16 %v2173
      %v3102 = vunpack.c.l.s8.bf16 %v2174
      %v3103 = vunpack.c.l.s8.bf16 %v2175
      %v3104 = vunpack.c.l.s8.bf16 %v2176
      %v3105 = vunpack.c.l.s8.bf16 %v2177
      %v3106 = vunpack.c.l.s8.bf16 %v2178
      %v3107 = vunpack.c.l.s8.bf16 %v2179
      %v3108 = vunpack.c.l.s8.bf16 %v2180
      %v3109 = vunpack.c.l.s8.bf16 %v2181
      %v3110 = vunpack.c.l.s8.bf16 %v2182
      %v3111 = vunpack.c.l.s8.bf16 %v2183
      %v3112 = vunpack.c.l.s8.bf16 %v2184
      %v3113 = vunpack.c.l.s8.bf16 %v2185
      %v3114 = vunpack.c.l.s8.bf16 %v2186
      %v3115 = vunpack.c.l.s8.bf16 %v2187
      %v3116 = vunpack.c.h.s8.bf16 %v2172
      %v3117 = vunpack.c.h.s8.bf16 %v2173
      %v3118 = vunpack.c.h.s8.bf16 %v2174
      %v3119 = vunpack.c.h.s8.bf16 %v2175
      %v3120 = vunpack.c.h.s8.bf16 %v2176
      %v3121 = vunpack.c.h.s8.bf16 %v2177
      %v3122 = vunpack.c.h.s8.bf16 %v2178
      %v3123 = vunpack.c.h.s8.bf16 %v2179
      %v3124 = vunpack.c.h.s8.bf16 %v2180
      %v3125 = vunpack.c.h.s8.bf16 %v2181
      %v3126 = vunpack.c.h.s8.bf16 %v2182
      %v3127 = vunpack.c.h.s8.bf16 %v2183
      %v3128 = vunpack.c.h.s8.bf16 %v2184
      %v3129 = vunpack.c.h.s8.bf16 %v2185
      %v3130 = vunpack.c.h.s8.bf16 %v2186
      %v3131 = vunpack.c.h.s8.bf16 %v2187
      %v3132 = vunpack.c.l.s8.bf16 %v2188
      %v3133 = vunpack.c.l.s8.bf16 %v2189
      %v3134 = vunpack.c.l.s8.bf16 %v2190
      %v3135 = vunpack.c.l.s8.bf16 %v2191
      %v3136 = vunpack.c.l.s8.bf16 %v2192
      %v3137 = vunpack.c.l.s8.bf16 %v2193
      %v3138 = vunpack.c.l.s8.bf16 %v2194
      %v3139 = vunpack.c.l.s8.bf16 %v2195
      %v3140 = vunpack.c.l.s8.bf16 %v2196
      %v3141 = vunpack.c.l.s8.bf16 %v2197
      %v3142 = vunpack.c.l.s8.bf16 %v2198
      %v3143 = vunpack.c.l.s8.bf16 %v2199
      %v3144 = vunpack.c.l.s8.bf16 %v2200
      %v3145 = vunpack.c.l.s8.bf16 %v2201
      %v3146 = vunpack.c.l.s8.bf16 %v2202
      %v3147 = vunpack.c.l.s8.bf16 %v2203
      %v3148 = vunpack.c.h.s8.bf16 %v2188
      %v3149 = vunpack.c.h.s8.bf16 %v2189
      %v3150 = vunpack.c.h.s8.bf16 %v2190
      %v3151 = vunpack.c.h.s8.bf16 %v2191
      %v3152 = vunpack.c.h.s8.bf16 %v2192
      %v3153 = vunpack.c.h.s8.bf16 %v2193
      %v3154 = vunpack.c.h.s8.bf16 %v2194
      %v3155 = vunpack.c.h.s8.bf16 %v2195
      %v3156 = vunpack.c.h.s8.bf16 %v2196
      %v3157 = vunpack.c.h.s8.bf16 %v2197
      %v3158 = vunpack.c.h.s8.bf16 %v2198
      %v3159 = vunpack.c.h.s8.bf16 %v2199
      %v3160 = vunpack.c.h.s8.bf16 %v2200
      %v3161 = vunpack.c.h.s8.bf16 %v2201
      %v3162 = vunpack.c.h.s8.bf16 %v2202
      %v3163 = vunpack.c.h.s8.bf16 %v2203
      %v3164 = vunpack.c.l.s8.bf16 %v2204
      %v3165 = vunpack.c.l.s8.bf16 %v2205
      %v3166 = vunpack.c.l.s8.bf16 %v2206
      %v3167 = vunpack.c.l.s8.bf16 %v2207
      %v3168 = vunpack.c.l.s8.bf16 %v2208
      %v3169 = vunpack.c.l.s8.bf16 %v2209
      %v3170 = vunpack.c.l.s8.bf16 %v2210
      %v3171 = vunpack.c.l.s8.bf16 %v2211
      %v3172 = vunpack.c.l.s8.bf16 %v2212
      %v3173 = vunpack.c.l.s8.bf16 %v2213
      %v3174 = vunpack.c.l.s8.bf16 %v2214
      %v3175 = vunpack.c.l.s8.bf16 %v2215
      %v3176 = vunpack.c.l.s8.bf16 %v2216
      %v3177 = vunpack.c.l.s8.bf16 %v2217
      %v3178 = vunpack.c.l.s8.bf16 %v2218
      %v3179 = vunpack.c.l.s8.bf16 %v2219
      %v3180 = vunpack.c.h.s8.bf16 %v2204
      %v3181 = vunpack.c.h.s8.bf16 %v2205
      %v3182 = vunpack.c.h.s8.bf16 %v2206
      %v3183 = vunpack.c.h.s8.bf16 %v2207
      %v3184 = vunpack.c.h.s8.bf16 %v2208
      %v3185 = vunpack.c.h.s8.bf16 %v2209
      %v3186 = vunpack.c.h.s8.bf16 %v2210
      %v3187 = vunpack.c.h.s8.bf16 %v2211
      %v3188 = vunpack.c.h.s8.bf16 %v2212
      %v3189 = vunpack.c.h.s8.bf16 %v2213
      %v3190 = vunpack.c.h.s8.bf16 %v2214
      %v3191 = vunpack.c.h.s8.bf16 %v2215
      %v3192 = vunpack.c.h.s8.bf16 %v2216
      %v3193 = vunpack.c.h.s8.bf16 %v2217
      %v3194 = vunpack.c.h.s8.bf16 %v2218
      %v3195 = vunpack.c.h.s8.bf16 %v2219
      %v3196 = vunpack.c.l.s8.bf16 %v2220
      %v3197 = vunpack.c.l.s8.bf16 %v2221
      %v3198 = vunpack.c.l.s8.bf16 %v2222
      %v3199 = vunpack.c.l.s8.bf16 %v2223
      %v3200 = vunpack.c.l.s8.bf16 %v2224
      %v3201 = vunpack.c.l.s8.bf16 %v2225
      %v3202 = vunpack.c.l.s8.bf16 %v2226
      %v3203 = vunpack.c.l.s8.bf16 %v2227
      %v3204 = vunpack.c.l.s8.bf16 %v2228
      %v3205 = vunpack.c.l.s8.bf16 %v2229
      %v3206 = vunpack.c.l.s8.bf16 %v2230
      %v3207 = vunpack.c.l.s8.bf16 %v2231
      %v3208 = vunpack.c.l.s8.bf16 %v2232
      %v3209 = vunpack.c.l.s8.bf16 %v2233
      %v3210 = vunpack.c.l.s8.bf16 %v2234
      %v3211 = vunpack.c.l.s8.bf16 %v2235
      %v3212 = vunpack.c.h.s8.bf16 %v2220
      %v3213 = vunpack.c.h.s8.bf16 %v2221
      %v3214 = vunpack.c.h.s8.bf16 %v2222
      %v3215 = vunpack.c.h.s8.bf16 %v2223
      %v3216 = vunpack.c.h.s8.bf16 %v2224
      %v3217 = vunpack.c.h.s8.bf16 %v2225
      %v3218 = vunpack.c.h.s8.bf16 %v2226
      %v3219 = vunpack.c.h.s8.bf16 %v2227
      %v3220 = vunpack.c.h.s8.bf16 %v2228
      %v3221 = vunpack.c.h.s8.bf16 %v2229
      %v3222 = vunpack.c.h.s8.bf16 %v2230
      %v3223 = vunpack.c.h.s8.bf16 %v2231
      %v3224 = vunpack.c.h.s8.bf16 %v2232
      %v3225 = vunpack.c.h.s8.bf16 %v2233
      %v3226 = vunpack.c.h.s8.bf16 %v2234
      %v3227 = vunpack.c.h.s8.bf16 %v2235
      %v3228 = vunpack.c.l.s8.bf16 %v2236
      %v3229 = vunpack.c.l.s8.bf16 %v2237
      %v3230 = vunpack.c.l.s8.bf16 %v2238
      %v3231 = vunpack.c.l.s8.bf16 %v2239
      %v3232 = vunpack.c.l.s8.bf16 %v2240
      %v3233 = vunpack.c.l.s8.bf16 %v2241
      %v3234 = vunpack.c.l.s8.bf16 %v2242
      %v3235 = vunpack.c.l.s8.bf16 %v2243
      %v3236 = vunpack.c.l.s8.bf16 %v2244
      %v3237 = vunpack.c.l.s8.bf16 %v2245
      %v3238 = vunpack.c.l.s8.bf16 %v2246
      %v3239 = vunpack.c.l.s8.bf16 %v2247
      %v3240 = vunpack.c.l.s8.bf16 %v2248
      %v3241 = vunpack.c.l.s8.bf16 %v2249
      %v3242 = vunpack.c.l.s8.bf16 %v2250
      %v3243 = vunpack.c.l.s8.bf16 %v2251
      %v3244 = vunpack.c.h.s8.bf16 %v2236
      %v3245 = vunpack.c.h.s8.bf16 %v2237
      %v3246 = vunpack.c.h.s8.bf16 %v2238
      %v3247 = vunpack.c.h.s8.bf16 %v2239
      %v3248 = vunpack.c.h.s8.bf16 %v2240
      %v3249 = vunpack.c.h.s8.bf16 %v2241
      %v3250 = vunpack.c.h.s8.bf16 %v2242
      %v3251 = vunpack.c.h.s8.bf16 %v2243
      %v3252 = vunpack.c.h.s8.bf16 %v2244
      %v3253 = vunpack.c.h.s8.bf16 %v2245
      %v3254 = vunpack.c.h.s8.bf16 %v2246
      %v3255 = vunpack.c.h.s8.bf16 %v2247
      %v3256 = vunpack.c.h.s8.bf16 %v2248
      %v3257 = vunpack.c.h.s8.bf16 %v2249
      %v3258 = vunpack.c.h.s8.bf16 %v2250
      %v3259 = vunpack.c.h.s8.bf16 %v2251
      %v3260 = vunpack.c.l.s8.bf16 %v2252
      %v3261 = vunpack.c.l.s8.bf16 %v2253
      %v3262 = vunpack.c.l.s8.bf16 %v2254
      %v3263 = vunpack.c.l.s8.bf16 %v2255
      %v3264 = vunpack.c.l.s8.bf16 %v2256
      %v3265 = vunpack.c.l.s8.bf16 %v2257
      %v3266 = vunpack.c.l.s8.bf16 %v2258
      %v3267 = vunpack.c.l.s8.bf16 %v2259
      %v3268 = vunpack.c.l.s8.bf16 %v2260
      %v3269 = vunpack.c.l.s8.bf16 %v2261
      %v3270 = vunpack.c.l.s8.bf16 %v2262
      %v3271 = vunpack.c.l.s8.bf16 %v2263
      %v3272 = vunpack.c.l.s8.bf16 %v2264
      %v3273 = vunpack.c.l.s8.bf16 %v2265
      %v3274 = vunpack.c.l.s8.bf16 %v2266
      %v3275 = vunpack.c.l.s8.bf16 %v2267
      %v3276 = vunpack.c.h.s8.bf16 %v2252
      %v3277 = vunpack.c.h.s8.bf16 %v2253
      %v3278 = vunpack.c.h.s8.bf16 %v2254
      %v3279 = vunpack.c.h.s8.bf16 %v2255
      %v3280 = vunpack.c.h.s8.bf16 %v2256
      %v3281 = vunpack.c.h.s8.bf16 %v2257
      %v3282 = vunpack.c.h.s8.bf16 %v2258
      %v3283 = vunpack.c.h.s8.bf16 %v2259
      %v3284 = vunpack.c.h.s8.bf16 %v2260
      %v3285 = vunpack.c.h.s8.bf16 %v2261
      %v3286 = vunpack.c.h.s8.bf16 %v2262
      %v3287 = vunpack.c.h.s8.bf16 %v2263
      %v3288 = vunpack.c.h.s8.bf16 %v2264
      %v3289 = vunpack.c.h.s8.bf16 %v2265
      %v3290 = vunpack.c.h.s8.bf16 %v2266
      %v3291 = vunpack.c.h.s8.bf16 %v2267
      %3292 = vst [vmem:[#allocation8] sm:$0xff] %v2268
      %3293 = vst [vmem:[#allocation8 + $0x8] sm:$0xff] %v2269
      %3294 = vst [vmem:[#allocation8 + $0x10] sm:$0xff] %v2270
      %3295 = vst [vmem:[#allocation8 + $0x18] sm:$0xff] %v2271
      %3296 = vst [vmem:[#allocation8 + $0x20] sm:$0xff] %v2272
      %3297 = vst [vmem:[#allocation8 + $0x28] sm:$0xff] %v2273
      %3298 = vst [vmem:[#allocation8 + $0x30] sm:$0xff] %v2274
      %3299 = vst [vmem:[#allocation8 + $0x38] sm:$0xff] %v2275
      %3300 = vst [vmem:[#allocation8 + $0x40] sm:$0xff] %v2276
      %3301 = vst [vmem:[#allocation8 + $0x48] sm:$0xff] %v2277
      %3302 = vst [vmem:[#allocation8 + $0x50] sm:$0xff] %v2278
      %3303 = vst [vmem:[#allocation8 + $0x58] sm:$0xff] %v2279
      %3304 = vst [vmem:[#allocation8 + $0x60] sm:$0xff] %v2280
      %3305 = vst [vmem:[#allocation8 + $0x68] sm:$0xff] %v2281
      %3306 = vst [vmem:[#allocation8 + $0x70] sm:$0xff] %v2282
      %3307 = vst [vmem:[#allocation8 + $0x78] sm:$0xff] %v2283
      %3308 = vst [vmem:[#allocation8 + $0x80] sm:$0xff] %v2284
      %3309 = vst [vmem:[#allocation8 + $0x88] sm:$0xff] %v2285
      %3310 = vst [vmem:[#allocation8 + $0x90] sm:$0xff] %v2286
      %3311 = vst [vmem:[#allocation8 + $0x98] sm:$0xff] %v2287
      %3312 = vst [vmem:[#allocation8 + $0xa0] sm:$0xff] %v2288
      %3313 = vst [vmem:[#allocation8 + $0xa8] sm:$0xff] %v2289
      %3314 = vst [vmem:[#allocation8 + $0xb0] sm:$0xff] %v2290
      %3315 = vst [vmem:[#allocation8 + $0xb8] sm:$0xff] %v2291
      %3316 = vst [vmem:[#allocation8 + $0xc0] sm:$0xff] %v2292
      %3317 = vst [vmem:[#allocation8 + $0xc8] sm:$0xff] %v2293
      %3318 = vst [vmem:[#allocation8 + $0xd0] sm:$0xff] %v2294
      %3319 = vst [vmem:[#allocation8 + $0xd8] sm:$0xff] %v2295
      %3320 = vst [vmem:[#allocation8 + $0xe0] sm:$0xff] %v2296
      %3321 = vst [vmem:[#allocation8 + $0xe8] sm:$0xff] %v2297
      %3322 = vst [vmem:[#allocation8 + $0xf0] sm:$0xff] %v2298
      %3323 = vst [vmem:[#allocation8 + $0xf8] sm:$0xff] %v2299
      %3324 = vst [vmem:[#allocation8 + $0x100] sm:$0xff] %v2300
      %3325 = vst [vmem:[#allocation8 + $0x108] sm:$0xff] %v2301
      %3326 = vst [vmem:[#allocation8 + $0x110] sm:$0xff] %v2302
      %3327 = vst [vmem:[#allocation8 + $0x118] sm:$0xff] %v2303
      %3328 = vst [vmem:[#allocation8 + $0x120] sm:$0xff] %v2304
      %3329 = vst [vmem:[#allocation8 + $0x128] sm:$0xff] %v2305
      %3330 = vst [vmem:[#allocation8 + $0x130] sm:$0xff] %v2306
      %3331 = vst [vmem:[#allocation8 + $0x138] sm:$0xff] %v2307
      %3332 = vst [vmem:[#allocation8 + $0x140] sm:$0xff] %v2308
      %3333 = vst [vmem:[#allocation8 + $0x148] sm:$0xff] %v2309
      %3334 = vst [vmem:[#allocation8 + $0x150] sm:$0xff] %v2310
      %3335 = vst [vmem:[#allocation8 + $0x158] sm:$0xff] %v2311
      %3336 = vst [vmem:[#allocation8 + $0x160] sm:$0xff] %v2312
      %3337 = vst [vmem:[#allocation8 + $0x168] sm:$0xff] %v2313
      %3338 = vst [vmem:[#allocation8 + $0x170] sm:$0xff] %v2314
      %3339 = vst [vmem:[#allocation8 + $0x178] sm:$0xff] %v2315
      %3340 = vst [vmem:[#allocation8 + $0x180] sm:$0xff] %v2316
      %3341 = vst [vmem:[#allocation8 + $0x188] sm:$0xff] %v2317
      %3342 = vst [vmem:[#allocation8 + $0x190] sm:$0xff] %v2318
      %3343 = vst [vmem:[#allocation8 + $0x198] sm:$0xff] %v2319
      %3344 = vst [vmem:[#allocation8 + $0x1a0] sm:$0xff] %v2320
      %3345 = vst [vmem:[#allocation8 + $0x1a8] sm:$0xff] %v2321
      %3346 = vst [vmem:[#allocation8 + $0x1b0] sm:$0xff] %v2322
      %3347 = vst [vmem:[#allocation8 + $0x1b8] sm:$0xff] %v2323
      %3348 = vst [vmem:[#allocation8 + $0x1c0] sm:$0xff] %v2324
      %3349 = vst [vmem:[#allocation8 + $0x1c8] sm:$0xff] %v2325
      %3350 = vst [vmem:[#allocation8 + $0x1d0] sm:$0xff] %v2326
      %3351 = vst [vmem:[#allocation8 + $0x1d8] sm:$0xff] %v2327
      %3352 = vst [vmem:[#allocation8 + $0x1e0] sm:$0xff] %v2328
      %3353 = vst [vmem:[#allocation8 + $0x1e8] sm:$0xff] %v2329
      %3354 = vst [vmem:[#allocation8 + $0x1f0] sm:$0xff] %v2330
      %3355 = vst [vmem:[#allocation8 + $0x1f8] sm:$0xff] %v2331
      %3356 = vst [vmem:[#allocation8 + $0x200] sm:$0xff] %v2332
      %3357 = vst [vmem:[#allocation8 + $0x208] sm:$0xff] %v2333
      %3358 = vst [vmem:[#allocation8 + $0x210] sm:$0xff] %v2334
      %3359 = vst [vmem:[#allocation8 + $0x218] sm:$0xff] %v2335
      %3360 = vst [vmem:[#allocation8 + $0x220] sm:$0xff] %v2336
      %3361 = vst [vmem:[#allocation8 + $0x228] sm:$0xff] %v2337
      %3362 = vst [vmem:[#allocation8 + $0x230] sm:$0xff] %v2338
      %3363 = vst [vmem:[#allocation8 + $0x238] sm:$0xff] %v2339
      %3364 = vst [vmem:[#allocation8 + $0x240] sm:$0xff] %v2340
      %3365 = vst [vmem:[#allocation8 + $0x248] sm:$0xff] %v2341
      %3366 = vst [vmem:[#allocation8 + $0x250] sm:$0xff] %v2342
      %3367 = vst [vmem:[#allocation8 + $0x258] sm:$0xff] %v2343
      %3368 = vst [vmem:[#allocation8 + $0x260] sm:$0xff] %v2344
      %3369 = vst [vmem:[#allocation8 + $0x268] sm:$0xff] %v2345
      %3370 = vst [vmem:[#allocation8 + $0x270] sm:$0xff] %v2346
      %3371 = vst [vmem:[#allocation8 + $0x278] sm:$0xff] %v2347
      %3372 = vst [vmem:[#allocation8 + $0x280] sm:$0xff] %v2348
      %3373 = vst [vmem:[#allocation8 + $0x288] sm:$0xff] %v2349
      %3374 = vst [vmem:[#allocation8 + $0x290] sm:$0xff] %v2350
      %3375 = vst [vmem:[#allocation8 + $0x298] sm:$0xff] %v2351
      %3376 = vst [vmem:[#allocation8 + $0x2a0] sm:$0xff] %v2352
      %3377 = vst [vmem:[#allocation8 + $0x2a8] sm:$0xff] %v2353
      %3378 = vst [vmem:[#allocation8 + $0x2b0] sm:$0xff] %v2354
      %3379 = vst [vmem:[#allocation8 + $0x2b8] sm:$0xff] %v2355
      %3380 = vst [vmem:[#allocation8 + $0x2c0] sm:$0xff] %v2356
      %3381 = vst [vmem:[#allocation8 + $0x2c8] sm:$0xff] %v2357
      %3382 = vst [vmem:[#allocation8 + $0x2d0] sm:$0xff] %v2358
      %3383 = vst [vmem:[#allocation8 + $0x2d8] sm:$0xff] %v2359
      %3384 = vst [vmem:[#allocation8 + $0x2e0] sm:$0xff] %v2360
      %3385 = vst [vmem:[#allocation8 + $0x2e8] sm:$0xff] %v2361
      %3386 = vst [vmem:[#allocation8 + $0x2f0] sm:$0xff] %v2362
      %3387 = vst [vmem:[#allocation8 + $0x2f8] sm:$0xff] %v2363
      %3388 = vst [vmem:[#allocation8 + $0x300] sm:$0xff] %v2364
      %3389 = vst [vmem:[#allocation8 + $0x308] sm:$0xff] %v2365
      %3390 = vst [vmem:[#allocation8 + $0x310] sm:$0xff] %v2366
      %3391 = vst [vmem:[#allocation8 + $0x318] sm:$0xff] %v2367
      %3392 = vst [vmem:[#allocation8 + $0x320] sm:$0xff] %v2368
      %3393 = vst [vmem:[#allocation8 + $0x328] sm:$0xff] %v2369
      %3394 = vst [vmem:[#allocation8 + $0x330] sm:$0xff] %v2370
      %3395 = vst [vmem:[#allocation8 + $0x338] sm:$0xff] %v2371
      %3396 = vst [vmem:[#allocation8 + $0x340] sm:$0xff] %v2372
      %3397 = vst [vmem:[#allocation8 + $0x348] sm:$0xff] %v2373
      %3398 = vst [vmem:[#allocation8 + $0x350] sm:$0xff] %v2374
      %3399 = vst [vmem:[#allocation8 + $0x358] sm:$0xff] %v2375
      %3400 = vst [vmem:[#allocation8 + $0x360] sm:$0xff] %v2376
      %3401 = vst [vmem:[#allocation8 + $0x368] sm:$0xff] %v2377
      %3402 = vst [vmem:[#allocation8 + $0x370] sm:$0xff] %v2378
      %3403 = vst [vmem:[#allocation8 + $0x378] sm:$0xff] %v2379
      %3404 = vst [vmem:[#allocation8 + $0x380] sm:$0xff] %v2380
      %3405 = vst [vmem:[#allocation8 + $0x388] sm:$0xff] %v2381
      %3406 = vst [vmem:[#allocation8 + $0x390] sm:$0xff] %v2382
      %3407 = vst [vmem:[#allocation8 + $0x398] sm:$0xff] %v2383
      %3408 = vst [vmem:[#allocation8 + $0x3a0] sm:$0xff] %v2384
      %3409 = vst [vmem:[#allocation8 + $0x3a8] sm:$0xff] %v2385
      %3410 = vst [vmem:[#allocation8 + $0x3b0] sm:$0xff] %v2386
      %3411 = vst [vmem:[#allocation8 + $0x3b8] sm:$0xff] %v2387
      %3412 = vst [vmem:[#allocation8 + $0x3c0] sm:$0xff] %v2388
      %3413 = vst [vmem:[#allocation8 + $0x3c8] sm:$0xff] %v2389
      %3414 = vst [vmem:[#allocation8 + $0x3d0] sm:$0xff] %v2390
      %3415 = vst [vmem:[#allocation8 + $0x3d8] sm:$0xff] %v2391
      %3416 = vst [vmem:[#allocation8 + $0x3e0] sm:$0xff] %v2392
      %3417 = vst [vmem:[#allocation8 + $0x3e8] sm:$0xff] %v2393
      %3418 = vst [vmem:[#allocation8 + $0x3f0] sm:$0xff] %v2394
      %3419 = vst [vmem:[#allocation8 + $0x3f8] sm:$0xff] %v2395
      %3420 = vst [vmem:[#allocation8 + $0x400] sm:$0xff] %v2396
      %3421 = vst [vmem:[#allocation8 + $0x408] sm:$0xff] %v2397
      %3422 = vst [vmem:[#allocation8 + $0x410] sm:$0xff] %v2398
      %3423 = vst [vmem:[#allocation8 + $0x418] sm:$0xff] %v2399
      %3424 = vst [vmem:[#allocation8 + $0x420] sm:$0xff] %v2400
      %3425 = vst [vmem:[#allocation8 + $0x428] sm:$0xff] %v2401
      %3426 = vst [vmem:[#allocation8 + $0x430] sm:$0xff] %v2402
      %3427 = vst [vmem:[#allocation8 + $0x438] sm:$0xff] %v2403
      %3428 = vst [vmem:[#allocation8 + $0x440] sm:$0xff] %v2404
      %3429 = vst [vmem:[#allocation8 + $0x448] sm:$0xff] %v2405
      %3430 = vst [vmem:[#allocation8 + $0x450] sm:$0xff] %v2406
      %3431 = vst [vmem:[#allocation8 + $0x458] sm:$0xff] %v2407
      %3432 = vst [vmem:[#allocation8 + $0x460] sm:$0xff] %v2408
      %3433 = vst [vmem:[#allocation8 + $0x468] sm:$0xff] %v2409
      %3434 = vst [vmem:[#allocation8 + $0x470] sm:$0xff] %v2410
      %3435 = vst [vmem:[#allocation8 + $0x478] sm:$0xff] %v2411
      %3436 = vst [vmem:[#allocation8 + $0x480] sm:$0xff] %v2412
      %3437 = vst [vmem:[#allocation8 + $0x488] sm:$0xff] %v2413
      %3438 = vst [vmem:[#allocation8 + $0x490] sm:$0xff] %v2414
      %3439 = vst [vmem:[#allocation8 + $0x498] sm:$0xff] %v2415
      %3440 = vst [vmem:[#allocation8 + $0x4a0] sm:$0xff] %v2416
      %3441 = vst [vmem:[#allocation8 + $0x4a8] sm:$0xff] %v2417
      %3442 = vst [vmem:[#allocation8 + $0x4b0] sm:$0xff] %v2418
      %3443 = vst [vmem:[#allocation8 + $0x4b8] sm:$0xff] %v2419
      %3444 = vst [vmem:[#allocation8 + $0x4c0] sm:$0xff] %v2420
      %3445 = vst [vmem:[#allocation8 + $0x4c8] sm:$0xff] %v2421
      %3446 = vst [vmem:[#allocation8 + $0x4d0] sm:$0xff] %v2422
      %3447 = vst [vmem:[#allocation8 + $0x4d8] sm:$0xff] %v2423
      %3448 = vst [vmem:[#allocation8 + $0x4e0] sm:$0xff] %v2424
      %3449 = vst [vmem:[#allocation8 + $0x4e8] sm:$0xff] %v2425
      %3450 = vst [vmem:[#allocation8 + $0x4f0] sm:$0xff] %v2426
      %3451 = vst [vmem:[#allocation8 + $0x4f8] sm:$0xff] %v2427
      %3452 = vst [vmem:[#allocation8 + $0x500] sm:$0xff] %v2428
      %3453 = vst [vmem:[#allocation8 + $0x508] sm:$0xff] %v2429
      %3454 = vst [vmem:[#allocation8 + $0x510] sm:$0xff] %v2430
      %3455 = vst [vmem:[#allocation8 + $0x518] sm:$0xff] %v2431
      %3456 = vst [vmem:[#allocation8 + $0x520] sm:$0xff] %v2432
      %3457 = vst [vmem:[#allocation8 + $0x528] sm:$0xff] %v2433
      %3458 = vst [vmem:[#allocation8 + $0x530] sm:$0xff] %v2434
      %3459 = vst [vmem:[#allocation8 + $0x538] sm:$0xff] %v2435
      %3460 = vst [vmem:[#allocation8 + $0x540] sm:$0xff] %v2436
      %3461 = vst [vmem:[#allocation8 + $0x548] sm:$0xff] %v2437
      %3462 = vst [vmem:[#allocation8 + $0x550] sm:$0xff] %v2438
      %3463 = vst [vmem:[#allocation8 + $0x558] sm:$0xff] %v2439
      %3464 = vst [vmem:[#allocation8 + $0x560] sm:$0xff] %v2440
      %3465 = vst [vmem:[#allocation8 + $0x568] sm:$0xff] %v2441
      %3466 = vst [vmem:[#allocation8 + $0x570] sm:$0xff] %v2442
      %3467 = vst [vmem:[#allocation8 + $0x578] sm:$0xff] %v2443
      %3468 = vst [vmem:[#allocation8 + $0x580] sm:$0xff] %v2444
      %3469 = vst [vmem:[#allocation8 + $0x588] sm:$0xff] %v2445
      %3470 = vst [vmem:[#allocation8 + $0x590] sm:$0xff] %v2446
      %3471 = vst [vmem:[#allocation8 + $0x598] sm:$0xff] %v2447
      %3472 = vst [vmem:[#allocation8 + $0x5a0] sm:$0xff] %v2448
      %3473 = vst [vmem:[#allocation8 + $0x5a8] sm:$0xff] %v2449
      %3474 = vst [vmem:[#allocation8 + $0x5b0] sm:$0xff] %v2450
      %3475 = vst [vmem:[#allocation8 + $0x5b8] sm:$0xff] %v2451
      %3476 = vst [vmem:[#allocation8 + $0x5c0] sm:$0xff] %v2452
      %3477 = vst [vmem:[#allocation8 + $0x5c8] sm:$0xff] %v2453
      %3478 = vst [vmem:[#allocation8 + $0x5d0] sm:$0xff] %v2454
      %3479 = vst [vmem:[#allocation8 + $0x5d8] sm:$0xff] %v2455
      %3480 = vst [vmem:[#allocation8 + $0x5e0] sm:$0xff] %v2456
      %3481 = vst [vmem:[#allocation8 + $0x5e8] sm:$0xff] %v2457
      %3482 = vst [vmem:[#allocation8 + $0x5f0] sm:$0xff] %v2458
      %3483 = vst [vmem:[#allocation8 + $0x5f8] sm:$0xff] %v2459
      %3484 = vst [vmem:[#allocation8 + $0x600] sm:$0xff] %v2460
      %3485 = vst [vmem:[#allocation8 + $0x608] sm:$0xff] %v2461
      %3486 = vst [vmem:[#allocation8 + $0x610] sm:$0xff] %v2462
      %3487 = vst [vmem:[#allocation8 + $0x618] sm:$0xff] %v2463
      %3488 = vst [vmem:[#allocation8 + $0x620] sm:$0xff] %v2464
      %3489 = vst [vmem:[#allocation8 + $0x628] sm:$0xff] %v2465
      %3490 = vst [vmem:[#allocation8 + $0x630] sm:$0xff] %v2466
      %3491 = vst [vmem:[#allocation8 + $0x638] sm:$0xff] %v2467
      %3492 = vst [vmem:[#allocation8 + $0x640] sm:$0xff] %v2468
      %3493 = vst [vmem:[#allocation8 + $0x648] sm:$0xff] %v2469
      %3494 = vst [vmem:[#allocation8 + $0x650] sm:$0xff] %v2470
      %3495 = vst [vmem:[#allocation8 + $0x658] sm:$0xff] %v2471
      %3496 = vst [vmem:[#allocation8 + $0x660] sm:$0xff] %v2472
      %3497 = vst [vmem:[#allocation8 + $0x668] sm:$0xff] %v2473
      %3498 = vst [vmem:[#allocation8 + $0x670] sm:$0xff] %v2474
      %3499 = vst [vmem:[#allocation8 + $0x678] sm:$0xff] %v2475
      %3500 = vst [vmem:[#allocation8 + $0x680] sm:$0xff] %v2476
      %3501 = vst [vmem:[#allocation8 + $0x688] sm:$0xff] %v2477
      %3502 = vst [vmem:[#allocation8 + $0x690] sm:$0xff] %v2478
      %3503 = vst [vmem:[#allocation8 + $0x698] sm:$0xff] %v2479
      %3504 = vst [vmem:[#allocation8 + $0x6a0] sm:$0xff] %v2480
      %3505 = vst [vmem:[#allocation8 + $0x6a8] sm:$0xff] %v2481
      %3506 = vst [vmem:[#allocation8 + $0x6b0] sm:$0xff] %v2482
      %3507 = vst [vmem:[#allocation8 + $0x6b8] sm:$0xff] %v2483
      %3508 = vst [vmem:[#allocation8 + $0x6c0] sm:$0xff] %v2484
      %3509 = vst [vmem:[#allocation8 + $0x6c8] sm:$0xff] %v2485
      %3510 = vst [vmem:[#allocation8 + $0x6d0] sm:$0xff] %v2486
      %3511 = vst [vmem:[#allocation8 + $0x6d8] sm:$0xff] %v2487
      %3512 = vst [vmem:[#allocation8 + $0x6e0] sm:$0xff] %v2488
      %3513 = vst [vmem:[#allocation8 + $0x6e8] sm:$0xff] %v2489
      %3514 = vst [vmem:[#allocation8 + $0x6f0] sm:$0xff] %v2490
      %3515 = vst [vmem:[#allocation8 + $0x6f8] sm:$0xff] %v2491
      %3516 = vst [vmem:[#allocation8 + $0x700] sm:$0xff] %v2492
      %3517 = vst [vmem:[#allocation8 + $0x708] sm:$0xff] %v2493
      %3518 = vst [vmem:[#allocation8 + $0x710] sm:$0xff] %v2494
      %3519 = vst [vmem:[#allocation8 + $0x718] sm:$0xff] %v2495
      %3520 = vst [vmem:[#allocation8 + $0x720] sm:$0xff] %v2496
      %3521 = vst [vmem:[#allocation8 + $0x728] sm:$0xff] %v2497
      %3522 = vst [vmem:[#allocation8 + $0x730] sm:$0xff] %v2498
      %3523 = vst [vmem:[#allocation8 + $0x738] sm:$0xff] %v2499
      %3524 = vst [vmem:[#allocation8 + $0x740] sm:$0xff] %v2500
      %3525 = vst [vmem:[#allocation8 + $0x748] sm:$0xff] %v2501
      %3526 = vst [vmem:[#allocation8 + $0x750] sm:$0xff] %v2502
      %3527 = vst [vmem:[#allocation8 + $0x758] sm:$0xff] %v2503
      %3528 = vst [vmem:[#allocation8 + $0x760] sm:$0xff] %v2504
      %3529 = vst [vmem:[#allocation8 + $0x768] sm:$0xff] %v2505
      %3530 = vst [vmem:[#allocation8 + $0x770] sm:$0xff] %v2506
      %3531 = vst [vmem:[#allocation8 + $0x778] sm:$0xff] %v2507
      %3532 = vst [vmem:[#allocation8 + $0x780] sm:$0xff] %v2508
      %3533 = vst [vmem:[#allocation8 + $0x788] sm:$0xff] %v2509
      %3534 = vst [vmem:[#allocation8 + $0x790] sm:$0xff] %v2510
      %3535 = vst [vmem:[#allocation8 + $0x798] sm:$0xff] %v2511
      %3536 = vst [vmem:[#allocation8 + $0x7a0] sm:$0xff] %v2512
      %3537 = vst [vmem:[#allocation8 + $0x7a8] sm:$0xff] %v2513
      %3538 = vst [vmem:[#allocation8 + $0x7b0] sm:$0xff] %v2514
      %3539 = vst [vmem:[#allocation8 + $0x7b8] sm:$0xff] %v2515
      %3540 = vst [vmem:[#allocation8 + $0x7c0] sm:$0xff] %v2516
      %3541 = vst [vmem:[#allocation8 + $0x7c8] sm:$0xff] %v2517
      %3542 = vst [vmem:[#allocation8 + $0x7d0] sm:$0xff] %v2518
      %3543 = vst [vmem:[#allocation8 + $0x7d8] sm:$0xff] %v2519
      %3544 = vst [vmem:[#allocation8 + $0x7e0] sm:$0xff] %v2520
      %3545 = vst [vmem:[#allocation8 + $0x7e8] sm:$0xff] %v2521
      %3546 = vst [vmem:[#allocation8 + $0x7f0] sm:$0xff] %v2522
      %3547 = vst [vmem:[#allocation8 + $0x7f8] sm:$0xff] %v2523
      %3548 = vst [vmem:[#allocation8 + $0x800] sm:$0xff] %v2524
      %3549 = vst [vmem:[#allocation8 + $0x808] sm:$0xff] %v2525
      %3550 = vst [vmem:[#allocation8 + $0x810] sm:$0xff] %v2526
      %3551 = vst [vmem:[#allocation8 + $0x818] sm:$0xff] %v2527
      %3552 = vst [vmem:[#allocation8 + $0x820] sm:$0xff] %v2528
      %3553 = vst [vmem:[#allocation8 + $0x828] sm:$0xff] %v2529
      %3554 = vst [vmem:[#allocation8 + $0x830] sm:$0xff] %v2530
      %3555 = vst [vmem:[#allocation8 + $0x838] sm:$0xff] %v2531
      %3556 = vst [vmem:[#allocation8 + $0x840] sm:$0xff] %v2532
      %3557 = vst [vmem:[#allocation8 + $0x848] sm:$0xff] %v2533
      %3558 = vst [vmem:[#allocation8 + $0x850] sm:$0xff] %v2534
      %3559 = vst [vmem:[#allocation8 + $0x858] sm:$0xff] %v2535
      %3560 = vst [vmem:[#allocation8 + $0x860] sm:$0xff] %v2536
      %3561 = vst [vmem:[#allocation8 + $0x868] sm:$0xff] %v2537
      %3562 = vst [vmem:[#allocation8 + $0x870] sm:$0xff] %v2538
      %3563 = vst [vmem:[#allocation8 + $0x878] sm:$0xff] %v2539
      %3564 = vst [vmem:[#allocation8 + $0x880] sm:$0xff] %v2540
      %3565 = vst [vmem:[#allocation8 + $0x888] sm:$0xff] %v2541
      %3566 = vst [vmem:[#allocation8 + $0x890] sm:$0xff] %v2542
      %3567 = vst [vmem:[#allocation8 + $0x898] sm:$0xff] %v2543
      %3568 = vst [vmem:[#allocation8 + $0x8a0] sm:$0xff] %v2544
      %3569 = vst [vmem:[#allocation8 + $0x8a8] sm:$0xff] %v2545
      %3570 = vst [vmem:[#allocation8 + $0x8b0] sm:$0xff] %v2546
      %3571 = vst [vmem:[#allocation8 + $0x8b8] sm:$0xff] %v2547
      %3572 = vst [vmem:[#allocation8 + $0x8c0] sm:$0xff] %v2548
      %3573 = vst [vmem:[#allocation8 + $0x8c8] sm:$0xff] %v2549
      %3574 = vst [vmem:[#allocation8 + $0x8d0] sm:$0xff] %v2550
      %3575 = vst [vmem:[#allocation8 + $0x8d8] sm:$0xff] %v2551
      %3576 = vst [vmem:[#allocation8 + $0x8e0] sm:$0xff] %v2552
      %3577 = vst [vmem:[#allocation8 + $0x8e8] sm:$0xff] %v2553
      %3578 = vst [vmem:[#allocation8 + $0x8f0] sm:$0xff] %v2554
      %3579 = vst [vmem:[#allocation8 + $0x8f8] sm:$0xff] %v2555
      %3580 = vst [vmem:[#allocation8 + $0x900] sm:$0xff] %v2556
      %3581 = vst [vmem:[#allocation8 + $0x908] sm:$0xff] %v2557
      %3582 = vst [vmem:[#allocation8 + $0x910] sm:$0xff] %v2558
      %3583 = vst [vmem:[#allocation8 + $0x918] sm:$0xff] %v2559
      %3584 = vst [vmem:[#allocation8 + $0x920] sm:$0xff] %v2560
      %3585 = vst [vmem:[#allocation8 + $0x928] sm:$0xff] %v2561
      %3586 = vst [vmem:[#allocation8 + $0x930] sm:$0xff] %v2562
      %3587 = vst [vmem:[#allocation8 + $0x938] sm:$0xff] %v2563
      %3588 = vst [vmem:[#allocation8 + $0x940] sm:$0xff] %v2564
      %3589 = vst [vmem:[#allocation8 + $0x948] sm:$0xff] %v2565
      %3590 = vst [vmem:[#allocation8 + $0x950] sm:$0xff] %v2566
      %3591 = vst [vmem:[#allocation8 + $0x958] sm:$0xff] %v2567
      %3592 = vst [vmem:[#allocation8 + $0x960] sm:$0xff] %v2568
      %3593 = vst [vmem:[#allocation8 + $0x968] sm:$0xff] %v2569
      %3594 = vst [vmem:[#allocation8 + $0x970] sm:$0xff] %v2570
      %3595 = vst [vmem:[#allocation8 + $0x978] sm:$0xff] %v2571
      %3596 = vst [vmem:[#allocation8 + $0x980] sm:$0xff] %v2572
      %3597 = vst [vmem:[#allocation8 + $0x988] sm:$0xff] %v2573
      %3598 = vst [vmem:[#allocation8 + $0x990] sm:$0xff] %v2574
      %3599 = vst [vmem:[#allocation8 + $0x998] sm:$0xff] %v2575
      %3600 = vst [vmem:[#allocation8 + $0x9a0] sm:$0xff] %v2576
      %3601 = vst [vmem:[#allocation8 + $0x9a8] sm:$0xff] %v2577
      %3602 = vst [vmem:[#allocation8 + $0x9b0] sm:$0xff] %v2578
      %3603 = vst [vmem:[#allocation8 + $0x9b8] sm:$0xff] %v2579
      %3604 = vst [vmem:[#allocation8 + $0x9c0] sm:$0xff] %v2580
      %3605 = vst [vmem:[#allocation8 + $0x9c8] sm:$0xff] %v2581
      %3606 = vst [vmem:[#allocation8 + $0x9d0] sm:$0xff] %v2582
      %3607 = vst [vmem:[#allocation8 + $0x9d8] sm:$0xff] %v2583
      %3608 = vst [vmem:[#allocation8 + $0x9e0] sm:$0xff] %v2584
      %3609 = vst [vmem:[#allocation8 + $0x9e8] sm:$0xff] %v2585
      %3610 = vst [vmem:[#allocation8 + $0x9f0] sm:$0xff] %v2586
      %3611 = vst [vmem:[#allocation8 + $0x9f8] sm:$0xff] %v2587
      %3612 = vst [vmem:[#allocation8 + $0xa00] sm:$0xff] %v2588
      %3613 = vst [vmem:[#allocation8 + $0xa08] sm:$0xff] %v2589
      %3614 = vst [vmem:[#allocation8 + $0xa10] sm:$0xff] %v2590
      %3615 = vst [vmem:[#allocation8 + $0xa18] sm:$0xff] %v2591
      %3616 = vst [vmem:[#allocation8 + $0xa20] sm:$0xff] %v2592
      %3617 = vst [vmem:[#allocation8 + $0xa28] sm:$0xff] %v2593
      %3618 = vst [vmem:[#allocation8 + $0xa30] sm:$0xff] %v2594
      %3619 = vst [vmem:[#allocation8 + $0xa38] sm:$0xff] %v2595
      %3620 = vst [vmem:[#allocation8 + $0xa40] sm:$0xff] %v2596
      %3621 = vst [vmem:[#allocation8 + $0xa48] sm:$0xff] %v2597
      %3622 = vst [vmem:[#allocation8 + $0xa50] sm:$0xff] %v2598
      %3623 = vst [vmem:[#allocation8 + $0xa58] sm:$0xff] %v2599
      %3624 = vst [vmem:[#allocation8 + $0xa60] sm:$0xff] %v2600
      %3625 = vst [vmem:[#allocation8 + $0xa68] sm:$0xff] %v2601
      %3626 = vst [vmem:[#allocation8 + $0xa70] sm:$0xff] %v2602
      %3627 = vst [vmem:[#allocation8 + $0xa78] sm:$0xff] %v2603
      %3628 = vst [vmem:[#allocation8 + $0xa80] sm:$0xff] %v2604
      %3629 = vst [vmem:[#allocation8 + $0xa88] sm:$0xff] %v2605
      %3630 = vst [vmem:[#allocation8 + $0xa90] sm:$0xff] %v2606
      %3631 = vst [vmem:[#allocation8 + $0xa98] sm:$0xff] %v2607
      %3632 = vst [vmem:[#allocation8 + $0xaa0] sm:$0xff] %v2608
      %3633 = vst [vmem:[#allocation8 + $0xaa8] sm:$0xff] %v2609
      %3634 = vst [vmem:[#allocation8 + $0xab0] sm:$0xff] %v2610
      %3635 = vst [vmem:[#allocation8 + $0xab8] sm:$0xff] %v2611
      %3636 = vst [vmem:[#allocation8 + $0xac0] sm:$0xff] %v2612
      %3637 = vst [vmem:[#allocation8 + $0xac8] sm:$0xff] %v2613
      %3638 = vst [vmem:[#allocation8 + $0xad0] sm:$0xff] %v2614
      %3639 = vst [vmem:[#allocation8 + $0xad8] sm:$0xff] %v2615
      %3640 = vst [vmem:[#allocation8 + $0xae0] sm:$0xff] %v2616
      %3641 = vst [vmem:[#allocation8 + $0xae8] sm:$0xff] %v2617
      %3642 = vst [vmem:[#allocation8 + $0xaf0] sm:$0xff] %v2618
      %3643 = vst [vmem:[#allocation8 + $0xaf8] sm:$0xff] %v2619
      %3644 = vst [vmem:[#allocation8 + $0xb00] sm:$0xff] %v2620
      %3645 = vst [vmem:[#allocation8 + $0xb08] sm:$0xff] %v2621
      %3646 = vst [vmem:[#allocation8 + $0xb10] sm:$0xff] %v2622
      %3647 = vst [vmem:[#allocation8 + $0xb18] sm:$0xff] %v2623
      %3648 = vst [vmem:[#allocation8 + $0xb20] sm:$0xff] %v2624
      %3649 = vst [vmem:[#allocation8 + $0xb28] sm:$0xff] %v2625
      %3650 = vst [vmem:[#allocation8 + $0xb30] sm:$0xff] %v2626
      %3651 = vst [vmem:[#allocation8 + $0xb38] sm:$0xff] %v2627
      %3652 = vst [vmem:[#allocation8 + $0xb40] sm:$0xff] %v2628
      %3653 = vst [vmem:[#allocation8 + $0xb48] sm:$0xff] %v2629
      %3654 = vst [vmem:[#allocation8 + $0xb50] sm:$0xff] %v2630
      %3655 = vst [vmem:[#allocation8 + $0xb58] sm:$0xff] %v2631
      %3656 = vst [vmem:[#allocation8 + $0xb60] sm:$0xff] %v2632
      %3657 = vst [vmem:[#allocation8 + $0xb68] sm:$0xff] %v2633
      %3658 = vst [vmem:[#allocation8 + $0xb70] sm:$0xff] %v2634
      %3659 = vst [vmem:[#allocation8 + $0xb78] sm:$0xff] %v2635
      %3660 = vst [vmem:[#allocation8 + $0xb80] sm:$0xff] %v2636
      %3661 = vst [vmem:[#allocation8 + $0xb88] sm:$0xff] %v2637
      %3662 = vst [vmem:[#allocation8 + $0xb90] sm:$0xff] %v2638
      %3663 = vst [vmem:[#allocation8 + $0xb98] sm:$0xff] %v2639
      %3664 = vst [vmem:[#allocation8 + $0xba0] sm:$0xff] %v2640
      %3665 = vst [vmem:[#allocation8 + $0xba8] sm:$0xff] %v2641
      %3666 = vst [vmem:[#allocation8 + $0xbb0] sm:$0xff] %v2642
      %3667 = vst [vmem:[#allocation8 + $0xbb8] sm:$0xff] %v2643
      %3668 = vst [vmem:[#allocation8 + $0xbc0] sm:$0xff] %v2644
      %3669 = vst [vmem:[#allocation8 + $0xbc8] sm:$0xff] %v2645
      %3670 = vst [vmem:[#allocation8 + $0xbd0] sm:$0xff] %v2646
      %3671 = vst [vmem:[#allocation8 + $0xbd8] sm:$0xff] %v2647
      %3672 = vst [vmem:[#allocation8 + $0xbe0] sm:$0xff] %v2648
      %3673 = vst [vmem:[#allocation8 + $0xbe8] sm:$0xff] %v2649
      %3674 = vst [vmem:[#allocation8 + $0xbf0] sm:$0xff] %v2650
      %3675 = vst [vmem:[#allocation8 + $0xbf8] sm:$0xff] %v2651
      %3676 = vst [vmem:[#allocation8 + $0xc00] sm:$0xff] %v2652
      %3677 = vst [vmem:[#allocation8 + $0xc08] sm:$0xff] %v2653
      %3678 = vst [vmem:[#allocation8 + $0xc10] sm:$0xff] %v2654
      %3679 = vst [vmem:[#allocation8 + $0xc18] sm:$0xff] %v2655
      %3680 = vst [vmem:[#allocation8 + $0xc20] sm:$0xff] %v2656
      %3681 = vst [vmem:[#allocation8 + $0xc28] sm:$0xff] %v2657
      %3682 = vst [vmem:[#allocation8 + $0xc30] sm:$0xff] %v2658
      %3683 = vst [vmem:[#allocation8 + $0xc38] sm:$0xff] %v2659
      %3684 = vst [vmem:[#allocation8 + $0xc40] sm:$0xff] %v2660
      %3685 = vst [vmem:[#allocation8 + $0xc48] sm:$0xff] %v2661
      %3686 = vst [vmem:[#allocation8 + $0xc50] sm:$0xff] %v2662
      %3687 = vst [vmem:[#allocation8 + $0xc58] sm:$0xff] %v2663
      %3688 = vst [vmem:[#allocation8 + $0xc60] sm:$0xff] %v2664
      %3689 = vst [vmem:[#allocation8 + $0xc68] sm:$0xff] %v2665
      %3690 = vst [vmem:[#allocation8 + $0xc70] sm:$0xff] %v2666
      %3691 = vst [vmem:[#allocation8 + $0xc78] sm:$0xff] %v2667
      %3692 = vst [vmem:[#allocation8 + $0xc80] sm:$0xff] %v2668
      %3693 = vst [vmem:[#allocation8 + $0xc88] sm:$0xff] %v2669
      %3694 = vst [vmem:[#allocation8 + $0xc90] sm:$0xff] %v2670
      %3695 = vst [vmem:[#allocation8 + $0xc98] sm:$0xff] %v2671
      %3696 = vst [vmem:[#allocation8 + $0xca0] sm:$0xff] %v2672
      %3697 = vst [vmem:[#allocation8 + $0xca8] sm:$0xff] %v2673
      %3698 = vst [vmem:[#allocation8 + $0xcb0] sm:$0xff] %v2674
      %3699 = vst [vmem:[#allocation8 + $0xcb8] sm:$0xff] %v2675
      %3700 = vst [vmem:[#allocation8 + $0xcc0] sm:$0xff] %v2676
      %3701 = vst [vmem:[#allocation8 + $0xcc8] sm:$0xff] %v2677
      %3702 = vst [vmem:[#allocation8 + $0xcd0] sm:$0xff] %v2678
      %3703 = vst [vmem:[#allocation8 + $0xcd8] sm:$0xff] %v2679
      %3704 = vst [vmem:[#allocation8 + $0xce0] sm:$0xff] %v2680
      %3705 = vst [vmem:[#allocation8 + $0xce8] sm:$0xff] %v2681
      %3706 = vst [vmem:[#allocation8 + $0xcf0] sm:$0xff] %v2682
      %3707 = vst [vmem:[#allocation8 + $0xcf8] sm:$0xff] %v2683
      %3708 = vst [vmem:[#allocation8 + $0xd00] sm:$0xff] %v2684
      %3709 = vst [vmem:[#allocation8 + $0xd08] sm:$0xff] %v2685
      %3710 = vst [vmem:[#allocation8 + $0xd10] sm:$0xff] %v2686
      %3711 = vst [vmem:[#allocation8 + $0xd18] sm:$0xff] %v2687
      %3712 = vst [vmem:[#allocation8 + $0xd20] sm:$0xff] %v2688
      %3713 = vst [vmem:[#allocation8 + $0xd28] sm:$0xff] %v2689
      %3714 = vst [vmem:[#allocation8 + $0xd30] sm:$0xff] %v2690
      %3715 = vst [vmem:[#allocation8 + $0xd38] sm:$0xff] %v2691
      %3716 = vst [vmem:[#allocation8 + $0xd40] sm:$0xff] %v2692
      %3717 = vst [vmem:[#allocation8 + $0xd48] sm:$0xff] %v2693
      %3718 = vst [vmem:[#allocation8 + $0xd50] sm:$0xff] %v2694
      %3719 = vst [vmem:[#allocation8 + $0xd58] sm:$0xff] %v2695
      %3720 = vst [vmem:[#allocation8 + $0xd60] sm:$0xff] %v2696
      %3721 = vst [vmem:[#allocation8 + $0xd68] sm:$0xff] %v2697
      %3722 = vst [vmem:[#allocation8 + $0xd70] sm:$0xff] %v2698
      %3723 = vst [vmem:[#allocation8 + $0xd78] sm:$0xff] %v2699
      %3724 = vst [vmem:[#allocation8 + $0xd80] sm:$0xff] %v2700
      %3725 = vst [vmem:[#allocation8 + $0xd88] sm:$0xff] %v2701
      %3726 = vst [vmem:[#allocation8 + $0xd90] sm:$0xff] %v2702
      %3727 = vst [vmem:[#allocation8 + $0xd98] sm:$0xff] %v2703
      %3728 = vst [vmem:[#allocation8 + $0xda0] sm:$0xff] %v2704
      %3729 = vst [vmem:[#allocation8 + $0xda8] sm:$0xff] %v2705
      %3730 = vst [vmem:[#allocation8 + $0xdb0] sm:$0xff] %v2706
      %3731 = vst [vmem:[#allocation8 + $0xdb8] sm:$0xff] %v2707
      %3732 = vst [vmem:[#allocation8 + $0xdc0] sm:$0xff] %v2708
      %3733 = vst [vmem:[#allocation8 + $0xdc8] sm:$0xff] %v2709
      %3734 = vst [vmem:[#allocation8 + $0xdd0] sm:$0xff] %v2710
      %3735 = vst [vmem:[#allocation8 + $0xdd8] sm:$0xff] %v2711
      %3736 = vst [vmem:[#allocation8 + $0xde0] sm:$0xff] %v2712
      %3737 = vst [vmem:[#allocation8 + $0xde8] sm:$0xff] %v2713
      %3738 = vst [vmem:[#allocation8 + $0xdf0] sm:$0xff] %v2714
      %3739 = vst [vmem:[#allocation8 + $0xdf8] sm:$0xff] %v2715
      %3740 = vst [vmem:[#allocation8 + $0xe00] sm:$0xff] %v2716
      %3741 = vst [vmem:[#allocation8 + $0xe08] sm:$0xff] %v2717
      %3742 = vst [vmem:[#allocation8 + $0xe10] sm:$0xff] %v2718
      %3743 = vst [vmem:[#allocation8 + $0xe18] sm:$0xff] %v2719
      %3744 = vst [vmem:[#allocation8 + $0xe20] sm:$0xff] %v2720
      %3745 = vst [vmem:[#allocation8 + $0xe28] sm:$0xff] %v2721
      %3746 = vst [vmem:[#allocation8 + $0xe30] sm:$0xff] %v2722
      %3747 = vst [vmem:[#allocation8 + $0xe38] sm:$0xff] %v2723
      %3748 = vst [vmem:[#allocation8 + $0xe40] sm:$0xff] %v2724
      %3749 = vst [vmem:[#allocation8 + $0xe48] sm:$0xff] %v2725
      %3750 = vst [vmem:[#allocation8 + $0xe50] sm:$0xff] %v2726
      %3751 = vst [vmem:[#allocation8 + $0xe58] sm:$0xff] %v2727
      %3752 = vst [vmem:[#allocation8 + $0xe60] sm:$0xff] %v2728
      %3753 = vst [vmem:[#allocation8 + $0xe68] sm:$0xff] %v2729
      %3754 = vst [vmem:[#allocation8 + $0xe70] sm:$0xff] %v2730
      %3755 = vst [vmem:[#allocation8 + $0xe78] sm:$0xff] %v2731
      %3756 = vst [vmem:[#allocation8 + $0xe80] sm:$0xff] %v2732
      %3757 = vst [vmem:[#allocation8 + $0xe88] sm:$0xff] %v2733
      %3758 = vst [vmem:[#allocation8 + $0xe90] sm:$0xff] %v2734
      %3759 = vst [vmem:[#allocation8 + $0xe98] sm:$0xff] %v2735
      %3760 = vst [vmem:[#allocation8 + $0xea0] sm:$0xff] %v2736
      %3761 = vst [vmem:[#allocation8 + $0xea8] sm:$0xff] %v2737
      %3762 = vst [vmem:[#allocation8 + $0xeb0] sm:$0xff] %v2738
      %3763 = vst [vmem:[#allocation8 + $0xeb8] sm:$0xff] %v2739
      %3764 = vst [vmem:[#allocation8 + $0xec0] sm:$0xff] %v2740
      %3765 = vst [vmem:[#allocation8 + $0xec8] sm:$0xff] %v2741
      %3766 = vst [vmem:[#allocation8 + $0xed0] sm:$0xff] %v2742
      %3767 = vst [vmem:[#allocation8 + $0xed8] sm:$0xff] %v2743
      %3768 = vst [vmem:[#allocation8 + $0xee0] sm:$0xff] %v2744
      %3769 = vst [vmem:[#allocation8 + $0xee8] sm:$0xff] %v2745
      %3770 = vst [vmem:[#allocation8 + $0xef0] sm:$0xff] %v2746
      %3771 = vst [vmem:[#allocation8 + $0xef8] sm:$0xff] %v2747
      %3772 = vst [vmem:[#allocation8 + $0xf00] sm:$0xff] %v2748
      %3773 = vst [vmem:[#allocation8 + $0xf08] sm:$0xff] %v2749
      %3774 = vst [vmem:[#allocation8 + $0xf10] sm:$0xff] %v2750
      %3775 = vst [vmem:[#allocation8 + $0xf18] sm:$0xff] %v2751
      %3776 = vst [vmem:[#allocation8 + $0xf20] sm:$0xff] %v2752
      %3777 = vst [vmem:[#allocation8 + $0xf28] sm:$0xff] %v2753
      %3778 = vst [vmem:[#allocation8 + $0xf30] sm:$0xff] %v2754
      %3779 = vst [vmem:[#allocation8 + $0xf38] sm:$0xff] %v2755
      %3780 = vst [vmem:[#allocation8 + $0xf40] sm:$0xff] %v2756
      %3781 = vst [vmem:[#allocation8 + $0xf48] sm:$0xff] %v2757
      %3782 = vst [vmem:[#allocation8 + $0xf50] sm:$0xff] %v2758
      %3783 = vst [vmem:[#allocation8 + $0xf58] sm:$0xff] %v2759
      %3784 = vst [vmem:[#allocation8 + $0xf60] sm:$0xff] %v2760
      %3785 = vst [vmem:[#allocation8 + $0xf68] sm:$0xff] %v2761
      %3786 = vst [vmem:[#allocation8 + $0xf70] sm:$0xff] %v2762
      %3787 = vst [vmem:[#allocation8 + $0xf78] sm:$0xff] %v2763
      %3788 = vst [vmem:[#allocation8 + $0xf80] sm:$0xff] %v2764
      %3789 = vst [vmem:[#allocation8 + $0xf88] sm:$0xff] %v2765
      %3790 = vst [vmem:[#allocation8 + $0xf90] sm:$0xff] %v2766
      %3791 = vst [vmem:[#allocation8 + $0xf98] sm:$0xff] %v2767
      %3792 = vst [vmem:[#allocation8 + $0xfa0] sm:$0xff] %v2768
      %3793 = vst [vmem:[#allocation8 + $0xfa8] sm:$0xff] %v2769
      %3794 = vst [vmem:[#allocation8 + $0xfb0] sm:$0xff] %v2770
      %3795 = vst [vmem:[#allocation8 + $0xfb8] sm:$0xff] %v2771
      %3796 = vst [vmem:[#allocation8 + $0xfc0] sm:$0xff] %v2772
      %3797 = vst [vmem:[#allocation8 + $0xfc8] sm:$0xff] %v2773
      %3798 = vst [vmem:[#allocation8 + $0xfd0] sm:$0xff] %v2774
      %3799 = vst [vmem:[#allocation8 + $0xfd8] sm:$0xff] %v2775
      %3800 = vst [vmem:[#allocation8 + $0xfe0] sm:$0xff] %v2776
      %3801 = vst [vmem:[#allocation8 + $0xfe8] sm:$0xff] %v2777
      %3802 = vst [vmem:[#allocation8 + $0xff0] sm:$0xff] %v2778
      %3803 = vst [vmem:[#allocation8 + $0xff8] sm:$0xff] %v2779
      %3804 = vst [vmem:[#allocation8 + $0x1000] sm:$0xff] %v2780
      %3805 = vst [vmem:[#allocation8 + $0x1008] sm:$0xff] %v2781
      %3806 = vst [vmem:[#allocation8 + $0x1010] sm:$0xff] %v2782
      %3807 = vst [vmem:[#allocation8 + $0x1018] sm:$0xff] %v2783
      %3808 = vst [vmem:[#allocation8 + $0x1020] sm:$0xff] %v2784
      %3809 = vst [vmem:[#allocation8 + $0x1028] sm:$0xff] %v2785
      %3810 = vst [vmem:[#allocation8 + $0x1030] sm:$0xff] %v2786
      %3811 = vst [vmem:[#allocation8 + $0x1038] sm:$0xff] %v2787
      %3812 = vst [vmem:[#allocation8 + $0x1040] sm:$0xff] %v2788
      %3813 = vst [vmem:[#allocation8 + $0x1048] sm:$0xff] %v2789
      %3814 = vst [vmem:[#allocation8 + $0x1050] sm:$0xff] %v2790
      %3815 = vst [vmem:[#allocation8 + $0x1058] sm:$0xff] %v2791
      %3816 = vst [vmem:[#allocation8 + $0x1060] sm:$0xff] %v2792
      %3817 = vst [vmem:[#allocation8 + $0x1068] sm:$0xff] %v2793
      %3818 = vst [vmem:[#allocation8 + $0x1070] sm:$0xff] %v2794
      %3819 = vst [vmem:[#allocation8 + $0x1078] sm:$0xff] %v2795
      %3820 = vst [vmem:[#allocation8 + $0x1080] sm:$0xff] %v2796
      %3821 = vst [vmem:[#allocation8 + $0x1088] sm:$0xff] %v2797
      %3822 = vst [vmem:[#allocation8 + $0x1090] sm:$0xff] %v2798
      %3823 = vst [vmem:[#allocation8 + $0x1098] sm:$0xff] %v2799
      %3824 = vst [vmem:[#allocation8 + $0x10a0] sm:$0xff] %v2800
      %3825 = vst [vmem:[#allocation8 + $0x10a8] sm:$0xff] %v2801
      %3826 = vst [vmem:[#allocation8 + $0x10b0] sm:$0xff] %v2802
      %3827 = vst [vmem:[#allocation8 + $0x10b8] sm:$0xff] %v2803
      %3828 = vst [vmem:[#allocation8 + $0x10c0] sm:$0xff] %v2804
      %3829 = vst [vmem:[#allocation8 + $0x10c8] sm:$0xff] %v2805
      %3830 = vst [vmem:[#allocation8 + $0x10d0] sm:$0xff] %v2806
      %3831 = vst [vmem:[#allocation8 + $0x10d8] sm:$0xff] %v2807
      %3832 = vst [vmem:[#allocation8 + $0x10e0] sm:$0xff] %v2808
      %3833 = vst [vmem:[#allocation8 + $0x10e8] sm:$0xff] %v2809
      %3834 = vst [vmem:[#allocation8 + $0x10f0] sm:$0xff] %v2810
      %3835 = vst [vmem:[#allocation8 + $0x10f8] sm:$0xff] %v2811
      %3836 = vst [vmem:[#allocation8 + $0x1100] sm:$0xff] %v2812
      %3837 = vst [vmem:[#allocation8 + $0x1108] sm:$0xff] %v2813
      %3838 = vst [vmem:[#allocation8 + $0x1110] sm:$0xff] %v2814
      %3839 = vst [vmem:[#allocation8 + $0x1118] sm:$0xff] %v2815
      %3840 = vst [vmem:[#allocation8 + $0x1120] sm:$0xff] %v2816
      %3841 = vst [vmem:[#allocation8 + $0x1128] sm:$0xff] %v2817
      %3842 = vst [vmem:[#allocation8 + $0x1130] sm:$0xff] %v2818
      %3843 = vst [vmem:[#allocation8 + $0x1138] sm:$0xff] %v2819
      %3844 = vst [vmem:[#allocation8 + $0x1140] sm:$0xff] %v2820
      %3845 = vst [vmem:[#allocation8 + $0x1148] sm:$0xff] %v2821
      %3846 = vst [vmem:[#allocation8 + $0x1150] sm:$0xff] %v2822
      %3847 = vst [vmem:[#allocation8 + $0x1158] sm:$0xff] %v2823
      %3848 = vst [vmem:[#allocation8 + $0x1160] sm:$0xff] %v2824
      %3849 = vst [vmem:[#allocation8 + $0x1168] sm:$0xff] %v2825
      %3850 = vst [vmem:[#allocation8 + $0x1170] sm:$0xff] %v2826
      %3851 = vst [vmem:[#allocation8 + $0x1178] sm:$0xff] %v2827
      %3852 = vst [vmem:[#allocation8 + $0x1180] sm:$0xff] %v2828
      %3853 = vst [vmem:[#allocation8 + $0x1188] sm:$0xff] %v2829
      %3854 = vst [vmem:[#allocation8 + $0x1190] sm:$0xff] %v2830
      %3855 = vst [vmem:[#allocation8 + $0x1198] sm:$0xff] %v2831
      %3856 = vst [vmem:[#allocation8 + $0x11a0] sm:$0xff] %v2832
      %3857 = vst [vmem:[#allocation8 + $0x11a8] sm:$0xff] %v2833
      %3858 = vst [vmem:[#allocation8 + $0x11b0] sm:$0xff] %v2834
      %3859 = vst [vmem:[#allocation8 + $0x11b8] sm:$0xff] %v2835
      %3860 = vst [vmem:[#allocation8 + $0x11c0] sm:$0xff] %v2836
      %3861 = vst [vmem:[#allocation8 + $0x11c8] sm:$0xff] %v2837
      %3862 = vst [vmem:[#allocation8 + $0x11d0] sm:$0xff] %v2838
      %3863 = vst [vmem:[#allocation8 + $0x11d8] sm:$0xff] %v2839
      %3864 = vst [vmem:[#allocation8 + $0x11e0] sm:$0xff] %v2840
      %3865 = vst [vmem:[#allocation8 + $0x11e8] sm:$0xff] %v2841
      %3866 = vst [vmem:[#allocation8 + $0x11f0] sm:$0xff] %v2842
      %3867 = vst [vmem:[#allocation8 + $0x11f8] sm:$0xff] %v2843
      %3868 = vst [vmem:[#allocation8 + $0x1200] sm:$0xff] %v2844
      %3869 = vst [vmem:[#allocation8 + $0x1208] sm:$0xff] %v2845
      %3870 = vst [vmem:[#allocation8 + $0x1210] sm:$0xff] %v2846
      %3871 = vst [vmem:[#allocation8 + $0x1218] sm:$0xff] %v2847
      %3872 = vst [vmem:[#allocation8 + $0x1220] sm:$0xff] %v2848
      %3873 = vst [vmem:[#allocation8 + $0x1228] sm:$0xff] %v2849
      %3874 = vst [vmem:[#allocation8 + $0x1230] sm:$0xff] %v2850
      %3875 = vst [vmem:[#allocation8 + $0x1238] sm:$0xff] %v2851
      %3876 = vst [vmem:[#allocation8 + $0x1240] sm:$0xff] %v2852
      %3877 = vst [vmem:[#allocation8 + $0x1248] sm:$0xff] %v2853
      %3878 = vst [vmem:[#allocation8 + $0x1250] sm:$0xff] %v2854
      %3879 = vst [vmem:[#allocation8 + $0x1258] sm:$0xff] %v2855
      %3880 = vst [vmem:[#allocation8 + $0x1260] sm:$0xff] %v2856
      %3881 = vst [vmem:[#allocation8 + $0x1268] sm:$0xff] %v2857
      %3882 = vst [vmem:[#allocation8 + $0x1270] sm:$0xff] %v2858
      %3883 = vst [vmem:[#allocation8 + $0x1278] sm:$0xff] %v2859
      %3884 = vst [vmem:[#allocation8 + $0x1280] sm:$0xff] %v2860
      %3885 = vst [vmem:[#allocation8 + $0x1288] sm:$0xff] %v2861
      %3886 = vst [vmem:[#allocation8 + $0x1290] sm:$0xff] %v2862
      %3887 = vst [vmem:[#allocation8 + $0x1298] sm:$0xff] %v2863
      %3888 = vst [vmem:[#allocation8 + $0x12a0] sm:$0xff] %v2864
      %3889 = vst [vmem:[#allocation8 + $0x12a8] sm:$0xff] %v2865
      %3890 = vst [vmem:[#allocation8 + $0x12b0] sm:$0xff] %v2866
      %3891 = vst [vmem:[#allocation8 + $0x12b8] sm:$0xff] %v2867
      %3892 = vst [vmem:[#allocation8 + $0x12c0] sm:$0xff] %v2868
      %3893 = vst [vmem:[#allocation8 + $0x12c8] sm:$0xff] %v2869
      %3894 = vst [vmem:[#allocation8 + $0x12d0] sm:$0xff] %v2870
      %3895 = vst [vmem:[#allocation8 + $0x12d8] sm:$0xff] %v2871
      %3896 = vst [vmem:[#allocation8 + $0x12e0] sm:$0xff] %v2872
      %3897 = vst [vmem:[#allocation8 + $0x12e8] sm:$0xff] %v2873
      %3898 = vst [vmem:[#allocation8 + $0x12f0] sm:$0xff] %v2874
      %3899 = vst [vmem:[#allocation8 + $0x12f8] sm:$0xff] %v2875
      %3900 = vst [vmem:[#allocation8 + $0x1300] sm:$0xff] %v2876
      %3901 = vst [vmem:[#allocation8 + $0x1308] sm:$0xff] %v2877
      %3902 = vst [vmem:[#allocation8 + $0x1310] sm:$0xff] %v2878
      %3903 = vst [vmem:[#allocation8 + $0x1318] sm:$0xff] %v2879
      %3904 = vst [vmem:[#allocation8 + $0x1320] sm:$0xff] %v2880
      %3905 = vst [vmem:[#allocation8 + $0x1328] sm:$0xff] %v2881
      %3906 = vst [vmem:[#allocation8 + $0x1330] sm:$0xff] %v2882
      %3907 = vst [vmem:[#allocation8 + $0x1338] sm:$0xff] %v2883
      %3908 = vst [vmem:[#allocation8 + $0x1340] sm:$0xff] %v2884
      %3909 = vst [vmem:[#allocation8 + $0x1348] sm:$0xff] %v2885
      %3910 = vst [vmem:[#allocation8 + $0x1350] sm:$0xff] %v2886
      %3911 = vst [vmem:[#allocation8 + $0x1358] sm:$0xff] %v2887
      %3912 = vst [vmem:[#allocation8 + $0x1360] sm:$0xff] %v2888
      %3913 = vst [vmem:[#allocation8 + $0x1368] sm:$0xff] %v2889
      %3914 = vst [vmem:[#allocation8 + $0x1370] sm:$0xff] %v2890
      %3915 = vst [vmem:[#allocation8 + $0x1378] sm:$0xff] %v2891
      %3916 = vst [vmem:[#allocation8 + $0x1380] sm:$0xff] %v2892
      %3917 = vst [vmem:[#allocation8 + $0x1388] sm:$0xff] %v2893
      %3918 = vst [vmem:[#allocation8 + $0x1390] sm:$0xff] %v2894
      %3919 = vst [vmem:[#allocation8 + $0x1398] sm:$0xff] %v2895
      %3920 = vst [vmem:[#allocation8 + $0x13a0] sm:$0xff] %v2896
      %3921 = vst [vmem:[#allocation8 + $0x13a8] sm:$0xff] %v2897
      %3922 = vst [vmem:[#allocation8 + $0x13b0] sm:$0xff] %v2898
      %3923 = vst [vmem:[#allocation8 + $0x13b8] sm:$0xff] %v2899
      %3924 = vst [vmem:[#allocation8 + $0x13c0] sm:$0xff] %v2900
      %3925 = vst [vmem:[#allocation8 + $0x13c8] sm:$0xff] %v2901
      %3926 = vst [vmem:[#allocation8 + $0x13d0] sm:$0xff] %v2902
      %3927 = vst [vmem:[#allocation8 + $0x13d8] sm:$0xff] %v2903
      %3928 = vst [vmem:[#allocation8 + $0x13e0] sm:$0xff] %v2904
      %3929 = vst [vmem:[#allocation8 + $0x13e8] sm:$0xff] %v2905
      %3930 = vst [vmem:[#allocation8 + $0x13f0] sm:$0xff] %v2906
      %3931 = vst [vmem:[#allocation8 + $0x13f8] sm:$0xff] %v2907
      %3932 = vst [vmem:[#allocation8 + $0x1400] sm:$0xff] %v2908
      %3933 = vst [vmem:[#allocation8 + $0x1408] sm:$0xff] %v2909
      %3934 = vst [vmem:[#allocation8 + $0x1410] sm:$0xff] %v2910
      %3935 = vst [vmem:[#allocation8 + $0x1418] sm:$0xff] %v2911
      %3936 = vst [vmem:[#allocation8 + $0x1420] sm:$0xff] %v2912
      %3937 = vst [vmem:[#allocation8 + $0x1428] sm:$0xff] %v2913
      %3938 = vst [vmem:[#allocation8 + $0x1430] sm:$0xff] %v2914
      %3939 = vst [vmem:[#allocation8 + $0x1438] sm:$0xff] %v2915
      %3940 = vst [vmem:[#allocation8 + $0x1440] sm:$0xff] %v2916
      %3941 = vst [vmem:[#allocation8 + $0x1448] sm:$0xff] %v2917
      %3942 = vst [vmem:[#allocation8 + $0x1450] sm:$0xff] %v2918
      %3943 = vst [vmem:[#allocation8 + $0x1458] sm:$0xff] %v2919
      %3944 = vst [vmem:[#allocation8 + $0x1460] sm:$0xff] %v2920
      %3945 = vst [vmem:[#allocation8 + $0x1468] sm:$0xff] %v2921
      %3946 = vst [vmem:[#allocation8 + $0x1470] sm:$0xff] %v2922
      %3947 = vst [vmem:[#allocation8 + $0x1478] sm:$0xff] %v2923
      %3948 = vst [vmem:[#allocation8 + $0x1480] sm:$0xff] %v2924
      %3949 = vst [vmem:[#allocation8 + $0x1488] sm:$0xff] %v2925
      %3950 = vst [vmem:[#allocation8 + $0x1490] sm:$0xff] %v2926
      %3951 = vst [vmem:[#allocation8 + $0x1498] sm:$0xff] %v2927
      %3952 = vst [vmem:[#allocation8 + $0x14a0] sm:$0xff] %v2928
      %3953 = vst [vmem:[#allocation8 + $0x14a8] sm:$0xff] %v2929
      %3954 = vst [vmem:[#allocation8 + $0x14b0] sm:$0xff] %v2930
      %3955 = vst [vmem:[#allocation8 + $0x14b8] sm:$0xff] %v2931
      %3956 = vst [vmem:[#allocation8 + $0x14c0] sm:$0xff] %v2932
      %3957 = vst [vmem:[#allocation8 + $0x14c8] sm:$0xff] %v2933
      %3958 = vst [vmem:[#allocation8 + $0x14d0] sm:$0xff] %v2934
      %3959 = vst [vmem:[#allocation8 + $0x14d8] sm:$0xff] %v2935
      %3960 = vst [vmem:[#allocation8 + $0x14e0] sm:$0xff] %v2936
      %3961 = vst [vmem:[#allocation8 + $0x14e8] sm:$0xff] %v2937
      %3962 = vst [vmem:[#allocation8 + $0x14f0] sm:$0xff] %v2938
      %3963 = vst [vmem:[#allocation8 + $0x14f8] sm:$0xff] %v2939
      %3964 = vst [vmem:[#allocation8 + $0x1500] sm:$0xff] %v2940
      %3965 = vst [vmem:[#allocation8 + $0x1508] sm:$0xff] %v2941
      %3966 = vst [vmem:[#allocation8 + $0x1510] sm:$0xff] %v2942
      %3967 = vst [vmem:[#allocation8 + $0x1518] sm:$0xff] %v2943
      %3968 = vst [vmem:[#allocation8 + $0x1520] sm:$0xff] %v2944
      %3969 = vst [vmem:[#allocation8 + $0x1528] sm:$0xff] %v2945
      %3970 = vst [vmem:[#allocation8 + $0x1530] sm:$0xff] %v2946
      %3971 = vst [vmem:[#allocation8 + $0x1538] sm:$0xff] %v2947
      %3972 = vst [vmem:[#allocation8 + $0x1540] sm:$0xff] %v2948
      %3973 = vst [vmem:[#allocation8 + $0x1548] sm:$0xff] %v2949
      %3974 = vst [vmem:[#allocation8 + $0x1550] sm:$0xff] %v2950
      %3975 = vst [vmem:[#allocation8 + $0x1558] sm:$0xff] %v2951
      %3976 = vst [vmem:[#allocation8 + $0x1560] sm:$0xff] %v2952
      %3977 = vst [vmem:[#allocation8 + $0x1568] sm:$0xff] %v2953
      %3978 = vst [vmem:[#allocation8 + $0x1570] sm:$0xff] %v2954
      %3979 = vst [vmem:[#allocation8 + $0x1578] sm:$0xff] %v2955
      %3980 = vst [vmem:[#allocation8 + $0x1580] sm:$0xff] %v2956
      %3981 = vst [vmem:[#allocation8 + $0x1588] sm:$0xff] %v2957
      %3982 = vst [vmem:[#allocation8 + $0x1590] sm:$0xff] %v2958
      %3983 = vst [vmem:[#allocation8 + $0x1598] sm:$0xff] %v2959
      %3984 = vst [vmem:[#allocation8 + $0x15a0] sm:$0xff] %v2960
      %3985 = vst [vmem:[#allocation8 + $0x15a8] sm:$0xff] %v2961
      %3986 = vst [vmem:[#allocation8 + $0x15b0] sm:$0xff] %v2962
      %3987 = vst [vmem:[#allocation8 + $0x15b8] sm:$0xff] %v2963
      %3988 = vst [vmem:[#allocation8 + $0x15c0] sm:$0xff] %v2964
      %3989 = vst [vmem:[#allocation8 + $0x15c8] sm:$0xff] %v2965
      %3990 = vst [vmem:[#allocation8 + $0x15d0] sm:$0xff] %v2966
      %3991 = vst [vmem:[#allocation8 + $0x15d8] sm:$0xff] %v2967
      %3992 = vst [vmem:[#allocation8 + $0x15e0] sm:$0xff] %v2968
      %3993 = vst [vmem:[#allocation8 + $0x15e8] sm:$0xff] %v2969
      %3994 = vst [vmem:[#allocation8 + $0x15f0] sm:$0xff] %v2970
      %3995 = vst [vmem:[#allocation8 + $0x15f8] sm:$0xff] %v2971
      %3996 = vst [vmem:[#allocation8 + $0x1600] sm:$0xff] %v2972
      %3997 = vst [vmem:[#allocation8 + $0x1608] sm:$0xff] %v2973
      %3998 = vst [vmem:[#allocation8 + $0x1610] sm:$0xff] %v2974
      %3999 = vst [vmem:[#allocation8 + $0x1618] sm:$0xff] %v2975
      %4000 = vst [vmem:[#allocation8 + $0x1620] sm:$0xff] %v2976
      %4001 = vst [vmem:[#allocation8 + $0x1628] sm:$0xff] %v2977
      %4002 = vst [vmem:[#allocation8 + $0x1630] sm:$0xff] %v2978
      %4003 = vst [vmem:[#allocation8 + $0x1638] sm:$0xff] %v2979
      %4004 = vst [vmem:[#allocation8 + $0x1640] sm:$0xff] %v2980
      %4005 = vst [vmem:[#allocation8 + $0x1648] sm:$0xff] %v2981
      %4006 = vst [vmem:[#allocation8 + $0x1650] sm:$0xff] %v2982
      %4007 = vst [vmem:[#allocation8 + $0x1658] sm:$0xff] %v2983
      %4008 = vst [vmem:[#allocation8 + $0x1660] sm:$0xff] %v2984
      %4009 = vst [vmem:[#allocation8 + $0x1668] sm:$0xff] %v2985
      %4010 = vst [vmem:[#allocation8 + $0x1670] sm:$0xff] %v2986
      %4011 = vst [vmem:[#allocation8 + $0x1678] sm:$0xff] %v2987
      %4012 = vst [vmem:[#allocation8 + $0x1680] sm:$0xff] %v2988
      %4013 = vst [vmem:[#allocation8 + $0x1688] sm:$0xff] %v2989
      %4014 = vst [vmem:[#allocation8 + $0x1690] sm:$0xff] %v2990
      %4015 = vst [vmem:[#allocation8 + $0x1698] sm:$0xff] %v2991
      %4016 = vst [vmem:[#allocation8 + $0x16a0] sm:$0xff] %v2992
      %4017 = vst [vmem:[#allocation8 + $0x16a8] sm:$0xff] %v2993
      %4018 = vst [vmem:[#allocation8 + $0x16b0] sm:$0xff] %v2994
      %4019 = vst [vmem:[#allocation8 + $0x16b8] sm:$0xff] %v2995
      %4020 = vst [vmem:[#allocation8 + $0x16c0] sm:$0xff] %v2996
      %4021 = vst [vmem:[#allocation8 + $0x16c8] sm:$0xff] %v2997
      %4022 = vst [vmem:[#allocation8 + $0x16d0] sm:$0xff] %v2998
      %4023 = vst [vmem:[#allocation8 + $0x16d8] sm:$0xff] %v2999
      %4024 = vst [vmem:[#allocation8 + $0x16e0] sm:$0xff] %v3000
      %4025 = vst [vmem:[#allocation8 + $0x16e8] sm:$0xff] %v3001
      %4026 = vst [vmem:[#allocation8 + $0x16f0] sm:$0xff] %v3002
      %4027 = vst [vmem:[#allocation8 + $0x16f8] sm:$0xff] %v3003
      %4028 = vst [vmem:[#allocation8 + $0x1700] sm:$0xff] %v3004
      %4029 = vst [vmem:[#allocation8 + $0x1708] sm:$0xff] %v3005
      %4030 = vst [vmem:[#allocation8 + $0x1710] sm:$0xff] %v3006
      %4031 = vst [vmem:[#allocation8 + $0x1718] sm:$0xff] %v3007
      %4032 = vst [vmem:[#allocation8 + $0x1720] sm:$0xff] %v3008
      %4033 = vst [vmem:[#allocation8 + $0x1728] sm:$0xff] %v3009
      %4034 = vst [vmem:[#allocation8 + $0x1730] sm:$0xff] %v3010
      %4035 = vst [vmem:[#allocation8 + $0x1738] sm:$0xff] %v3011
      %4036 = vst [vmem:[#allocation8 + $0x1740] sm:$0xff] %v3012
      %4037 = vst [vmem:[#allocation8 + $0x1748] sm:$0xff] %v3013
      %4038 = vst [vmem:[#allocation8 + $0x1750] sm:$0xff] %v3014
      %4039 = vst [vmem:[#allocation8 + $0x1758] sm:$0xff] %v3015
      %4040 = vst [vmem:[#allocation8 + $0x1760] sm:$0xff] %v3016
      %4041 = vst [vmem:[#allocation8 + $0x1768] sm:$0xff] %v3017
      %4042 = vst [vmem:[#allocation8 + $0x1770] sm:$0xff] %v3018
      %4043 = vst [vmem:[#allocation8 + $0x1778] sm:$0xff] %v3019
      %4044 = vst [vmem:[#allocation8 + $0x1780] sm:$0xff] %v3020
      %4045 = vst [vmem:[#allocation8 + $0x1788] sm:$0xff] %v3021
      %4046 = vst [vmem:[#allocation8 + $0x1790] sm:$0xff] %v3022
      %4047 = vst [vmem:[#allocation8 + $0x1798] sm:$0xff] %v3023
      %4048 = vst [vmem:[#allocation8 + $0x17a0] sm:$0xff] %v3024
      %4049 = vst [vmem:[#allocation8 + $0x17a8] sm:$0xff] %v3025
      %4050 = vst [vmem:[#allocation8 + $0x17b0] sm:$0xff] %v3026
      %4051 = vst [vmem:[#allocation8 + $0x17b8] sm:$0xff] %v3027
      %4052 = vst [vmem:[#allocation8 + $0x17c0] sm:$0xff] %v3028
      %4053 = vst [vmem:[#allocation8 + $0x17c8] sm:$0xff] %v3029
      %4054 = vst [vmem:[#allocation8 + $0x17d0] sm:$0xff] %v3030
      %4055 = vst [vmem:[#allocation8 + $0x17d8] sm:$0xff] %v3031
      %4056 = vst [vmem:[#allocation8 + $0x17e0] sm:$0xff] %v3032
      %4057 = vst [vmem:[#allocation8 + $0x17e8] sm:$0xff] %v3033
      %4058 = vst [vmem:[#allocation8 + $0x17f0] sm:$0xff] %v3034
      %4059 = vst [vmem:[#allocation8 + $0x17f8] sm:$0xff] %v3035
      %4060 = vst [vmem:[#allocation8 + $0x1800] sm:$0xff] %v3036
      %4061 = vst [vmem:[#allocation8 + $0x1808] sm:$0xff] %v3037
      %4062 = vst [vmem:[#allocation8 + $0x1810] sm:$0xff] %v3038
      %4063 = vst [vmem:[#allocation8 + $0x1818] sm:$0xff] %v3039
      %4064 = vst [vmem:[#allocation8 + $0x1820] sm:$0xff] %v3040
      %4065 = vst [vmem:[#allocation8 + $0x1828] sm:$0xff] %v3041
      %4066 = vst [vmem:[#allocation8 + $0x1830] sm:$0xff] %v3042
      %4067 = vst [vmem:[#allocation8 + $0x1838] sm:$0xff] %v3043
      %4068 = vst [vmem:[#allocation8 + $0x1840] sm:$0xff] %v3044
      %4069 = vst [vmem:[#allocation8 + $0x1848] sm:$0xff] %v3045
      %4070 = vst [vmem:[#allocation8 + $0x1850] sm:$0xff] %v3046
      %4071 = vst [vmem:[#allocation8 + $0x1858] sm:$0xff] %v3047
      %4072 = vst [vmem:[#allocation8 + $0x1860] sm:$0xff] %v3048
      %4073 = vst [vmem:[#allocation8 + $0x1868] sm:$0xff] %v3049
      %4074 = vst [vmem:[#allocation8 + $0x1870] sm:$0xff] %v3050
      %4075 = vst [vmem:[#allocation8 + $0x1878] sm:$0xff] %v3051
      %4076 = vst [vmem:[#allocation8 + $0x1880] sm:$0xff] %v3052
      %4077 = vst [vmem:[#allocation8 + $0x1888] sm:$0xff] %v3053
      %4078 = vst [vmem:[#allocation8 + $0x1890] sm:$0xff] %v3054
      %4079 = vst [vmem:[#allocation8 + $0x1898] sm:$0xff] %v3055
      %4080 = vst [vmem:[#allocation8 + $0x18a0] sm:$0xff] %v3056
      %4081 = vst [vmem:[#allocation8 + $0x18a8] sm:$0xff] %v3057
      %4082 = vst [vmem:[#allocation8 + $0x18b0] sm:$0xff] %v3058
      %4083 = vst [vmem:[#allocation8 + $0x18b8] sm:$0xff] %v3059
      %4084 = vst [vmem:[#allocation8 + $0x18c0] sm:$0xff] %v3060
      %4085 = vst [vmem:[#allocation8 + $0x18c8] sm:$0xff] %v3061
      %4086 = vst [vmem:[#allocation8 + $0x18d0] sm:$0xff] %v3062
      %4087 = vst [vmem:[#allocation8 + $0x18d8] sm:$0xff] %v3063
      %4088 = vst [vmem:[#allocation8 + $0x18e0] sm:$0xff] %v3064
      %4089 = vst [vmem:[#allocation8 + $0x18e8] sm:$0xff] %v3065
      %4090 = vst [vmem:[#allocation8 + $0x18f0] sm:$0xff] %v3066
      %4091 = vst [vmem:[#allocation8 + $0x18f8] sm:$0xff] %v3067
      %4092 = vst [vmem:[#allocation8 + $0x1900] sm:$0xff] %v3068
      %4093 = vst [vmem:[#allocation8 + $0x1908] sm:$0xff] %v3069
      %4094 = vst [vmem:[#allocation8 + $0x1910] sm:$0xff] %v3070
      %4095 = vst [vmem:[#allocation8 + $0x1918] sm:$0xff] %v3071
      %4096 = vst [vmem:[#allocation8 + $0x1920] sm:$0xff] %v3072
      %4097 = vst [vmem:[#allocation8 + $0x1928] sm:$0xff] %v3073
      %4098 = vst [vmem:[#allocation8 + $0x1930] sm:$0xff] %v3074
      %4099 = vst [vmem:[#allocation8 + $0x1938] sm:$0xff] %v3075
      %4100 = vst [vmem:[#allocation8 + $0x1940] sm:$0xff] %v3076
      %4101 = vst [vmem:[#allocation8 + $0x1948] sm:$0xff] %v3077
      %4102 = vst [vmem:[#allocation8 + $0x1950] sm:$0xff] %v3078
      %4103 = vst [vmem:[#allocation8 + $0x1958] sm:$0xff] %v3079
      %4104 = vst [vmem:[#allocation8 + $0x1960] sm:$0xff] %v3080
      %4105 = vst [vmem:[#allocation8 + $0x1968] sm:$0xff] %v3081
      %4106 = vst [vmem:[#allocation8 + $0x1970] sm:$0xff] %v3082
      %4107 = vst [vmem:[#allocation8 + $0x1978] sm:$0xff] %v3083
      %4108 = vst [vmem:[#allocation8 + $0x1980] sm:$0xff] %v3084
      %4109 = vst [vmem:[#allocation8 + $0x1988] sm:$0xff] %v3085
      %4110 = vst [vmem:[#allocation8 + $0x1990] sm:$0xff] %v3086
      %4111 = vst [vmem:[#allocation8 + $0x1998] sm:$0xff] %v3087
      %4112 = vst [vmem:[#allocation8 + $0x19a0] sm:$0xff] %v3088
      %4113 = vst [vmem:[#allocation8 + $0x19a8] sm:$0xff] %v3089
      %4114 = vst [vmem:[#allocation8 + $0x19b0] sm:$0xff] %v3090
      %4115 = vst [vmem:[#allocation8 + $0x19b8] sm:$0xff] %v3091
      %4116 = vst [vmem:[#allocation8 + $0x19c0] sm:$0xff] %v3092
      %4117 = vst [vmem:[#allocation8 + $0x19c8] sm:$0xff] %v3093
      %4118 = vst [vmem:[#allocation8 + $0x19d0] sm:$0xff] %v3094
      %4119 = vst [vmem:[#allocation8 + $0x19d8] sm:$0xff] %v3095
      %4120 = vst [vmem:[#allocation8 + $0x19e0] sm:$0xff] %v3096
      %4121 = vst [vmem:[#allocation8 + $0x19e8] sm:$0xff] %v3097
      %4122 = vst [vmem:[#allocation8 + $0x19f0] sm:$0xff] %v3098
      %4123 = vst [vmem:[#allocation8 + $0x19f8] sm:$0xff] %v3099
      %4124 = vst [vmem:[#allocation8 + $0x1a00] sm:$0xff] %v3100
      %4125 = vst [vmem:[#allocation8 + $0x1a08] sm:$0xff] %v3101
      %4126 = vst [vmem:[#allocation8 + $0x1a10] sm:$0xff] %v3102
      %4127 = vst [vmem:[#allocation8 + $0x1a18] sm:$0xff] %v3103
      %4128 = vst [vmem:[#allocation8 + $0x1a20] sm:$0xff] %v3104
      %4129 = vst [vmem:[#allocation8 + $0x1a28] sm:$0xff] %v3105
      %4130 = vst [vmem:[#allocation8 + $0x1a30] sm:$0xff] %v3106
      %4131 = vst [vmem:[#allocation8 + $0x1a38] sm:$0xff] %v3107
      %4132 = vst [vmem:[#allocation8 + $0x1a40] sm:$0xff] %v3108
      %4133 = vst [vmem:[#allocation8 + $0x1a48] sm:$0xff] %v3109
      %4134 = vst [vmem:[#allocation8 + $0x1a50] sm:$0xff] %v3110
      %4135 = vst [vmem:[#allocation8 + $0x1a58] sm:$0xff] %v3111
      %4136 = vst [vmem:[#allocation8 + $0x1a60] sm:$0xff] %v3112
      %4137 = vst [vmem:[#allocation8 + $0x1a68] sm:$0xff] %v3113
      %4138 = vst [vmem:[#allocation8 + $0x1a70] sm:$0xff] %v3114
      %4139 = vst [vmem:[#allocation8 + $0x1a78] sm:$0xff] %v3115
      %4140 = vst [vmem:[#allocation8 + $0x1a80] sm:$0xff] %v3116
      %4141 = vst [vmem:[#allocation8 + $0x1a88] sm:$0xff] %v3117
      %4142 = vst [vmem:[#allocation8 + $0x1a90] sm:$0xff] %v3118
      %4143 = vst [vmem:[#allocation8 + $0x1a98] sm:$0xff] %v3119
      %4144 = vst [vmem:[#allocation8 + $0x1aa0] sm:$0xff] %v3120
      %4145 = vst [vmem:[#allocation8 + $0x1aa8] sm:$0xff] %v3121
      %4146 = vst [vmem:[#allocation8 + $0x1ab0] sm:$0xff] %v3122
      %4147 = vst [vmem:[#allocation8 + $0x1ab8] sm:$0xff] %v3123
      %4148 = vst [vmem:[#allocation8 + $0x1ac0] sm:$0xff] %v3124
      %4149 = vst [vmem:[#allocation8 + $0x1ac8] sm:$0xff] %v3125
      %4150 = vst [vmem:[#allocation8 + $0x1ad0] sm:$0xff] %v3126
      %4151 = vst [vmem:[#allocation8 + $0x1ad8] sm:$0xff] %v3127
      %4152 = vst [vmem:[#allocation8 + $0x1ae0] sm:$0xff] %v3128
      %4153 = vst [vmem:[#allocation8 + $0x1ae8] sm:$0xff] %v3129
      %4154 = vst [vmem:[#allocation8 + $0x1af0] sm:$0xff] %v3130
      %4155 = vst [vmem:[#allocation8 + $0x1af8] sm:$0xff] %v3131
      %4156 = vst [vmem:[#allocation8 + $0x1b00] sm:$0xff] %v3132
      %4157 = vst [vmem:[#allocation8 + $0x1b08] sm:$0xff] %v3133
      %4158 = vst [vmem:[#allocation8 + $0x1b10] sm:$0xff] %v3134
      %4159 = vst [vmem:[#allocation8 + $0x1b18] sm:$0xff] %v3135
      %4160 = vst [vmem:[#allocation8 + $0x1b20] sm:$0xff] %v3136
      %4161 = vst [vmem:[#allocation8 + $0x1b28] sm:$0xff] %v3137
      %4162 = vst [vmem:[#allocation8 + $0x1b30] sm:$0xff] %v3138
      %4163 = vst [vmem:[#allocation8 + $0x1b38] sm:$0xff] %v3139
      %4164 = vst [vmem:[#allocation8 + $0x1b40] sm:$0xff] %v3140
      %4165 = vst [vmem:[#allocation8 + $0x1b48] sm:$0xff] %v3141
      %4166 = vst [vmem:[#allocation8 + $0x1b50] sm:$0xff] %v3142
      %4167 = vst [vmem:[#allocation8 + $0x1b58] sm:$0xff] %v3143
      %4168 = vst [vmem:[#allocation8 + $0x1b60] sm:$0xff] %v3144
      %4169 = vst [vmem:[#allocation8 + $0x1b68] sm:$0xff] %v3145
      %4170 = vst [vmem:[#allocation8 + $0x1b70] sm:$0xff] %v3146
      %4171 = vst [vmem:[#allocation8 + $0x1b78] sm:$0xff] %v3147
      %4172 = vst [vmem:[#allocation8 + $0x1b80] sm:$0xff] %v3148
      %4173 = vst [vmem:[#allocation8 + $0x1b88] sm:$0xff] %v3149
      %4174 = vst [vmem:[#allocation8 + $0x1b90] sm:$0xff] %v3150
      %4175 = vst [vmem:[#allocation8 + $0x1b98] sm:$0xff] %v3151
      %4176 = vst [vmem:[#allocation8 + $0x1ba0] sm:$0xff] %v3152
      %4177 = vst [vmem:[#allocation8 + $0x1ba8] sm:$0xff] %v3153
      %4178 = vst [vmem:[#allocation8 + $0x1bb0] sm:$0xff] %v3154
      %4179 = vst [vmem:[#allocation8 + $0x1bb8] sm:$0xff] %v3155
      %4180 = vst [vmem:[#allocation8 + $0x1bc0] sm:$0xff] %v3156
      %4181 = vst [vmem:[#allocation8 + $0x1bc8] sm:$0xff] %v3157
      %4182 = vst [vmem:[#allocation8 + $0x1bd0] sm:$0xff] %v3158
      %4183 = vst [vmem:[#allocation8 + $0x1bd8] sm:$0xff] %v3159
      %4184 = vst [vmem:[#allocation8 + $0x1be0] sm:$0xff] %v3160
      %4185 = vst [vmem:[#allocation8 + $0x1be8] sm:$0xff] %v3161
      %4186 = vst [vmem:[#allocation8 + $0x1bf0] sm:$0xff] %v3162
      %4187 = vst [vmem:[#allocation8 + $0x1bf8] sm:$0xff] %v3163
      %4188 = vst [vmem:[#allocation8 + $0x1c00] sm:$0xff] %v3164
      %4189 = vst [vmem:[#allocation8 + $0x1c08] sm:$0xff] %v3165
      %4190 = vst [vmem:[#allocation8 + $0x1c10] sm:$0xff] %v3166
      %4191 = vst [vmem:[#allocation8 + $0x1c18] sm:$0xff] %v3167
      %4192 = vst [vmem:[#allocation8 + $0x1c20] sm:$0xff] %v3168
      %4193 = vst [vmem:[#allocation8 + $0x1c28] sm:$0xff] %v3169
      %4194 = vst [vmem:[#allocation8 + $0x1c30] sm:$0xff] %v3170
      %4195 = vst [vmem:[#allocation8 + $0x1c38] sm:$0xff] %v3171
      %4196 = vst [vmem:[#allocation8 + $0x1c40] sm:$0xff] %v3172
      %4197 = vst [vmem:[#allocation8 + $0x1c48] sm:$0xff] %v3173
      %4198 = vst [vmem:[#allocation8 + $0x1c50] sm:$0xff] %v3174
      %4199 = vst [vmem:[#allocation8 + $0x1c58] sm:$0xff] %v3175
      %4200 = vst [vmem:[#allocation8 + $0x1c60] sm:$0xff] %v3176
      %4201 = vst [vmem:[#allocation8 + $0x1c68] sm:$0xff] %v3177
      %4202 = vst [vmem:[#allocation8 + $0x1c70] sm:$0xff] %v3178
      %4203 = vst [vmem:[#allocation8 + $0x1c78] sm:$0xff] %v3179
      %4204 = vst [vmem:[#allocation8 + $0x1c80] sm:$0xff] %v3180
      %4205 = vst [vmem:[#allocation8 + $0x1c88] sm:$0xff] %v3181
      %4206 = vst [vmem:[#allocation8 + $0x1c90] sm:$0xff] %v3182
      %4207 = vst [vmem:[#allocation8 + $0x1c98] sm:$0xff] %v3183
      %4208 = vst [vmem:[#allocation8 + $0x1ca0] sm:$0xff] %v3184
      %4209 = vst [vmem:[#allocation8 + $0x1ca8] sm:$0xff] %v3185
      %4210 = vst [vmem:[#allocation8 + $0x1cb0] sm:$0xff] %v3186
      %4211 = vst [vmem:[#allocation8 + $0x1cb8] sm:$0xff] %v3187
      %4212 = vst [vmem:[#allocation8 + $0x1cc0] sm:$0xff] %v3188
      %4213 = vst [vmem:[#allocation8 + $0x1cc8] sm:$0xff] %v3189
      %4214 = vst [vmem:[#allocation8 + $0x1cd0] sm:$0xff] %v3190
      %4215 = vst [vmem:[#allocation8 + $0x1cd8] sm:$0xff] %v3191
      %4216 = vst [vmem:[#allocation8 + $0x1ce0] sm:$0xff] %v3192
      %4217 = vst [vmem:[#allocation8 + $0x1ce8] sm:$0xff] %v3193
      %4218 = vst [vmem:[#allocation8 + $0x1cf0] sm:$0xff] %v3194
      %4219 = vst [vmem:[#allocation8 + $0x1cf8] sm:$0xff] %v3195
      %4220 = vst [vmem:[#allocation8 + $0x1d00] sm:$0xff] %v3196
      %4221 = vst [vmem:[#allocation8 + $0x1d08] sm:$0xff] %v3197
      %4222 = vst [vmem:[#allocation8 + $0x1d10] sm:$0xff] %v3198
      %4223 = vst [vmem:[#allocation8 + $0x1d18] sm:$0xff] %v3199
      %4224 = vst [vmem:[#allocation8 + $0x1d20] sm:$0xff] %v3200
      %4225 = vst [vmem:[#allocation8 + $0x1d28] sm:$0xff] %v3201
      %4226 = vst [vmem:[#allocation8 + $0x1d30] sm:$0xff] %v3202
      %4227 = vst [vmem:[#allocation8 + $0x1d38] sm:$0xff] %v3203
      %4228 = vst [vmem:[#allocation8 + $0x1d40] sm:$0xff] %v3204
      %4229 = vst [vmem:[#allocation8 + $0x1d48] sm:$0xff] %v3205
      %4230 = vst [vmem:[#allocation8 + $0x1d50] sm:$0xff] %v3206
      %4231 = vst [vmem:[#allocation8 + $0x1d58] sm:$0xff] %v3207
      %4232 = vst [vmem:[#allocation8 + $0x1d60] sm:$0xff] %v3208
      %4233 = vst [vmem:[#allocation8 + $0x1d68] sm:$0xff] %v3209
      %4234 = vst [vmem:[#allocation8 + $0x1d70] sm:$0xff] %v3210
      %4235 = vst [vmem:[#allocation8 + $0x1d78] sm:$0xff] %v3211
      %4236 = vst [vmem:[#allocation8 + $0x1d80] sm:$0xff] %v3212
      %4237 = vst [vmem:[#allocation8 + $0x1d88] sm:$0xff] %v3213
      %4238 = vst [vmem:[#allocation8 + $0x1d90] sm:$0xff] %v3214
      %4239 = vst [vmem:[#allocation8 + $0x1d98] sm:$0xff] %v3215
      %4240 = vst [vmem:[#allocation8 + $0x1da0] sm:$0xff] %v3216
      %4241 = vst [vmem:[#allocation8 + $0x1da8] sm:$0xff] %v3217
      %4242 = vst [vmem:[#allocation8 + $0x1db0] sm:$0xff] %v3218
      %4243 = vst [vmem:[#allocation8 + $0x1db8] sm:$0xff] %v3219
      %4244 = vst [vmem:[#allocation8 + $0x1dc0] sm:$0xff] %v3220
      %4245 = vst [vmem:[#allocation8 + $0x1dc8] sm:$0xff] %v3221
      %4246 = vst [vmem:[#allocation8 + $0x1dd0] sm:$0xff] %v3222
      %4247 = vst [vmem:[#allocation8 + $0x1dd8] sm:$0xff] %v3223
      %4248 = vst [vmem:[#allocation8 + $0x1de0] sm:$0xff] %v3224
      %4249 = vst [vmem:[#allocation8 + $0x1de8] sm:$0xff] %v3225
      %4250 = vst [vmem:[#allocation8 + $0x1df0] sm:$0xff] %v3226
      %4251 = vst [vmem:[#allocation8 + $0x1df8] sm:$0xff] %v3227
      %4252 = vst [vmem:[#allocation8 + $0x1e00] sm:$0xff] %v3228
      %4253 = vst [vmem:[#allocation8 + $0x1e08] sm:$0xff] %v3229
      %4254 = vst [vmem:[#allocation8 + $0x1e10] sm:$0xff] %v3230
      %4255 = vst [vmem:[#allocation8 + $0x1e18] sm:$0xff] %v3231
      %4256 = vst [vmem:[#allocation8 + $0x1e20] sm:$0xff] %v3232
      %4257 = vst [vmem:[#allocation8 + $0x1e28] sm:$0xff] %v3233
      %4258 = vst [vmem:[#allocation8 + $0x1e30] sm:$0xff] %v3234
      %4259 = vst [vmem:[#allocation8 + $0x1e38] sm:$0xff] %v3235
      %4260 = vst [vmem:[#allocation8 + $0x1e40] sm:$0xff] %v3236
      %4261 = vst [vmem:[#allocation8 + $0x1e48] sm:$0xff] %v3237
      %4262 = vst [vmem:[#allocation8 + $0x1e50] sm:$0xff] %v3238
      %4263 = vst [vmem:[#allocation8 + $0x1e58] sm:$0xff] %v3239
      %4264 = vst [vmem:[#allocation8 + $0x1e60] sm:$0xff] %v3240
      %4265 = vst [vmem:[#allocation8 + $0x1e68] sm:$0xff] %v3241
      %4266 = vst [vmem:[#allocation8 + $0x1e70] sm:$0xff] %v3242
      %4267 = vst [vmem:[#allocation8 + $0x1e78] sm:$0xff] %v3243
      %4268 = vst [vmem:[#allocation8 + $0x1e80] sm:$0xff] %v3244
      %4269 = vst [vmem:[#allocation8 + $0x1e88] sm:$0xff] %v3245
      %4270 = vst [vmem:[#allocation8 + $0x1e90] sm:$0xff] %v3246
      %4271 = vst [vmem:[#allocation8 + $0x1e98] sm:$0xff] %v3247
      %4272 = vst [vmem:[#allocation8 + $0x1ea0] sm:$0xff] %v3248
      %4273 = vst [vmem:[#allocation8 + $0x1ea8] sm:$0xff] %v3249
      %4274 = vst [vmem:[#allocation8 + $0x1eb0] sm:$0xff] %v3250
      %4275 = vst [vmem:[#allocation8 + $0x1eb8] sm:$0xff] %v3251
      %4276 = vst [vmem:[#allocation8 + $0x1ec0] sm:$0xff] %v3252
      %4277 = vst [vmem:[#allocation8 + $0x1ec8] sm:$0xff] %v3253
      %4278 = vst [vmem:[#allocation8 + $0x1ed0] sm:$0xff] %v3254
      %4279 = vst [vmem:[#allocation8 + $0x1ed8] sm:$0xff] %v3255
      %4280 = vst [vmem:[#allocation8 + $0x1ee0] sm:$0xff] %v3256
      %4281 = vst [vmem:[#allocation8 + $0x1ee8] sm:$0xff] %v3257
      %4282 = vst [vmem:[#allocation8 + $0x1ef0] sm:$0xff] %v3258
      %4283 = vst [vmem:[#allocation8 + $0x1ef8] sm:$0xff] %v3259
      %4284 = vst [vmem:[#allocation8 + $0x1f00] sm:$0xff] %v3260
      %4285 = vst [vmem:[#allocation8 + $0x1f08] sm:$0xff] %v3261
      %4286 = vst [vmem:[#allocation8 + $0x1f10] sm:$0xff] %v3262
      %4287 = vst [vmem:[#allocation8 + $0x1f18] sm:$0xff] %v3263
      %4288 = vst [vmem:[#allocation8 + $0x1f20] sm:$0xff] %v3264
      %4289 = vst [vmem:[#allocation8 + $0x1f28] sm:$0xff] %v3265
      %4290 = vst [vmem:[#allocation8 + $0x1f30] sm:$0xff] %v3266
      %4291 = vst [vmem:[#allocation8 + $0x1f38] sm:$0xff] %v3267
      %4292 = vst [vmem:[#allocation8 + $0x1f40] sm:$0xff] %v3268
      %4293 = vst [vmem:[#allocation8 + $0x1f48] sm:$0xff] %v3269
      %4294 = vst [vmem:[#allocation8 + $0x1f50] sm:$0xff] %v3270
      %4295 = vst [vmem:[#allocation8 + $0x1f58] sm:$0xff] %v3271
      %4296 = vst [vmem:[#allocation8 + $0x1f60] sm:$0xff] %v3272
      %4297 = vst [vmem:[#allocation8 + $0x1f68] sm:$0xff] %v3273
      %4298 = vst [vmem:[#allocation8 + $0x1f70] sm:$0xff] %v3274
      %4299 = vst [vmem:[#allocation8 + $0x1f78] sm:$0xff] %v3275
      %4300 = vst [vmem:[#allocation8 + $0x1f80] sm:$0xff] %v3276
      %4301 = vst [vmem:[#allocation8 + $0x1f88] sm:$0xff] %v3277
      %4302 = vst [vmem:[#allocation8 + $0x1f90] sm:$0xff] %v3278
      %4303 = vst [vmem:[#allocation8 + $0x1f98] sm:$0xff] %v3279
      %4304 = vst [vmem:[#allocation8 + $0x1fa0] sm:$0xff] %v3280
      %4305 = vst [vmem:[#allocation8 + $0x1fa8] sm:$0xff] %v3281
      %4306 = vst [vmem:[#allocation8 + $0x1fb0] sm:$0xff] %v3282
      %4307 = vst [vmem:[#allocation8 + $0x1fb8] sm:$0xff] %v3283
      %4308 = vst [vmem:[#allocation8 + $0x1fc0] sm:$0xff] %v3284
      %4309 = vst [vmem:[#allocation8 + $0x1fc8] sm:$0xff] %v3285
      %4310 = vst [vmem:[#allocation8 + $0x1fd0] sm:$0xff] %v3286
      %4311 = vst [vmem:[#allocation8 + $0x1fd8] sm:$0xff] %v3287
      %4312 = vst [vmem:[#allocation8 + $0x1fe0] sm:$0xff] %v3288
      %4313 = vst [vmem:[#allocation8 + $0x1fe8] sm:$0xff] %v3289
      %4314 = vst [vmem:[#allocation8 + $0x1ff0] sm:$0xff] %v3290
      %4315 = vst [vmem:[#allocation8 + $0x1ff8] sm:$0xff] %v3291
    $region105: #{tpu_custom_call.1} parent=1 // pred_fallthru
      _
    %v4316 = vld [vmem:[#allocation8] sm:$0xff]
    %v4317 = vld [vmem:[#allocation8 + $0x8] sm:$0xff]
    %v4318 = vld [vmem:[#allocation8 + $0x10] sm:$0xff]
    %v4319 = vld [vmem:[#allocation8 + $0x18] sm:$0xff]
    %v4320 = vld [vmem:[#allocation8 + $0x20] sm:$0xff]
    %v4321 = vld [vmem:[#allocation8 + $0x28] sm:$0xff]
    %v4322 = vld [vmem:[#allocation8 + $0x30] sm:$0xff]
    %v4323 = vld [vmem:[#allocation8 + $0x38] sm:$0xff]
    %v4324 = vld [vmem:[#allocation8 + $0x40] sm:$0xff]
    %v4325 = vld [vmem:[#allocation8 + $0x48] sm:$0xff]
    %v4326 = vld [vmem:[#allocation8 + $0x50] sm:$0xff]
    %v4327 = vld [vmem:[#allocation8 + $0x58] sm:$0xff]
    %v4328 = vld [vmem:[#allocation8 + $0x60] sm:$0xff]
    %v4329 = vld [vmem:[#allocation8 + $0x68] sm:$0xff]
    %v4330 = vld [vmem:[#allocation8 + $0x70] sm:$0xff]
    %v4331 = vld [vmem:[#allocation8 + $0x78] sm:$0xff]
    %v4332 = vld [vmem:[#allocation8 + $0x80] sm:$0xff]
    %v4333 = vld [vmem:[#allocation8 + $0x88] sm:$0xff]
    %v4334 = vld [vmem:[#allocation8 + $0x90] sm:$0xff]
    %v4335 = vld [vmem:[#allocation8 + $0x98] sm:$0xff]
    %v4336 = vld [vmem:[#allocation8 + $0xa0] sm:$0xff]
    %v4337 = vld [vmem:[#allocation8 + $0xa8] sm:$0xff]
    %v4338 = vld [vmem:[#allocation8 + $0xb0] sm:$0xff]
    %v4339 = vld [vmem:[#allocation8 + $0xb8] sm:$0xff]
    %v4340 = vld [vmem:[#allocation8 + $0xc0] sm:$0xff]
    %v4341 = vld [vmem:[#allocation8 + $0xc8] sm:$0xff]
    %v4342 = vld [vmem:[#allocation8 + $0xd0] sm:$0xff]
    %v4343 = vld [vmem:[#allocation8 + $0xd8] sm:$0xff]
    %v4344 = vld [vmem:[#allocation8 + $0xe0] sm:$0xff]
    %v4345 = vld [vmem:[#allocation8 + $0xe8] sm:$0xff]
    %v4346 = vld [vmem:[#allocation8 + $0xf0] sm:$0xff]
    %v4347 = vld [vmem:[#allocation8 + $0xf8] sm:$0xff]
    %v4348 = vld [vmem:[#allocation8 + $0x100] sm:$0xff]
    %v4349 = vld [vmem:[#allocation8 + $0x108] sm:$0xff]
    %v4350 = vld [vmem:[#allocation8 + $0x110] sm:$0xff]
    %v4351 = vld [vmem:[#allocation8 + $0x118] sm:$0xff]
    %v4352 = vld [vmem:[#allocation8 + $0x120] sm:$0xff]
    %v4353 = vld [vmem:[#allocation8 + $0x128] sm:$0xff]
    %v4354 = vld [vmem:[#allocation8 + $0x130] sm:$0xff]
    %v4355 = vld [vmem:[#allocation8 + $0x138] sm:$0xff]
    %v4356 = vld [vmem:[#allocation8 + $0x140] sm:$0xff]
    %v4357 = vld [vmem:[#allocation8 + $0x148] sm:$0xff]
    %v4358 = vld [vmem:[#allocation8 + $0x150] sm:$0xff]
    %v4359 = vld [vmem:[#allocation8 + $0x158] sm:$0xff]
    %v4360 = vld [vmem:[#allocation8 + $0x160] sm:$0xff]
    %v4361 = vld [vmem:[#allocation8 + $0x168] sm:$0xff]
    %v4362 = vld [vmem:[#allocation8 + $0x170] sm:$0xff]
    %v4363 = vld [vmem:[#allocation8 + $0x178] sm:$0xff]
    %v4364 = vld [vmem:[#allocation8 + $0x180] sm:$0xff]
    %v4365 = vld [vmem:[#allocation8 + $0x188] sm:$0xff]
    %v4366 = vld [vmem:[#allocation8 + $0x190] sm:$0xff]
    %v4367 = vld [vmem:[#allocation8 + $0x198] sm:$0xff]
    %v4368 = vld [vmem:[#allocation8 + $0x1a0] sm:$0xff]
    %v4369 = vld [vmem:[#allocation8 + $0x1a8] sm:$0xff]
    %v4370 = vld [vmem:[#allocation8 + $0x1b0] sm:$0xff]
    %v4371 = vld [vmem:[#allocation8 + $0x1b8] sm:$0xff]
    %v4372 = vld [vmem:[#allocation8 + $0x1c0] sm:$0xff]
    %v4373 = vld [vmem:[#allocation8 + $0x1c8] sm:$0xff]
    %v4374 = vld [vmem:[#allocation8 + $0x1d0] sm:$0xff]
    %v4375 = vld [vmem:[#allocation8 + $0x1d8] sm:$0xff]
    %v4376 = vld [vmem:[#allocation8 + $0x1e0] sm:$0xff]
    %v4377 = vld [vmem:[#allocation8 + $0x1e8] sm:$0xff]
    %v4378 = vld [vmem:[#allocation8 + $0x1f0] sm:$0xff]
    %v4379 = vld [vmem:[#allocation8 + $0x1f8] sm:$0xff]
    %v4380 = vld [vmem:[#allocation8 + $0x200] sm:$0xff]
    %v4381 = vld [vmem:[#allocation8 + $0x208] sm:$0xff]
    %v4382 = vld [vmem:[#allocation8 + $0x210] sm:$0xff]
    %v4383 = vld [vmem:[#allocation8 + $0x218] sm:$0xff]
    %v4384 = vld [vmem:[#allocation8 + $0x220] sm:$0xff]
    %v4385 = vld [vmem:[#allocation8 + $0x228] sm:$0xff]
    %v4386 = vld [vmem:[#allocation8 + $0x230] sm:$0xff]
    %v4387 = vld [vmem:[#allocation8 + $0x238] sm:$0xff]
    %v4388 = vld [vmem:[#allocation8 + $0x240] sm:$0xff]
    %v4389 = vld [vmem:[#allocation8 + $0x248] sm:$0xff]
    %v4390 = vld [vmem:[#allocation8 + $0x250] sm:$0xff]
    %v4391 = vld [vmem:[#allocation8 + $0x258] sm:$0xff]
    %v4392 = vld [vmem:[#allocation8 + $0x260] sm:$0xff]
    %v4393 = vld [vmem:[#allocation8 + $0x268] sm:$0xff]
    %v4394 = vld [vmem:[#allocation8 + $0x270] sm:$0xff]
    %v4395 = vld [vmem:[#allocation8 + $0x278] sm:$0xff]
    %v4396 = vld [vmem:[#allocation8 + $0x280] sm:$0xff]
    %v4397 = vld [vmem:[#allocation8 + $0x288] sm:$0xff]
    %v4398 = vld [vmem:[#allocation8 + $0x290] sm:$0xff]
    %v4399 = vld [vmem:[#allocation8 + $0x298] sm:$0xff]
    %v4400 = vld [vmem:[#allocation8 + $0x2a0] sm:$0xff]
    %v4401 = vld [vmem:[#allocation8 + $0x2a8] sm:$0xff]
    %v4402 = vld [vmem:[#allocation8 + $0x2b0] sm:$0xff]
    %v4403 = vld [vmem:[#allocation8 + $0x2b8] sm:$0xff]
    %v4404 = vld [vmem:[#allocation8 + $0x2c0] sm:$0xff]
    %v4405 = vld [vmem:[#allocation8 + $0x2c8] sm:$0xff]
    %v4406 = vld [vmem:[#allocation8 + $0x2d0] sm:$0xff]
    %v4407 = vld [vmem:[#allocation8 + $0x2d8] sm:$0xff]
    %v4408 = vld [vmem:[#allocation8 + $0x2e0] sm:$0xff]
    %v4409 = vld [vmem:[#allocation8 + $0x2e8] sm:$0xff]
    %v4410 = vld [vmem:[#allocation8 + $0x2f0] sm:$0xff]
    %v4411 = vld [vmem:[#allocation8 + $0x2f8] sm:$0xff]
    %v4412 = vld [vmem:[#allocation8 + $0x300] sm:$0xff]
    %v4413 = vld [vmem:[#allocation8 + $0x308] sm:$0xff]
    %v4414 = vld [vmem:[#allocation8 + $0x310] sm:$0xff]
    %v4415 = vld [vmem:[#allocation8 + $0x318] sm:$0xff]
    %v4416 = vld [vmem:[#allocation8 + $0x320] sm:$0xff]
    %v4417 = vld [vmem:[#allocation8 + $0x328] sm:$0xff]
    %v4418 = vld [vmem:[#allocation8 + $0x330] sm:$0xff]
    %v4419 = vld [vmem:[#allocation8 + $0x338] sm:$0xff]
    %v4420 = vld [vmem:[#allocation8 + $0x340] sm:$0xff]
    %v4421 = vld [vmem:[#allocation8 + $0x348] sm:$0xff]
    %v4422 = vld [vmem:[#allocation8 + $0x350] sm:$0xff]
    %v4423 = vld [vmem:[#allocation8 + $0x358] sm:$0xff]
    %v4424 = vld [vmem:[#allocation8 + $0x360] sm:$0xff]
    %v4425 = vld [vmem:[#allocation8 + $0x368] sm:$0xff]
    %v4426 = vld [vmem:[#allocation8 + $0x370] sm:$0xff]
    %v4427 = vld [vmem:[#allocation8 + $0x378] sm:$0xff]
    %v4428 = vld [vmem:[#allocation8 + $0x380] sm:$0xff]
    %v4429 = vld [vmem:[#allocation8 + $0x388] sm:$0xff]
    %v4430 = vld [vmem:[#allocation8 + $0x390] sm:$0xff]
    %v4431 = vld [vmem:[#allocation8 + $0x398] sm:$0xff]
    %v4432 = vld [vmem:[#allocation8 + $0x3a0] sm:$0xff]
    %v4433 = vld [vmem:[#allocation8 + $0x3a8] sm:$0xff]
    %v4434 = vld [vmem:[#allocation8 + $0x3b0] sm:$0xff]
    %v4435 = vld [vmem:[#allocation8 + $0x3b8] sm:$0xff]
    %v4436 = vld [vmem:[#allocation8 + $0x3c0] sm:$0xff]
    %v4437 = vld [vmem:[#allocation8 + $0x3c8] sm:$0xff]
    %v4438 = vld [vmem:[#allocation8 + $0x3d0] sm:$0xff]
    %v4439 = vld [vmem:[#allocation8 + $0x3d8] sm:$0xff]
    %v4440 = vld [vmem:[#allocation8 + $0x3e0] sm:$0xff]
    %v4441 = vld [vmem:[#allocation8 + $0x3e8] sm:$0xff]
    %v4442 = vld [vmem:[#allocation8 + $0x3f0] sm:$0xff]
    %v4443 = vld [vmem:[#allocation8 + $0x3f8] sm:$0xff]
    %v4444 = vld [vmem:[#allocation8 + $0x400] sm:$0xff]
    %v4445 = vld [vmem:[#allocation8 + $0x408] sm:$0xff]
    %v4446 = vld [vmem:[#allocation8 + $0x410] sm:$0xff]
    %v4447 = vld [vmem:[#allocation8 + $0x418] sm:$0xff]
    %v4448 = vld [vmem:[#allocation8 + $0x420] sm:$0xff]
    %v4449 = vld [vmem:[#allocation8 + $0x428] sm:$0xff]
    %v4450 = vld [vmem:[#allocation8 + $0x430] sm:$0xff]
    %v4451 = vld [vmem:[#allocation8 + $0x438] sm:$0xff]
    %v4452 = vld [vmem:[#allocation8 + $0x440] sm:$0xff]
    %v4453 = vld [vmem:[#allocation8 + $0x448] sm:$0xff]
    %v4454 = vld [vmem:[#allocation8 + $0x450] sm:$0xff]
    %v4455 = vld [vmem:[#allocation8 + $0x458] sm:$0xff]
    %v4456 = vld [vmem:[#allocation8 + $0x460] sm:$0xff]
    %v4457 = vld [vmem:[#allocation8 + $0x468] sm:$0xff]
    %v4458 = vld [vmem:[#allocation8 + $0x470] sm:$0xff]
    %v4459 = vld [vmem:[#allocation8 + $0x478] sm:$0xff]
    %v4460 = vld [vmem:[#allocation8 + $0x480] sm:$0xff]
    %v4461 = vld [vmem:[#allocation8 + $0x488] sm:$0xff]
    %v4462 = vld [vmem:[#allocation8 + $0x490] sm:$0xff]
    %v4463 = vld [vmem:[#allocation8 + $0x498] sm:$0xff]
    %v4464 = vld [vmem:[#allocation8 + $0x4a0] sm:$0xff]
    %v4465 = vld [vmem:[#allocation8 + $0x4a8] sm:$0xff]
    %v4466 = vld [vmem:[#allocation8 + $0x4b0] sm:$0xff]
    %v4467 = vld [vmem:[#allocation8 + $0x4b8] sm:$0xff]
    %v4468 = vld [vmem:[#allocation8 + $0x4c0] sm:$0xff]
    %v4469 = vld [vmem:[#allocation8 + $0x4c8] sm:$0xff]
    %v4470 = vld [vmem:[#allocation8 + $0x4d0] sm:$0xff]
    %v4471 = vld [vmem:[#allocation8 + $0x4d8] sm:$0xff]
    %v4472 = vld [vmem:[#allocation8 + $0x4e0] sm:$0xff]
    %v4473 = vld [vmem:[#allocation8 + $0x4e8] sm:$0xff]
    %v4474 = vld [vmem:[#allocation8 + $0x4f0] sm:$0xff]
    %v4475 = vld [vmem:[#allocation8 + $0x4f8] sm:$0xff]
    %v4476 = vld [vmem:[#allocation8 + $0x500] sm:$0xff]
    %v4477 = vld [vmem:[#allocation8 + $0x508] sm:$0xff]
    %v4478 = vld [vmem:[#allocation8 + $0x510] sm:$0xff]
    %v4479 = vld [vmem:[#allocation8 + $0x518] sm:$0xff]
    %v4480 = vld [vmem:[#allocation8 + $0x520] sm:$0xff]
    %v4481 = vld [vmem:[#allocation8 + $0x528] sm:$0xff]
    %v4482 = vld [vmem:[#allocation8 + $0x530] sm:$0xff]
    %v4483 = vld [vmem:[#allocation8 + $0x538] sm:$0xff]
    %v4484 = vld [vmem:[#allocation8 + $0x540] sm:$0xff]
    %v4485 = vld [vmem:[#allocation8 + $0x548] sm:$0xff]
    %v4486 = vld [vmem:[#allocation8 + $0x550] sm:$0xff]
    %v4487 = vld [vmem:[#allocation8 + $0x558] sm:$0xff]
    %v4488 = vld [vmem:[#allocation8 + $0x560] sm:$0xff]
    %v4489 = vld [vmem:[#allocation8 + $0x568] sm:$0xff]
    %v4490 = vld [vmem:[#allocation8 + $0x570] sm:$0xff]
    %v4491 = vld [vmem:[#allocation8 + $0x578] sm:$0xff]
    %v4492 = vld [vmem:[#allocation8 + $0x580] sm:$0xff]
    %v4493 = vld [vmem:[#allocation8 + $0x588] sm:$0xff]
    %v4494 = vld [vmem:[#allocation8 + $0x590] sm:$0xff]
    %v4495 = vld [vmem:[#allocation8 + $0x598] sm:$0xff]
    %v4496 = vld [vmem:[#allocation8 + $0x5a0] sm:$0xff]
    %v4497 = vld [vmem:[#allocation8 + $0x5a8] sm:$0xff]
    %v4498 = vld [vmem:[#allocation8 + $0x5b0] sm:$0xff]
    %v4499 = vld [vmem:[#allocation8 + $0x5b8] sm:$0xff]
    %v4500 = vld [vmem:[#allocation8 + $0x5c0] sm:$0xff]
    %v4501 = vld [vmem:[#allocation8 + $0x5c8] sm:$0xff]
    %v4502 = vld [vmem:[#allocation8 + $0x5d0] sm:$0xff]
    %v4503 = vld [vmem:[#allocation8 + $0x5d8] sm:$0xff]
    %v4504 = vld [vmem:[#allocation8 + $0x5e0] sm:$0xff]
    %v4505 = vld [vmem:[#allocation8 + $0x5e8] sm:$0xff]
    %v4506 = vld [vmem:[#allocation8 + $0x5f0] sm:$0xff]
    %v4507 = vld [vmem:[#allocation8 + $0x5f8] sm:$0xff]
    %v4508 = vld [vmem:[#allocation8 + $0x600] sm:$0xff]
    %v4509 = vld [vmem:[#allocation8 + $0x608] sm:$0xff]
    %v4510 = vld [vmem:[#allocation8 + $0x610] sm:$0xff]
    %v4511 = vld [vmem:[#allocation8 + $0x618] sm:$0xff]
    %v4512 = vld [vmem:[#allocation8 + $0x620] sm:$0xff]
    %v4513 = vld [vmem:[#allocation8 + $0x628] sm:$0xff]
    %v4514 = vld [vmem:[#allocation8 + $0x630] sm:$0xff]
    %v4515 = vld [vmem:[#allocation8 + $0x638] sm:$0xff]
    %v4516 = vld [vmem:[#allocation8 + $0x640] sm:$0xff]
    %v4517 = vld [vmem:[#allocation8 + $0x648] sm:$0xff]
    %v4518 = vld [vmem:[#allocation8 + $0x650] sm:$0xff]
    %v4519 = vld [vmem:[#allocation8 + $0x658] sm:$0xff]
    %v4520 = vld [vmem:[#allocation8 + $0x660] sm:$0xff]
    %v4521 = vld [vmem:[#allocation8 + $0x668] sm:$0xff]
    %v4522 = vld [vmem:[#allocation8 + $0x670] sm:$0xff]
    %v4523 = vld [vmem:[#allocation8 + $0x678] sm:$0xff]
    %v4524 = vld [vmem:[#allocation8 + $0x680] sm:$0xff]
    %v4525 = vld [vmem:[#allocation8 + $0x688] sm:$0xff]
    %v4526 = vld [vmem:[#allocation8 + $0x690] sm:$0xff]
    %v4527 = vld [vmem:[#allocation8 + $0x698] sm:$0xff]
    %v4528 = vld [vmem:[#allocation8 + $0x6a0] sm:$0xff]
    %v4529 = vld [vmem:[#allocation8 + $0x6a8] sm:$0xff]
    %v4530 = vld [vmem:[#allocation8 + $0x6b0] sm:$0xff]
    %v4531 = vld [vmem:[#allocation8 + $0x6b8] sm:$0xff]
    %v4532 = vld [vmem:[#allocation8 + $0x6c0] sm:$0xff]
    %v4533 = vld [vmem:[#allocation8 + $0x6c8] sm:$0xff]
    %v4534 = vld [vmem:[#allocation8 + $0x6d0] sm:$0xff]
    %v4535 = vld [vmem:[#allocation8 + $0x6d8] sm:$0xff]
    %v4536 = vld [vmem:[#allocation8 + $0x6e0] sm:$0xff]
    %v4537 = vld [vmem:[#allocation8 + $0x6e8] sm:$0xff]
    %v4538 = vld [vmem:[#allocation8 + $0x6f0] sm:$0xff]
    %v4539 = vld [vmem:[#allocation8 + $0x6f8] sm:$0xff]
    %v4540 = vld [vmem:[#allocation8 + $0x700] sm:$0xff]
    %v4541 = vld [vmem:[#allocation8 + $0x708] sm:$0xff]
    %v4542 = vld [vmem:[#allocation8 + $0x710] sm:$0xff]
    %v4543 = vld [vmem:[#allocation8 + $0x718] sm:$0xff]
    %v4544 = vld [vmem:[#allocation8 + $0x720] sm:$0xff]
    %v4545 = vld [vmem:[#allocation8 + $0x728] sm:$0xff]
    %v4546 = vld [vmem:[#allocation8 + $0x730] sm:$0xff]
    %v4547 = vld [vmem:[#allocation8 + $0x738] sm:$0xff]
    %v4548 = vld [vmem:[#allocation8 + $0x740] sm:$0xff]
    %v4549 = vld [vmem:[#allocation8 + $0x748] sm:$0xff]
    %v4550 = vld [vmem:[#allocation8 + $0x750] sm:$0xff]
    %v4551 = vld [vmem:[#allocation8 + $0x758] sm:$0xff]
    %v4552 = vld [vmem:[#allocation8 + $0x760] sm:$0xff]
    %v4553 = vld [vmem:[#allocation8 + $0x768] sm:$0xff]
    %v4554 = vld [vmem:[#allocation8 + $0x770] sm:$0xff]
    %v4555 = vld [vmem:[#allocation8 + $0x778] sm:$0xff]
    %v4556 = vld [vmem:[#allocation8 + $0x780] sm:$0xff]
    %v4557 = vld [vmem:[#allocation8 + $0x788] sm:$0xff]
    %v4558 = vld [vmem:[#allocation8 + $0x790] sm:$0xff]
    %v4559 = vld [vmem:[#allocation8 + $0x798] sm:$0xff]
    %v4560 = vld [vmem:[#allocation8 + $0x7a0] sm:$0xff]
    %v4561 = vld [vmem:[#allocation8 + $0x7a8] sm:$0xff]
    %v4562 = vld [vmem:[#allocation8 + $0x7b0] sm:$0xff]
    %v4563 = vld [vmem:[#allocation8 + $0x7b8] sm:$0xff]
    %v4564 = vld [vmem:[#allocation8 + $0x7c0] sm:$0xff]
    %v4565 = vld [vmem:[#allocation8 + $0x7c8] sm:$0xff]
    %v4566 = vld [vmem:[#allocation8 + $0x7d0] sm:$0xff]
    %v4567 = vld [vmem:[#allocation8 + $0x7d8] sm:$0xff]
    %v4568 = vld [vmem:[#allocation8 + $0x7e0] sm:$0xff]
    %v4569 = vld [vmem:[#allocation8 + $0x7e8] sm:$0xff]
    %v4570 = vld [vmem:[#allocation8 + $0x7f0] sm:$0xff]
    %v4571 = vld [vmem:[#allocation8 + $0x7f8] sm:$0xff]
    %v4572 = vld [vmem:[#allocation8 + $0x800] sm:$0xff]
    %v4573 = vld [vmem:[#allocation8 + $0x808] sm:$0xff]
    %v4574 = vld [vmem:[#allocation8 + $0x810] sm:$0xff]
    %v4575 = vld [vmem:[#allocation8 + $0x818] sm:$0xff]
    %v4576 = vld [vmem:[#allocation8 + $0x820] sm:$0xff]
    %v4577 = vld [vmem:[#allocation8 + $0x828] sm:$0xff]
    %v4578 = vld [vmem:[#allocation8 + $0x830] sm:$0xff]
    %v4579 = vld [vmem:[#allocation8 + $0x838] sm:$0xff]
    %v4580 = vld [vmem:[#allocation8 + $0x840] sm:$0xff]
    %v4581 = vld [vmem:[#allocation8 + $0x848] sm:$0xff]
    %v4582 = vld [vmem:[#allocation8 + $0x850] sm:$0xff]
    %v4583 = vld [vmem:[#allocation8 + $0x858] sm:$0xff]
    %v4584 = vld [vmem:[#allocation8 + $0x860] sm:$0xff]
    %v4585 = vld [vmem:[#allocation8 + $0x868] sm:$0xff]
    %v4586 = vld [vmem:[#allocation8 + $0x870] sm:$0xff]
    %v4587 = vld [vmem:[#allocation8 + $0x878] sm:$0xff]
    %v4588 = vld [vmem:[#allocation8 + $0x880] sm:$0xff]
    %v4589 = vld [vmem:[#allocation8 + $0x888] sm:$0xff]
    %v4590 = vld [vmem:[#allocation8 + $0x890] sm:$0xff]
    %v4591 = vld [vmem:[#allocation8 + $0x898] sm:$0xff]
    %v4592 = vld [vmem:[#allocation8 + $0x8a0] sm:$0xff]
    %v4593 = vld [vmem:[#allocation8 + $0x8a8] sm:$0xff]
    %v4594 = vld [vmem:[#allocation8 + $0x8b0] sm:$0xff]
    %v4595 = vld [vmem:[#allocation8 + $0x8b8] sm:$0xff]
    %v4596 = vld [vmem:[#allocation8 + $0x8c0] sm:$0xff]
    %v4597 = vld [vmem:[#allocation8 + $0x8c8] sm:$0xff]
    %v4598 = vld [vmem:[#allocation8 + $0x8d0] sm:$0xff]
    %v4599 = vld [vmem:[#allocation8 + $0x8d8] sm:$0xff]
    %v4600 = vld [vmem:[#allocation8 + $0x8e0] sm:$0xff]
    %v4601 = vld [vmem:[#allocation8 + $0x8e8] sm:$0xff]
    %v4602 = vld [vmem:[#allocation8 + $0x8f0] sm:$0xff]
    %v4603 = vld [vmem:[#allocation8 + $0x8f8] sm:$0xff]
    %v4604 = vld [vmem:[#allocation8 + $0x900] sm:$0xff]
    %v4605 = vld [vmem:[#allocation8 + $0x908] sm:$0xff]
    %v4606 = vld [vmem:[#allocation8 + $0x910] sm:$0xff]
    %v4607 = vld [vmem:[#allocation8 + $0x918] sm:$0xff]
    %v4608 = vld [vmem:[#allocation8 + $0x920] sm:$0xff]
    %v4609 = vld [vmem:[#allocation8 + $0x928] sm:$0xff]
    %v4610 = vld [vmem:[#allocation8 + $0x930] sm:$0xff]
    %v4611 = vld [vmem:[#allocation8 + $0x938] sm:$0xff]
    %v4612 = vld [vmem:[#allocation8 + $0x940] sm:$0xff]
    %v4613 = vld [vmem:[#allocation8 + $0x948] sm:$0xff]
    %v4614 = vld [vmem:[#allocation8 + $0x950] sm:$0xff]
    %v4615 = vld [vmem:[#allocation8 + $0x958] sm:$0xff]
    %v4616 = vld [vmem:[#allocation8 + $0x960] sm:$0xff]
    %v4617 = vld [vmem:[#allocation8 + $0x968] sm:$0xff]
    %v4618 = vld [vmem:[#allocation8 + $0x970] sm:$0xff]
    %v4619 = vld [vmem:[#allocation8 + $0x978] sm:$0xff]
    %v4620 = vld [vmem:[#allocation8 + $0x980] sm:$0xff]
    %v4621 = vld [vmem:[#allocation8 + $0x988] sm:$0xff]
    %v4622 = vld [vmem:[#allocation8 + $0x990] sm:$0xff]
    %v4623 = vld [vmem:[#allocation8 + $0x998] sm:$0xff]
    %v4624 = vld [vmem:[#allocation8 + $0x9a0] sm:$0xff]
    %v4625 = vld [vmem:[#allocation8 + $0x9a8] sm:$0xff]
    %v4626 = vld [vmem:[#allocation8 + $0x9b0] sm:$0xff]
    %v4627 = vld [vmem:[#allocation8 + $0x9b8] sm:$0xff]
    %v4628 = vld [vmem:[#allocation8 + $0x9c0] sm:$0xff]
    %v4629 = vld [vmem:[#allocation8 + $0x9c8] sm:$0xff]
    %v4630 = vld [vmem:[#allocation8 + $0x9d0] sm:$0xff]
    %v4631 = vld [vmem:[#allocation8 + $0x9d8] sm:$0xff]
    %v4632 = vld [vmem:[#allocation8 + $0x9e0] sm:$0xff]
    %v4633 = vld [vmem:[#allocation8 + $0x9e8] sm:$0xff]
    %v4634 = vld [vmem:[#allocation8 + $0x9f0] sm:$0xff]
    %v4635 = vld [vmem:[#allocation8 + $0x9f8] sm:$0xff]
    %v4636 = vld [vmem:[#allocation8 + $0xa00] sm:$0xff]
    %v4637 = vld [vmem:[#allocation8 + $0xa08] sm:$0xff]
    %v4638 = vld [vmem:[#allocation8 + $0xa10] sm:$0xff]
    %v4639 = vld [vmem:[#allocation8 + $0xa18] sm:$0xff]
    %v4640 = vld [vmem:[#allocation8 + $0xa20] sm:$0xff]
    %v4641 = vld [vmem:[#allocation8 + $0xa28] sm:$0xff]
    %v4642 = vld [vmem:[#allocation8 + $0xa30] sm:$0xff]
    %v4643 = vld [vmem:[#allocation8 + $0xa38] sm:$0xff]
    %v4644 = vld [vmem:[#allocation8 + $0xa40] sm:$0xff]
    %v4645 = vld [vmem:[#allocation8 + $0xa48] sm:$0xff]
    %v4646 = vld [vmem:[#allocation8 + $0xa50] sm:$0xff]
    %v4647 = vld [vmem:[#allocation8 + $0xa58] sm:$0xff]
    %v4648 = vld [vmem:[#allocation8 + $0xa60] sm:$0xff]
    %v4649 = vld [vmem:[#allocation8 + $0xa68] sm:$0xff]
    %v4650 = vld [vmem:[#allocation8 + $0xa70] sm:$0xff]
    %v4651 = vld [vmem:[#allocation8 + $0xa78] sm:$0xff]
    %v4652 = vld [vmem:[#allocation8 + $0xa80] sm:$0xff]
    %v4653 = vld [vmem:[#allocation8 + $0xa88] sm:$0xff]
    %v4654 = vld [vmem:[#allocation8 + $0xa90] sm:$0xff]
    %v4655 = vld [vmem:[#allocation8 + $0xa98] sm:$0xff]
    %v4656 = vld [vmem:[#allocation8 + $0xaa0] sm:$0xff]
    %v4657 = vld [vmem:[#allocation8 + $0xaa8] sm:$0xff]
    %v4658 = vld [vmem:[#allocation8 + $0xab0] sm:$0xff]
    %v4659 = vld [vmem:[#allocation8 + $0xab8] sm:$0xff]
    %v4660 = vld [vmem:[#allocation8 + $0xac0] sm:$0xff]
    %v4661 = vld [vmem:[#allocation8 + $0xac8] sm:$0xff]
    %v4662 = vld [vmem:[#allocation8 + $0xad0] sm:$0xff]
    %v4663 = vld [vmem:[#allocation8 + $0xad8] sm:$0xff]
    %v4664 = vld [vmem:[#allocation8 + $0xae0] sm:$0xff]
    %v4665 = vld [vmem:[#allocation8 + $0xae8] sm:$0xff]
    %v4666 = vld [vmem:[#allocation8 + $0xaf0] sm:$0xff]
    %v4667 = vld [vmem:[#allocation8 + $0xaf8] sm:$0xff]
    %v4668 = vld [vmem:[#allocation8 + $0xb00] sm:$0xff]
    %v4669 = vld [vmem:[#allocation8 + $0xb08] sm:$0xff]
    %v4670 = vld [vmem:[#allocation8 + $0xb10] sm:$0xff]
    %v4671 = vld [vmem:[#allocation8 + $0xb18] sm:$0xff]
    %v4672 = vld [vmem:[#allocation8 + $0xb20] sm:$0xff]
    %v4673 = vld [vmem:[#allocation8 + $0xb28] sm:$0xff]
    %v4674 = vld [vmem:[#allocation8 + $0xb30] sm:$0xff]
    %v4675 = vld [vmem:[#allocation8 + $0xb38] sm:$0xff]
    %v4676 = vld [vmem:[#allocation8 + $0xb40] sm:$0xff]
    %v4677 = vld [vmem:[#allocation8 + $0xb48] sm:$0xff]
    %v4678 = vld [vmem:[#allocation8 + $0xb50] sm:$0xff]
    %v4679 = vld [vmem:[#allocation8 + $0xb58] sm:$0xff]
    %v4680 = vld [vmem:[#allocation8 + $0xb60] sm:$0xff]
    %v4681 = vld [vmem:[#allocation8 + $0xb68] sm:$0xff]
    %v4682 = vld [vmem:[#allocation8 + $0xb70] sm:$0xff]
    %v4683 = vld [vmem:[#allocation8 + $0xb78] sm:$0xff]
    %v4684 = vld [vmem:[#allocation8 + $0xb80] sm:$0xff]
    %v4685 = vld [vmem:[#allocation8 + $0xb88] sm:$0xff]
    %v4686 = vld [vmem:[#allocation8 + $0xb90] sm:$0xff]
    %v4687 = vld [vmem:[#allocation8 + $0xb98] sm:$0xff]
    %v4688 = vld [vmem:[#allocation8 + $0xba0] sm:$0xff]
    %v4689 = vld [vmem:[#allocation8 + $0xba8] sm:$0xff]
    %v4690 = vld [vmem:[#allocation8 + $0xbb0] sm:$0xff]
    %v4691 = vld [vmem:[#allocation8 + $0xbb8] sm:$0xff]
    %v4692 = vld [vmem:[#allocation8 + $0xbc0] sm:$0xff]
    %v4693 = vld [vmem:[#allocation8 + $0xbc8] sm:$0xff]
    %v4694 = vld [vmem:[#allocation8 + $0xbd0] sm:$0xff]
    %v4695 = vld [vmem:[#allocation8 + $0xbd8] sm:$0xff]
    %v4696 = vld [vmem:[#allocation8 + $0xbe0] sm:$0xff]
    %v4697 = vld [vmem:[#allocation8 + $0xbe8] sm:$0xff]
    %v4698 = vld [vmem:[#allocation8 + $0xbf0] sm:$0xff]
    %v4699 = vld [vmem:[#allocation8 + $0xbf8] sm:$0xff]
    %v4700 = vld [vmem:[#allocation8 + $0xc00] sm:$0xff]
    %v4701 = vld [vmem:[#allocation8 + $0xc08] sm:$0xff]
    %v4702 = vld [vmem:[#allocation8 + $0xc10] sm:$0xff]
    %v4703 = vld [vmem:[#allocation8 + $0xc18] sm:$0xff]
    %v4704 = vld [vmem:[#allocation8 + $0xc20] sm:$0xff]
    %v4705 = vld [vmem:[#allocation8 + $0xc28] sm:$0xff]
    %v4706 = vld [vmem:[#allocation8 + $0xc30] sm:$0xff]
    %v4707 = vld [vmem:[#allocation8 + $0xc38] sm:$0xff]
    %v4708 = vld [vmem:[#allocation8 + $0xc40] sm:$0xff]
    %v4709 = vld [vmem:[#allocation8 + $0xc48] sm:$0xff]
    %v4710 = vld [vmem:[#allocation8 + $0xc50] sm:$0xff]
    %v4711 = vld [vmem:[#allocation8 + $0xc58] sm:$0xff]
    %v4712 = vld [vmem:[#allocation8 + $0xc60] sm:$0xff]
    %v4713 = vld [vmem:[#allocation8 + $0xc68] sm:$0xff]
    %v4714 = vld [vmem:[#allocation8 + $0xc70] sm:$0xff]
    %v4715 = vld [vmem:[#allocation8 + $0xc78] sm:$0xff]
    %v4716 = vld [vmem:[#allocation8 + $0xc80] sm:$0xff]
    %v4717 = vld [vmem:[#allocation8 + $0xc88] sm:$0xff]
    %v4718 = vld [vmem:[#allocation8 + $0xc90] sm:$0xff]
    %v4719 = vld [vmem:[#allocation8 + $0xc98] sm:$0xff]
    %v4720 = vld [vmem:[#allocation8 + $0xca0] sm:$0xff]
    %v4721 = vld [vmem:[#allocation8 + $0xca8] sm:$0xff]
    %v4722 = vld [vmem:[#allocation8 + $0xcb0] sm:$0xff]
    %v4723 = vld [vmem:[#allocation8 + $0xcb8] sm:$0xff]
    %v4724 = vld [vmem:[#allocation8 + $0xcc0] sm:$0xff]
    %v4725 = vld [vmem:[#allocation8 + $0xcc8] sm:$0xff]
    %v4726 = vld [vmem:[#allocation8 + $0xcd0] sm:$0xff]
    %v4727 = vld [vmem:[#allocation8 + $0xcd8] sm:$0xff]
    %v4728 = vld [vmem:[#allocation8 + $0xce0] sm:$0xff]
    %v4729 = vld [vmem:[#allocation8 + $0xce8] sm:$0xff]
    %v4730 = vld [vmem:[#allocation8 + $0xcf0] sm:$0xff]
    %v4731 = vld [vmem:[#allocation8 + $0xcf8] sm:$0xff]
    %v4732 = vld [vmem:[#allocation8 + $0xd00] sm:$0xff]
    %v4733 = vld [vmem:[#allocation8 + $0xd08] sm:$0xff]
    %v4734 = vld [vmem:[#allocation8 + $0xd10] sm:$0xff]
    %v4735 = vld [vmem:[#allocation8 + $0xd18] sm:$0xff]
    %v4736 = vld [vmem:[#allocation8 + $0xd20] sm:$0xff]
    %v4737 = vld [vmem:[#allocation8 + $0xd28] sm:$0xff]
    %v4738 = vld [vmem:[#allocation8 + $0xd30] sm:$0xff]
    %v4739 = vld [vmem:[#allocation8 + $0xd38] sm:$0xff]
    %v4740 = vld [vmem:[#allocation8 + $0xd40] sm:$0xff]
    %v4741 = vld [vmem:[#allocation8 + $0xd48] sm:$0xff]
    %v4742 = vld [vmem:[#allocation8 + $0xd50] sm:$0xff]
    %v4743 = vld [vmem:[#allocation8 + $0xd58] sm:$0xff]
    %v4744 = vld [vmem:[#allocation8 + $0xd60] sm:$0xff]
    %v4745 = vld [vmem:[#allocation8 + $0xd68] sm:$0xff]
    %v4746 = vld [vmem:[#allocation8 + $0xd70] sm:$0xff]
    %v4747 = vld [vmem:[#allocation8 + $0xd78] sm:$0xff]
    %v4748 = vld [vmem:[#allocation8 + $0xd80] sm:$0xff]
    %v4749 = vld [vmem:[#allocation8 + $0xd88] sm:$0xff]
    %v4750 = vld [vmem:[#allocation8 + $0xd90] sm:$0xff]
    %v4751 = vld [vmem:[#allocation8 + $0xd98] sm:$0xff]
    %v4752 = vld [vmem:[#allocation8 + $0xda0] sm:$0xff]
    %v4753 = vld [vmem:[#allocation8 + $0xda8] sm:$0xff]
    %v4754 = vld [vmem:[#allocation8 + $0xdb0] sm:$0xff]
    %v4755 = vld [vmem:[#allocation8 + $0xdb8] sm:$0xff]
    %v4756 = vld [vmem:[#allocation8 + $0xdc0] sm:$0xff]
    %v4757 = vld [vmem:[#allocation8 + $0xdc8] sm:$0xff]
    %v4758 = vld [vmem:[#allocation8 + $0xdd0] sm:$0xff]
    %v4759 = vld [vmem:[#allocation8 + $0xdd8] sm:$0xff]
    %v4760 = vld [vmem:[#allocation8 + $0xde0] sm:$0xff]
    %v4761 = vld [vmem:[#allocation8 + $0xde8] sm:$0xff]
    %v4762 = vld [vmem:[#allocation8 + $0xdf0] sm:$0xff]
    %v4763 = vld [vmem:[#allocation8 + $0xdf8] sm:$0xff]
    %v4764 = vld [vmem:[#allocation8 + $0xe00] sm:$0xff]
    %v4765 = vld [vmem:[#allocation8 + $0xe08] sm:$0xff]
    %v4766 = vld [vmem:[#allocation8 + $0xe10] sm:$0xff]
    %v4767 = vld [vmem:[#allocation8 + $0xe18] sm:$0xff]
    %v4768 = vld [vmem:[#allocation8 + $0xe20] sm:$0xff]
    %v4769 = vld [vmem:[#allocation8 + $0xe28] sm:$0xff]
    %v4770 = vld [vmem:[#allocation8 + $0xe30] sm:$0xff]
    %v4771 = vld [vmem:[#allocation8 + $0xe38] sm:$0xff]
    %v4772 = vld [vmem:[#allocation8 + $0xe40] sm:$0xff]
    %v4773 = vld [vmem:[#allocation8 + $0xe48] sm:$0xff]
    %v4774 = vld [vmem:[#allocation8 + $0xe50] sm:$0xff]
    %v4775 = vld [vmem:[#allocation8 + $0xe58] sm:$0xff]
    %v4776 = vld [vmem:[#allocation8 + $0xe60] sm:$0xff]
    %v4777 = vld [vmem:[#allocation8 + $0xe68] sm:$0xff]
    %v4778 = vld [vmem:[#allocation8 + $0xe70] sm:$0xff]
    %v4779 = vld [vmem:[#allocation8 + $0xe78] sm:$0xff]
    %v4780 = vld [vmem:[#allocation8 + $0xe80] sm:$0xff]
    %v4781 = vld [vmem:[#allocation8 + $0xe88] sm:$0xff]
    %v4782 = vld [vmem:[#allocation8 + $0xe90] sm:$0xff]
    %v4783 = vld [vmem:[#allocation8 + $0xe98] sm:$0xff]
    %v4784 = vld [vmem:[#allocation8 + $0xea0] sm:$0xff]
    %v4785 = vld [vmem:[#allocation8 + $0xea8] sm:$0xff]
    %v4786 = vld [vmem:[#allocation8 + $0xeb0] sm:$0xff]
    %v4787 = vld [vmem:[#allocation8 + $0xeb8] sm:$0xff]
    %v4788 = vld [vmem:[#allocation8 + $0xec0] sm:$0xff]
    %v4789 = vld [vmem:[#allocation8 + $0xec8] sm:$0xff]
    %v4790 = vld [vmem:[#allocation8 + $0xed0] sm:$0xff]
    %v4791 = vld [vmem:[#allocation8 + $0xed8] sm:$0xff]
    %v4792 = vld [vmem:[#allocation8 + $0xee0] sm:$0xff]
    %v4793 = vld [vmem:[#allocation8 + $0xee8] sm:$0xff]
    %v4794 = vld [vmem:[#allocation8 + $0xef0] sm:$0xff]
    %v4795 = vld [vmem:[#allocation8 + $0xef8] sm:$0xff]
    %v4796 = vld [vmem:[#allocation8 + $0xf00] sm:$0xff]
    %v4797 = vld [vmem:[#allocation8 + $0xf08] sm:$0xff]
    %v4798 = vld [vmem:[#allocation8 + $0xf10] sm:$0xff]
    %v4799 = vld [vmem:[#allocation8 + $0xf18] sm:$0xff]
    %v4800 = vld [vmem:[#allocation8 + $0xf20] sm:$0xff]
    %v4801 = vld [vmem:[#allocation8 + $0xf28] sm:$0xff]
    %v4802 = vld [vmem:[#allocation8 + $0xf30] sm:$0xff]
    %v4803 = vld [vmem:[#allocation8 + $0xf38] sm:$0xff]
    %v4804 = vld [vmem:[#allocation8 + $0xf40] sm:$0xff]
    %v4805 = vld [vmem:[#allocation8 + $0xf48] sm:$0xff]
    %v4806 = vld [vmem:[#allocation8 + $0xf50] sm:$0xff]
    %v4807 = vld [vmem:[#allocation8 + $0xf58] sm:$0xff]
    %v4808 = vld [vmem:[#allocation8 + $0xf60] sm:$0xff]
    %v4809 = vld [vmem:[#allocation8 + $0xf68] sm:$0xff]
    %v4810 = vld [vmem:[#allocation8 + $0xf70] sm:$0xff]
    %v4811 = vld [vmem:[#allocation8 + $0xf78] sm:$0xff]
    %v4812 = vld [vmem:[#allocation8 + $0xf80] sm:$0xff]
    %v4813 = vld [vmem:[#allocation8 + $0xf88] sm:$0xff]
    %v4814 = vld [vmem:[#allocation8 + $0xf90] sm:$0xff]
    %v4815 = vld [vmem:[#allocation8 + $0xf98] sm:$0xff]
    %v4816 = vld [vmem:[#allocation8 + $0xfa0] sm:$0xff]
    %v4817 = vld [vmem:[#allocation8 + $0xfa8] sm:$0xff]
    %v4818 = vld [vmem:[#allocation8 + $0xfb0] sm:$0xff]
    %v4819 = vld [vmem:[#allocation8 + $0xfb8] sm:$0xff]
    %v4820 = vld [vmem:[#allocation8 + $0xfc0] sm:$0xff]
    %v4821 = vld [vmem:[#allocation8 + $0xfc8] sm:$0xff]
    %v4822 = vld [vmem:[#allocation8 + $0xfd0] sm:$0xff]
    %v4823 = vld [vmem:[#allocation8 + $0xfd8] sm:$0xff]
    %v4824 = vld [vmem:[#allocation8 + $0xfe0] sm:$0xff]
    %v4825 = vld [vmem:[#allocation8 + $0xfe8] sm:$0xff]
    %v4826 = vld [vmem:[#allocation8 + $0xff0] sm:$0xff]
    %v4827 = vld [vmem:[#allocation8 + $0xff8] sm:$0xff]
    %v4828 = vld [vmem:[#allocation8 + $0x1000] sm:$0xff]
    %v4829 = vld [vmem:[#allocation8 + $0x1008] sm:$0xff]
    %v4830 = vld [vmem:[#allocation8 + $0x1010] sm:$0xff]
    %v4831 = vld [vmem:[#allocation8 + $0x1018] sm:$0xff]
    %v4832 = vld [vmem:[#allocation8 + $0x1020] sm:$0xff]
    %v4833 = vld [vmem:[#allocation8 + $0x1028] sm:$0xff]
    %v4834 = vld [vmem:[#allocation8 + $0x1030] sm:$0xff]
    %v4835 = vld [vmem:[#allocation8 + $0x1038] sm:$0xff]
    %v4836 = vld [vmem:[#allocation8 + $0x1040] sm:$0xff]
    %v4837 = vld [vmem:[#allocation8 + $0x1048] sm:$0xff]
    %v4838 = vld [vmem:[#allocation8 + $0x1050] sm:$0xff]
    %v4839 = vld [vmem:[#allocation8 + $0x1058] sm:$0xff]
    %v4840 = vld [vmem:[#allocation8 + $0x1060] sm:$0xff]
    %v4841 = vld [vmem:[#allocation8 + $0x1068] sm:$0xff]
    %v4842 = vld [vmem:[#allocation8 + $0x1070] sm:$0xff]
    %v4843 = vld [vmem:[#allocation8 + $0x1078] sm:$0xff]
    %v4844 = vld [vmem:[#allocation8 + $0x1080] sm:$0xff]
    %v4845 = vld [vmem:[#allocation8 + $0x1088] sm:$0xff]
    %v4846 = vld [vmem:[#allocation8 + $0x1090] sm:$0xff]
    %v4847 = vld [vmem:[#allocation8 + $0x1098] sm:$0xff]
    %v4848 = vld [vmem:[#allocation8 + $0x10a0] sm:$0xff]
    %v4849 = vld [vmem:[#allocation8 + $0x10a8] sm:$0xff]
    %v4850 = vld [vmem:[#allocation8 + $0x10b0] sm:$0xff]
    %v4851 = vld [vmem:[#allocation8 + $0x10b8] sm:$0xff]
    %v4852 = vld [vmem:[#allocation8 + $0x10c0] sm:$0xff]
    %v4853 = vld [vmem:[#allocation8 + $0x10c8] sm:$0xff]
    %v4854 = vld [vmem:[#allocation8 + $0x10d0] sm:$0xff]
    %v4855 = vld [vmem:[#allocation8 + $0x10d8] sm:$0xff]
    %v4856 = vld [vmem:[#allocation8 + $0x10e0] sm:$0xff]
    %v4857 = vld [vmem:[#allocation8 + $0x10e8] sm:$0xff]
    %v4858 = vld [vmem:[#allocation8 + $0x10f0] sm:$0xff]
    %v4859 = vld [vmem:[#allocation8 + $0x10f8] sm:$0xff]
    %v4860 = vld [vmem:[#allocation8 + $0x1100] sm:$0xff]
    %v4861 = vld [vmem:[#allocation8 + $0x1108] sm:$0xff]
    %v4862 = vld [vmem:[#allocation8 + $0x1110] sm:$0xff]
    %v4863 = vld [vmem:[#allocation8 + $0x1118] sm:$0xff]
    %v4864 = vld [vmem:[#allocation8 + $0x1120] sm:$0xff]
    %v4865 = vld [vmem:[#allocation8 + $0x1128] sm:$0xff]
    %v4866 = vld [vmem:[#allocation8 + $0x1130] sm:$0xff]
    %v4867 = vld [vmem:[#allocation8 + $0x1138] sm:$0xff]
    %v4868 = vld [vmem:[#allocation8 + $0x1140] sm:$0xff]
    %v4869 = vld [vmem:[#allocation8 + $0x1148] sm:$0xff]
    %v4870 = vld [vmem:[#allocation8 + $0x1150] sm:$0xff]
    %v4871 = vld [vmem:[#allocation8 + $0x1158] sm:$0xff]
    %v4872 = vld [vmem:[#allocation8 + $0x1160] sm:$0xff]
    %v4873 = vld [vmem:[#allocation8 + $0x1168] sm:$0xff]
    %v4874 = vld [vmem:[#allocation8 + $0x1170] sm:$0xff]
    %v4875 = vld [vmem:[#allocation8 + $0x1178] sm:$0xff]
    %v4876 = vld [vmem:[#allocation8 + $0x1180] sm:$0xff]
    %v4877 = vld [vmem:[#allocation8 + $0x1188] sm:$0xff]
    %v4878 = vld [vmem:[#allocation8 + $0x1190] sm:$0xff]
    %v4879 = vld [vmem:[#allocation8 + $0x1198] sm:$0xff]
    %v4880 = vld [vmem:[#allocation8 + $0x11a0] sm:$0xff]
    %v4881 = vld [vmem:[#allocation8 + $0x11a8] sm:$0xff]
    %v4882 = vld [vmem:[#allocation8 + $0x11b0] sm:$0xff]
    %v4883 = vld [vmem:[#allocation8 + $0x11b8] sm:$0xff]
    %v4884 = vld [vmem:[#allocation8 + $0x11c0] sm:$0xff]
    %v4885 = vld [vmem:[#allocation8 + $0x11c8] sm:$0xff]
    %v4886 = vld [vmem:[#allocation8 + $0x11d0] sm:$0xff]
    %v4887 = vld [vmem:[#allocation8 + $0x11d8] sm:$0xff]
    %v4888 = vld [vmem:[#allocation8 + $0x11e0] sm:$0xff]
    %v4889 = vld [vmem:[#allocation8 + $0x11e8] sm:$0xff]
    %v4890 = vld [vmem:[#allocation8 + $0x11f0] sm:$0xff]
    %v4891 = vld [vmem:[#allocation8 + $0x11f8] sm:$0xff]
    %v4892 = vld [vmem:[#allocation8 + $0x1200] sm:$0xff]
    %v4893 = vld [vmem:[#allocation8 + $0x1208] sm:$0xff]
    %v4894 = vld [vmem:[#allocation8 + $0x1210] sm:$0xff]
    %v4895 = vld [vmem:[#allocation8 + $0x1218] sm:$0xff]
    %v4896 = vld [vmem:[#allocation8 + $0x1220] sm:$0xff]
    %v4897 = vld [vmem:[#allocation8 + $0x1228] sm:$0xff]
    %v4898 = vld [vmem:[#allocation8 + $0x1230] sm:$0xff]
    %v4899 = vld [vmem:[#allocation8 + $0x1238] sm:$0xff]
    %v4900 = vld [vmem:[#allocation8 + $0x1240] sm:$0xff]
    %v4901 = vld [vmem:[#allocation8 + $0x1248] sm:$0xff]
    %v4902 = vld [vmem:[#allocation8 + $0x1250] sm:$0xff]
    %v4903 = vld [vmem:[#allocation8 + $0x1258] sm:$0xff]
    %v4904 = vld [vmem:[#allocation8 + $0x1260] sm:$0xff]
    %v4905 = vld [vmem:[#allocation8 + $0x1268] sm:$0xff]
    %v4906 = vld [vmem:[#allocation8 + $0x1270] sm:$0xff]
    %v4907 = vld [vmem:[#allocation8 + $0x1278] sm:$0xff]
    %v4908 = vld [vmem:[#allocation8 + $0x1280] sm:$0xff]
    %v4909 = vld [vmem:[#allocation8 + $0x1288] sm:$0xff]
    %v4910 = vld [vmem:[#allocation8 + $0x1290] sm:$0xff]
    %v4911 = vld [vmem:[#allocation8 + $0x1298] sm:$0xff]
    %v4912 = vld [vmem:[#allocation8 + $0x12a0] sm:$0xff]
    %v4913 = vld [vmem:[#allocation8 + $0x12a8] sm:$0xff]
    %v4914 = vld [vmem:[#allocation8 + $0x12b0] sm:$0xff]
    %v4915 = vld [vmem:[#allocation8 + $0x12b8] sm:$0xff]
    %v4916 = vld [vmem:[#allocation8 + $0x12c0] sm:$0xff]
    %v4917 = vld [vmem:[#allocation8 + $0x12c8] sm:$0xff]
    %v4918 = vld [vmem:[#allocation8 + $0x12d0] sm:$0xff]
    %v4919 = vld [vmem:[#allocation8 + $0x12d8] sm:$0xff]
    %v4920 = vld [vmem:[#allocation8 + $0x12e0] sm:$0xff]
    %v4921 = vld [vmem:[#allocation8 + $0x12e8] sm:$0xff]
    %v4922 = vld [vmem:[#allocation8 + $0x12f0] sm:$0xff]
    %v4923 = vld [vmem:[#allocation8 + $0x12f8] sm:$0xff]
    %v4924 = vld [vmem:[#allocation8 + $0x1300] sm:$0xff]
    %v4925 = vld [vmem:[#allocation8 + $0x1308] sm:$0xff]
    %v4926 = vld [vmem:[#allocation8 + $0x1310] sm:$0xff]
    %v4927 = vld [vmem:[#allocation8 + $0x1318] sm:$0xff]
    %v4928 = vld [vmem:[#allocation8 + $0x1320] sm:$0xff]
    %v4929 = vld [vmem:[#allocation8 + $0x1328] sm:$0xff]
    %v4930 = vld [vmem:[#allocation8 + $0x1330] sm:$0xff]
    %v4931 = vld [vmem:[#allocation8 + $0x1338] sm:$0xff]
    %v4932 = vld [vmem:[#allocation8 + $0x1340] sm:$0xff]
    %v4933 = vld [vmem:[#allocation8 + $0x1348] sm:$0xff]
    %v4934 = vld [vmem:[#allocation8 + $0x1350] sm:$0xff]
    %v4935 = vld [vmem:[#allocation8 + $0x1358] sm:$0xff]
    %v4936 = vld [vmem:[#allocation8 + $0x1360] sm:$0xff]
    %v4937 = vld [vmem:[#allocation8 + $0x1368] sm:$0xff]
    %v4938 = vld [vmem:[#allocation8 + $0x1370] sm:$0xff]
    %v4939 = vld [vmem:[#allocation8 + $0x1378] sm:$0xff]
    %v4940 = vld [vmem:[#allocation8 + $0x1380] sm:$0xff]
    %v4941 = vld [vmem:[#allocation8 + $0x1388] sm:$0xff]
    %v4942 = vld [vmem:[#allocation8 + $0x1390] sm:$0xff]
    %v4943 = vld [vmem:[#allocation8 + $0x1398] sm:$0xff]
    %v4944 = vld [vmem:[#allocation8 + $0x13a0] sm:$0xff]
    %v4945 = vld [vmem:[#allocation8 + $0x13a8] sm:$0xff]
    %v4946 = vld [vmem:[#allocation8 + $0x13b0] sm:$0xff]
    %v4947 = vld [vmem:[#allocation8 + $0x13b8] sm:$0xff]
    %v4948 = vld [vmem:[#allocation8 + $0x13c0] sm:$0xff]
    %v4949 = vld [vmem:[#allocation8 + $0x13c8] sm:$0xff]
    %v4950 = vld [vmem:[#allocation8 + $0x13d0] sm:$0xff]
    %v4951 = vld [vmem:[#allocation8 + $0x13d8] sm:$0xff]
    %v4952 = vld [vmem:[#allocation8 + $0x13e0] sm:$0xff]
    %v4953 = vld [vmem:[#allocation8 + $0x13e8] sm:$0xff]
    %v4954 = vld [vmem:[#allocation8 + $0x13f0] sm:$0xff]
    %v4955 = vld [vmem:[#allocation8 + $0x13f8] sm:$0xff]
    %v4956 = vld [vmem:[#allocation8 + $0x1400] sm:$0xff]
    %v4957 = vld [vmem:[#allocation8 + $0x1408] sm:$0xff]
    %v4958 = vld [vmem:[#allocation8 + $0x1410] sm:$0xff]
    %v4959 = vld [vmem:[#allocation8 + $0x1418] sm:$0xff]
    %v4960 = vld [vmem:[#allocation8 + $0x1420] sm:$0xff]
    %v4961 = vld [vmem:[#allocation8 + $0x1428] sm:$0xff]
    %v4962 = vld [vmem:[#allocation8 + $0x1430] sm:$0xff]
    %v4963 = vld [vmem:[#allocation8 + $0x1438] sm:$0xff]
    %v4964 = vld [vmem:[#allocation8 + $0x1440] sm:$0xff]
    %v4965 = vld [vmem:[#allocation8 + $0x1448] sm:$0xff]
    %v4966 = vld [vmem:[#allocation8 + $0x1450] sm:$0xff]
    %v4967 = vld [vmem:[#allocation8 + $0x1458] sm:$0xff]
    %v4968 = vld [vmem:[#allocation8 + $0x1460] sm:$0xff]
    %v4969 = vld [vmem:[#allocation8 + $0x1468] sm:$0xff]
    %v4970 = vld [vmem:[#allocation8 + $0x1470] sm:$0xff]
    %v4971 = vld [vmem:[#allocation8 + $0x1478] sm:$0xff]
    %v4972 = vld [vmem:[#allocation8 + $0x1480] sm:$0xff]
    %v4973 = vld [vmem:[#allocation8 + $0x1488] sm:$0xff]
    %v4974 = vld [vmem:[#allocation8 + $0x1490] sm:$0xff]
    %v4975 = vld [vmem:[#allocation8 + $0x1498] sm:$0xff]
    %v4976 = vld [vmem:[#allocation8 + $0x14a0] sm:$0xff]
    %v4977 = vld [vmem:[#allocation8 + $0x14a8] sm:$0xff]
    %v4978 = vld [vmem:[#allocation8 + $0x14b0] sm:$0xff]
    %v4979 = vld [vmem:[#allocation8 + $0x14b8] sm:$0xff]
    %v4980 = vld [vmem:[#allocation8 + $0x14c0] sm:$0xff]
    %v4981 = vld [vmem:[#allocation8 + $0x14c8] sm:$0xff]
    %v4982 = vld [vmem:[#allocation8 + $0x14d0] sm:$0xff]
    %v4983 = vld [vmem:[#allocation8 + $0x14d8] sm:$0xff]
    %v4984 = vld [vmem:[#allocation8 + $0x14e0] sm:$0xff]
    %v4985 = vld [vmem:[#allocation8 + $0x14e8] sm:$0xff]
    %v4986 = vld [vmem:[#allocation8 + $0x14f0] sm:$0xff]
    %v4987 = vld [vmem:[#allocation8 + $0x14f8] sm:$0xff]
    %v4988 = vld [vmem:[#allocation8 + $0x1500] sm:$0xff]
    %v4989 = vld [vmem:[#allocation8 + $0x1508] sm:$0xff]
    %v4990 = vld [vmem:[#allocation8 + $0x1510] sm:$0xff]
    %v4991 = vld [vmem:[#allocation8 + $0x1518] sm:$0xff]
    %v4992 = vld [vmem:[#allocation8 + $0x1520] sm:$0xff]
    %v4993 = vld [vmem:[#allocation8 + $0x1528] sm:$0xff]
    %v4994 = vld [vmem:[#allocation8 + $0x1530] sm:$0xff]
    %v4995 = vld [vmem:[#allocation8 + $0x1538] sm:$0xff]
    %v4996 = vld [vmem:[#allocation8 + $0x1540] sm:$0xff]
    %v4997 = vld [vmem:[#allocation8 + $0x1548] sm:$0xff]
    %v4998 = vld [vmem:[#allocation8 + $0x1550] sm:$0xff]
    %v4999 = vld [vmem:[#allocation8 + $0x1558] sm:$0xff]
    %v5000 = vld [vmem:[#allocation8 + $0x1560] sm:$0xff]
    %v5001 = vld [vmem:[#allocation8 + $0x1568] sm:$0xff]
    %v5002 = vld [vmem:[#allocation8 + $0x1570] sm:$0xff]
    %v5003 = vld [vmem:[#allocation8 + $0x1578] sm:$0xff]
    %v5004 = vld [vmem:[#allocation8 + $0x1580] sm:$0xff]
    %v5005 = vld [vmem:[#allocation8 + $0x1588] sm:$0xff]
    %v5006 = vld [vmem:[#allocation8 + $0x1590] sm:$0xff]
    %v5007 = vld [vmem:[#allocation8 + $0x1598] sm:$0xff]
    %v5008 = vld [vmem:[#allocation8 + $0x15a0] sm:$0xff]
    %v5009 = vld [vmem:[#allocation8 + $0x15a8] sm:$0xff]
    %v5010 = vld [vmem:[#allocation8 + $0x15b0] sm:$0xff]
    %v5011 = vld [vmem:[#allocation8 + $0x15b8] sm:$0xff]
    %v5012 = vld [vmem:[#allocation8 + $0x15c0] sm:$0xff]
    %v5013 = vld [vmem:[#allocation8 + $0x15c8] sm:$0xff]
    %v5014 = vld [vmem:[#allocation8 + $0x15d0] sm:$0xff]
    %v5015 = vld [vmem:[#allocation8 + $0x15d8] sm:$0xff]
    %v5016 = vld [vmem:[#allocation8 + $0x15e0] sm:$0xff]
    %v5017 = vld [vmem:[#allocation8 + $0x15e8] sm:$0xff]
    %v5018 = vld [vmem:[#allocation8 + $0x15f0] sm:$0xff]
    %v5019 = vld [vmem:[#allocation8 + $0x15f8] sm:$0xff]
    %v5020 = vld [vmem:[#allocation8 + $0x1600] sm:$0xff]
    %v5021 = vld [vmem:[#allocation8 + $0x1608] sm:$0xff]
    %v5022 = vld [vmem:[#allocation8 + $0x1610] sm:$0xff]
    %v5023 = vld [vmem:[#allocation8 + $0x1618] sm:$0xff]
    %v5024 = vld [vmem:[#allocation8 + $0x1620] sm:$0xff]
    %v5025 = vld [vmem:[#allocation8 + $0x1628] sm:$0xff]
    %v5026 = vld [vmem:[#allocation8 + $0x1630] sm:$0xff]
    %v5027 = vld [vmem:[#allocation8 + $0x1638] sm:$0xff]
    %v5028 = vld [vmem:[#allocation8 + $0x1640] sm:$0xff]
    %v5029 = vld [vmem:[#allocation8 + $0x1648] sm:$0xff]
    %v5030 = vld [vmem:[#allocation8 + $0x1650] sm:$0xff]
    %v5031 = vld [vmem:[#allocation8 + $0x1658] sm:$0xff]
    %v5032 = vld [vmem:[#allocation8 + $0x1660] sm:$0xff]
    %v5033 = vld [vmem:[#allocation8 + $0x1668] sm:$0xff]
    %v5034 = vld [vmem:[#allocation8 + $0x1670] sm:$0xff]
    %v5035 = vld [vmem:[#allocation8 + $0x1678] sm:$0xff]
    %v5036 = vld [vmem:[#allocation8 + $0x1680] sm:$0xff]
    %v5037 = vld [vmem:[#allocation8 + $0x1688] sm:$0xff]
    %v5038 = vld [vmem:[#allocation8 + $0x1690] sm:$0xff]
    %v5039 = vld [vmem:[#allocation8 + $0x1698] sm:$0xff]
    %v5040 = vld [vmem:[#allocation8 + $0x16a0] sm:$0xff]
    %v5041 = vld [vmem:[#allocation8 + $0x16a8] sm:$0xff]
    %v5042 = vld [vmem:[#allocation8 + $0x16b0] sm:$0xff]
    %v5043 = vld [vmem:[#allocation8 + $0x16b8] sm:$0xff]
    %v5044 = vld [vmem:[#allocation8 + $0x16c0] sm:$0xff]
    %v5045 = vld [vmem:[#allocation8 + $0x16c8] sm:$0xff]
    %v5046 = vld [vmem:[#allocation8 + $0x16d0] sm:$0xff]
    %v5047 = vld [vmem:[#allocation8 + $0x16d8] sm:$0xff]
    %v5048 = vld [vmem:[#allocation8 + $0x16e0] sm:$0xff]
    %v5049 = vld [vmem:[#allocation8 + $0x16e8] sm:$0xff]
    %v5050 = vld [vmem:[#allocation8 + $0x16f0] sm:$0xff]
    %v5051 = vld [vmem:[#allocation8 + $0x16f8] sm:$0xff]
    %v5052 = vld [vmem:[#allocation8 + $0x1700] sm:$0xff]
    %v5053 = vld [vmem:[#allocation8 + $0x1708] sm:$0xff]
    %v5054 = vld [vmem:[#allocation8 + $0x1710] sm:$0xff]
    %v5055 = vld [vmem:[#allocation8 + $0x1718] sm:$0xff]
    %v5056 = vld [vmem:[#allocation8 + $0x1720] sm:$0xff]
    %v5057 = vld [vmem:[#allocation8 + $0x1728] sm:$0xff]
    %v5058 = vld [vmem:[#allocation8 + $0x1730] sm:$0xff]
    %v5059 = vld [vmem:[#allocation8 + $0x1738] sm:$0xff]
    %v5060 = vld [vmem:[#allocation8 + $0x1740] sm:$0xff]
    %v5061 = vld [vmem:[#allocation8 + $0x1748] sm:$0xff]
    %v5062 = vld [vmem:[#allocation8 + $0x1750] sm:$0xff]
    %v5063 = vld [vmem:[#allocation8 + $0x1758] sm:$0xff]
    %v5064 = vld [vmem:[#allocation8 + $0x1760] sm:$0xff]
    %v5065 = vld [vmem:[#allocation8 + $0x1768] sm:$0xff]
    %v5066 = vld [vmem:[#allocation8 + $0x1770] sm:$0xff]
    %v5067 = vld [vmem:[#allocation8 + $0x1778] sm:$0xff]
    %v5068 = vld [vmem:[#allocation8 + $0x1780] sm:$0xff]
    %v5069 = vld [vmem:[#allocation8 + $0x1788] sm:$0xff]
    %v5070 = vld [vmem:[#allocation8 + $0x1790] sm:$0xff]
    %v5071 = vld [vmem:[#allocation8 + $0x1798] sm:$0xff]
    %v5072 = vld [vmem:[#allocation8 + $0x17a0] sm:$0xff]
    %v5073 = vld [vmem:[#allocation8 + $0x17a8] sm:$0xff]
    %v5074 = vld [vmem:[#allocation8 + $0x17b0] sm:$0xff]
    %v5075 = vld [vmem:[#allocation8 + $0x17b8] sm:$0xff]
    %v5076 = vld [vmem:[#allocation8 + $0x17c0] sm:$0xff]
    %v5077 = vld [vmem:[#allocation8 + $0x17c8] sm:$0xff]
    %v5078 = vld [vmem:[#allocation8 + $0x17d0] sm:$0xff]
    %v5079 = vld [vmem:[#allocation8 + $0x17d8] sm:$0xff]
    %v5080 = vld [vmem:[#allocation8 + $0x17e0] sm:$0xff]
    %v5081 = vld [vmem:[#allocation8 + $0x17e8] sm:$0xff]
    %v5082 = vld [vmem:[#allocation8 + $0x17f0] sm:$0xff]
    %v5083 = vld [vmem:[#allocation8 + $0x17f8] sm:$0xff]
    %v5084 = vld [vmem:[#allocation8 + $0x1800] sm:$0xff]
    %v5085 = vld [vmem:[#allocation8 + $0x1808] sm:$0xff]
    %v5086 = vld [vmem:[#allocation8 + $0x1810] sm:$0xff]
    %v5087 = vld [vmem:[#allocation8 + $0x1818] sm:$0xff]
    %v5088 = vld [vmem:[#allocation8 + $0x1820] sm:$0xff]
    %v5089 = vld [vmem:[#allocation8 + $0x1828] sm:$0xff]
    %v5090 = vld [vmem:[#allocation8 + $0x1830] sm:$0xff]
    %v5091 = vld [vmem:[#allocation8 + $0x1838] sm:$0xff]
    %v5092 = vld [vmem:[#allocation8 + $0x1840] sm:$0xff]
    %v5093 = vld [vmem:[#allocation8 + $0x1848] sm:$0xff]
    %v5094 = vld [vmem:[#allocation8 + $0x1850] sm:$0xff]
    %v5095 = vld [vmem:[#allocation8 + $0x1858] sm:$0xff]
    %v5096 = vld [vmem:[#allocation8 + $0x1860] sm:$0xff]
    %v5097 = vld [vmem:[#allocation8 + $0x1868] sm:$0xff]
    %v5098 = vld [vmem:[#allocation8 + $0x1870] sm:$0xff]
    %v5099 = vld [vmem:[#allocation8 + $0x1878] sm:$0xff]
    %v5100 = vld [vmem:[#allocation8 + $0x1880] sm:$0xff]
    %v5101 = vld [vmem:[#allocation8 + $0x1888] sm:$0xff]
    %v5102 = vld [vmem:[#allocation8 + $0x1890] sm:$0xff]
    %v5103 = vld [vmem:[#allocation8 + $0x1898] sm:$0xff]
    %v5104 = vld [vmem:[#allocation8 + $0x18a0] sm:$0xff]
    %v5105 = vld [vmem:[#allocation8 + $0x18a8] sm:$0xff]
    %v5106 = vld [vmem:[#allocation8 + $0x18b0] sm:$0xff]
    %v5107 = vld [vmem:[#allocation8 + $0x18b8] sm:$0xff]
    %v5108 = vld [vmem:[#allocation8 + $0x18c0] sm:$0xff]
    %v5109 = vld [vmem:[#allocation8 + $0x18c8] sm:$0xff]
    %v5110 = vld [vmem:[#allocation8 + $0x18d0] sm:$0xff]
    %v5111 = vld [vmem:[#allocation8 + $0x18d8] sm:$0xff]
    %v5112 = vld [vmem:[#allocation8 + $0x18e0] sm:$0xff]
    %v5113 = vld [vmem:[#allocation8 + $0x18e8] sm:$0xff]
    %v5114 = vld [vmem:[#allocation8 + $0x18f0] sm:$0xff]
    %v5115 = vld [vmem:[#allocation8 + $0x18f8] sm:$0xff]
    %v5116 = vld [vmem:[#allocation8 + $0x1900] sm:$0xff]
    %v5117 = vld [vmem:[#allocation8 + $0x1908] sm:$0xff]
    %v5118 = vld [vmem:[#allocation8 + $0x1910] sm:$0xff]
    %v5119 = vld [vmem:[#allocation8 + $0x1918] sm:$0xff]
    %v5120 = vld [vmem:[#allocation8 + $0x1920] sm:$0xff]
    %v5121 = vld [vmem:[#allocation8 + $0x1928] sm:$0xff]
    %v5122 = vld [vmem:[#allocation8 + $0x1930] sm:$0xff]
    %v5123 = vld [vmem:[#allocation8 + $0x1938] sm:$0xff]
    %v5124 = vld [vmem:[#allocation8 + $0x1940] sm:$0xff]
    %v5125 = vld [vmem:[#allocation8 + $0x1948] sm:$0xff]
    %v5126 = vld [vmem:[#allocation8 + $0x1950] sm:$0xff]
    %v5127 = vld [vmem:[#allocation8 + $0x1958] sm:$0xff]
    %v5128 = vld [vmem:[#allocation8 + $0x1960] sm:$0xff]
    %v5129 = vld [vmem:[#allocation8 + $0x1968] sm:$0xff]
    %v5130 = vld [vmem:[#allocation8 + $0x1970] sm:$0xff]
    %v5131 = vld [vmem:[#allocation8 + $0x1978] sm:$0xff]
    %v5132 = vld [vmem:[#allocation8 + $0x1980] sm:$0xff]
    %v5133 = vld [vmem:[#allocation8 + $0x1988] sm:$0xff]
    %v5134 = vld [vmem:[#allocation8 + $0x1990] sm:$0xff]
    %v5135 = vld [vmem:[#allocation8 + $0x1998] sm:$0xff]
    %v5136 = vld [vmem:[#allocation8 + $0x19a0] sm:$0xff]
    %v5137 = vld [vmem:[#allocation8 + $0x19a8] sm:$0xff]
    %v5138 = vld [vmem:[#allocation8 + $0x19b0] sm:$0xff]
    %v5139 = vld [vmem:[#allocation8 + $0x19b8] sm:$0xff]
    %v5140 = vld [vmem:[#allocation8 + $0x19c0] sm:$0xff]
    %v5141 = vld [vmem:[#allocation8 + $0x19c8] sm:$0xff]
    %v5142 = vld [vmem:[#allocation8 + $0x19d0] sm:$0xff]
    %v5143 = vld [vmem:[#allocation8 + $0x19d8] sm:$0xff]
    %v5144 = vld [vmem:[#allocation8 + $0x19e0] sm:$0xff]
    %v5145 = vld [vmem:[#allocation8 + $0x19e8] sm:$0xff]
    %v5146 = vld [vmem:[#allocation8 + $0x19f0] sm:$0xff]
    %v5147 = vld [vmem:[#allocation8 + $0x19f8] sm:$0xff]
    %v5148 = vld [vmem:[#allocation8 + $0x1a00] sm:$0xff]
    %v5149 = vld [vmem:[#allocation8 + $0x1a08] sm:$0xff]
    %v5150 = vld [vmem:[#allocation8 + $0x1a10] sm:$0xff]
    %v5151 = vld [vmem:[#allocation8 + $0x1a18] sm:$0xff]
    %v5152 = vld [vmem:[#allocation8 + $0x1a20] sm:$0xff]
    %v5153 = vld [vmem:[#allocation8 + $0x1a28] sm:$0xff]
    %v5154 = vld [vmem:[#allocation8 + $0x1a30] sm:$0xff]
    %v5155 = vld [vmem:[#allocation8 + $0x1a38] sm:$0xff]
    %v5156 = vld [vmem:[#allocation8 + $0x1a40] sm:$0xff]
    %v5157 = vld [vmem:[#allocation8 + $0x1a48] sm:$0xff]
    %v5158 = vld [vmem:[#allocation8 + $0x1a50] sm:$0xff]
    %v5159 = vld [vmem:[#allocation8 + $0x1a58] sm:$0xff]
    %v5160 = vld [vmem:[#allocation8 + $0x1a60] sm:$0xff]
    %v5161 = vld [vmem:[#allocation8 + $0x1a68] sm:$0xff]
    %v5162 = vld [vmem:[#allocation8 + $0x1a70] sm:$0xff]
    %v5163 = vld [vmem:[#allocation8 + $0x1a78] sm:$0xff]
    %v5164 = vld [vmem:[#allocation8 + $0x1a80] sm:$0xff]
    %v5165 = vld [vmem:[#allocation8 + $0x1a88] sm:$0xff]
    %v5166 = vld [vmem:[#allocation8 + $0x1a90] sm:$0xff]
    %v5167 = vld [vmem:[#allocation8 + $0x1a98] sm:$0xff]
    %v5168 = vld [vmem:[#allocation8 + $0x1aa0] sm:$0xff]
    %v5169 = vld [vmem:[#allocation8 + $0x1aa8] sm:$0xff]
    %v5170 = vld [vmem:[#allocation8 + $0x1ab0] sm:$0xff]
    %v5171 = vld [vmem:[#allocation8 + $0x1ab8] sm:$0xff]
    %v5172 = vld [vmem:[#allocation8 + $0x1ac0] sm:$0xff]
    %v5173 = vld [vmem:[#allocation8 + $0x1ac8] sm:$0xff]
    %v5174 = vld [vmem:[#allocation8 + $0x1ad0] sm:$0xff]
    %v5175 = vld [vmem:[#allocation8 + $0x1ad8] sm:$0xff]
    %v5176 = vld [vmem:[#allocation8 + $0x1ae0] sm:$0xff]
    %v5177 = vld [vmem:[#allocation8 + $0x1ae8] sm:$0xff]
    %v5178 = vld [vmem:[#allocation8 + $0x1af0] sm:$0xff]
    %v5179 = vld [vmem:[#allocation8 + $0x1af8] sm:$0xff]
    %v5180 = vld [vmem:[#allocation8 + $0x1b00] sm:$0xff]
    %v5181 = vld [vmem:[#allocation8 + $0x1b08] sm:$0xff]
    %v5182 = vld [vmem:[#allocation8 + $0x1b10] sm:$0xff]
    %v5183 = vld [vmem:[#allocation8 + $0x1b18] sm:$0xff]
    %v5184 = vld [vmem:[#allocation8 + $0x1b20] sm:$0xff]
    %v5185 = vld [vmem:[#allocation8 + $0x1b28] sm:$0xff]
    %v5186 = vld [vmem:[#allocation8 + $0x1b30] sm:$0xff]
    %v5187 = vld [vmem:[#allocation8 + $0x1b38] sm:$0xff]
    %v5188 = vld [vmem:[#allocation8 + $0x1b40] sm:$0xff]
    %v5189 = vld [vmem:[#allocation8 + $0x1b48] sm:$0xff]
    %v5190 = vld [vmem:[#allocation8 + $0x1b50] sm:$0xff]
    %v5191 = vld [vmem:[#allocation8 + $0x1b58] sm:$0xff]
    %v5192 = vld [vmem:[#allocation8 + $0x1b60] sm:$0xff]
    %v5193 = vld [vmem:[#allocation8 + $0x1b68] sm:$0xff]
    %v5194 = vld [vmem:[#allocation8 + $0x1b70] sm:$0xff]
    %v5195 = vld [vmem:[#allocation8 + $0x1b78] sm:$0xff]
    %v5196 = vld [vmem:[#allocation8 + $0x1b80] sm:$0xff]
    %v5197 = vld [vmem:[#allocation8 + $0x1b88] sm:$0xff]
    %v5198 = vld [vmem:[#allocation8 + $0x1b90] sm:$0xff]
    %v5199 = vld [vmem:[#allocation8 + $0x1b98] sm:$0xff]
    %v5200 = vld [vmem:[#allocation8 + $0x1ba0] sm:$0xff]
    %v5201 = vld [vmem:[#allocation8 + $0x1ba8] sm:$0xff]
    %v5202 = vld [vmem:[#allocation8 + $0x1bb0] sm:$0xff]
    %v5203 = vld [vmem:[#allocation8 + $0x1bb8] sm:$0xff]
    %v5204 = vld [vmem:[#allocation8 + $0x1bc0] sm:$0xff]
    %v5205 = vld [vmem:[#allocation8 + $0x1bc8] sm:$0xff]
    %v5206 = vld [vmem:[#allocation8 + $0x1bd0] sm:$0xff]
    %v5207 = vld [vmem:[#allocation8 + $0x1bd8] sm:$0xff]
    %v5208 = vld [vmem:[#allocation8 + $0x1be0] sm:$0xff]
    %v5209 = vld [vmem:[#allocation8 + $0x1be8] sm:$0xff]
    %v5210 = vld [vmem:[#allocation8 + $0x1bf0] sm:$0xff]
    %v5211 = vld [vmem:[#allocation8 + $0x1bf8] sm:$0xff]
    %v5212 = vld [vmem:[#allocation8 + $0x1c00] sm:$0xff]
    %v5213 = vld [vmem:[#allocation8 + $0x1c08] sm:$0xff]
    %v5214 = vld [vmem:[#allocation8 + $0x1c10] sm:$0xff]
    %v5215 = vld [vmem:[#allocation8 + $0x1c18] sm:$0xff]
    %v5216 = vld [vmem:[#allocation8 + $0x1c20] sm:$0xff]
    %v5217 = vld [vmem:[#allocation8 + $0x1c28] sm:$0xff]
    %v5218 = vld [vmem:[#allocation8 + $0x1c30] sm:$0xff]
    %v5219 = vld [vmem:[#allocation8 + $0x1c38] sm:$0xff]
    %v5220 = vld [vmem:[#allocation8 + $0x1c40] sm:$0xff]
    %v5221 = vld [vmem:[#allocation8 + $0x1c48] sm:$0xff]
    %v5222 = vld [vmem:[#allocation8 + $0x1c50] sm:$0xff]
    %v5223 = vld [vmem:[#allocation8 + $0x1c58] sm:$0xff]
    %v5224 = vld [vmem:[#allocation8 + $0x1c60] sm:$0xff]
    %v5225 = vld [vmem:[#allocation8 + $0x1c68] sm:$0xff]
    %v5226 = vld [vmem:[#allocation8 + $0x1c70] sm:$0xff]
    %v5227 = vld [vmem:[#allocation8 + $0x1c78] sm:$0xff]
    %v5228 = vld [vmem:[#allocation8 + $0x1c80] sm:$0xff]
    %v5229 = vld [vmem:[#allocation8 + $0x1c88] sm:$0xff]
    %v5230 = vld [vmem:[#allocation8 + $0x1c90] sm:$0xff]
    %v5231 = vld [vmem:[#allocation8 + $0x1c98] sm:$0xff]
    %v5232 = vld [vmem:[#allocation8 + $0x1ca0] sm:$0xff]
    %v5233 = vld [vmem:[#allocation8 + $0x1ca8] sm:$0xff]
    %v5234 = vld [vmem:[#allocation8 + $0x1cb0] sm:$0xff]
    %v5235 = vld [vmem:[#allocation8 + $0x1cb8] sm:$0xff]
    %v5236 = vld [vmem:[#allocation8 + $0x1cc0] sm:$0xff]
    %v5237 = vld [vmem:[#allocation8 + $0x1cc8] sm:$0xff]
    %v5238 = vld [vmem:[#allocation8 + $0x1cd0] sm:$0xff]
    %v5239 = vld [vmem:[#allocation8 + $0x1cd8] sm:$0xff]
    %v5240 = vld [vmem:[#allocation8 + $0x1ce0] sm:$0xff]
    %v5241 = vld [vmem:[#allocation8 + $0x1ce8] sm:$0xff]
    %v5242 = vld [vmem:[#allocation8 + $0x1cf0] sm:$0xff]
    %v5243 = vld [vmem:[#allocation8 + $0x1cf8] sm:$0xff]
    %v5244 = vld [vmem:[#allocation8 + $0x1d00] sm:$0xff]
    %v5245 = vld [vmem:[#allocation8 + $0x1d08] sm:$0xff]
    %v5246 = vld [vmem:[#allocation8 + $0x1d10] sm:$0xff]
    %v5247 = vld [vmem:[#allocation8 + $0x1d18] sm:$0xff]
    %v5248 = vld [vmem:[#allocation8 + $0x1d20] sm:$0xff]
    %v5249 = vld [vmem:[#allocation8 + $0x1d28] sm:$0xff]
    %v5250 = vld [vmem:[#allocation8 + $0x1d30] sm:$0xff]
    %v5251 = vld [vmem:[#allocation8 + $0x1d38] sm:$0xff]
    %v5252 = vld [vmem:[#allocation8 + $0x1d40] sm:$0xff]
    %v5253 = vld [vmem:[#allocation8 + $0x1d48] sm:$0xff]
    %v5254 = vld [vmem:[#allocation8 + $0x1d50] sm:$0xff]
    %v5255 = vld [vmem:[#allocation8 + $0x1d58] sm:$0xff]
    %v5256 = vld [vmem:[#allocation8 + $0x1d60] sm:$0xff]
    %v5257 = vld [vmem:[#allocation8 + $0x1d68] sm:$0xff]
    %v5258 = vld [vmem:[#allocation8 + $0x1d70] sm:$0xff]
    %v5259 = vld [vmem:[#allocation8 + $0x1d78] sm:$0xff]
    %v5260 = vld [vmem:[#allocation8 + $0x1d80] sm:$0xff]
    %v5261 = vld [vmem:[#allocation8 + $0x1d88] sm:$0xff]
    %v5262 = vld [vmem:[#allocation8 + $0x1d90] sm:$0xff]
    %v5263 = vld [vmem:[#allocation8 + $0x1d98] sm:$0xff]
    %v5264 = vld [vmem:[#allocation8 + $0x1da0] sm:$0xff]
    %v5265 = vld [vmem:[#allocation8 + $0x1da8] sm:$0xff]
    %v5266 = vld [vmem:[#allocation8 + $0x1db0] sm:$0xff]
    %v5267 = vld [vmem:[#allocation8 + $0x1db8] sm:$0xff]
    %v5268 = vld [vmem:[#allocation8 + $0x1dc0] sm:$0xff]
    %v5269 = vld [vmem:[#allocation8 + $0x1dc8] sm:$0xff]
    %v5270 = vld [vmem:[#allocation8 + $0x1dd0] sm:$0xff]
    %v5271 = vld [vmem:[#allocation8 + $0x1dd8] sm:$0xff]
    %v5272 = vld [vmem:[#allocation8 + $0x1de0] sm:$0xff]
    %v5273 = vld [vmem:[#allocation8 + $0x1de8] sm:$0xff]
    %v5274 = vld [vmem:[#allocation8 + $0x1df0] sm:$0xff]
    %v5275 = vld [vmem:[#allocation8 + $0x1df8] sm:$0xff]
    %v5276 = vld [vmem:[#allocation8 + $0x1e00] sm:$0xff]
    %v5277 = vld [vmem:[#allocation8 + $0x1e08] sm:$0xff]
    %v5278 = vld [vmem:[#allocation8 + $0x1e10] sm:$0xff]
    %v5279 = vld [vmem:[#allocation8 + $0x1e18] sm:$0xff]
    %v5280 = vld [vmem:[#allocation8 + $0x1e20] sm:$0xff]
    %v5281 = vld [vmem:[#allocation8 + $0x1e28] sm:$0xff]
    %v5282 = vld [vmem:[#allocation8 + $0x1e30] sm:$0xff]
    %v5283 = vld [vmem:[#allocation8 + $0x1e38] sm:$0xff]
    %v5284 = vld [vmem:[#allocation8 + $0x1e40] sm:$0xff]
    %v5285 = vld [vmem:[#allocation8 + $0x1e48] sm:$0xff]
    %v5286 = vld [vmem:[#allocation8 + $0x1e50] sm:$0xff]
    %v5287 = vld [vmem:[#allocation8 + $0x1e58] sm:$0xff]
    %v5288 = vld [vmem:[#allocation8 + $0x1e60] sm:$0xff]
    %v5289 = vld [vmem:[#allocation8 + $0x1e68] sm:$0xff]
    %v5290 = vld [vmem:[#allocation8 + $0x1e70] sm:$0xff]
    %v5291 = vld [vmem:[#allocation8 + $0x1e78] sm:$0xff]
    %v5292 = vld [vmem:[#allocation8 + $0x1e80] sm:$0xff]
    %v5293 = vld [vmem:[#allocation8 + $0x1e88] sm:$0xff]
    %v5294 = vld [vmem:[#allocation8 + $0x1e90] sm:$0xff]
    %v5295 = vld [vmem:[#allocation8 + $0x1e98] sm:$0xff]
    %v5296 = vld [vmem:[#allocation8 + $0x1ea0] sm:$0xff]
    %v5297 = vld [vmem:[#allocation8 + $0x1ea8] sm:$0xff]
    %v5298 = vld [vmem:[#allocation8 + $0x1eb0] sm:$0xff]
    %v5299 = vld [vmem:[#allocation8 + $0x1eb8] sm:$0xff]
    %v5300 = vld [vmem:[#allocation8 + $0x1ec0] sm:$0xff]
    %v5301 = vld [vmem:[#allocation8 + $0x1ec8] sm:$0xff]
    %v5302 = vld [vmem:[#allocation8 + $0x1ed0] sm:$0xff]
    %v5303 = vld [vmem:[#allocation8 + $0x1ed8] sm:$0xff]
    %v5304 = vld [vmem:[#allocation8 + $0x1ee0] sm:$0xff]
    %v5305 = vld [vmem:[#allocation8 + $0x1ee8] sm:$0xff]
    %v5306 = vld [vmem:[#allocation8 + $0x1ef0] sm:$0xff]
    %v5307 = vld [vmem:[#allocation8 + $0x1ef8] sm:$0xff]
    %v5308 = vld [vmem:[#allocation8 + $0x1f00] sm:$0xff]
    %v5309 = vld [vmem:[#allocation8 + $0x1f08] sm:$0xff]
    %v5310 = vld [vmem:[#allocation8 + $0x1f10] sm:$0xff]
    %v5311 = vld [vmem:[#allocation8 + $0x1f18] sm:$0xff]
    %v5312 = vld [vmem:[#allocation8 + $0x1f20] sm:$0xff]
    %v5313 = vld [vmem:[#allocation8 + $0x1f28] sm:$0xff]
    %v5314 = vld [vmem:[#allocation8 + $0x1f30] sm:$0xff]
    %v5315 = vld [vmem:[#allocation8 + $0x1f38] sm:$0xff]
    %v5316 = vld [vmem:[#allocation8 + $0x1f40] sm:$0xff]
    %v5317 = vld [vmem:[#allocation8 + $0x1f48] sm:$0xff]
    %v5318 = vld [vmem:[#allocation8 + $0x1f50] sm:$0xff]
    %v5319 = vld [vmem:[#allocation8 + $0x1f58] sm:$0xff]
    %v5320 = vld [vmem:[#allocation8 + $0x1f60] sm:$0xff]
    %v5321 = vld [vmem:[#allocation8 + $0x1f68] sm:$0xff]
    %v5322 = vld [vmem:[#allocation8 + $0x1f70] sm:$0xff]
    %v5323 = vld [vmem:[#allocation8 + $0x1f78] sm:$0xff]
    %v5324 = vld [vmem:[#allocation8 + $0x1f80] sm:$0xff]
    %v5325 = vld [vmem:[#allocation8 + $0x1f88] sm:$0xff]
    %v5326 = vld [vmem:[#allocation8 + $0x1f90] sm:$0xff]
    %v5327 = vld [vmem:[#allocation8 + $0x1f98] sm:$0xff]
    %v5328 = vld [vmem:[#allocation8 + $0x1fa0] sm:$0xff]
    %v5329 = vld [vmem:[#allocation8 + $0x1fa8] sm:$0xff]
    %v5330 = vld [vmem:[#allocation8 + $0x1fb0] sm:$0xff]
    %v5331 = vld [vmem:[#allocation8 + $0x1fb8] sm:$0xff]
    %v5332 = vld [vmem:[#allocation8 + $0x1fc0] sm:$0xff]
    %v5333 = vld [vmem:[#allocation8 + $0x1fc8] sm:$0xff]
    %v5334 = vld [vmem:[#allocation8 + $0x1fd0] sm:$0xff]
    %v5335 = vld [vmem:[#allocation8 + $0x1fd8] sm:$0xff]
    %v5336 = vld [vmem:[#allocation8 + $0x1fe0] sm:$0xff]
    %v5337 = vld [vmem:[#allocation8 + $0x1fe8] sm:$0xff]
    %v5338 = vld [vmem:[#allocation8 + $0x1ff0] sm:$0xff]
    %v5339 = vld [vmem:[#allocation8 + $0x1ff8] sm:$0xff]
    %5340 = vmatprep.subr.bf16.mxu0 %v4317
    %5341 = vmatpush1.bf16.msra.mxu0 %v4316
    %5342 = vmatprep.subr.bf16.mxu0 %v4333
    %5343 = vmatpush1.bf16.msra.mxu0 %v4332
    %5344 = vmatprep.subr.bf16.mxu0 %v4349
    %5345 = vmatpush1.bf16.msra.mxu0 %v4348
    %5346 = vmatprep.subr.bf16.mxu0 %v4365
    %5347 = vmatpush1.bf16.msra.mxu0 %v4364
    %5348 = vmatprep.subr.bf16.mxu0 %v4381
    %5349 = vmatpush1.bf16.msra.mxu0 %v4380
    %5350 = vmatprep.subr.bf16.mxu0 %v4397
    %5351 = vmatpush1.bf16.msra.mxu0 %v4396
    %5352 = vmatprep.subr.bf16.mxu0 %v4413
    %5353 = vmatpush1.bf16.msra.mxu0 %v4412
    %5354 = vmatprep.subr.bf16.mxu0 %v4429
    %5355 = vmatpush1.bf16.msra.mxu0 %v4428
    %5356 = vmatprep.subr.bf16.mxu0 %v4445
    %5357 = vmatpush1.bf16.msra.mxu0 %v4444
    %5358 = vmatprep.subr.bf16.mxu0 %v4461
    %5359 = vmatpush1.bf16.msra.mxu0 %v4460
    %5360 = vmatprep.subr.bf16.mxu0 %v4477
    %5361 = vmatpush1.bf16.msra.mxu0 %v4476
    %5362 = vmatprep.subr.bf16.mxu0 %v4493
    %5363 = vmatpush1.bf16.msra.mxu0 %v4492
    %5364 = vmatprep.subr.bf16.mxu0 %v4509
    %5365 = vmatpush1.bf16.msra.mxu0 %v4508
    %5366 = vmatprep.subr.bf16.mxu0 %v4525
    %5367 = vmatpush1.bf16.msra.mxu0 %v4524
    %5368 = vmatprep.subr.bf16.mxu0 %v4541
    %5369 = vmatpush1.bf16.msra.mxu0 %v4540
    %5370 = vmatprep.subr.bf16.mxu0 %v4557
    %5371 = vmatpush1.bf16.msra.mxu0 %v4556
    %5372 = vmatprep.mubr.bf16.mxu0 %v1741
    %5373 = vmatmul.mubr.bf16.gmra.mrb[0].mxu0 %v1740
    %v5374 = vpop.f32.mrb[0].mxu0
    %v5375 = vadd.f32 0.0, %v5374
    %v5376 = vpop.f32.mrb[0].mxu0
    %v5377 = vadd.f32 0.0, %v5376
    %v5378 = vpop.f32.mrb[0].mxu0
    %v5379 = vpop.f32.mrb[0].mxu0
    %5380 = vdwg.mxu0
    %5381 = vmatprep.subr.bf16.mxu0 %v4573
    %5382 = vmatpush1.bf16.msra.mxu0 %v4572
    %5383 = vmatprep.subr.bf16.mxu0 %v4589
    %5384 = vmatpush1.bf16.msra.mxu0 %v4588
    %5385 = vmatprep.subr.bf16.mxu0 %v4605
    %5386 = vmatpush1.bf16.msra.mxu0 %v4604
    %5387 = vmatprep.subr.bf16.mxu0 %v4621
    %5388 = vmatpush1.bf16.msra.mxu0 %v4620
    %5389 = vmatprep.subr.bf16.mxu0 %v4637
    %5390 = vmatpush1.bf16.msra.mxu0 %v4636
    %5391 = vmatprep.subr.bf16.mxu0 %v4653
    %5392 = vmatpush1.bf16.msra.mxu0 %v4652
    %5393 = vmatprep.subr.bf16.mxu0 %v4669
    %5394 = vmatpush1.bf16.msra.mxu0 %v4668
    %5395 = vmatprep.subr.bf16.mxu0 %v4685
    %5396 = vmatpush1.bf16.msra.mxu0 %v4684
    %5397 = vmatprep.subr.bf16.mxu0 %v4701
    %5398 = vmatpush1.bf16.msra.mxu0 %v4700
    %5399 = vmatprep.subr.bf16.mxu0 %v4717
    %5400 = vmatpush1.bf16.msra.mxu0 %v4716
    %5401 = vmatprep.subr.bf16.mxu0 %v4733
    %5402 = vmatpush1.bf16.msra.mxu0 %v4732
    %5403 = vmatprep.subr.bf16.mxu0 %v4749
    %5404 = vmatpush1.bf16.msra.mxu0 %v4748
    %5405 = vmatprep.subr.bf16.mxu0 %v4765
    %5406 = vmatpush1.bf16.msra.mxu0 %v4764
    %5407 = vmatprep.subr.bf16.mxu0 %v4781
    %5408 = vmatpush1.bf16.msra.mxu0 %v4780
    %5409 = vmatprep.subr.bf16.mxu0 %v4797
    %5410 = vmatpush1.bf16.msra.mxu0 %v4796
    %5411 = vmatprep.subr.bf16.mxu0 %v4813
    %5412 = vmatpush1.bf16.msra.mxu0 %v4812
    %5413 = vmatprep.mubr.bf16.mxu0 %v1743
    %5414 = vmatmul.mubr.bf16.gmra.mrb[0].mxu0 %v1742
    %v5415 = vpop.f32.mrb[0].mxu0
    %v5416 = vadd.f32 %v5375, %v5415
    %v5417 = vpop.f32.mrb[0].mxu0
    %v5418 = vadd.f32 %v5377, %v5417
    %v5419 = vpop.f32.mrb[0].mxu0
    %v5420 = vpop.f32.mrb[0].mxu0
    %5421 = vdwg.mxu0
    %5422 = vmatprep.subr.bf16.mxu0 %v4829
    %5423 = vmatpush1.bf16.msra.mxu0 %v4828
    %5424 = vmatprep.subr.bf16.mxu0 %v4845
    %5425 = vmatpush1.bf16.msra.mxu0 %v4844
    %5426 = vmatprep.subr.bf16.mxu0 %v4861
    %5427 = vmatpush1.bf16.msra.mxu0 %v4860
    %5428 = vmatprep.subr.bf16.mxu0 %v4877
    %5429 = vmatpush1.bf16.msra.mxu0 %v4876
    %5430 = vmatprep.subr.bf16.mxu0 %v4893
    %5431 = vmatpush1.bf16.msra.mxu0 %v4892
    %5432 = vmatprep.subr.bf16.mxu0 %v4909
    %5433 = vmatpush1.bf16.msra.mxu0 %v4908
    %5434 = vmatprep.subr.bf16.mxu0 %v4925
    %5435 = vmatpush1.bf16.msra.mxu0 %v4924
    %5436 = vmatprep.subr.bf16.mxu0 %v4941
    %5437 = vmatpush1.bf16.msra.mxu0 %v4940
    %5438 = vmatprep.subr.bf16.mxu0 %v4957
    %5439 = vmatpush1.bf16.msra.mxu0 %v4956
    %5440 = vmatprep.subr.bf16.mxu0 %v4973
    %5441 = vmatpush1.bf16.msra.mxu0 %v4972
    %5442 = vmatprep.subr.bf16.mxu0 %v4989
    %5443 = vmatpush1.bf16.msra.mxu0 %v4988
    %5444 = vmatprep.subr.bf16.mxu0 %v5005
    %5445 = vmatpush1.bf16.msra.mxu0 %v5004
    %5446 = vmatprep.subr.bf16.mxu0 %v5021
    %5447 = vmatpush1.bf16.msra.mxu0 %v5020
    %5448 = vmatprep.subr.bf16.mxu0 %v5037
    %5449 = vmatpush1.bf16.msra.mxu0 %v5036
    %5450 = vmatprep.subr.bf16.mxu0 %v5053
    %5451 = vmatpush1.bf16.msra.mxu0 %v5052
    %5452 = vmatprep.subr.bf16.mxu0 %v5069
    %5453 = vmatpush1.bf16.msra.mxu0 %v5068
    %5454 = vmatprep.mubr.bf16.mxu0 %v1745
    %5455 = vmatmul.mubr.bf16.gmra.mrb[0].mxu0 %v1744
    %v5456 = vpop.f32.mrb[0].mxu0
    %v5457 = vadd.f32 %v5416, %v5456
    %v5458 = vpop.f32.mrb[0].mxu0
    %v5459 = vadd.f32 %v5418, %v5458
    %v5460 = vpop.f32.mrb[0].mxu0
    %v5461 = vpop.f32.mrb[0].mxu0
    %5462 = vdwg.mxu0
    %5463 = vmatprep.subr.bf16.mxu0 %v5085
    %5464 = vmatpush1.bf16.msra.mxu0 %v5084
    %5465 = vmatprep.subr.bf16.mxu0 %v5101
    %5466 = vmatpush1.bf16.msra.mxu0 %v5100
    %5467 = vmatprep.subr.bf16.mxu0 %v5117
    %5468 = vmatpush1.bf16.msra.mxu0 %v5116
    %5469 = vmatprep.subr.bf16.mxu0 %v5133
    %5470 = vmatpush1.bf16.msra.mxu0 %v5132
    %5471 = vmatprep.subr.bf16.mxu0 %v5149
    %5472 = vmatpush1.bf16.msra.mxu0 %v5148
    %5473 = vmatprep.subr.bf16.mxu0 %v5165
    %5474 = vmatpush1.bf16.msra.mxu0 %v5164
    %5475 = vmatprep.subr.bf16.mxu0 %v5181
    %5476 = vmatpush1.bf16.msra.mxu0 %v5180
    %5477 = vmatprep.subr.bf16.mxu0 %v5197
    %5478 = vmatpush1.bf16.msra.mxu0 %v5196
    %5479 = vmatprep.subr.bf16.mxu0 %v5213
    %5480 = vmatpush1.bf16.msra.mxu0 %v5212
    %5481 = vmatprep.subr.bf16.mxu0 %v5229
    %5482 = vmatpush1.bf16.msra.mxu0 %v5228
    %5483 = vmatprep.subr.bf16.mxu0 %v5245
    %5484 = vmatpush1.bf16.msra.mxu0 %v5244
    %5485 = vmatprep.subr.bf16.mxu0 %v5261
    %5486 = vmatpush1.bf16.msra.mxu0 %v5260
    %5487 = vmatprep.subr.bf16.mxu0 %v5277
    %5488 = vmatpush1.bf16.msra.mxu0 %v5276
    %5489 = vmatprep.subr.bf16.mxu0 %v5293
    %5490 = vmatpush1.bf16.msra.mxu0 %v5292
    %5491 = vmatprep.subr.bf16.mxu0 %v5309
    %5492 = vmatpush1.bf16.msra.mxu0 %v5308
    %5493 = vmatprep.subr.bf16.mxu0 %v5325
    %5494 = vmatpush1.bf16.msra.mxu0 %v5324
    %5495 = vmatprep.mubr.bf16.mxu0 %v1747
    %5496 = vmatmul.mubr.bf16.gmra.mrb[0].mxu0 %v1746
    %v5497 = vpop.f32.mrb[0].mxu0
    %v5498 = vadd.f32 %v5457, %v5497
    %v5499 = vpop.f32.mrb[0].mxu0
    %v5500 = vadd.f32 %v5459, %v5499
    %v5501 = vpop.f32.mrb[0].mxu0
    %v5502 = vpop.f32.mrb[0].mxu0
    %5503 = vdwg.mxu0
    %5504 = vmatprep.subr.bf16.mxu0 %v4319
    %5505 = vmatpush1.bf16.msra.mxu0 %v4318
    %5506 = vmatprep.subr.bf16.mxu0 %v4335
    %5507 = vmatpush1.bf16.msra.mxu0 %v4334
    %5508 = vmatprep.subr.bf16.mxu0 %v4351
    %5509 = vmatpush1.bf16.msra.mxu0 %v4350
    %5510 = vmatprep.subr.bf16.mxu0 %v4367
    %5511 = vmatpush1.bf16.msra.mxu0 %v4366
    %5512 = vmatprep.subr.bf16.mxu0 %v4383
    %5513 = vmatpush1.bf16.msra.mxu0 %v4382
    %5514 = vmatprep.subr.bf16.mxu0 %v4399
    %5515 = vmatpush1.bf16.msra.mxu0 %v4398
    %5516 = vmatprep.subr.bf16.mxu0 %v4415
    %5517 = vmatpush1.bf16.msra.mxu0 %v4414
    %5518 = vmatprep.subr.bf16.mxu0 %v4431
    %5519 = vmatpush1.bf16.msra.mxu0 %v4430
    %5520 = vmatprep.subr.bf16.mxu0 %v4447
    %5521 = vmatpush1.bf16.msra.mxu0 %v4446
    %5522 = vmatprep.subr.bf16.mxu0 %v4463
    %5523 = vmatpush1.bf16.msra.mxu0 %v4462
    %5524 = vmatprep.subr.bf16.mxu0 %v4479
    %5525 = vmatpush1.bf16.msra.mxu0 %v4478
    %5526 = vmatprep.subr.bf16.mxu0 %v4495
    %5527 = vmatpush1.bf16.msra.mxu0 %v4494
    %5528 = vmatprep.subr.bf16.mxu0 %v4511
    %5529 = vmatpush1.bf16.msra.mxu0 %v4510
    %5530 = vmatprep.subr.bf16.mxu0 %v4527
    %5531 = vmatpush1.bf16.msra.mxu0 %v4526
    %5532 = vmatprep.subr.bf16.mxu0 %v4543
    %5533 = vmatpush1.bf16.msra.mxu0 %v4542
    %5534 = vmatprep.subr.bf16.mxu0 %v4559
    %5535 = vmatpush1.bf16.msra.mxu0 %v4558
    %5536 = vmatprep.mubr.bf16.mxu0 %v1741
    %5537 = vmatmul.mubr.bf16.gmra.mrb[0].mxu0 %v1740
    %v5538 = vpop.f32.mrb[0].mxu0
    %v5539 = vadd.f32 0.0, %v5538
    %v5540 = vpop.f32.mrb[0].mxu0
    %v5541 = vadd.f32 0.0, %v5540
    %v5542 = vpop.f32.mrb[0].mxu0
    %v5543 = vpop.f32.mrb[0].mxu0
    %5544 = vdwg.mxu0
    %5545 = vmatprep.subr.bf16.mxu0 %v4575
    %5546 = vmatpush1.bf16.msra.mxu0 %v4574
    %5547 = vmatprep.subr.bf16.mxu0 %v4591
    %5548 = vmatpush1.bf16.msra.mxu0 %v4590
    %5549 = vmatprep.subr.bf16.mxu0 %v4607
    %5550 = vmatpush1.bf16.msra.mxu0 %v4606
    %5551 = vmatprep.subr.bf16.mxu0 %v4623
    %5552 = vmatpush1.bf16.msra.mxu0 %v4622
    %5553 = vmatprep.subr.bf16.mxu0 %v4639
    %5554 = vmatpush1.bf16.msra.mxu0 %v4638
    %5555 = vmatprep.subr.bf16.mxu0 %v4655
    %5556 = vmatpush1.bf16.msra.mxu0 %v4654
    %5557 = vmatprep.subr.bf16.mxu0 %v4671
    %5558 = vmatpush1.bf16.msra.mxu0 %v4670
    %5559 = vmatprep.subr.bf16.mxu0 %v4687
    %5560 = vmatpush1.bf16.msra.mxu0 %v4686
    %5561 = vmatprep.subr.bf16.mxu0 %v4703
    %5562 = vmatpush1.bf16.msra.mxu0 %v4702
    %5563 = vmatprep.subr.bf16.mxu0 %v4719
    %5564 = vmatpush1.bf16.msra.mxu0 %v4718
    %5565 = vmatprep.subr.bf16.mxu0 %v4735
    %5566 = vmatpush1.bf16.msra.mxu0 %v4734
    %5567 = vmatprep.subr.bf16.mxu0 %v4751
    %5568 = vmatpush1.bf16.msra.mxu0 %v4750
    %5569 = vmatprep.subr.bf16.mxu0 %v4767
    %5570 = vmatpush1.bf16.msra.mxu0 %v4766
    %5571 = vmatprep.subr.bf16.mxu0 %v4783
    %5572 = vmatpush1.bf16.msra.mxu0 %v4782
    %5573 = vmatprep.subr.bf16.mxu0 %v4799
    %5574 = vmatpush1.bf16.msra.mxu0 %v4798
    %5575 = vmatprep.subr.bf16.mxu0 %v4815
    %5576 = vmatpush1.bf16.msra.mxu0 %v4814
    %5577 = vmatprep.mubr.bf16.mxu0 %v1743
    %5578 = vmatmul.mubr.bf16.gmra.mrb[0].mxu0 %v1742
    %v5579 = vpop.f32.mrb[0].mxu0
    %v5580 = vadd.f32 %v5539, %v5579
    %v5581 = vpop.f32.mrb[0].mxu0
    %v5582 = vadd.f32 %v5541, %v5581
    %v5583 = vpop.f32.mrb[0].mxu0
    %v5584 = vpop.f32.mrb[0].mxu0
    %5585 = vdwg.mxu0
    %5586 = vmatprep.subr.bf16.mxu0 %v4831
    %5587 = vmatpush1.bf16.msra.mxu0 %v4830
    %5588 = vmatprep.subr.bf16.mxu0 %v4847
    %5589 = vmatpush1.bf16.msra.mxu0 %v4846
    %5590 = vmatprep.subr.bf16.mxu0 %v4863
    %5591 = vmatpush1.bf16.msra.mxu0 %v4862
    %5592 = vmatprep.subr.bf16.mxu0 %v4879
    %5593 = vmatpush1.bf16.msra.mxu0 %v4878
    %5594 = vmatprep.subr.bf16.mxu0 %v4895
    %5595 = vmatpush1.bf16.msra.mxu0 %v4894
    %5596 = vmatprep.subr.bf16.mxu0 %v4911
    %5597 = vmatpush1.bf16.msra.mxu0 %v4910
    %5598 = vmatprep.subr.bf16.mxu0 %v4927
    %5599 = vmatpush1.bf16.msra.mxu0 %v4926
    %5600 = vmatprep.subr.bf16.mxu0 %v4943
    %5601 = vmatpush1.bf16.msra.mxu0 %v4942
    %5602 = vmatprep.subr.bf16.mxu0 %v4959
    %5603 = vmatpush1.bf16.msra.mxu0 %v4958
    %5604 = vmatprep.subr.bf16.mxu0 %v4975
    %5605 = vmatpush1.bf16.msra.mxu0 %v4974
    %5606 = vmatprep.subr.bf16.mxu0 %v4991
    %5607 = vmatpush1.bf16.msra.mxu0 %v4990
    %5608 = vmatprep.subr.bf16.mxu0 %v5007
    %5609 = vmatpush1.bf16.msra.mxu0 %v5006
    %5610 = vmatprep.subr.bf16.mxu0 %v5023
    %5611 = vmatpush1.bf16.msra.mxu0 %v5022
    %5612 = vmatprep.subr.bf16.mxu0 %v5039
    %5613 = vmatpush1.bf16.msra.mxu0 %v5038
    %5614 = vmatprep.subr.bf16.mxu0 %v5055
    %5615 = vmatpush1.bf16.msra.mxu0 %v5054
    %5616 = vmatprep.subr.bf16.mxu0 %v5071
    %5617 = vmatpush1.bf16.msra.mxu0 %v5070
    %5618 = vmatprep.mubr.bf16.mxu0 %v1745
    %5619 = vmatmul.mubr.bf16.gmra.mrb[0].mxu0 %v1744
    %v5620 = vpop.f32.mrb[0].mxu0
    %v5621 = vadd.f32 %v5580, %v5620
    %v5622 = vpop.f32.mrb[0].mxu0
    %v5623 = vadd.f32 %v5582, %v5622
    %v5624 = vpop.f32.mrb[0].mxu0
    %v5625 = vpop.f32.mrb[0].mxu0
    %5626 = vdwg.mxu0
    %5627 = vmatprep.subr.bf16.mxu0 %v5087
    %5628 = vmatpush1.bf16.msra.mxu0 %v5086
    %5629 = vmatprep.subr.bf16.mxu0 %v5103
    %5630 = vmatpush1.bf16.msra.mxu0 %v5102
    %5631 = vmatprep.subr.bf16.mxu0 %v5119
    %5632 = vmatpush1.bf16.msra.mxu0 %v5118
    %5633 = vmatprep.subr.bf16.mxu0 %v5135
    %5634 = vmatpush1.bf16.msra.mxu0 %v5134
    %5635 = vmatprep.subr.bf16.mxu0 %v5151
    %5636 = vmatpush1.bf16.msra.mxu0 %v5150
    %5637 = vmatprep.subr.bf16.mxu0 %v5167
    %5638 = vmatpush1.bf16.msra.mxu0 %v5166
    %5639 = vmatprep.subr.bf16.mxu0 %v5183
    %5640 = vmatpush1.bf16.msra.mxu0 %v5182
    %5641 = vmatprep.subr.bf16.mxu0 %v5199
    %5642 = vmatpush1.bf16.msra.mxu0 %v5198
    %5643 = vmatprep.subr.bf16.mxu0 %v5215
    %5644 = vmatpush1.bf16.msra.mxu0 %v5214
    %5645 = vmatprep.subr.bf16.mxu0 %v5231
    %5646 = vmatpush1.bf16.msra.mxu0 %v5230
    %5647 = vmatprep.subr.bf16.mxu0 %v5247
    %5648 = vmatpush1.bf16.msra.mxu0 %v5246
    %5649 = vmatprep.subr.bf16.mxu0 %v5263
    %5650 = vmatpush1.bf16.msra.mxu0 %v5262
    %5651 = vmatprep.subr.bf16.mxu0 %v5279
    %5652 = vmatpush1.bf16.msra.mxu0 %v5278
    %5653 = vmatprep.subr.bf16.mxu0 %v5295
    %5654 = vmatpush1.bf16.msra.mxu0 %v5294
    %5655 = vmatprep.subr.bf16.mxu0 %v5311
    %5656 = vmatpush1.bf16.msra.mxu0 %v5310
    %5657 = vmatprep.subr.bf16.mxu0 %v5327
    %5658 = vmatpush1.bf16.msra.mxu0 %v5326
    %5659 = vmatprep.mubr.bf16.mxu0 %v1747
    %5660 = vmatmul.mubr.bf16.gmra.mrb[0].mxu0 %v1746
    %v5661 = vpop.f32.mrb[0].mxu0
    %v5662 = vadd.f32 %v5621, %v5661
    %v5663 = vpop.f32.mrb[0].mxu0
    %v5664 = vadd.f32 %v5623, %v5663
    %v5665 = vpop.f32.mrb[0].mxu0
    %v5666 = vpop.f32.mrb[0].mxu0
    %5667 = vdwg.mxu0
    %5668 = vmatprep.subr.bf16.mxu0 %v4321
    %5669 = vmatpush1.bf16.msra.mxu0 %v4320
    %5670 = vmatprep.subr.bf16.mxu0 %v4337
    %5671 = vmatpush1.bf16.msra.mxu0 %v4336
    %5672 = vmatprep.subr.bf16.mxu0 %v4353
    %5673 = vmatpush1.bf16.msra.mxu0 %v4352
    %5674 = vmatprep.subr.bf16.mxu0 %v4369
    %5675 = vmatpush1.bf16.msra.mxu0 %v4368
    %5676 = vmatprep.subr.bf16.mxu0 %v4385
    %5677 = vmatpush1.bf16.msra.mxu0 %v4384
    %5678 = vmatprep.subr.bf16.mxu0 %v4401
    %5679 = vmatpush1.bf16.msra.mxu0 %v4400
    %5680 = vmatprep.subr.bf16.mxu0 %v4417
    %5681 = vmatpush1.bf16.msra.mxu0 %v4416
    %5682 = vmatprep.subr.bf16.mxu0 %v4433
    %5683 = vmatpush1.bf16.msra.mxu0 %v4432
    %5684 = vmatprep.subr.bf16.mxu0 %v4449
    %5685 = vmatpush1.bf16.msra.mxu0 %v4448
    %5686 = vmatprep.subr.bf16.mxu0 %v4465
    %5687 = vmatpush1.bf16.msra.mxu0 %v4464
    %5688 = vmatprep.subr.bf16.mxu0 %v4481
    %5689 = vmatpush1.bf16.msra.mxu0 %v4480
    %5690 = vmatprep.subr.bf16.mxu0 %v4497
    %5691 = vmatpush1.bf16.msra.mxu0 %v4496
    %5692 = vmatprep.subr.bf16.mxu0 %v4513
    %5693 = vmatpush1.bf16.msra.mxu0 %v4512
    %5694 = vmatprep.subr.bf16.mxu0 %v4529
    %5695 = vmatpush1.bf16.msra.mxu0 %v4528
    %5696 = vmatprep.subr.bf16.mxu0 %v4545
    %5697 = vmatpush1.bf16.msra.mxu0 %v4544
    %5698 = vmatprep.subr.bf16.mxu0 %v4561
    %5699 = vmatpush1.bf16.msra.mxu0 %v4560
    %5700 = vmatprep.mubr.bf16.mxu0 %v1741
    %5701 = vmatmul.mubr.bf16.gmra.mrb[0].mxu0 %v1740
    %v5702 = vpop.f32.mrb[0].mxu0
    %v5703 = vadd.f32 0.0, %v5702
    %v5704 = vpop.f32.mrb[0].mxu0
    %v5705 = vadd.f32 0.0, %v5704
    %v5706 = vpop.f32.mrb[0].mxu0
    %v5707 = vpop.f32.mrb[0].mxu0
    %5708 = vdwg.mxu0
    %5709 = vmatprep.subr.bf16.mxu0 %v4577
    %5710 = vmatpush1.bf16.msra.mxu0 %v4576
    %5711 = vmatprep.subr.bf16.mxu0 %v4593
    %5712 = vmatpush1.bf16.msra.mxu0 %v4592
    %5713 = vmatprep.subr.bf16.mxu0 %v4609
    %5714 = vmatpush1.bf16.msra.mxu0 %v4608
    %5715 = vmatprep.subr.bf16.mxu0 %v4625
    %5716 = vmatpush1.bf16.msra.mxu0 %v4624
    %5717 = vmatprep.subr.bf16.mxu0 %v4641
    %5718 = vmatpush1.bf16.msra.mxu0 %v4640
    %5719 = vmatprep.subr.bf16.mxu0 %v4657
    %5720 = vmatpush1.bf16.msra.mxu0 %v4656
    %5721 = vmatprep.subr.bf16.mxu0 %v4673
    %5722 = vmatpush1.bf16.msra.mxu0 %v4672
    %5723 = vmatprep.subr.bf16.mxu0 %v4689
    %5724 = vmatpush1.bf16.msra.mxu0 %v4688
    %5725 = vmatprep.subr.bf16.mxu0 %v4705
    %5726 = vmatpush1.bf16.msra.mxu0 %v4704
    %5727 = vmatprep.subr.bf16.mxu0 %v4721
    %5728 = vmatpush1.bf16.msra.mxu0 %v4720
    %5729 = vmatprep.subr.bf16.mxu0 %v4737
    %5730 = vmatpush1.bf16.msra.mxu0 %v4736
    %5731 = vmatprep.subr.bf16.mxu0 %v4753
    %5732 = vmatpush1.bf16.msra.mxu0 %v4752
    %5733 = vmatprep.subr.bf16.mxu0 %v4769
    %5734 = vmatpush1.bf16.msra.mxu0 %v4768
    %5735 = vmatprep.subr.bf16.mxu0 %v4785
    %5736 = vmatpush1.bf16.msra.mxu0 %v4784
    %5737 = vmatprep.subr.bf16.mxu0 %v4801
    %5738 = vmatpush1.bf16.msra.mxu0 %v4800
    %5739 = vmatprep.subr.bf16.mxu0 %v4817
    %5740 = vmatpush1.bf16.msra.mxu0 %v4816
    %5741 = vmatprep.mubr.bf16.mxu0 %v1743
    %5742 = vmatmul.mubr.bf16.gmra.mrb[0].mxu0 %v1742
    %v5743 = vpop.f32.mrb[0].mxu0
    %v5744 = vadd.f32 %v5703, %v5743
    %v5745 = vpop.f32.mrb[0].mxu0
    %v5746 = vadd.f32 %v5705, %v5745
    %v5747 = vpop.f32.mrb[0].mxu0
    %v5748 = vpop.f32.mrb[0].mxu0
    %5749 = vdwg.mxu0
    %5750 = vmatprep.subr.bf16.mxu0 %v4833
    %5751 = vmatpush1.bf16.msra.mxu0 %v4832
    %5752 = vmatprep.subr.bf16.mxu0 %v4849
    %5753 = vmatpush1.bf16.msra.mxu0 %v4848
    %5754 = vmatprep.subr.bf16.mxu0 %v4865
    %5755 = vmatpush1.bf16.msra.mxu0 %v4864
    %5756 = vmatprep.subr.bf16.mxu0 %v4881
    %5757 = vmatpush1.bf16.msra.mxu0 %v4880
    %5758 = vmatprep.subr.bf16.mxu0 %v4897
    %5759 = vmatpush1.bf16.msra.mxu0 %v4896
    %5760 = vmatprep.subr.bf16.mxu0 %v4913
    %5761 = vmatpush1.bf16.msra.mxu0 %v4912
    %5762 = vmatprep.subr.bf16.mxu0 %v4929
    %5763 = vmatpush1.bf16.msra.mxu0 %v4928
    %5764 = vmatprep.subr.bf16.mxu0 %v4945
    %5765 = vmatpush1.bf16.msra.mxu0 %v4944
    %5766 = vmatprep.subr.bf16.mxu0 %v4961
    %5767 = vmatpush1.bf16.msra.mxu0 %v4960
    %5768 = vmatprep.subr.bf16.mxu0 %v4977
    %5769 = vmatpush1.bf16.msra.mxu0 %v4976
    %5770 = vmatprep.subr.bf16.mxu0 %v4993
    %5771 = vmatpush1.bf16.msra.mxu0 %v4992
    %5772 = vmatprep.subr.bf16.mxu0 %v5009
    %5773 = vmatpush1.bf16.msra.mxu0 %v5008
    %5774 = vmatprep.subr.bf16.mxu0 %v5025
    %5775 = vmatpush1.bf16.msra.mxu0 %v5024
    %5776 = vmatprep.subr.bf16.mxu0 %v5041
    %5777 = vmatpush1.bf16.msra.mxu0 %v5040
    %5778 = vmatprep.subr.bf16.mxu0 %v5057
    %5779 = vmatpush1.bf16.msra.mxu0 %v5056
    %5780 = vmatprep.subr.bf16.mxu0 %v5073
    %5781 = vmatpush1.bf16.msra.mxu0 %v5072
    %5782 = vmatprep.mubr.bf16.mxu0 %v1745
    %5783 = vmatmul.mubr.bf16.gmra.mrb[0].mxu0 %v1744
    %v5784 = vpop.f32.mrb[0].mxu0
    %v5785 = vadd.f32 %v5744, %v5784
    %v5786 = vpop.f32.mrb[0].mxu0
    %v5787 = vadd.f32 %v5746, %v5786
    %v5788 = vpop.f32.mrb[0].mxu0
    %v5789 = vpop.f32.mrb[0].mxu0
    %5790 = vdwg.mxu0
    %5791 = vmatprep.subr.bf16.mxu0 %v5089
    %5792 = vmatpush1.bf16.msra.mxu0 %v5088
    %5793 = vmatprep.subr.bf16.mxu0 %v5105
    %5794 = vmatpush1.bf16.msra.mxu0 %v5104
    %5795 = vmatprep.subr.bf16.mxu0 %v5121
    %5796 = vmatpush1.bf16.msra.mxu0 %v5120
    %5797 = vmatprep.subr.bf16.mxu0 %v5137
    %5798 = vmatpush1.bf16.msra.mxu0 %v5136
    %5799 = vmatprep.subr.bf16.mxu0 %v5153
    %5800 = vmatpush1.bf16.msra.mxu0 %v5152
    %5801 = vmatprep.subr.bf16.mxu0 %v5169
    %5802 = vmatpush1.bf16.msra.mxu0 %v5168
    %5803 = vmatprep.subr.bf16.mxu0 %v5185
    %5804 = vmatpush1.bf16.msra.mxu0 %v5184
    %5805 = vmatprep.subr.bf16.mxu0 %v5201
    %5806 = vmatpush1.bf16.msra.mxu0 %v5200
    %5807 = vmatprep.subr.bf16.mxu0 %v5217
    %5808 = vmatpush1.bf16.msra.mxu0 %v5216
    %5809 = vmatprep.subr.bf16.mxu0 %v5233
    %5810 = vmatpush1.bf16.msra.mxu0 %v5232
    %5811 = vmatprep.subr.bf16.mxu0 %v5249
    %5812 = vmatpush1.bf16.msra.mxu0 %v5248
    %5813 = vmatprep.subr.bf16.mxu0 %v5265
    %5814 = vmatpush1.bf16.msra.mxu0 %v5264
    %5815 = vmatprep.subr.bf16.mxu0 %v5281
    %5816 = vmatpush1.bf16.msra.mxu0 %v5280
    %5817 = vmatprep.subr.bf16.mxu0 %v5297
    %5818 = vmatpush1.bf16.msra.mxu0 %v5296
    %5819 = vmatprep.subr.bf16.mxu0 %v5313
    %5820 = vmatpush1.bf16.msra.mxu0 %v5312
    %5821 = vmatprep.subr.bf16.mxu0 %v5329
    %5822 = vmatpush1.bf16.msra.mxu0 %v5328
    %5823 = vmatprep.mubr.bf16.mxu0 %v1747
    %5824 = vmatmul.mubr.bf16.gmra.mrb[0].mxu0 %v1746
    %v5825 = vpop.f32.mrb[0].mxu0
    %v5826 = vadd.f32 %v5785, %v5825
    %v5827 = vpop.f32.mrb[0].mxu0
    %v5828 = vadd.f32 %v5787, %v5827
    %v5829 = vpop.f32.mrb[0].mxu0
    %v5830 = vpop.f32.mrb[0].mxu0
    %5831 = vdwg.mxu0
    %5832 = vmatprep.subr.bf16.mxu0 %v4323
    %5833 = vmatpush1.bf16.msra.mxu0 %v4322
    %5834 = vmatprep.subr.bf16.mxu0 %v4339
    %5835 = vmatpush1.bf16.msra.mxu0 %v4338
    %5836 = vmatprep.subr.bf16.mxu0 %v4355
    %5837 = vmatpush1.bf16.msra.mxu0 %v4354
    %5838 = vmatprep.subr.bf16.mxu0 %v4371
    %5839 = vmatpush1.bf16.msra.mxu0 %v4370
    %5840 = vmatprep.subr.bf16.mxu0 %v4387
    %5841 = vmatpush1.bf16.msra.mxu0 %v4386
    %5842 = vmatprep.subr.bf16.mxu0 %v4403
    %5843 = vmatpush1.bf16.msra.mxu0 %v4402
    %5844 = vmatprep.subr.bf16.mxu0 %v4419
    %5845 = vmatpush1.bf16.msra.mxu0 %v4418
    %5846 = vmatprep.subr.bf16.mxu0 %v4435
    %5847 = vmatpush1.bf16.msra.mxu0 %v4434
    %5848 = vmatprep.subr.bf16.mxu0 %v4451
    %5849 = vmatpush1.bf16.msra.mxu0 %v4450
    %5850 = vmatprep.subr.bf16.mxu0 %v4467
    %5851 = vmatpush1.bf16.msra.mxu0 %v4466
    %5852 = vmatprep.subr.bf16.mxu0 %v4483
    %5853 = vmatpush1.bf16.msra.mxu0 %v4482
    %5854 = vmatprep.subr.bf16.mxu0 %v4499
    %5855 = vmatpush1.bf16.msra.mxu0 %v4498
    %5856 = vmatprep.subr.bf16.mxu0 %v4515
    %5857 = vmatpush1.bf16.msra.mxu0 %v4514
    %5858 = vmatprep.subr.bf16.mxu0 %v4531
    %5859 = vmatpush1.bf16.msra.mxu0 %v4530
    %5860 = vmatprep.subr.bf16.mxu0 %v4547
    %5861 = vmatpush1.bf16.msra.mxu0 %v4546
    %5862 = vmatprep.subr.bf16.mxu0 %v4563
    %5863 = vmatpush1.bf16.msra.mxu0 %v4562
    %5864 = vmatprep.mubr.bf16.mxu0 %v1741
    %5865 = vmatmul.mubr.bf16.gmra.mrb[0].mxu0 %v1740
    %v5866 = vpop.f32.mrb[0].mxu0
    %v5867 = vadd.f32 0.0, %v5866
    %v5868 = vpop.f32.mrb[0].mxu0
    %v5869 = vadd.f32 0.0, %v5868
    %v5870 = vpop.f32.mrb[0].mxu0
    %v5871 = vpop.f32.mrb[0].mxu0
    %5872 = vdwg.mxu0
    %5873 = vmatprep.subr.bf16.mxu0 %v4579
    %5874 = vmatpush1.bf16.msra.mxu0 %v4578
    %5875 = vmatprep.subr.bf16.mxu0 %v4595
    %5876 = vmatpush1.bf16.msra.mxu0 %v4594
    %5877 = vmatprep.subr.bf16.mxu0 %v4611
    %5878 = vmatpush1.bf16.msra.mxu0 %v4610
    %5879 = vmatprep.subr.bf16.mxu0 %v4627
    %5880 = vmatpush1.bf16.msra.mxu0 %v4626
    %5881 = vmatprep.subr.bf16.mxu0 %v4643
    %5882 = vmatpush1.bf16.msra.mxu0 %v4642
    %5883 = vmatprep.subr.bf16.mxu0 %v4659
    %5884 = vmatpush1.bf16.msra.mxu0 %v4658
    %5885 = vmatprep.subr.bf16.mxu0 %v4675
    %5886 = vmatpush1.bf16.msra.mxu0 %v4674
    %5887 = vmatprep.subr.bf16.mxu0 %v4691
    %5888 = vmatpush1.bf16.msra.mxu0 %v4690
    %5889 = vmatprep.subr.bf16.mxu0 %v4707
    %5890 = vmatpush1.bf16.msra.mxu0 %v4706
    %5891 = vmatprep.subr.bf16.mxu0 %v4723
    %5892 = vmatpush1.bf16.msra.mxu0 %v4722
    %5893 = vmatprep.subr.bf16.mxu0 %v4739
    %5894 = vmatpush1.bf16.msra.mxu0 %v4738
    %5895 = vmatprep.subr.bf16.mxu0 %v4755
    %5896 = vmatpush1.bf16.msra.mxu0 %v4754
    %5897 = vmatprep.subr.bf16.mxu0 %v4771
    %5898 = vmatpush1.bf16.msra.mxu0 %v4770
    %5899 = vmatprep.subr.bf16.mxu0 %v4787
    %5900 = vmatpush1.bf16.msra.mxu0 %v4786
    %5901 = vmatprep.subr.bf16.mxu0 %v4803
    %5902 = vmatpush1.bf16.msra.mxu0 %v4802
    %5903 = vmatprep.subr.bf16.mxu0 %v4819
    %5904 = vmatpush1.bf16.msra.mxu0 %v4818
    %5905 = vmatprep.mubr.bf16.mxu0 %v1743
    %5906 = vmatmul.mubr.bf16.gmra.mrb[0].mxu0 %v1742
    %v5907 = vpop.f32.mrb[0].mxu0
    %v5908 = vadd.f32 %v5867, %v5907
    %v5909 = vpop.f32.mrb[0].mxu0
    %v5910 = vadd.f32 %v5869, %v5909
    %v5911 = vpop.f32.mrb[0].mxu0
    %v5912 = vpop.f32.mrb[0].mxu0
    %5913 = vdwg.mxu0
    %5914 = vmatprep.subr.bf16.mxu0 %v4835
    %5915 = vmatpush1.bf16.msra.mxu0 %v4834
    %5916 = vmatprep.subr.bf16.mxu0 %v4851
    %5917 = vmatpush1.bf16.msra.mxu0 %v4850
    %5918 = vmatprep.subr.bf16.mxu0 %v4867
    %5919 = vmatpush1.bf16.msra.mxu0 %v4866
    %5920 = vmatprep.subr.bf16.mxu0 %v4883
    %5921 = vmatpush1.bf16.msra.mxu0 %v4882
    %5922 = vmatprep.subr.bf16.mxu0 %v4899
    %5923 = vmatpush1.bf16.msra.mxu0 %v4898
    %5924 = vmatprep.subr.bf16.mxu0 %v4915
    %5925 = vmatpush1.bf16.msra.mxu0 %v4914
    %5926 = vmatprep.subr.bf16.mxu0 %v4931
    %5927 = vmatpush1.bf16.msra.mxu0 %v4930
    %5928 = vmatprep.subr.bf16.mxu0 %v4947
    %5929 = vmatpush1.bf16.msra.mxu0 %v4946
    %5930 = vmatprep.subr.bf16.mxu0 %v4963
    %5931 = vmatpush1.bf16.msra.mxu0 %v4962
    %5932 = vmatprep.subr.bf16.mxu0 %v4979
    %5933 = vmatpush1.bf16.msra.mxu0 %v4978
    %5934 = vmatprep.subr.bf16.mxu0 %v4995
    %5935 = vmatpush1.bf16.msra.mxu0 %v4994
    %5936 = vmatprep.subr.bf16.mxu0 %v5011
    %5937 = vmatpush1.bf16.msra.mxu0 %v5010
    %5938 = vmatprep.subr.bf16.mxu0 %v5027
    %5939 = vmatpush1.bf16.msra.mxu0 %v5026
    %5940 = vmatprep.subr.bf16.mxu0 %v5043
    %5941 = vmatpush1.bf16.msra.mxu0 %v5042
    %5942 = vmatprep.subr.bf16.mxu0 %v5059
    %5943 = vmatpush1.bf16.msra.mxu0 %v5058
    %5944 = vmatprep.subr.bf16.mxu0 %v5075
    %5945 = vmatpush1.bf16.msra.mxu0 %v5074
    %5946 = vmatprep.mubr.bf16.mxu0 %v1745
    %5947 = vmatmul.mubr.bf16.gmra.mrb[0].mxu0 %v1744
    %v5948 = vpop.f32.mrb[0].mxu0
    %v5949 = vadd.f32 %v5908, %v5948
    %v5950 = vpop.f32.mrb[0].mxu0
    %v5951 = vadd.f32 %v5910, %v5950
    %v5952 = vpop.f32.mrb[0].mxu0
    %v5953 = vpop.f32.mrb[0].mxu0
    %5954 = vdwg.mxu0
    %5955 = vmatprep.subr.bf16.mxu0 %v5091
    %5956 = vmatpush1.bf16.msra.mxu0 %v5090
    %5957 = vmatprep.subr.bf16.mxu0 %v5107
    %5958 = vmatpush1.bf16.msra.mxu0 %v5106
    %5959 = vmatprep.subr.bf16.mxu0 %v5123
    %5960 = vmatpush1.bf16.msra.mxu0 %v5122
    %5961 = vmatprep.subr.bf16.mxu0 %v5139
    %5962 = vmatpush1.bf16.msra.mxu0 %v5138
    %5963 = vmatprep.subr.bf16.mxu0 %v5155
    %5964 = vmatpush1.bf16.msra.mxu0 %v5154
    %5965 = vmatprep.subr.bf16.mxu0 %v5171
    %5966 = vmatpush1.bf16.msra.mxu0 %v5170
    %5967 = vmatprep.subr.bf16.mxu0 %v5187
    %5968 = vmatpush1.bf16.msra.mxu0 %v5186
    %5969 = vmatprep.subr.bf16.mxu0 %v5203
    %5970 = vmatpush1.bf16.msra.mxu0 %v5202
    %5971 = vmatprep.subr.bf16.mxu0 %v5219
    %5972 = vmatpush1.bf16.msra.mxu0 %v5218
    %5973 = vmatprep.subr.bf16.mxu0 %v5235
    %5974 = vmatpush1.bf16.msra.mxu0 %v5234
    %5975 = vmatprep.subr.bf16.mxu0 %v5251
    %5976 = vmatpush1.bf16.msra.mxu0 %v5250
    %5977 = vmatprep.subr.bf16.mxu0 %v5267
    %5978 = vmatpush1.bf16.msra.mxu0 %v5266
    %5979 = vmatprep.subr.bf16.mxu0 %v5283
    %5980 = vmatpush1.bf16.msra.mxu0 %v5282
    %5981 = vmatprep.subr.bf16.mxu0 %v5299
    %5982 = vmatpush1.bf16.msra.mxu0 %v5298
    %5983 = vmatprep.subr.bf16.mxu0 %v5315
    %5984 = vmatpush1.bf16.msra.mxu0 %v5314
    %5985 = vmatprep.subr.bf16.mxu0 %v5331
    %5986 = vmatpush1.bf16.msra.mxu0 %v5330
    %5987 = vmatprep.mubr.bf16.mxu0 %v1747
    %5988 = vmatmul.mubr.bf16.gmra.mrb[0].mxu0 %v1746
    %v5989 = vpop.f32.mrb[0].mxu0
    %v5990 = vadd.f32 %v5949, %v5989
    %v5991 = vpop.f32.mrb[0].mxu0
    %v5992 = vadd.f32 %v5951, %v5991
    %v5993 = vpop.f32.mrb[0].mxu0
    %v5994 = vpop.f32.mrb[0].mxu0
    %5995 = vdwg.mxu0
    %5996 = vmatprep.subr.bf16.mxu0 %v4325
    %5997 = vmatpush1.bf16.msra.mxu0 %v4324
    %5998 = vmatprep.subr.bf16.mxu0 %v4341
    %5999 = vmatpush1.bf16.msra.mxu0 %v4340
    %6000 = vmatprep.subr.bf16.mxu0 %v4357
    %6001 = vmatpush1.bf16.msra.mxu0 %v4356
    %6002 = vmatprep.subr.bf16.mxu0 %v4373
    %6003 = vmatpush1.bf16.msra.mxu0 %v4372
    %6004 = vmatprep.subr.bf16.mxu0 %v4389
    %6005 = vmatpush1.bf16.msra.mxu0 %v4388
    %6006 = vmatprep.subr.bf16.mxu0 %v4405
    %6007 = vmatpush1.bf16.msra.mxu0 %v4404
    %6008 = vmatprep.subr.bf16.mxu0 %v4421
    %6009 = vmatpush1.bf16.msra.mxu0 %v4420
    %6010 = vmatprep.subr.bf16.mxu0 %v4437
    %6011 = vmatpush1.bf16.msra.mxu0 %v4436
    %6012 = vmatprep.subr.bf16.mxu0 %v4453
    %6013 = vmatpush1.bf16.msra.mxu0 %v4452
    %6014 = vmatprep.subr.bf16.mxu0 %v4469
    %6015 = vmatpush1.bf16.msra.mxu0 %v4468
    %6016 = vmatprep.subr.bf16.mxu0 %v4485
    %6017 = vmatpush1.bf16.msra.mxu0 %v4484
    %6018 = vmatprep.subr.bf16.mxu0 %v4501
    %6019 = vmatpush1.bf16.msra.mxu0 %v4500
    %6020 = vmatprep.subr.bf16.mxu0 %v4517
    %6021 = vmatpush1.bf16.msra.mxu0 %v4516
    %6022 = vmatprep.subr.bf16.mxu0 %v4533
    %6023 = vmatpush1.bf16.msra.mxu0 %v4532
    %6024 = vmatprep.subr.bf16.mxu0 %v4549
    %6025 = vmatpush1.bf16.msra.mxu0 %v4548
    %6026 = vmatprep.subr.bf16.mxu0 %v4565
    %6027 = vmatpush1.bf16.msra.mxu0 %v4564
    %6028 = vmatprep.mubr.bf16.mxu0 %v1741
    %6029 = vmatmul.mubr.bf16.gmra.mrb[0].mxu0 %v1740
    %v6030 = vpop.f32.mrb[0].mxu0
    %v6031 = vadd.f32 0.0, %v6030
    %v6032 = vpop.f32.mrb[0].mxu0
    %v6033 = vadd.f32 0.0, %v6032
    %v6034 = vpop.f32.mrb[0].mxu0
    %v6035 = vpop.f32.mrb[0].mxu0
    %6036 = vdwg.mxu0
    %6037 = vmatprep.subr.bf16.mxu0 %v4581
    %6038 = vmatpush1.bf16.msra.mxu0 %v4580
    %6039 = vmatprep.subr.bf16.mxu0 %v4597
    %6040 = vmatpush1.bf16.msra.mxu0 %v4596
    %6041 = vmatprep.subr.bf16.mxu0 %v4613
    %6042 = vmatpush1.bf16.msra.mxu0 %v4612
    %6043 = vmatprep.subr.bf16.mxu0 %v4629
    %6044 = vmatpush1.bf16.msra.mxu0 %v4628
    %6045 = vmatprep.subr.bf16.mxu0 %v4645
    %6046 = vmatpush1.bf16.msra.mxu0 %v4644
    %6047 = vmatprep.subr.bf16.mxu0 %v4661
    %6048 = vmatpush1.bf16.msra.mxu0 %v4660
    %6049 = vmatprep.subr.bf16.mxu0 %v4677
    %6050 = vmatpush1.bf16.msra.mxu0 %v4676
    %6051 = vmatprep.subr.bf16.mxu0 %v4693
    %6052 = vmatpush1.bf16.msra.mxu0 %v4692
    %6053 = vmatprep.subr.bf16.mxu0 %v4709
    %6054 = vmatpush1.bf16.msra.mxu0 %v4708
    %6055 = vmatprep.subr.bf16.mxu0 %v4725
    %6056 = vmatpush1.bf16.msra.mxu0 %v4724
    %6057 = vmatprep.subr.bf16.mxu0 %v4741
    %6058 = vmatpush1.bf16.msra.mxu0 %v4740
    %6059 = vmatprep.subr.bf16.mxu0 %v4757
    %6060 = vmatpush1.bf16.msra.mxu0 %v4756
    %6061 = vmatprep.subr.bf16.mxu0 %v4773
    %6062 = vmatpush1.bf16.msra.mxu0 %v4772
    %6063 = vmatprep.subr.bf16.mxu0 %v4789
    %6064 = vmatpush1.bf16.msra.mxu0 %v4788
    %6065 = vmatprep.subr.bf16.mxu0 %v4805
    %6066 = vmatpush1.bf16.msra.mxu0 %v4804
    %6067 = vmatprep.subr.bf16.mxu0 %v4821
    %6068 = vmatpush1.bf16.msra.mxu0 %v4820
    %6069 = vmatprep.mubr.bf16.mxu0 %v1743
    %6070 = vmatmul.mubr.bf16.gmra.mrb[0].mxu0 %v1742
    %v6071 = vpop.f32.mrb[0].mxu0
    %v6072 = vadd.f32 %v6031, %v6071
    %v6073 = vpop.f32.mrb[0].mxu0
    %v6074 = vadd.f32 %v6033, %v6073
    %v6075 = vpop.f32.mrb[0].mxu0
    %v6076 = vpop.f32.mrb[0].mxu0
    %6077 = vdwg.mxu0
    %6078 = vmatprep.subr.bf16.mxu0 %v4837
    %6079 = vmatpush1.bf16.msra.mxu0 %v4836
    %6080 = vmatprep.subr.bf16.mxu0 %v4853
    %6081 = vmatpush1.bf16.msra.mxu0 %v4852
    %6082 = vmatprep.subr.bf16.mxu0 %v4869
    %6083 = vmatpush1.bf16.msra.mxu0 %v4868
    %6084 = vmatprep.subr.bf16.mxu0 %v4885
    %6085 = vmatpush1.bf16.msra.mxu0 %v4884
    %6086 = vmatprep.subr.bf16.mxu0 %v4901
    %6087 = vmatpush1.bf16.msra.mxu0 %v4900
    %6088 = vmatprep.subr.bf16.mxu0 %v4917
    %6089 = vmatpush1.bf16.msra.mxu0 %v4916
    %6090 = vmatprep.subr.bf16.mxu0 %v4933
    %6091 = vmatpush1.bf16.msra.mxu0 %v4932
    %6092 = vmatprep.subr.bf16.mxu0 %v4949
    %6093 = vmatpush1.bf16.msra.mxu0 %v4948
    %6094 = vmatprep.subr.bf16.mxu0 %v4965
    %6095 = vmatpush1.bf16.msra.mxu0 %v4964
    %6096 = vmatprep.subr.bf16.mxu0 %v4981
    %6097 = vmatpush1.bf16.msra.mxu0 %v4980
    %6098 = vmatprep.subr.bf16.mxu0 %v4997
    %6099 = vmatpush1.bf16.msra.mxu0 %v4996
    %6100 = vmatprep.subr.bf16.mxu0 %v5013
    %6101 = vmatpush1.bf16.msra.mxu0 %v5012
    %6102 = vmatprep.subr.bf16.mxu0 %v5029
    %6103 = vmatpush1.bf16.msra.mxu0 %v5028
    %6104 = vmatprep.subr.bf16.mxu0 %v5045
    %6105 = vmatpush1.bf16.msra.mxu0 %v5044
    %6106 = vmatprep.subr.bf16.mxu0 %v5061
    %6107 = vmatpush1.bf16.msra.mxu0 %v5060
    %6108 = vmatprep.subr.bf16.mxu0 %v5077
    %6109 = vmatpush1.bf16.msra.mxu0 %v5076
    %6110 = vmatprep.mubr.bf16.mxu0 %v1745
    %6111 = vmatmul.mubr.bf16.gmra.mrb[0].mxu0 %v1744
    %v6112 = vpop.f32.mrb[0].mxu0
    %v6113 = vadd.f32 %v6072, %v6112
    %v6114 = vpop.f32.mrb[0].mxu0
    %v6115 = vadd.f32 %v6074, %v6114
    %v6116 = vpop.f32.mrb[0].mxu0
    %v6117 = vpop.f32.mrb[0].mxu0
    %6118 = vdwg.mxu0
    %6119 = vmatprep.subr.bf16.mxu0 %v5093
    %6120 = vmatpush1.bf16.msra.mxu0 %v5092
    %6121 = vmatprep.subr.bf16.mxu0 %v5109
    %6122 = vmatpush1.bf16.msra.mxu0 %v5108
    %6123 = vmatprep.subr.bf16.mxu0 %v5125
    %6124 = vmatpush1.bf16.msra.mxu0 %v5124
    %6125 = vmatprep.subr.bf16.mxu0 %v5141
    %6126 = vmatpush1.bf16.msra.mxu0 %v5140
    %6127 = vmatprep.subr.bf16.mxu0 %v5157
    %6128 = vmatpush1.bf16.msra.mxu0 %v5156
    %6129 = vmatprep.subr.bf16.mxu0 %v5173
    %6130 = vmatpush1.bf16.msra.mxu0 %v5172
    %6131 = vmatprep.subr.bf16.mxu0 %v5189
    %6132 = vmatpush1.bf16.msra.mxu0 %v5188
    %6133 = vmatprep.subr.bf16.mxu0 %v5205
    %6134 = vmatpush1.bf16.msra.mxu0 %v5204
    %6135 = vmatprep.subr.bf16.mxu0 %v5221
    %6136 = vmatpush1.bf16.msra.mxu0 %v5220
    %6137 = vmatprep.subr.bf16.mxu0 %v5237
    %6138 = vmatpush1.bf16.msra.mxu0 %v5236
    %6139 = vmatprep.subr.bf16.mxu0 %v5253
    %6140 = vmatpush1.bf16.msra.mxu0 %v5252
    %6141 = vmatprep.subr.bf16.mxu0 %v5269
    %6142 = vmatpush1.bf16.msra.mxu0 %v5268
    %6143 = vmatprep.subr.bf16.mxu0 %v5285
    %6144 = vmatpush1.bf16.msra.mxu0 %v5284
    %6145 = vmatprep.subr.bf16.mxu0 %v5301
    %6146 = vmatpush1.bf16.msra.mxu0 %v5300
    %6147 = vmatprep.subr.bf16.mxu0 %v5317
    %6148 = vmatpush1.bf16.msra.mxu0 %v5316
    %6149 = vmatprep.subr.bf16.mxu0 %v5333
    %6150 = vmatpush1.bf16.msra.mxu0 %v5332
    %6151 = vmatprep.mubr.bf16.mxu0 %v1747
    %6152 = vmatmul.mubr.bf16.gmra.mrb[0].mxu0 %v1746
    %v6153 = vpop.f32.mrb[0].mxu0
    %v6154 = vadd.f32 %v6113, %v6153
    %v6155 = vpop.f32.mrb[0].mxu0
    %v6156 = vadd.f32 %v6115, %v6155
    %v6157 = vpop.f32.mrb[0].mxu0
    %v6158 = vpop.f32.mrb[0].mxu0
    %6159 = vdwg.mxu0
    %6160 = vmatprep.subr.bf16.mxu0 %v4327
    %6161 = vmatpush1.bf16.msra.mxu0 %v4326
    %6162 = vmatprep.subr.bf16.mxu0 %v4343
    %6163 = vmatpush1.bf16.msra.mxu0 %v4342
    %6164 = vmatprep.subr.bf16.mxu0 %v4359
    %6165 = vmatpush1.bf16.msra.mxu0 %v4358
    %6166 = vmatprep.subr.bf16.mxu0 %v4375
    %6167 = vmatpush1.bf16.msra.mxu0 %v4374
    %6168 = vmatprep.subr.bf16.mxu0 %v4391
    %6169 = vmatpush1.bf16.msra.mxu0 %v4390
    %6170 = vmatprep.subr.bf16.mxu0 %v4407
    %6171 = vmatpush1.bf16.msra.mxu0 %v4406
    %6172 = vmatprep.subr.bf16.mxu0 %v4423
    %6173 = vmatpush1.bf16.msra.mxu0 %v4422
    %6174 = vmatprep.subr.bf16.mxu0 %v4439
    %6175 = vmatpush1.bf16.msra.mxu0 %v4438
    %6176 = vmatprep.subr.bf16.mxu0 %v4455
    %6177 = vmatpush1.bf16.msra.mxu0 %v4454
    %6178 = vmatprep.subr.bf16.mxu0 %v4471
    %6179 = vmatpush1.bf16.msra.mxu0 %v4470
    %6180 = vmatprep.subr.bf16.mxu0 %v4487
    %6181 = vmatpush1.bf16.msra.mxu0 %v4486
    %6182 = vmatprep.subr.bf16.mxu0 %v4503
    %6183 = vmatpush1.bf16.msra.mxu0 %v4502
    %6184 = vmatprep.subr.bf16.mxu0 %v4519
    %6185 = vmatpush1.bf16.msra.mxu0 %v4518
    %6186 = vmatprep.subr.bf16.mxu0 %v4535
    %6187 = vmatpush1.bf16.msra.mxu0 %v4534
    %6188 = vmatprep.subr.bf16.mxu0 %v4551
    %6189 = vmatpush1.bf16.msra.mxu0 %v4550
    %6190 = vmatprep.subr.bf16.mxu0 %v4567
    %6191 = vmatpush1.bf16.msra.mxu0 %v4566
    %6192 = vmatprep.mubr.bf16.mxu0 %v1741
    %6193 = vmatmul.mubr.bf16.gmra.mrb[0].mxu0 %v1740
    %v6194 = vpop.f32.mrb[0].mxu0
    %v6195 = vadd.f32 0.0, %v6194
    %v6196 = vpop.f32.mrb[0].mxu0
    %v6197 = vadd.f32 0.0, %v6196
    %v6198 = vpop.f32.mrb[0].mxu0
    %v6199 = vpop.f32.mrb[0].mxu0
    %6200 = vdwg.mxu0
    %6201 = vmatprep.subr.bf16.mxu0 %v4583
    %6202 = vmatpush1.bf16.msra.mxu0 %v4582
    %6203 = vmatprep.subr.bf16.mxu0 %v4599
    %6204 = vmatpush1.bf16.msra.mxu0 %v4598
    %6205 = vmatprep.subr.bf16.mxu0 %v4615
    %6206 = vmatpush1.bf16.msra.mxu0 %v4614
    %6207 = vmatprep.subr.bf16.mxu0 %v4631
    %6208 = vmatpush1.bf16.msra.mxu0 %v4630
    %6209 = vmatprep.subr.bf16.mxu0 %v4647
    %6210 = vmatpush1.bf16.msra.mxu0 %v4646
    %6211 = vmatprep.subr.bf16.mxu0 %v4663
    %6212 = vmatpush1.bf16.msra.mxu0 %v4662
    %6213 = vmatprep.subr.bf16.mxu0 %v4679
    %6214 = vmatpush1.bf16.msra.mxu0 %v4678
    %6215 = vmatprep.subr.bf16.mxu0 %v4695
    %6216 = vmatpush1.bf16.msra.mxu0 %v4694
    %6217 = vmatprep.subr.bf16.mxu0 %v4711
    %6218 = vmatpush1.bf16.msra.mxu0 %v4710
    %6219 = vmatprep.subr.bf16.mxu0 %v4727
    %6220 = vmatpush1.bf16.msra.mxu0 %v4726
    %6221 = vmatprep.subr.bf16.mxu0 %v4743
    %6222 = vmatpush1.bf16.msra.mxu0 %v4742
    %6223 = vmatprep.subr.bf16.mxu0 %v4759
    %6224 = vmatpush1.bf16.msra.mxu0 %v4758
    %6225 = vmatprep.subr.bf16.mxu0 %v4775
    %6226 = vmatpush1.bf16.msra.mxu0 %v4774
    %6227 = vmatprep.subr.bf16.mxu0 %v4791
    %6228 = vmatpush1.bf16.msra.mxu0 %v4790
    %6229 = vmatprep.subr.bf16.mxu0 %v4807
    %6230 = vmatpush1.bf16.msra.mxu0 %v4806
    %6231 = vmatprep.subr.bf16.mxu0 %v4823
    %6232 = vmatpush1.bf16.msra.mxu0 %v4822
    %6233 = vmatprep.mubr.bf16.mxu0 %v1743
    %6234 = vmatmul.mubr.bf16.gmra.mrb[0].mxu0 %v1742
    %v6235 = vpop.f32.mrb[0].mxu0
    %v6236 = vadd.f32 %v6195, %v6235
    %v6237 = vpop.f32.mrb[0].mxu0
    %v6238 = vadd.f32 %v6197, %v6237
    %v6239 = vpop.f32.mrb[0].mxu0
    %v6240 = vpop.f32.mrb[0].mxu0
    %6241 = vdwg.mxu0
    %6242 = vmatprep.subr.bf16.mxu0 %v4839
    %6243 = vmatpush1.bf16.msra.mxu0 %v4838
    %6244 = vmatprep.subr.bf16.mxu0 %v4855
    %6245 = vmatpush1.bf16.msra.mxu0 %v4854
    %6246 = vmatprep.subr.bf16.mxu0 %v4871
    %6247 = vmatpush1.bf16.msra.mxu0 %v4870
    %6248 = vmatprep.subr.bf16.mxu0 %v4887
    %6249 = vmatpush1.bf16.msra.mxu0 %v4886
    %6250 = vmatprep.subr.bf16.mxu0 %v4903
    %6251 = vmatpush1.bf16.msra.mxu0 %v4902
    %6252 = vmatprep.subr.bf16.mxu0 %v4919
    %6253 = vmatpush1.bf16.msra.mxu0 %v4918
    %6254 = vmatprep.subr.bf16.mxu0 %v4935
    %6255 = vmatpush1.bf16.msra.mxu0 %v4934
    %6256 = vmatprep.subr.bf16.mxu0 %v4951
    %6257 = vmatpush1.bf16.msra.mxu0 %v4950
    %6258 = vmatprep.subr.bf16.mxu0 %v4967
    %6259 = vmatpush1.bf16.msra.mxu0 %v4966
    %6260 = vmatprep.subr.bf16.mxu0 %v4983
    %6261 = vmatpush1.bf16.msra.mxu0 %v4982
    %6262 = vmatprep.subr.bf16.mxu0 %v4999
    %6263 = vmatpush1.bf16.msra.mxu0 %v4998
    %6264 = vmatprep.subr.bf16.mxu0 %v5015
    %6265 = vmatpush1.bf16.msra.mxu0 %v5014
    %6266 = vmatprep.subr.bf16.mxu0 %v5031
    %6267 = vmatpush1.bf16.msra.mxu0 %v5030
    %6268 = vmatprep.subr.bf16.mxu0 %v5047
    %6269 = vmatpush1.bf16.msra.mxu0 %v5046
    %6270 = vmatprep.subr.bf16.mxu0 %v5063
    %6271 = vmatpush1.bf16.msra.mxu0 %v5062
    %6272 = vmatprep.subr.bf16.mxu0 %v5079
    %6273 = vmatpush1.bf16.msra.mxu0 %v5078
    %6274 = vmatprep.mubr.bf16.mxu0 %v1745
    %6275 = vmatmul.mubr.bf16.gmra.mrb[0].mxu0 %v1744
    %v6276 = vpop.f32.mrb[0].mxu0
    %v6277 = vadd.f32 %v6236, %v6276
    %v6278 = vpop.f32.mrb[0].mxu0
    %v6279 = vadd.f32 %v6238, %v6278
    %v6280 = vpop.f32.mrb[0].mxu0
    %v6281 = vpop.f32.mrb[0].mxu0
    %6282 = vdwg.mxu0
    %6283 = vmatprep.subr.bf16.mxu0 %v5095
    %6284 = vmatpush1.bf16.msra.mxu0 %v5094
    %6285 = vmatprep.subr.bf16.mxu0 %v5111
    %6286 = vmatpush1.bf16.msra.mxu0 %v5110
    %6287 = vmatprep.subr.bf16.mxu0 %v5127
    %6288 = vmatpush1.bf16.msra.mxu0 %v5126
    %6289 = vmatprep.subr.bf16.mxu0 %v5143
    %6290 = vmatpush1.bf16.msra.mxu0 %v5142
    %6291 = vmatprep.subr.bf16.mxu0 %v5159
    %6292 = vmatpush1.bf16.msra.mxu0 %v5158
    %6293 = vmatprep.subr.bf16.mxu0 %v5175
    %6294 = vmatpush1.bf16.msra.mxu0 %v5174
    %6295 = vmatprep.subr.bf16.mxu0 %v5191
    %6296 = vmatpush1.bf16.msra.mxu0 %v5190
    %6297 = vmatprep.subr.bf16.mxu0 %v5207
    %6298 = vmatpush1.bf16.msra.mxu0 %v5206
    %6299 = vmatprep.subr.bf16.mxu0 %v5223
    %6300 = vmatpush1.bf16.msra.mxu0 %v5222
    %6301 = vmatprep.subr.bf16.mxu0 %v5239
    %6302 = vmatpush1.bf16.msra.mxu0 %v5238
    %6303 = vmatprep.subr.bf16.mxu0 %v5255
    %6304 = vmatpush1.bf16.msra.mxu0 %v5254
    %6305 = vmatprep.subr.bf16.mxu0 %v5271
    %6306 = vmatpush1.bf16.msra.mxu0 %v5270
    %6307 = vmatprep.subr.bf16.mxu0 %v5287
    %6308 = vmatpush1.bf16.msra.mxu0 %v5286
    %6309 = vmatprep.subr.bf16.mxu0 %v5303
    %6310 = vmatpush1.bf16.msra.mxu0 %v5302
    %6311 = vmatprep.subr.bf16.mxu0 %v5319
    %6312 = vmatpush1.bf16.msra.mxu0 %v5318
    %6313 = vmatprep.subr.bf16.mxu0 %v5335
    %6314 = vmatpush1.bf16.msra.mxu0 %v5334
    %6315 = vmatprep.mubr.bf16.mxu0 %v1747
    %6316 = vmatmul.mubr.bf16.gmra.mrb[0].mxu0 %v1746
    %v6317 = vpop.f32.mrb[0].mxu0
    %v6318 = vadd.f32 %v6277, %v6317
    %v6319 = vpop.f32.mrb[0].mxu0
    %v6320 = vadd.f32 %v6279, %v6319
    %v6321 = vpop.f32.mrb[0].mxu0
    %v6322 = vpop.f32.mrb[0].mxu0
    %6323 = vdwg.mxu0
    %6324 = vmatprep.subr.bf16.mxu0 %v4329
    %6325 = vmatpush1.bf16.msra.mxu0 %v4328
    %6326 = vmatprep.subr.bf16.mxu0 %v4345
    %6327 = vmatpush1.bf16.msra.mxu0 %v4344
    %6328 = vmatprep.subr.bf16.mxu0 %v4361
    %6329 = vmatpush1.bf16.msra.mxu0 %v4360
    %6330 = vmatprep.subr.bf16.mxu0 %v4377
    %6331 = vmatpush1.bf16.msra.mxu0 %v4376
    %6332 = vmatprep.subr.bf16.mxu0 %v4393
    %6333 = vmatpush1.bf16.msra.mxu0 %v4392
    %6334 = vmatprep.subr.bf16.mxu0 %v4409
    %6335 = vmatpush1.bf16.msra.mxu0 %v4408
    %6336 = vmatprep.subr.bf16.mxu0 %v4425
    %6337 = vmatpush1.bf16.msra.mxu0 %v4424
    %6338 = vmatprep.subr.bf16.mxu0 %v4441
    %6339 = vmatpush1.bf16.msra.mxu0 %v4440
    %6340 = vmatprep.subr.bf16.mxu0 %v4457
    %6341 = vmatpush1.bf16.msra.mxu0 %v4456
    %6342 = vmatprep.subr.bf16.mxu0 %v4473
    %6343 = vmatpush1.bf16.msra.mxu0 %v4472
    %6344 = vmatprep.subr.bf16.mxu0 %v4489
    %6345 = vmatpush1.bf16.msra.mxu0 %v4488
    %6346 = vmatprep.subr.bf16.mxu0 %v4505
    %6347 = vmatpush1.bf16.msra.mxu0 %v4504
    %6348 = vmatprep.subr.bf16.mxu0 %v4521
    %6349 = vmatpush1.bf16.msra.mxu0 %v4520
    %6350 = vmatprep.subr.bf16.mxu0 %v4537
    %6351 = vmatpush1.bf16.msra.mxu0 %v4536
    %6352 = vmatprep.subr.bf16.mxu0 %v4553
    %6353 = vmatpush1.bf16.msra.mxu0 %v4552
    %6354 = vmatprep.subr.bf16.mxu0 %v4569
    %6355 = vmatpush1.bf16.msra.mxu0 %v4568
    %6356 = vmatprep.mubr.bf16.mxu0 %v1741
    %6357 = vmatmul.mubr.bf16.gmra.mrb[0].mxu0 %v1740
    %v6358 = vpop.f32.mrb[0].mxu0
    %v6359 = vadd.f32 0.0, %v6358
    %v6360 = vpop.f32.mrb[0].mxu0
    %v6361 = vadd.f32 0.0, %v6360
    %v6362 = vpop.f32.mrb[0].mxu0
    %v6363 = vpop.f32.mrb[0].mxu0
    %6364 = vdwg.mxu0
    %6365 = vmatprep.subr.bf16.mxu0 %v4585
    %6366 = vmatpush1.bf16.msra.mxu0 %v4584
    %6367 = vmatprep.subr.bf16.mxu0 %v4601
    %6368 = vmatpush1.bf16.msra.mxu0 %v4600
    %6369 = vmatprep.subr.bf16.mxu0 %v4617
    %6370 = vmatpush1.bf16.msra.mxu0 %v4616
    %6371 = vmatprep.subr.bf16.mxu0 %v4633
    %6372 = vmatpush1.bf16.msra.mxu0 %v4632
    %6373 = vmatprep.subr.bf16.mxu0 %v4649
    %6374 = vmatpush1.bf16.msra.mxu0 %v4648
    %6375 = vmatprep.subr.bf16.mxu0 %v4665
    %6376 = vmatpush1.bf16.msra.mxu0 %v4664
    %6377 = vmatprep.subr.bf16.mxu0 %v4681
    %6378 = vmatpush1.bf16.msra.mxu0 %v4680
    %6379 = vmatprep.subr.bf16.mxu0 %v4697
    %6380 = vmatpush1.bf16.msra.mxu0 %v4696
    %6381 = vmatprep.subr.bf16.mxu0 %v4713
    %6382 = vmatpush1.bf16.msra.mxu0 %v4712
    %6383 = vmatprep.subr.bf16.mxu0 %v4729
    %6384 = vmatpush1.bf16.msra.mxu0 %v4728
    %6385 = vmatprep.subr.bf16.mxu0 %v4745
    %6386 = vmatpush1.bf16.msra.mxu0 %v4744
    %6387 = vmatprep.subr.bf16.mxu0 %v4761
    %6388 = vmatpush1.bf16.msra.mxu0 %v4760
    %6389 = vmatprep.subr.bf16.mxu0 %v4777
    %6390 = vmatpush1.bf16.msra.mxu0 %v4776
    %6391 = vmatprep.subr.bf16.mxu0 %v4793
    %6392 = vmatpush1.bf16.msra.mxu0 %v4792
    %6393 = vmatprep.subr.bf16.mxu0 %v4809
    %6394 = vmatpush1.bf16.msra.mxu0 %v4808
    %6395 = vmatprep.subr.bf16.mxu0 %v4825
    %6396 = vmatpush1.bf16.msra.mxu0 %v4824
    %6397 = vmatprep.mubr.bf16.mxu0 %v1743
    %6398 = vmatmul.mubr.bf16.gmra.mrb[0].mxu0 %v1742
    %v6399 = vpop.f32.mrb[0].mxu0
    %v6400 = vadd.f32 %v6359, %v6399
    %v6401 = vpop.f32.mrb[0].mxu0
    %v6402 = vadd.f32 %v6361, %v6401
    %v6403 = vpop.f32.mrb[0].mxu0
    %v6404 = vpop.f32.mrb[0].mxu0
    %6405 = vdwg.mxu0
    %6406 = vmatprep.subr.bf16.mxu0 %v4841
    %6407 = vmatpush1.bf16.msra.mxu0 %v4840
    %6408 = vmatprep.subr.bf16.mxu0 %v4857
    %6409 = vmatpush1.bf16.msra.mxu0 %v4856
    %6410 = vmatprep.subr.bf16.mxu0 %v4873
    %6411 = vmatpush1.bf16.msra.mxu0 %v4872
    %6412 = vmatprep.subr.bf16.mxu0 %v4889
    %6413 = vmatpush1.bf16.msra.mxu0 %v4888
    %6414 = vmatprep.subr.bf16.mxu0 %v4905
    %6415 = vmatpush1.bf16.msra.mxu0 %v4904
    %6416 = vmatprep.subr.bf16.mxu0 %v4921
    %6417 = vmatpush1.bf16.msra.mxu0 %v4920
    %6418 = vmatprep.subr.bf16.mxu0 %v4937
    %6419 = vmatpush1.bf16.msra.mxu0 %v4936
    %6420 = vmatprep.subr.bf16.mxu0 %v4953
    %6421 = vmatpush1.bf16.msra.mxu0 %v4952
    %6422 = vmatprep.subr.bf16.mxu0 %v4969
    %6423 = vmatpush1.bf16.msra.mxu0 %v4968
    %6424 = vmatprep.subr.bf16.mxu0 %v4985
    %6425 = vmatpush1.bf16.msra.mxu0 %v4984
    %6426 = vmatprep.subr.bf16.mxu0 %v5001
    %6427 = vmatpush1.bf16.msra.mxu0 %v5000
    %6428 = vmatprep.subr.bf16.mxu0 %v5017
    %6429 = vmatpush1.bf16.msra.mxu0 %v5016
    %6430 = vmatprep.subr.bf16.mxu0 %v5033
    %6431 = vmatpush1.bf16.msra.mxu0 %v5032
    %6432 = vmatprep.subr.bf16.mxu0 %v5049
    %6433 = vmatpush1.bf16.msra.mxu0 %v5048
    %6434 = vmatprep.subr.bf16.mxu0 %v5065
    %6435 = vmatpush1.bf16.msra.mxu0 %v5064
    %6436 = vmatprep.subr.bf16.mxu0 %v5081
    %6437 = vmatpush1.bf16.msra.mxu0 %v5080
    %6438 = vmatprep.mubr.bf16.mxu0 %v1745
    %6439 = vmatmul.mubr.bf16.gmra.mrb[0].mxu0 %v1744
    %v6440 = vpop.f32.mrb[0].mxu0
    %v6441 = vadd.f32 %v6400, %v6440
    %v6442 = vpop.f32.mrb[0].mxu0
    %v6443 = vadd.f32 %v6402, %v6442
    %v6444 = vpop.f32.mrb[0].mxu0
    %v6445 = vpop.f32.mrb[0].mxu0
    %6446 = vdwg.mxu0
    %6447 = vmatprep.subr.bf16.mxu0 %v5097
    %6448 = vmatpush1.bf16.msra.mxu0 %v5096
    %6449 = vmatprep.subr.bf16.mxu0 %v5113
    %6450 = vmatpush1.bf16.msra.mxu0 %v5112
    %6451 = vmatprep.subr.bf16.mxu0 %v5129
    %6452 = vmatpush1.bf16.msra.mxu0 %v5128
    %6453 = vmatprep.subr.bf16.mxu0 %v5145
    %6454 = vmatpush1.bf16.msra.mxu0 %v5144
    %6455 = vmatprep.subr.bf16.mxu0 %v5161
    %6456 = vmatpush1.bf16.msra.mxu0 %v5160
    %6457 = vmatprep.subr.bf16.mxu0 %v5177
    %6458 = vmatpush1.bf16.msra.mxu0 %v5176
    %6459 = vmatprep.subr.bf16.mxu0 %v5193
    %6460 = vmatpush1.bf16.msra.mxu0 %v5192
    %6461 = vmatprep.subr.bf16.mxu0 %v5209
    %6462 = vmatpush1.bf16.msra.mxu0 %v5208
    %6463 = vmatprep.subr.bf16.mxu0 %v5225
    %6464 = vmatpush1.bf16.msra.mxu0 %v5224
    %6465 = vmatprep.subr.bf16.mxu0 %v5241
    %6466 = vmatpush1.bf16.msra.mxu0 %v5240
    %6467 = vmatprep.subr.bf16.mxu0 %v5257
    %6468 = vmatpush1.bf16.msra.mxu0 %v5256
    %6469 = vmatprep.subr.bf16.mxu0 %v5273
    %6470 = vmatpush1.bf16.msra.mxu0 %v5272
    %6471 = vmatprep.subr.bf16.mxu0 %v5289
    %6472 = vmatpush1.bf16.msra.mxu0 %v5288
    %6473 = vmatprep.subr.bf16.mxu0 %v5305
    %6474 = vmatpush1.bf16.msra.mxu0 %v5304
    %6475 = vmatprep.subr.bf16.mxu0 %v5321
    %6476 = vmatpush1.bf16.msra.mxu0 %v5320
    %6477 = vmatprep.subr.bf16.mxu0 %v5337
    %6478 = vmatpush1.bf16.msra.mxu0 %v5336
    %6479 = vmatprep.mubr.bf16.mxu0 %v1747
    %6480 = vmatmul.mubr.bf16.gmra.mrb[0].mxu0 %v1746
    %v6481 = vpop.f32.mrb[0].mxu0
    %v6482 = vadd.f32 %v6441, %v6481
    %v6483 = vpop.f32.mrb[0].mxu0
    %v6484 = vadd.f32 %v6443, %v6483
    %v6485 = vpop.f32.mrb[0].mxu0
    %v6486 = vpop.f32.mrb[0].mxu0
    %6487 = vdwg.mxu0
    %6488 = vmatprep.subr.bf16.mxu0 %v4331
    %6489 = vmatpush1.bf16.msra.mxu0 %v4330
    %6490 = vmatprep.subr.bf16.mxu0 %v4347
    %6491 = vmatpush1.bf16.msra.mxu0 %v4346
    %6492 = vmatprep.subr.bf16.mxu0 %v4363
    %6493 = vmatpush1.bf16.msra.mxu0 %v4362
    %6494 = vmatprep.subr.bf16.mxu0 %v4379
    %6495 = vmatpush1.bf16.msra.mxu0 %v4378
    %6496 = vmatprep.subr.bf16.mxu0 %v4395
    %6497 = vmatpush1.bf16.msra.mxu0 %v4394
    %6498 = vmatprep.subr.bf16.mxu0 %v4411
    %6499 = vmatpush1.bf16.msra.mxu0 %v4410
    %6500 = vmatprep.subr.bf16.mxu0 %v4427
    %6501 = vmatpush1.bf16.msra.mxu0 %v4426
    %6502 = vmatprep.subr.bf16.mxu0 %v4443
    %6503 = vmatpush1.bf16.msra.mxu0 %v4442
    %6504 = vmatprep.subr.bf16.mxu0 %v4459
    %6505 = vmatpush1.bf16.msra.mxu0 %v4458
    %6506 = vmatprep.subr.bf16.mxu0 %v4475
    %6507 = vmatpush1.bf16.msra.mxu0 %v4474
    %6508 = vmatprep.subr.bf16.mxu0 %v4491
    %6509 = vmatpush1.bf16.msra.mxu0 %v4490
    %6510 = vmatprep.subr.bf16.mxu0 %v4507
    %6511 = vmatpush1.bf16.msra.mxu0 %v4506
    %6512 = vmatprep.subr.bf16.mxu0 %v4523
    %6513 = vmatpush1.bf16.msra.mxu0 %v4522
    %6514 = vmatprep.subr.bf16.mxu0 %v4539
    %6515 = vmatpush1.bf16.msra.mxu0 %v4538
    %6516 = vmatprep.subr.bf16.mxu0 %v4555
    %6517 = vmatpush1.bf16.msra.mxu0 %v4554
    %6518 = vmatprep.subr.bf16.mxu0 %v4571
    %6519 = vmatpush1.bf16.msra.mxu0 %v4570
    %6520 = vmatprep.mubr.bf16.mxu0 %v1741
    %6521 = vmatmul.mubr.bf16.gmra.mrb[0].mxu0 %v1740
    %v6522 = vpop.f32.mrb[0].mxu0
    %v6523 = vadd.f32 0.0, %v6522
    %v6524 = vpop.f32.mrb[0].mxu0
    %v6525 = vadd.f32 0.0, %v6524
    %v6526 = vpop.f32.mrb[0].mxu0
    %v6527 = vpop.f32.mrb[0].mxu0
    %6528 = vdwg.mxu0
    %6529 = vmatprep.subr.bf16.mxu0 %v4587
    %6530 = vmatpush1.bf16.msra.mxu0 %v4586
    %6531 = vmatprep.subr.bf16.mxu0 %v4603
    %6532 = vmatpush1.bf16.msra.mxu0 %v4602
    %6533 = vmatprep.subr.bf16.mxu0 %v4619
    %6534 = vmatpush1.bf16.msra.mxu0 %v4618
    %6535 = vmatprep.subr.bf16.mxu0 %v4635
    %6536 = vmatpush1.bf16.msra.mxu0 %v4634
    %6537 = vmatprep.subr.bf16.mxu0 %v4651
    %6538 = vmatpush1.bf16.msra.mxu0 %v4650
    %6539 = vmatprep.subr.bf16.mxu0 %v4667
    %6540 = vmatpush1.bf16.msra.mxu0 %v4666
    %6541 = vmatprep.subr.bf16.mxu0 %v4683
    %6542 = vmatpush1.bf16.msra.mxu0 %v4682
    %6543 = vmatprep.subr.bf16.mxu0 %v4699
    %6544 = vmatpush1.bf16.msra.mxu0 %v4698
    %6545 = vmatprep.subr.bf16.mxu0 %v4715
    %6546 = vmatpush1.bf16.msra.mxu0 %v4714
    %6547 = vmatprep.subr.bf16.mxu0 %v4731
    %6548 = vmatpush1.bf16.msra.mxu0 %v4730
    %6549 = vmatprep.subr.bf16.mxu0 %v4747
    %6550 = vmatpush1.bf16.msra.mxu0 %v4746
    %6551 = vmatprep.subr.bf16.mxu0 %v4763
    %6552 = vmatpush1.bf16.msra.mxu0 %v4762
    %6553 = vmatprep.subr.bf16.mxu0 %v4779
    %6554 = vmatpush1.bf16.msra.mxu0 %v4778
    %6555 = vmatprep.subr.bf16.mxu0 %v4795
    %6556 = vmatpush1.bf16.msra.mxu0 %v4794
    %6557 = vmatprep.subr.bf16.mxu0 %v4811
    %6558 = vmatpush1.bf16.msra.mxu0 %v4810
    %6559 = vmatprep.subr.bf16.mxu0 %v4827
    %6560 = vmatpush1.bf16.msra.mxu0 %v4826
    %6561 = vmatprep.mubr.bf16.mxu0 %v1743
    %6562 = vmatmul.mubr.bf16.gmra.mrb[0].mxu0 %v1742
    %v6563 = vpop.f32.mrb[0].mxu0
    %v6564 = vadd.f32 %v6523, %v6563
    %v6565 = vpop.f32.mrb[0].mxu0
    %v6566 = vadd.f32 %v6525, %v6565
    %v6567 = vpop.f32.mrb[0].mxu0
    %v6568 = vpop.f32.mrb[0].mxu0
    %6569 = vdwg.mxu0
    %6570 = vmatprep.subr.bf16.mxu0 %v4843
    %6571 = vmatpush1.bf16.msra.mxu0 %v4842
    %6572 = vmatprep.subr.bf16.mxu0 %v4859
    %6573 = vmatpush1.bf16.msra.mxu0 %v4858
    %6574 = vmatprep.subr.bf16.mxu0 %v4875
    %6575 = vmatpush1.bf16.msra.mxu0 %v4874
    %6576 = vmatprep.subr.bf16.mxu0 %v4891
    %6577 = vmatpush1.bf16.msra.mxu0 %v4890
    %6578 = vmatprep.subr.bf16.mxu0 %v4907
    %6579 = vmatpush1.bf16.msra.mxu0 %v4906
    %6580 = vmatprep.subr.bf16.mxu0 %v4923
    %6581 = vmatpush1.bf16.msra.mxu0 %v4922
    %6582 = vmatprep.subr.bf16.mxu0 %v4939
    %6583 = vmatpush1.bf16.msra.mxu0 %v4938
    %6584 = vmatprep.subr.bf16.mxu0 %v4955
    %6585 = vmatpush1.bf16.msra.mxu0 %v4954
    %6586 = vmatprep.subr.bf16.mxu0 %v4971
    %6587 = vmatpush1.bf16.msra.mxu0 %v4970
    %6588 = vmatprep.subr.bf16.mxu0 %v4987
    %6589 = vmatpush1.bf16.msra.mxu0 %v4986
    %6590 = vmatprep.subr.bf16.mxu0 %v5003
    %6591 = vmatpush1.bf16.msra.mxu0 %v5002
    %6592 = vmatprep.subr.bf16.mxu0 %v5019
    %6593 = vmatpush1.bf16.msra.mxu0 %v5018
    %6594 = vmatprep.subr.bf16.mxu0 %v5035
    %6595 = vmatpush1.bf16.msra.mxu0 %v5034
    %6596 = vmatprep.subr.bf16.mxu0 %v5051
    %6597 = vmatpush1.bf16.msra.mxu0 %v5050
    %6598 = vmatprep.subr.bf16.mxu0 %v5067
    %6599 = vmatpush1.bf16.msra.mxu0 %v5066
    %6600 = vmatprep.subr.bf16.mxu0 %v5083
    %6601 = vmatpush1.bf16.msra.mxu0 %v5082
    %6602 = vmatprep.mubr.bf16.mxu0 %v1745
    %6603 = vmatmul.mubr.bf16.gmra.mrb[0].mxu0 %v1744
    %v6604 = vpop.f32.mrb[0].mxu0
    %v6605 = vadd.f32 %v6564, %v6604
    %v6606 = vpop.f32.mrb[0].mxu0
    %v6607 = vadd.f32 %v6566, %v6606
    %v6608 = vpop.f32.mrb[0].mxu0
    %v6609 = vpop.f32.mrb[0].mxu0
    %6610 = vdwg.mxu0
    %6611 = vmatprep.subr.bf16.mxu0 %v5099
    %6612 = vmatpush1.bf16.msra.mxu0 %v5098
    %6613 = vmatprep.subr.bf16.mxu0 %v5115
    %6614 = vmatpush1.bf16.msra.mxu0 %v5114
    %6615 = vmatprep.subr.bf16.mxu0 %v5131
    %6616 = vmatpush1.bf16.msra.mxu0 %v5130
    %6617 = vmatprep.subr.bf16.mxu0 %v5147
    %6618 = vmatpush1.bf16.msra.mxu0 %v5146
    %6619 = vmatprep.subr.bf16.mxu0 %v5163
    %6620 = vmatpush1.bf16.msra.mxu0 %v5162
    %6621 = vmatprep.subr.bf16.mxu0 %v5179
    %6622 = vmatpush1.bf16.msra.mxu0 %v5178
    %6623 = vmatprep.subr.bf16.mxu0 %v5195
    %6624 = vmatpush1.bf16.msra.mxu0 %v5194
    %6625 = vmatprep.subr.bf16.mxu0 %v5211
    %6626 = vmatpush1.bf16.msra.mxu0 %v5210
    %6627 = vmatprep.subr.bf16.mxu0 %v5227
    %6628 = vmatpush1.bf16.msra.mxu0 %v5226
    %6629 = vmatprep.subr.bf16.mxu0 %v5243
    %6630 = vmatpush1.bf16.msra.mxu0 %v5242
    %6631 = vmatprep.subr.bf16.mxu0 %v5259
    %6632 = vmatpush1.bf16.msra.mxu0 %v5258
    %6633 = vmatprep.subr.bf16.mxu0 %v5275
    %6634 = vmatpush1.bf16.msra.mxu0 %v5274
    %6635 = vmatprep.subr.bf16.mxu0 %v5291
    %6636 = vmatpush1.bf16.msra.mxu0 %v5290
    %6637 = vmatprep.subr.bf16.mxu0 %v5307
    %6638 = vmatpush1.bf16.msra.mxu0 %v5306
    %6639 = vmatprep.subr.bf16.mxu0 %v5323
    %6640 = vmatpush1.bf16.msra.mxu0 %v5322
    %6641 = vmatprep.subr.bf16.mxu0 %v5339
    %6642 = vmatpush1.bf16.msra.mxu0 %v5338
    %6643 = vmatprep.mubr.bf16.mxu0 %v1747
    %6644 = vmatmul.mubr.bf16.gmra.mrb[0].mxu0 %v1746
    %v6645 = vpop.f32.mrb[0].mxu0
    %v6646 = vadd.f32 %v6605, %v6645
    %v6647 = vpop.f32.mrb[0].mxu0
    %v6648 = vadd.f32 %v6607, %v6647
    %v6649 = vpop.f32.mrb[0].mxu0
    %v6650 = vpop.f32.mrb[0].mxu0
    %6651 = vdwg.mxu0
    %v6652 = vld [vmem:[#allocation20] sm:$0xff]
    %v6653 = vld [vmem:[#allocation20 + $0x8] sm:$0xff]
    %v6656 = vlaneseq
    %v6657 = vshrl.u32 %v6656, 7
    %v6658 = vsub.s32 0, %v6657
    %v6659 = vrot.slane %v6652, %v6658
    %v6660 = vlaneseq
    %v6661 = vshrl.u32 %v6660, 7
    %v6662 = vsub.s32 1, %v6661
    %v6663 = vrot.slane %v6652, %v6662
    %v6664 = vlaneseq
    %v6665 = vshrl.u32 %v6664, 7
    %v6666 = vsub.s32 2, %v6665
    %v6667 = vrot.slane %v6652, %v6666
    %v6668 = vlaneseq
    %v6669 = vshrl.u32 %v6668, 7
    %v6670 = vsub.s32 3, %v6669
    %v6671 = vrot.slane %v6652, %v6670
    %v6672 = vlaneseq
    %v6673 = vshrl.u32 %v6672, 7
    %v6674 = vsub.s32 4, %v6673
    %v6675 = vrot.slane %v6652, %v6674
    %v6676 = vlaneseq
    %v6677 = vshrl.u32 %v6676, 7
    %v6678 = vsub.s32 5, %v6677
    %v6679 = vrot.slane %v6652, %v6678
    %v6680 = vlaneseq
    %v6681 = vshrl.u32 %v6680, 7
    %v6682 = vsub.s32 6, %v6681
    %v6683 = vrot.slane %v6652, %v6682
    %v6684 = vlaneseq
    %v6685 = vshrl.u32 %v6684, 7
    %v6686 = vsub.s32 7, %v6685
    %v6687 = vrot.slane %v6652, %v6686
    %v6688 = vlaneseq
    %v6689 = vshrl.u32 %v6688, 7
    %v6690 = vsub.s32 0, %v6689
    %v6691 = vrot.slane %v6653, %v6690
    %v6692 = vlaneseq
    %v6693 = vshrl.u32 %v6692, 7
    %v6694 = vsub.s32 1, %v6693
    %v6695 = vrot.slane %v6653, %v6694
    %v6696 = vlaneseq
    %v6697 = vshrl.u32 %v6696, 7
    %v6698 = vsub.s32 2, %v6697
    %v6699 = vrot.slane %v6653, %v6698
    %v6700 = vlaneseq
    %v6701 = vshrl.u32 %v6700, 7
    %v6702 = vsub.s32 3, %v6701
    %v6703 = vrot.slane %v6653, %v6702
    %v6704 = vlaneseq
    %v6705 = vshrl.u32 %v6704, 7
    %v6706 = vsub.s32 4, %v6705
    %v6707 = vrot.slane %v6653, %v6706
    %v6708 = vlaneseq
    %v6709 = vshrl.u32 %v6708, 7
    %v6710 = vsub.s32 5, %v6709
    %v6711 = vrot.slane %v6653, %v6710
    %v6712 = vlaneseq
    %v6713 = vshrl.u32 %v6712, 7
    %v6714 = vsub.s32 6, %v6713
    %v6715 = vrot.slane %v6653, %v6714
    %v6716 = vlaneseq
    %v6717 = vshrl.u32 %v6716, 7
    %v6718 = vsub.s32 7, %v6717
    %v6719 = vrot.slane %v6653, %v6718
    %v6736 = vmul.f32 %v5498, %v6659
    %v6737 = vmul.f32 %v5500, %v6663
    %v6738 = vmul.f32 %v5662, %v6667
    %v6739 = vmul.f32 %v5664, %v6671
    %v6740 = vmul.f32 %v5826, %v6675
    %v6741 = vmul.f32 %v5828, %v6679
    %v6742 = vmul.f32 %v5990, %v6683
    %v6743 = vmul.f32 %v5992, %v6687
    %v6744 = vmul.f32 %v6154, %v6691
    %v6745 = vmul.f32 %v6156, %v6695
    %v6746 = vmul.f32 %v6318, %v6699
    %v6747 = vmul.f32 %v6320, %v6703
    %v6748 = vmul.f32 %v6482, %v6707
    %v6749 = vmul.f32 %v6484, %v6711
    %v6750 = vmul.f32 %v6646, %v6715
    %v6751 = vmul.f32 %v6648, %v6719
    %v6752 = vld [vmem:[#allocation22] sm:$0xff]
    %v6753 = vld [vmem:[#allocation22 + $0x8] sm:$0xff]
    %v6756 = vlaneseq
    %v6757 = vshrl.u32 %v6756, 7
    %v6758 = vsub.s32 0, %v6757
    %v6759 = vrot.slane %v6752, %v6758
    %v6760 = vlaneseq
    %v6761 = vshrl.u32 %v6760, 7
    %v6762 = vsub.s32 1, %v6761
    %v6763 = vrot.slane %v6752, %v6762
    %v6764 = vlaneseq
    %v6765 = vshrl.u32 %v6764, 7
    %v6766 = vsub.s32 2, %v6765
    %v6767 = vrot.slane %v6752, %v6766
    %v6768 = vlaneseq
    %v6769 = vshrl.u32 %v6768, 7
    %v6770 = vsub.s32 3, %v6769
    %v6771 = vrot.slane %v6752, %v6770
    %v6772 = vlaneseq
    %v6773 = vshrl.u32 %v6772, 7
    %v6774 = vsub.s32 4, %v6773
    %v6775 = vrot.slane %v6752, %v6774
    %v6776 = vlaneseq
    %v6777 = vshrl.u32 %v6776, 7
    %v6778 = vsub.s32 5, %v6777
    %v6779 = vrot.slane %v6752, %v6778
    %v6780 = vlaneseq
    %v6781 = vshrl.u32 %v6780, 7
    %v6782 = vsub.s32 6, %v6781
    %v6783 = vrot.slane %v6752, %v6782
    %v6784 = vlaneseq
    %v6785 = vshrl.u32 %v6784, 7
    %v6786 = vsub.s32 7, %v6785
    %v6787 = vrot.slane %v6752, %v6786
    %v6788 = vlaneseq
    %v6789 = vshrl.u32 %v6788, 7
    %v6790 = vsub.s32 0, %v6789
    %v6791 = vrot.slane %v6753, %v6790
    %v6792 = vlaneseq
    %v6793 = vshrl.u32 %v6792, 7
    %v6794 = vsub.s32 1, %v6793
    %v6795 = vrot.slane %v6753, %v6794
    %v6796 = vlaneseq
    %v6797 = vshrl.u32 %v6796, 7
    %v6798 = vsub.s32 2, %v6797
    %v6799 = vrot.slane %v6753, %v6798
    %v6800 = vlaneseq
    %v6801 = vshrl.u32 %v6800, 7
    %v6802 = vsub.s32 3, %v6801
    %v6803 = vrot.slane %v6753, %v6802
    %v6804 = vlaneseq
    %v6805 = vshrl.u32 %v6804, 7
    %v6806 = vsub.s32 4, %v6805
    %v6807 = vrot.slane %v6753, %v6806
    %v6808 = vlaneseq
    %v6809 = vshrl.u32 %v6808, 7
    %v6810 = vsub.s32 5, %v6809
    %v6811 = vrot.slane %v6753, %v6810
    %v6812 = vlaneseq
    %v6813 = vshrl.u32 %v6812, 7
    %v6814 = vsub.s32 6, %v6813
    %v6815 = vrot.slane %v6753, %v6814
    %v6816 = vlaneseq
    %v6817 = vshrl.u32 %v6816, 7
    %v6818 = vsub.s32 7, %v6817
    %v6819 = vrot.slane %v6753, %v6818
    %v6836 = vadd.f32 %v6736, %v6759
    %v6837 = vadd.f32 %v6737, %v6763
    %v6838 = vadd.f32 %v6738, %v6767
    %v6839 = vadd.f32 %v6739, %v6771
    %v6840 = vadd.f32 %v6740, %v6775
    %v6841 = vadd.f32 %v6741, %v6779
    %v6842 = vadd.f32 %v6742, %v6783
    %v6843 = vadd.f32 %v6743, %v6787
    %v6844 = vadd.f32 %v6744, %v6791
    %v6845 = vadd.f32 %v6745, %v6795
    %v6846 = vadd.f32 %v6746, %v6799
    %v6847 = vadd.f32 %v6747, %v6803
    %v6848 = vadd.f32 %v6748, %v6807
    %v6849 = vadd.f32 %v6749, %v6811
    %v6850 = vadd.f32 %v6750, %v6815
    %v6851 = vadd.f32 %v6751, %v6819
    %vm6852 = vcmp.gt.f32.partialorder %v6836, 0.0
    %vm6853 = vcmp.gt.f32.partialorder %v6837, 0.0
    %vm6854 = vcmp.gt.f32.partialorder %v6838, 0.0
    %vm6855 = vcmp.gt.f32.partialorder %v6839, 0.0
    %vm6856 = vcmp.gt.f32.partialorder %v6840, 0.0
    %vm6857 = vcmp.gt.f32.partialorder %v6841, 0.0
    %vm6858 = vcmp.gt.f32.partialorder %v6842, 0.0
    %vm6859 = vcmp.gt.f32.partialorder %v6843, 0.0
    %vm6860 = vcmp.gt.f32.partialorder %v6844, 0.0
    %vm6861 = vcmp.gt.f32.partialorder %v6845, 0.0
    %vm6862 = vcmp.gt.f32.partialorder %v6846, 0.0
    %vm6863 = vcmp.gt.f32.partialorder %v6847, 0.0
    %vm6864 = vcmp.gt.f32.partialorder %v6848, 0.0
    %vm6865 = vcmp.gt.f32.partialorder %v6849, 0.0
    %vm6866 = vcmp.gt.f32.partialorder %v6850, 0.0
    %vm6867 = vcmp.gt.f32.partialorder %v6851, 0.0
    %v6868 = vmul.f32 %v6836, 0.2
    %v6869 = vmul.f32 %v6837, 0.2
    %v6870 = vmul.f32 %v6838, 0.2
    %v6871 = vmul.f32 %v6839, 0.2
    %v6872 = vmul.f32 %v6840, 0.2
    %v6873 = vmul.f32 %v6841, 0.2
    %v6874 = vmul.f32 %v6842, 0.2
    %v6875 = vmul.f32 %v6843, 0.2
    %v6876 = vmul.f32 %v6844, 0.2
    %v6877 = vmul.f32 %v6845, 0.2
    %v6878 = vmul.f32 %v6846, 0.2
    %v6879 = vmul.f32 %v6847, 0.2
    %v6880 = vmul.f32 %v6848, 0.2
    %v6881 = vmul.f32 %v6849, 0.2
    %v6882 = vmul.f32 %v6850, 0.2
    %v6883 = vmul.f32 %v6851, 0.2
    %v6884 = vsel %vm6852, %v6836, %v6868
    %v6885 = vsel %vm6853, %v6837, %v6869
    %v6886 = vsel %vm6854, %v6838, %v6870
    %v6887 = vsel %vm6855, %v6839, %v6871
    %v6888 = vsel %vm6856, %v6840, %v6872
    %v6889 = vsel %vm6857, %v6841, %v6873
    %v6890 = vsel %vm6858, %v6842, %v6874
    %v6891 = vsel %vm6859, %v6843, %v6875
    %v6892 = vsel %vm6860, %v6844, %v6876
    %v6893 = vsel %vm6861, %v6845, %v6877
    %v6894 = vsel %vm6862, %v6846, %v6878
    %v6895 = vsel %vm6863, %v6847, %v6879
    %v6896 = vsel %vm6864, %v6848, %v6880
    %v6897 = vsel %vm6865, %v6849, %v6881
    %v6898 = vsel %vm6866, %v6850, %v6882
    %v6899 = vsel %vm6867, %v6851, %v6883
    %v6900 = vpack.c.bf16 %v6884, %v6884
    %v6901 = vpack.c.bf16 %v6885, %v6885
    %v6902 = vpack.c.bf16 %v6886, %v6886
    %v6903 = vpack.c.bf16 %v6887, %v6887
    %v6904 = vpack.c.bf16 %v6888, %v6888
    %v6905 = vpack.c.bf16 %v6889, %v6889
    %v6906 = vpack.c.bf16 %v6890, %v6890
    %v6907 = vpack.c.bf16 %v6891, %v6891
    %v6908 = vpack.c.bf16 %v6892, %v6892
    %v6909 = vpack.c.bf16 %v6893, %v6893
    %v6910 = vpack.c.bf16 %v6894, %v6894
    %v6911 = vpack.c.bf16 %v6895, %v6895
    %v6912 = vpack.c.bf16 %v6896, %v6896
    %v6913 = vpack.c.bf16 %v6897, %v6897
    %v6914 = vpack.c.bf16 %v6898, %v6898
    %v6915 = vpack.c.bf16 %v6899, %v6899
    // Predicated region
    $region106: #{tpu_custom_call.1} parent=1 // pred_check
      %p6916 = pneg %p142
    $region107: #{tpu_custom_call.1} parent=1 // pred_check_branch
      %6918 = sbr.rel (%p6916) target = $region109
    $region108: #{tpu_custom_call.1} parent=1 // pred_region
      %s6919 = scalar_lea.sflag [#allocation10], 3
      %s6920 = smul.u32 2, 256
      %s6921 = smul.u32 %s6920, 1
      %s6922 = sshll.u32 %s6921, 4
      %6923 = dma.done %s6919, %s6922
      %v6924 = vld [vmem:[#allocation5] sm:$0xff]
      %v6925 = vld [vmem:[#allocation5 + $0x8] sm:$0xff]
      %v6926 = vld [vmem:[#allocation5 + $0x10] sm:$0xff]
      %v6927 = vld [vmem:[#allocation5 + $0x18] sm:$0xff]
      %v6928 = vld [vmem:[#allocation5 + $0x20] sm:$0xff]
      %v6929 = vld [vmem:[#allocation5 + $0x28] sm:$0xff]
      %v6930 = vld [vmem:[#allocation5 + $0x30] sm:$0xff]
      %v6931 = vld [vmem:[#allocation5 + $0x38] sm:$0xff]
      %v6932 = vld [vmem:[#allocation5 + $0x40] sm:$0xff]
      %v6933 = vld [vmem:[#allocation5 + $0x48] sm:$0xff]
      %v6934 = vld [vmem:[#allocation5 + $0x50] sm:$0xff]
      %v6935 = vld [vmem:[#allocation5 + $0x58] sm:$0xff]
      %v6936 = vld [vmem:[#allocation5 + $0x60] sm:$0xff]
      %v6937 = vld [vmem:[#allocation5 + $0x68] sm:$0xff]
      %v6938 = vld [vmem:[#allocation5 + $0x70] sm:$0xff]
      %v6939 = vld [vmem:[#allocation5 + $0x78] sm:$0xff]
      %v6940 = vld [vmem:[#allocation5 + $0x80] sm:$0xff]
      %v6941 = vld [vmem:[#allocation5 + $0x88] sm:$0xff]
      %v6942 = vld [vmem:[#allocation5 + $0x90] sm:$0xff]
      %v6943 = vld [vmem:[#allocation5 + $0x98] sm:$0xff]
      %v6944 = vld [vmem:[#allocation5 + $0xa0] sm:$0xff]
      %v6945 = vld [vmem:[#allocation5 + $0xa8] sm:$0xff]
      %v6946 = vld [vmem:[#allocation5 + $0xb0] sm:$0xff]
      %v6947 = vld [vmem:[#allocation5 + $0xb8] sm:$0xff]
      %v6948 = vld [vmem:[#allocation5 + $0xc0] sm:$0xff]
      %v6949 = vld [vmem:[#allocation5 + $0xc8] sm:$0xff]
      %v6950 = vld [vmem:[#allocation5 + $0xd0] sm:$0xff]
      %v6951 = vld [vmem:[#allocation5 + $0xd8] sm:$0xff]
      %v6952 = vld [vmem:[#allocation5 + $0xe0] sm:$0xff]
      %v6953 = vld [vmem:[#allocation5 + $0xe8] sm:$0xff]
      %v6954 = vld [vmem:[#allocation5 + $0xf0] sm:$0xff]
      %v6955 = vld [vmem:[#allocation5 + $0xf8] sm:$0xff]
      %v6956 = vld [vmem:[#allocation5 + $0x100] sm:$0xff]
      %v6957 = vld [vmem:[#allocation5 + $0x108] sm:$0xff]
      %v6958 = vld [vmem:[#allocation5 + $0x110] sm:$0xff]
      %v6959 = vld [vmem:[#allocation5 + $0x118] sm:$0xff]
      %v6960 = vld [vmem:[#allocation5 + $0x120] sm:$0xff]
      %v6961 = vld [vmem:[#allocation5 + $0x128] sm:$0xff]
      %v6962 = vld [vmem:[#allocation5 + $0x130] sm:$0xff]
      %v6963 = vld [vmem:[#allocation5 + $0x138] sm:$0xff]
      %v6964 = vld [vmem:[#allocation5 + $0x140] sm:$0xff]
      %v6965 = vld [vmem:[#allocation5 + $0x148] sm:$0xff]
      %v6966 = vld [vmem:[#allocation5 + $0x150] sm:$0xff]
      %v6967 = vld [vmem:[#allocation5 + $0x158] sm:$0xff]
      %v6968 = vld [vmem:[#allocation5 + $0x160] sm:$0xff]
      %v6969 = vld [vmem:[#allocation5 + $0x168] sm:$0xff]
      %v6970 = vld [vmem:[#allocation5 + $0x170] sm:$0xff]
      %v6971 = vld [vmem:[#allocation5 + $0x178] sm:$0xff]
      %v6972 = vld [vmem:[#allocation5 + $0x180] sm:$0xff]
      %v6973 = vld [vmem:[#allocation5 + $0x188] sm:$0xff]
      %v6974 = vld [vmem:[#allocation5 + $0x190] sm:$0xff]
      %v6975 = vld [vmem:[#allocation5 + $0x198] sm:$0xff]
      %v6976 = vld [vmem:[#allocation5 + $0x1a0] sm:$0xff]
      %v6977 = vld [vmem:[#allocation5 + $0x1a8] sm:$0xff]
      %v6978 = vld [vmem:[#allocation5 + $0x1b0] sm:$0xff]
      %v6979 = vld [vmem:[#allocation5 + $0x1b8] sm:$0xff]
      %v6980 = vld [vmem:[#allocation5 + $0x1c0] sm:$0xff]
      %v6981 = vld [vmem:[#allocation5 + $0x1c8] sm:$0xff]
      %v6982 = vld [vmem:[#allocation5 + $0x1d0] sm:$0xff]
      %v6983 = vld [vmem:[#allocation5 + $0x1d8] sm:$0xff]
      %v6984 = vld [vmem:[#allocation5 + $0x1e0] sm:$0xff]
      %v6985 = vld [vmem:[#allocation5 + $0x1e8] sm:$0xff]
      %v6986 = vld [vmem:[#allocation5 + $0x1f0] sm:$0xff]
      %v6987 = vld [vmem:[#allocation5 + $0x1f8] sm:$0xff]
      %v6988 = vunpack.c.l.s8.bf16 %v6924
      %v6989 = vunpack.c.h.s8.bf16 %v6924
      %v6990 = vunpack.c.l.s8.bf16 %v6925
      %v6991 = vunpack.c.h.s8.bf16 %v6925
      %v6992 = vunpack.c.l.s8.bf16 %v6926
      %v6993 = vunpack.c.h.s8.bf16 %v6926
      %v6994 = vunpack.c.l.s8.bf16 %v6927
      %v6995 = vunpack.c.h.s8.bf16 %v6927
      %v6996 = vunpack.c.l.s8.bf16 %v6928
      %v6997 = vunpack.c.h.s8.bf16 %v6928
      %v6998 = vunpack.c.l.s8.bf16 %v6929
      %v6999 = vunpack.c.h.s8.bf16 %v6929
      %v7000 = vunpack.c.l.s8.bf16 %v6930
      %v7001 = vunpack.c.h.s8.bf16 %v6930
      %v7002 = vunpack.c.l.s8.bf16 %v6931
      %v7003 = vunpack.c.h.s8.bf16 %v6931
      %v7004 = vunpack.c.l.s8.bf16 %v6932
      %v7005 = vunpack.c.h.s8.bf16 %v6932
      %v7006 = vunpack.c.l.s8.bf16 %v6933
      %v7007 = vunpack.c.h.s8.bf16 %v6933
      %v7008 = vunpack.c.l.s8.bf16 %v6934
      %v7009 = vunpack.c.h.s8.bf16 %v6934
      %v7010 = vunpack.c.l.s8.bf16 %v6935
      %v7011 = vunpack.c.h.s8.bf16 %v6935
      %v7012 = vunpack.c.l.s8.bf16 %v6936
      %v7013 = vunpack.c.h.s8.bf16 %v6936
      %v7014 = vunpack.c.l.s8.bf16 %v6937
      %v7015 = vunpack.c.h.s8.bf16 %v6937
      %v7016 = vunpack.c.l.s8.bf16 %v6938
      %v7017 = vunpack.c.h.s8.bf16 %v6938
      %v7018 = vunpack.c.l.s8.bf16 %v6939
      %v7019 = vunpack.c.h.s8.bf16 %v6939
      %v7020 = vunpack.c.l.s8.bf16 %v6940
      %v7021 = vunpack.c.h.s8.bf16 %v6940
      %v7022 = vunpack.c.l.s8.bf16 %v6941
      %v7023 = vunpack.c.h.s8.bf16 %v6941
      %v7024 = vunpack.c.l.s8.bf16 %v6942
      %v7025 = vunpack.c.h.s8.bf16 %v6942
      %v7026 = vunpack.c.l.s8.bf16 %v6943
      %v7027 = vunpack.c.h.s8.bf16 %v6943
      %v7028 = vunpack.c.l.s8.bf16 %v6944
      %v7029 = vunpack.c.h.s8.bf16 %v6944
      %v7030 = vunpack.c.l.s8.bf16 %v6945
      %v7031 = vunpack.c.h.s8.bf16 %v6945
      %v7032 = vunpack.c.l.s8.bf16 %v6946
      %v7033 = vunpack.c.h.s8.bf16 %v6946
      %v7034 = vunpack.c.l.s8.bf16 %v6947
      %v7035 = vunpack.c.h.s8.bf16 %v6947
      %v7036 = vunpack.c.l.s8.bf16 %v6948
      %v7037 = vunpack.c.h.s8.bf16 %v6948
      %v7038 = vunpack.c.l.s8.bf16 %v6949
      %v7039 = vunpack.c.h.s8.bf16 %v6949
      %v7040 = vunpack.c.l.s8.bf16 %v6950
      %v7041 = vunpack.c.h.s8.bf16 %v6950
      %v7042 = vunpack.c.l.s8.bf16 %v6951
      %v7043 = vunpack.c.h.s8.bf16 %v6951
      %v7044 = vunpack.c.l.s8.bf16 %v6952
      %v7045 = vunpack.c.h.s8.bf16 %v6952
      %v7046 = vunpack.c.l.s8.bf16 %v6953
      %v7047 = vunpack.c.h.s8.bf16 %v6953
      %v7048 = vunpack.c.l.s8.bf16 %v6954
      %v7049 = vunpack.c.h.s8.bf16 %v6954
      %v7050 = vunpack.c.l.s8.bf16 %v6955
      %v7051 = vunpack.c.h.s8.bf16 %v6955
      %v7052 = vunpack.c.l.s8.bf16 %v6956
      %v7053 = vunpack.c.h.s8.bf16 %v6956
      %v7054 = vunpack.c.l.s8.bf16 %v6957
      %v7055 = vunpack.c.h.s8.bf16 %v6957
      %v7056 = vunpack.c.l.s8.bf16 %v6958
      %v7057 = vunpack.c.h.s8.bf16 %v6958
      %v7058 = vunpack.c.l.s8.bf16 %v6959
      %v7059 = vunpack.c.h.s8.bf16 %v6959
      %v7060 = vunpack.c.l.s8.bf16 %v6960
      %v7061 = vunpack.c.h.s8.bf16 %v6960
      %v7062 = vunpack.c.l.s8.bf16 %v6961
      %v7063 = vunpack.c.h.s8.bf16 %v6961
      %v7064 = vunpack.c.l.s8.bf16 %v6962
      %v7065 = vunpack.c.h.s8.bf16 %v6962
      %v7066 = vunpack.c.l.s8.bf16 %v6963
      %v7067 = vunpack.c.h.s8.bf16 %v6963
      %v7068 = vunpack.c.l.s8.bf16 %v6964
      %v7069 = vunpack.c.h.s8.bf16 %v6964
      %v7070 = vunpack.c.l.s8.bf16 %v6965
      %v7071 = vunpack.c.h.s8.bf16 %v6965
      %v7072 = vunpack.c.l.s8.bf16 %v6966
      %v7073 = vunpack.c.h.s8.bf16 %v6966
      %v7074 = vunpack.c.l.s8.bf16 %v6967
      %v7075 = vunpack.c.h.s8.bf16 %v6967
      %v7076 = vunpack.c.l.s8.bf16 %v6968
      %v7077 = vunpack.c.h.s8.bf16 %v6968
      %v7078 = vunpack.c.l.s8.bf16 %v6969
      %v7079 = vunpack.c.h.s8.bf16 %v6969
      %v7080 = vunpack.c.l.s8.bf16 %v6970
      %v7081 = vunpack.c.h.s8.bf16 %v6970
      %v7082 = vunpack.c.l.s8.bf16 %v6971
      %v7083 = vunpack.c.h.s8.bf16 %v6971
      %v7084 = vunpack.c.l.s8.bf16 %v6972
      %v7085 = vunpack.c.h.s8.bf16 %v6972
      %v7086 = vunpack.c.l.s8.bf16 %v6973
      %v7087 = vunpack.c.h.s8.bf16 %v6973
      %v7088 = vunpack.c.l.s8.bf16 %v6974
      %v7089 = vunpack.c.h.s8.bf16 %v6974
      %v7090 = vunpack.c.l.s8.bf16 %v6975
      %v7091 = vunpack.c.h.s8.bf16 %v6975
      %v7092 = vunpack.c.l.s8.bf16 %v6976
      %v7093 = vunpack.c.h.s8.bf16 %v6976
      %v7094 = vunpack.c.l.s8.bf16 %v6977
      %v7095 = vunpack.c.h.s8.bf16 %v6977
      %v7096 = vunpack.c.l.s8.bf16 %v6978
      %v7097 = vunpack.c.h.s8.bf16 %v6978
      %v7098 = vunpack.c.l.s8.bf16 %v6979
      %v7099 = vunpack.c.h.s8.bf16 %v6979
      %v7100 = vunpack.c.l.s8.bf16 %v6980
      %v7101 = vunpack.c.h.s8.bf16 %v6980
      %v7102 = vunpack.c.l.s8.bf16 %v6981
      %v7103 = vunpack.c.h.s8.bf16 %v6981
      %v7104 = vunpack.c.l.s8.bf16 %v6982
      %v7105 = vunpack.c.h.s8.bf16 %v6982
      %v7106 = vunpack.c.l.s8.bf16 %v6983
      %v7107 = vunpack.c.h.s8.bf16 %v6983
      %v7108 = vunpack.c.l.s8.bf16 %v6984
      %v7109 = vunpack.c.h.s8.bf16 %v6984
      %v7110 = vunpack.c.l.s8.bf16 %v6985
      %v7111 = vunpack.c.h.s8.bf16 %v6985
      %v7112 = vunpack.c.l.s8.bf16 %v6986
      %v7113 = vunpack.c.h.s8.bf16 %v6986
      %v7114 = vunpack.c.l.s8.bf16 %v6987
      %v7115 = vunpack.c.h.s8.bf16 %v6987
      %7116 = vst [vmem:[#allocation9] sm:$0xff] %v6988
      %7117 = vst [vmem:[#allocation9 + $0x8] sm:$0xff] %v6989
      %7118 = vst [vmem:[#allocation9 + $0x10] sm:$0xff] %v6990
      %7119 = vst [vmem:[#allocation9 + $0x18] sm:$0xff] %v6991
      %7120 = vst [vmem:[#allocation9 + $0x20] sm:$0xff] %v6992
      %7121 = vst [vmem:[#allocation9 + $0x28] sm:$0xff] %v6993
      %7122 = vst [vmem:[#allocation9 + $0x30] sm:$0xff] %v6994
      %7123 = vst [vmem:[#allocation9 + $0x38] sm:$0xff] %v6995
      %7124 = vst [vmem:[#allocation9 + $0x40] sm:$0xff] %v6996
      %7125 = vst [vmem:[#allocation9 + $0x48] sm:$0xff] %v6997
      %7126 = vst [vmem:[#allocation9 + $0x50] sm:$0xff] %v6998
      %7127 = vst [vmem:[#allocation9 + $0x58] sm:$0xff] %v6999
      %7128 = vst [vmem:[#allocation9 + $0x60] sm:$0xff] %v7000
      %7129 = vst [vmem:[#allocation9 + $0x68] sm:$0xff] %v7001
      %7130 = vst [vmem:[#allocation9 + $0x70] sm:$0xff] %v7002
      %7131 = vst [vmem:[#allocation9 + $0x78] sm:$0xff] %v7003
      %7132 = vst [vmem:[#allocation9 + $0x80] sm:$0xff] %v7004
      %7133 = vst [vmem:[#allocation9 + $0x88] sm:$0xff] %v7005
      %7134 = vst [vmem:[#allocation9 + $0x90] sm:$0xff] %v7006
      %7135 = vst [vmem:[#allocation9 + $0x98] sm:$0xff] %v7007
      %7136 = vst [vmem:[#allocation9 + $0xa0] sm:$0xff] %v7008
      %7137 = vst [vmem:[#allocation9 + $0xa8] sm:$0xff] %v7009
      %7138 = vst [vmem:[#allocation9 + $0xb0] sm:$0xff] %v7010
      %7139 = vst [vmem:[#allocation9 + $0xb8] sm:$0xff] %v7011
      %7140 = vst [vmem:[#allocation9 + $0xc0] sm:$0xff] %v7012
      %7141 = vst [vmem:[#allocation9 + $0xc8] sm:$0xff] %v7013
      %7142 = vst [vmem:[#allocation9 + $0xd0] sm:$0xff] %v7014
      %7143 = vst [vmem:[#allocation9 + $0xd8] sm:$0xff] %v7015
      %7144 = vst [vmem:[#allocation9 + $0xe0] sm:$0xff] %v7016
      %7145 = vst [vmem:[#allocation9 + $0xe8] sm:$0xff] %v7017
      %7146 = vst [vmem:[#allocation9 + $0xf0] sm:$0xff] %v7018
      %7147 = vst [vmem:[#allocation9 + $0xf8] sm:$0xff] %v7019
      %7148 = vst [vmem:[#allocation9 + $0x100] sm:$0xff] %v7020
      %7149 = vst [vmem:[#allocation9 + $0x108] sm:$0xff] %v7021
      %7150 = vst [vmem:[#allocation9 + $0x110] sm:$0xff] %v7022
      %7151 = vst [vmem:[#allocation9 + $0x118] sm:$0xff] %v7023
      %7152 = vst [vmem:[#allocation9 + $0x120] sm:$0xff] %v7024
      %7153 = vst [vmem:[#allocation9 + $0x128] sm:$0xff] %v7025
      %7154 = vst [vmem:[#allocation9 + $0x130] sm:$0xff] %v7026
      %7155 = vst [vmem:[#allocation9 + $0x138] sm:$0xff] %v7027
      %7156 = vst [vmem:[#allocation9 + $0x140] sm:$0xff] %v7028
      %7157 = vst [vmem:[#allocation9 + $0x148] sm:$0xff] %v7029
      %7158 = vst [vmem:[#allocation9 + $0x150] sm:$0xff] %v7030
      %7159 = vst [vmem:[#allocation9 + $0x158] sm:$0xff] %v7031
      %7160 = vst [vmem:[#allocation9 + $0x160] sm:$0xff] %v7032
      %7161 = vst [vmem:[#allocation9 + $0x168] sm:$0xff] %v7033
      %7162 = vst [vmem:[#allocation9 + $0x170] sm:$0xff] %v7034
      %7163 = vst [vmem:[#allocation9 + $0x178] sm:$0xff] %v7035
      %7164 = vst [vmem:[#allocation9 + $0x180] sm:$0xff] %v7036
      %7165 = vst [vmem:[#allocation9 + $0x188] sm:$0xff] %v7037
      %7166 = vst [vmem:[#allocation9 + $0x190] sm:$0xff] %v7038
      %7167 = vst [vmem:[#allocation9 + $0x198] sm:$0xff] %v7039
      %7168 = vst [vmem:[#allocation9 + $0x1a0] sm:$0xff] %v7040
      %7169 = vst [vmem:[#allocation9 + $0x1a8] sm:$0xff] %v7041
      %7170 = vst [vmem:[#allocation9 + $0x1b0] sm:$0xff] %v7042
      %7171 = vst [vmem:[#allocation9 + $0x1b8] sm:$0xff] %v7043
      %7172 = vst [vmem:[#allocation9 + $0x1c0] sm:$0xff] %v7044
      %7173 = vst [vmem:[#allocation9 + $0x1c8] sm:$0xff] %v7045
      %7174 = vst [vmem:[#allocation9 + $0x1d0] sm:$0xff] %v7046
      %7175 = vst [vmem:[#allocation9 + $0x1d8] sm:$0xff] %v7047
      %7176 = vst [vmem:[#allocation9 + $0x1e0] sm:$0xff] %v7048
      %7177 = vst [vmem:[#allocation9 + $0x1e8] sm:$0xff] %v7049
      %7178 = vst [vmem:[#allocation9 + $0x1f0] sm:$0xff] %v7050
      %7179 = vst [vmem:[#allocation9 + $0x1f8] sm:$0xff] %v7051
      %7180 = vst [vmem:[#allocation9 + $0x200] sm:$0xff] %v7052
      %7181 = vst [vmem:[#allocation9 + $0x208] sm:$0xff] %v7053
      %7182 = vst [vmem:[#allocation9 + $0x210] sm:$0xff] %v7054
      %7183 = vst [vmem:[#allocation9 + $0x218] sm:$0xff] %v7055
      %7184 = vst [vmem:[#allocation9 + $0x220] sm:$0xff] %v7056
      %7185 = vst [vmem:[#allocation9 + $0x228] sm:$0xff] %v7057
      %7186 = vst [vmem:[#allocation9 + $0x230] sm:$0xff] %v7058
      %7187 = vst [vmem:[#allocation9 + $0x238] sm:$0xff] %v7059
      %7188 = vst [vmem:[#allocation9 + $0x240] sm:$0xff] %v7060
      %7189 = vst [vmem:[#allocation9 + $0x248] sm:$0xff] %v7061
      %7190 = vst [vmem:[#allocation9 + $0x250] sm:$0xff] %v7062
      %7191 = vst [vmem:[#allocation9 + $0x258] sm:$0xff] %v7063
      %7192 = vst [vmem:[#allocation9 + $0x260] sm:$0xff] %v7064
      %7193 = vst [vmem:[#allocation9 + $0x268] sm:$0xff] %v7065
      %7194 = vst [vmem:[#allocation9 + $0x270] sm:$0xff] %v7066
      %7195 = vst [vmem:[#allocation9 + $0x278] sm:$0xff] %v7067
      %7196 = vst [vmem:[#allocation9 + $0x280] sm:$0xff] %v7068
      %7197 = vst [vmem:[#allocation9 + $0x288] sm:$0xff] %v7069
      %7198 = vst [vmem:[#allocation9 + $0x290] sm:$0xff] %v7070
      %7199 = vst [vmem:[#allocation9 + $0x298] sm:$0xff] %v7071
      %7200 = vst [vmem:[#allocation9 + $0x2a0] sm:$0xff] %v7072
      %7201 = vst [vmem:[#allocation9 + $0x2a8] sm:$0xff] %v7073
      %7202 = vst [vmem:[#allocation9 + $0x2b0] sm:$0xff] %v7074
      %7203 = vst [vmem:[#allocation9 + $0x2b8] sm:$0xff] %v7075
      %7204 = vst [vmem:[#allocation9 + $0x2c0] sm:$0xff] %v7076
      %7205 = vst [vmem:[#allocation9 + $0x2c8] sm:$0xff] %v7077
      %7206 = vst [vmem:[#allocation9 + $0x2d0] sm:$0xff] %v7078
      %7207 = vst [vmem:[#allocation9 + $0x2d8] sm:$0xff] %v7079
      %7208 = vst [vmem:[#allocation9 + $0x2e0] sm:$0xff] %v7080
      %7209 = vst [vmem:[#allocation9 + $0x2e8] sm:$0xff] %v7081
      %7210 = vst [vmem:[#allocation9 + $0x2f0] sm:$0xff] %v7082
      %7211 = vst [vmem:[#allocation9 + $0x2f8] sm:$0xff] %v7083
      %7212 = vst [vmem:[#allocation9 + $0x300] sm:$0xff] %v7084
      %7213 = vst [vmem:[#allocation9 + $0x308] sm:$0xff] %v7085
      %7214 = vst [vmem:[#allocation9 + $0x310] sm:$0xff] %v7086
      %7215 = vst [vmem:[#allocation9 + $0x318] sm:$0xff] %v7087
      %7216 = vst [vmem:[#allocation9 + $0x320] sm:$0xff] %v7088
      %7217 = vst [vmem:[#allocation9 + $0x328] sm:$0xff] %v7089
      %7218 = vst [vmem:[#allocation9 + $0x330] sm:$0xff] %v7090
      %7219 = vst [vmem:[#allocation9 + $0x338] sm:$0xff] %v7091
      %7220 = vst [vmem:[#allocation9 + $0x340] sm:$0xff] %v7092
      %7221 = vst [vmem:[#allocation9 + $0x348] sm:$0xff] %v7093
      %7222 = vst [vmem:[#allocation9 + $0x350] sm:$0xff] %v7094
      %7223 = vst [vmem:[#allocation9 + $0x358] sm:$0xff] %v7095
      %7224 = vst [vmem:[#allocation9 + $0x360] sm:$0xff] %v7096
      %7225 = vst [vmem:[#allocation9 + $0x368] sm:$0xff] %v7097
      %7226 = vst [vmem:[#allocation9 + $0x370] sm:$0xff] %v7098
      %7227 = vst [vmem:[#allocation9 + $0x378] sm:$0xff] %v7099
      %7228 = vst [vmem:[#allocation9 + $0x380] sm:$0xff] %v7100
      %7229 = vst [vmem:[#allocation9 + $0x388] sm:$0xff] %v7101
      %7230 = vst [vmem:[#allocation9 + $0x390] sm:$0xff] %v7102
      %7231 = vst [vmem:[#allocation9 + $0x398] sm:$0xff] %v7103
      %7232 = vst [vmem:[#allocation9 + $0x3a0] sm:$0xff] %v7104
      %7233 = vst [vmem:[#allocation9 + $0x3a8] sm:$0xff] %v7105
      %7234 = vst [vmem:[#allocation9 + $0x3b0] sm:$0xff] %v7106
      %7235 = vst [vmem:[#allocation9 + $0x3b8] sm:$0xff] %v7107
      %7236 = vst [vmem:[#allocation9 + $0x3c0] sm:$0xff] %v7108
      %7237 = vst [vmem:[#allocation9 + $0x3c8] sm:$0xff] %v7109
      %7238 = vst [vmem:[#allocation9 + $0x3d0] sm:$0xff] %v7110
      %7239 = vst [vmem:[#allocation9 + $0x3d8] sm:$0xff] %v7111
      %7240 = vst [vmem:[#allocation9 + $0x3e0] sm:$0xff] %v7112
      %7241 = vst [vmem:[#allocation9 + $0x3e8] sm:$0xff] %v7113
      %7242 = vst [vmem:[#allocation9 + $0x3f0] sm:$0xff] %v7114
      %7243 = vst [vmem:[#allocation9 + $0x3f8] sm:$0xff] %v7115
    $region109: #{tpu_custom_call.1} parent=1 // pred_fallthru
      _
    %v7244 = vld [vmem:[#allocation9] sm:$0xff]
    %v7245 = vld [vmem:[#allocation9 + $0x8] sm:$0xff]
    %v7246 = vld [vmem:[#allocation9 + $0x10] sm:$0xff]
    %v7247 = vld [vmem:[#allocation9 + $0x18] sm:$0xff]
    %v7248 = vld [vmem:[#allocation9 + $0x20] sm:$0xff]
    %v7249 = vld [vmem:[#allocation9 + $0x28] sm:$0xff]
    %v7250 = vld [vmem:[#allocation9 + $0x30] sm:$0xff]
    %v7251 = vld [vmem:[#allocation9 + $0x38] sm:$0xff]
    %v7252 = vld [vmem:[#allocation9 + $0x40] sm:$0xff]
    %v7253 = vld [vmem:[#allocation9 + $0x48] sm:$0xff]
    %v7254 = vld [vmem:[#allocation9 + $0x50] sm:$0xff]
    %v7255 = vld [vmem:[#allocation9 + $0x58] sm:$0xff]
    %v7256 = vld [vmem:[#allocation9 + $0x60] sm:$0xff]
    %v7257 = vld [vmem:[#allocation9 + $0x68] sm:$0xff]
    %v7258 = vld [vmem:[#allocation9 + $0x70] sm:$0xff]
    %v7259 = vld [vmem:[#allocation9 + $0x78] sm:$0xff]
    %v7260 = vld [vmem:[#allocation9 + $0x80] sm:$0xff]
    %v7261 = vld [vmem:[#allocation9 + $0x88] sm:$0xff]
    %v7262 = vld [vmem:[#allocation9 + $0x90] sm:$0xff]
    %v7263 = vld [vmem:[#allocation9 + $0x98] sm:$0xff]
    %v7264 = vld [vmem:[#allocation9 + $0xa0] sm:$0xff]
    %v7265 = vld [vmem:[#allocation9 + $0xa8] sm:$0xff]
    %v7266 = vld [vmem:[#allocation9 + $0xb0] sm:$0xff]
    %v7267 = vld [vmem:[#allocation9 + $0xb8] sm:$0xff]
    %v7268 = vld [vmem:[#allocation9 + $0xc0] sm:$0xff]
    %v7269 = vld [vmem:[#allocation9 + $0xc8] sm:$0xff]
    %v7270 = vld [vmem:[#allocation9 + $0xd0] sm:$0xff]
    %v7271 = vld [vmem:[#allocation9 + $0xd8] sm:$0xff]
    %v7272 = vld [vmem:[#allocation9 + $0xe0] sm:$0xff]
    %v7273 = vld [vmem:[#allocation9 + $0xe8] sm:$0xff]
    %v7274 = vld [vmem:[#allocation9 + $0xf0] sm:$0xff]
    %v7275 = vld [vmem:[#allocation9 + $0xf8] sm:$0xff]
    %v7276 = vld [vmem:[#allocation9 + $0x100] sm:$0xff]
    %v7277 = vld [vmem:[#allocation9 + $0x108] sm:$0xff]
    %v7278 = vld [vmem:[#allocation9 + $0x110] sm:$0xff]
    %v7279 = vld [vmem:[#allocation9 + $0x118] sm:$0xff]
    %v7280 = vld [vmem:[#allocation9 + $0x120] sm:$0xff]
    %v7281 = vld [vmem:[#allocation9 + $0x128] sm:$0xff]
    %v7282 = vld [vmem:[#allocation9 + $0x130] sm:$0xff]
    %v7283 = vld [vmem:[#allocation9 + $0x138] sm:$0xff]
    %v7284 = vld [vmem:[#allocation9 + $0x140] sm:$0xff]
    %v7285 = vld [vmem:[#allocation9 + $0x148] sm:$0xff]
    %v7286 = vld [vmem:[#allocation9 + $0x150] sm:$0xff]
    %v7287 = vld [vmem:[#allocation9 + $0x158] sm:$0xff]
    %v7288 = vld [vmem:[#allocation9 + $0x160] sm:$0xff]
    %v7289 = vld [vmem:[#allocation9 + $0x168] sm:$0xff]
    %v7290 = vld [vmem:[#allocation9 + $0x170] sm:$0xff]
    %v7291 = vld [vmem:[#allocation9 + $0x178] sm:$0xff]
    %v7292 = vld [vmem:[#allocation9 + $0x180] sm:$0xff]
    %v7293 = vld [vmem:[#allocation9 + $0x188] sm:$0xff]
    %v7294 = vld [vmem:[#allocation9 + $0x190] sm:$0xff]
    %v7295 = vld [vmem:[#allocation9 + $0x198] sm:$0xff]
    %v7296 = vld [vmem:[#allocation9 + $0x1a0] sm:$0xff]
    %v7297 = vld [vmem:[#allocation9 + $0x1a8] sm:$0xff]
    %v7298 = vld [vmem:[#allocation9 + $0x1b0] sm:$0xff]
    %v7299 = vld [vmem:[#allocation9 + $0x1b8] sm:$0xff]
    %v7300 = vld [vmem:[#allocation9 + $0x1c0] sm:$0xff]
    %v7301 = vld [vmem:[#allocation9 + $0x1c8] sm:$0xff]
    %v7302 = vld [vmem:[#allocation9 + $0x1d0] sm:$0xff]
    %v7303 = vld [vmem:[#allocation9 + $0x1d8] sm:$0xff]
    %v7304 = vld [vmem:[#allocation9 + $0x1e0] sm:$0xff]
    %v7305 = vld [vmem:[#allocation9 + $0x1e8] sm:$0xff]
    %v7306 = vld [vmem:[#allocation9 + $0x1f0] sm:$0xff]
    %v7307 = vld [vmem:[#allocation9 + $0x1f8] sm:$0xff]
    %v7308 = vld [vmem:[#allocation9 + $0x200] sm:$0xff]
    %v7309 = vld [vmem:[#allocation9 + $0x208] sm:$0xff]
    %v7310 = vld [vmem:[#allocation9 + $0x210] sm:$0xff]
    %v7311 = vld [vmem:[#allocation9 + $0x218] sm:$0xff]
    %v7312 = vld [vmem:[#allocation9 + $0x220] sm:$0xff]
    %v7313 = vld [vmem:[#allocation9 + $0x228] sm:$0xff]
    %v7314 = vld [vmem:[#allocation9 + $0x230] sm:$0xff]
    %v7315 = vld [vmem:[#allocation9 + $0x238] sm:$0xff]
    %v7316 = vld [vmem:[#allocation9 + $0x240] sm:$0xff]
    %v7317 = vld [vmem:[#allocation9 + $0x248] sm:$0xff]
    %v7318 = vld [vmem:[#allocation9 + $0x250] sm:$0xff]
    %v7319 = vld [vmem:[#allocation9 + $0x258] sm:$0xff]
    %v7320 = vld [vmem:[#allocation9 + $0x260] sm:$0xff]
    %v7321 = vld [vmem:[#allocation9 + $0x268] sm:$0xff]
    %v7322 = vld [vmem:[#allocation9 + $0x270] sm:$0xff]
    %v7323 = vld [vmem:[#allocation9 + $0x278] sm:$0xff]
    %v7324 = vld [vmem:[#allocation9 + $0x280] sm:$0xff]
    %v7325 = vld [vmem:[#allocation9 + $0x288] sm:$0xff]
    %v7326 = vld [vmem:[#allocation9 + $0x290] sm:$0xff]
    %v7327 = vld [vmem:[#allocation9 + $0x298] sm:$0xff]
    %v7328 = vld [vmem:[#allocation9 + $0x2a0] sm:$0xff]
    %v7329 = vld [vmem:[#allocation9 + $0x2a8] sm:$0xff]
    %v7330 = vld [vmem:[#allocation9 + $0x2b0] sm:$0xff]
    %v7331 = vld [vmem:[#allocation9 + $0x2b8] sm:$0xff]
    %v7332 = vld [vmem:[#allocation9 + $0x2c0] sm:$0xff]
    %v7333 = vld [vmem:[#allocation9 + $0x2c8] sm:$0xff]
    %v7334 = vld [vmem:[#allocation9 + $0x2d0] sm:$0xff]
    %v7335 = vld [vmem:[#allocation9 + $0x2d8] sm:$0xff]
    %v7336 = vld [vmem:[#allocation9 + $0x2e0] sm:$0xff]
    %v7337 = vld [vmem:[#allocation9 + $0x2e8] sm:$0xff]
    %v7338 = vld [vmem:[#allocation9 + $0x2f0] sm:$0xff]
    %v7339 = vld [vmem:[#allocation9 + $0x2f8] sm:$0xff]
    %v7340 = vld [vmem:[#allocation9 + $0x300] sm:$0xff]
    %v7341 = vld [vmem:[#allocation9 + $0x308] sm:$0xff]
    %v7342 = vld [vmem:[#allocation9 + $0x310] sm:$0xff]
    %v7343 = vld [vmem:[#allocation9 + $0x318] sm:$0xff]
    %v7344 = vld [vmem:[#allocation9 + $0x320] sm:$0xff]
    %v7345 = vld [vmem:[#allocation9 + $0x328] sm:$0xff]
    %v7346 = vld [vmem:[#allocation9 + $0x330] sm:$0xff]
    %v7347 = vld [vmem:[#allocation9 + $0x338] sm:$0xff]
    %v7348 = vld [vmem:[#allocation9 + $0x340] sm:$0xff]
    %v7349 = vld [vmem:[#allocation9 + $0x348] sm:$0xff]
    %v7350 = vld [vmem:[#allocation9 + $0x350] sm:$0xff]
    %v7351 = vld [vmem:[#allocation9 + $0x358] sm:$0xff]
    %v7352 = vld [vmem:[#allocation9 + $0x360] sm:$0xff]
    %v7353 = vld [vmem:[#allocation9 + $0x368] sm:$0xff]
    %v7354 = vld [vmem:[#allocation9 + $0x370] sm:$0xff]
    %v7355 = vld [vmem:[#allocation9 + $0x378] sm:$0xff]
    %v7356 = vld [vmem:[#allocation9 + $0x380] sm:$0xff]
    %v7357 = vld [vmem:[#allocation9 + $0x388] sm:$0xff]
    %v7358 = vld [vmem:[#allocation9 + $0x390] sm:$0xff]
    %v7359 = vld [vmem:[#allocation9 + $0x398] sm:$0xff]
    %v7360 = vld [vmem:[#allocation9 + $0x3a0] sm:$0xff]
    %v7361 = vld [vmem:[#allocation9 + $0x3a8] sm:$0xff]
    %v7362 = vld [vmem:[#allocation9 + $0x3b0] sm:$0xff]
    %v7363 = vld [vmem:[#allocation9 + $0x3b8] sm:$0xff]
    %v7364 = vld [vmem:[#allocation9 + $0x3c0] sm:$0xff]
    %v7365 = vld [vmem:[#allocation9 + $0x3c8] sm:$0xff]
    %v7366 = vld [vmem:[#allocation9 + $0x3d0] sm:$0xff]
    %v7367 = vld [vmem:[#allocation9 + $0x3d8] sm:$0xff]
    %v7368 = vld [vmem:[#allocation9 + $0x3e0] sm:$0xff]
    %v7369 = vld [vmem:[#allocation9 + $0x3e8] sm:$0xff]
    %v7370 = vld [vmem:[#allocation9 + $0x3f0] sm:$0xff]
    %v7371 = vld [vmem:[#allocation9 + $0x3f8] sm:$0xff]
    %7372 = vmatprep.subr.bf16.mxu0 0
    %7373 = vmatpush1.bf16.msra.mxu0 %v7244
    %7374 = vmatprep.subr.bf16.mxu0 0
    %7375 = vmatpush1.bf16.msra.mxu0 %v7245
    %7376 = vmatprep.subr.bf16.mxu0 0
    %7377 = vmatpush1.bf16.msra.mxu0 %v7246
    %7378 = vmatprep.subr.bf16.mxu0 0
    %7379 = vmatpush1.bf16.msra.mxu0 %v7247
    %7380 = vmatprep.subr.bf16.mxu0 0
    %7381 = vmatpush1.bf16.msra.mxu0 %v7248
    %7382 = vmatprep.subr.bf16.mxu0 0
    %7383 = vmatpush1.bf16.msra.mxu0 %v7249
    %7384 = vmatprep.subr.bf16.mxu0 0
    %7385 = vmatpush1.bf16.msra.mxu0 %v7250
    %7386 = vmatprep.subr.bf16.mxu0 0
    %7387 = vmatpush1.bf16.msra.mxu0 %v7251
    %7388 = vmatprep.subr.bf16.mxu0 0
    %7389 = vmatpush1.bf16.msra.mxu0 %v7252
    %7390 = vmatprep.subr.bf16.mxu0 0
    %7391 = vmatpush1.bf16.msra.mxu0 %v7253
    %7392 = vmatprep.subr.bf16.mxu0 0
    %7393 = vmatpush1.bf16.msra.mxu0 %v7254
    %7394 = vmatprep.subr.bf16.mxu0 0
    %7395 = vmatpush1.bf16.msra.mxu0 %v7255
    %7396 = vmatprep.subr.bf16.mxu0 0
    %7397 = vmatpush1.bf16.msra.mxu0 %v7256
    %7398 = vmatprep.subr.bf16.mxu0 0
    %7399 = vmatpush1.bf16.msra.mxu0 %v7257
    %7400 = vmatprep.subr.bf16.mxu0 0
    %7401 = vmatpush1.bf16.msra.mxu0 %v7258
    %7402 = vmatprep.subr.bf16.mxu0 0
    %7403 = vmatpush1.bf16.msra.mxu0 %v7259
    %7404 = vmatprep.mubr.bf16.mxu0 %v6901
    %7405 = vmatmul.mubr.bf16.gmra.mrb[0].mxu0 %v6900
    %v7406 = vpop.f32.mrb[0].mxu0
    %v7407 = vadd.f32 0.0, %v7406
    %v7408 = vpop.f32.mrb[0].mxu0
    %v7409 = vpop.f32.mrb[0].mxu0
    %v7410 = vpop.f32.mrb[0].mxu0
    %7411 = vdwg.mxu0
    %7412 = vmatprep.subr.bf16.mxu0 0
    %7413 = vmatpush1.bf16.msra.mxu0 %v7260
    %7414 = vmatprep.subr.bf16.mxu0 0
    %7415 = vmatpush1.bf16.msra.mxu0 %v7261
    %7416 = vmatprep.subr.bf16.mxu0 0
    %7417 = vmatpush1.bf16.msra.mxu0 %v7262
    %7418 = vmatprep.subr.bf16.mxu0 0
    %7419 = vmatpush1.bf16.msra.mxu0 %v7263
    %7420 = vmatprep.subr.bf16.mxu0 0
    %7421 = vmatpush1.bf16.msra.mxu0 %v7264
    %7422 = vmatprep.subr.bf16.mxu0 0
    %7423 = vmatpush1.bf16.msra.mxu0 %v7265
    %7424 = vmatprep.subr.bf16.mxu0 0
    %7425 = vmatpush1.bf16.msra.mxu0 %v7266
    %7426 = vmatprep.subr.bf16.mxu0 0
    %7427 = vmatpush1.bf16.msra.mxu0 %v7267
    %7428 = vmatprep.subr.bf16.mxu0 0
    %7429 = vmatpush1.bf16.msra.mxu0 %v7268
    %7430 = vmatprep.subr.bf16.mxu0 0
    %7431 = vmatpush1.bf16.msra.mxu0 %v7269
    %7432 = vmatprep.subr.bf16.mxu0 0
    %7433 = vmatpush1.bf16.msra.mxu0 %v7270
    %7434 = vmatprep.subr.bf16.mxu0 0
    %7435 = vmatpush1.bf16.msra.mxu0 %v7271
    %7436 = vmatprep.subr.bf16.mxu0 0
    %7437 = vmatpush1.bf16.msra.mxu0 %v7272
    %7438 = vmatprep.subr.bf16.mxu0 0
    %7439 = vmatpush1.bf16.msra.mxu0 %v7273
    %7440 = vmatprep.subr.bf16.mxu0 0
    %7441 = vmatpush1.bf16.msra.mxu0 %v7274
    %7442 = vmatprep.subr.bf16.mxu0 0
    %7443 = vmatpush1.bf16.msra.mxu0 %v7275
    %7444 = vmatprep.mubr.bf16.mxu0 %v6903
    %7445 = vmatmul.mubr.bf16.gmra.mrb[0].mxu0 %v6902
    %v7446 = vpop.f32.mrb[0].mxu0
    %v7447 = vadd.f32 %v7407, %v7446
    %v7448 = vpop.f32.mrb[0].mxu0
    %v7449 = vpop.f32.mrb[0].mxu0
    %v7450 = vpop.f32.mrb[0].mxu0
    %7451 = vdwg.mxu0
    %7452 = vmatprep.subr.bf16.mxu0 0
    %7453 = vmatpush1.bf16.msra.mxu0 %v7276
    %7454 = vmatprep.subr.bf16.mxu0 0
    %7455 = vmatpush1.bf16.msra.mxu0 %v7277
    %7456 = vmatprep.subr.bf16.mxu0 0
    %7457 = vmatpush1.bf16.msra.mxu0 %v7278
    %7458 = vmatprep.subr.bf16.mxu0 0
    %7459 = vmatpush1.bf16.msra.mxu0 %v7279
    %7460 = vmatprep.subr.bf16.mxu0 0
    %7461 = vmatpush1.bf16.msra.mxu0 %v7280
    %7462 = vmatprep.subr.bf16.mxu0 0
    %7463 = vmatpush1.bf16.msra.mxu0 %v7281
    %7464 = vmatprep.subr.bf16.mxu0 0
    %7465 = vmatpush1.bf16.msra.mxu0 %v7282
    %7466 = vmatprep.subr.bf16.mxu0 0
    %7467 = vmatpush1.bf16.msra.mxu0 %v7283
    %7468 = vmatprep.subr.bf16.mxu0 0
    %7469 = vmatpush1.bf16.msra.mxu0 %v7284
    %7470 = vmatprep.subr.bf16.mxu0 0
    %7471 = vmatpush1.bf16.msra.mxu0 %v7285
    %7472 = vmatprep.subr.bf16.mxu0 0
    %7473 = vmatpush1.bf16.msra.mxu0 %v7286
    %7474 = vmatprep.subr.bf16.mxu0 0
    %7475 = vmatpush1.bf16.msra.mxu0 %v7287
    %7476 = vmatprep.subr.bf16.mxu0 0
    %7477 = vmatpush1.bf16.msra.mxu0 %v7288
    %7478 = vmatprep.subr.bf16.mxu0 0
    %7479 = vmatpush1.bf16.msra.mxu0 %v7289
    %7480 = vmatprep.subr.bf16.mxu0 0
    %7481 = vmatpush1.bf16.msra.mxu0 %v7290
    %7482 = vmatprep.subr.bf16.mxu0 0
    %7483 = vmatpush1.bf16.msra.mxu0 %v7291
    %7484 = vmatprep.mubr.bf16.mxu0 %v6905
    %7485 = vmatmul.mubr.bf16.gmra.mrb[0].mxu0 %v6904
    %v7486 = vpop.f32.mrb[0].mxu0
    %v7487 = vadd.f32 %v7447, %v7486
    %v7488 = vpop.f32.mrb[0].mxu0
    %v7489 = vpop.f32.mrb[0].mxu0
    %v7490 = vpop.f32.mrb[0].mxu0
    %7491 = vdwg.mxu0
    %7492 = vmatprep.subr.bf16.mxu0 0
    %7493 = vmatpush1.bf16.msra.mxu0 %v7292
    %7494 = vmatprep.subr.bf16.mxu0 0
    %7495 = vmatpush1.bf16.msra.mxu0 %v7293
    %7496 = vmatprep.subr.bf16.mxu0 0
    %7497 = vmatpush1.bf16.msra.mxu0 %v7294
    %7498 = vmatprep.subr.bf16.mxu0 0
    %7499 = vmatpush1.bf16.msra.mxu0 %v7295
    %7500 = vmatprep.subr.bf16.mxu0 0
    %7501 = vmatpush1.bf16.msra.mxu0 %v7296
    %7502 = vmatprep.subr.bf16.mxu0 0
    %7503 = vmatpush1.bf16.msra.mxu0 %v7297
    %7504 = vmatprep.subr.bf16.mxu0 0
    %7505 = vmatpush1.bf16.msra.mxu0 %v7298
    %7506 = vmatprep.subr.bf16.mxu0 0
    %7507 = vmatpush1.bf16.msra.mxu0 %v7299
    %7508 = vmatprep.subr.bf16.mxu0 0
    %7509 = vmatpush1.bf16.msra.mxu0 %v7300
    %7510 = vmatprep.subr.bf16.mxu0 0
    %7511 = vmatpush1.bf16.msra.mxu0 %v7301
    %7512 = vmatprep.subr.bf16.mxu0 0
    %7513 = vmatpush1.bf16.msra.mxu0 %v7302
    %7514 = vmatprep.subr.bf16.mxu0 0
    %7515 = vmatpush1.bf16.msra.mxu0 %v7303
    %7516 = vmatprep.subr.bf16.mxu0 0
    %7517 = vmatpush1.bf16.msra.mxu0 %v7304
    %7518 = vmatprep.subr.bf16.mxu0 0
    %7519 = vmatpush1.bf16.msra.mxu0 %v7305
    %7520 = vmatprep.subr.bf16.mxu0 0
    %7521 = vmatpush1.bf16.msra.mxu0 %v7306
    %7522 = vmatprep.subr.bf16.mxu0 0
    %7523 = vmatpush1.bf16.msra.mxu0 %v7307
    %7524 = vmatprep.mubr.bf16.mxu0 %v6907
    %7525 = vmatmul.mubr.bf16.gmra.mrb[0].mxu0 %v6906
    %v7526 = vpop.f32.mrb[0].mxu0
    %v7527 = vadd.f32 %v7487, %v7526
    %v7528 = vpop.f32.mrb[0].mxu0
    %v7529 = vpop.f32.mrb[0].mxu0
    %v7530 = vpop.f32.mrb[0].mxu0
    %7531 = vdwg.mxu0
    %7532 = vmatprep.subr.bf16.mxu0 0
    %7533 = vmatpush1.bf16.msra.mxu0 %v7308
    %7534 = vmatprep.subr.bf16.mxu0 0
    %7535 = vmatpush1.bf16.msra.mxu0 %v7309
    %7536 = vmatprep.subr.bf16.mxu0 0
    %7537 = vmatpush1.bf16.msra.mxu0 %v7310
    %7538 = vmatprep.subr.bf16.mxu0 0
    %7539 = vmatpush1.bf16.msra.mxu0 %v7311
    %7540 = vmatprep.subr.bf16.mxu0 0
    %7541 = vmatpush1.bf16.msra.mxu0 %v7312
    %7542 = vmatprep.subr.bf16.mxu0 0
    %7543 = vmatpush1.bf16.msra.mxu0 %v7313
    %7544 = vmatprep.subr.bf16.mxu0 0
    %7545 = vmatpush1.bf16.msra.mxu0 %v7314
    %7546 = vmatprep.subr.bf16.mxu0 0
    %7547 = vmatpush1.bf16.msra.mxu0 %v7315
    %7548 = vmatprep.subr.bf16.mxu0 0
    %7549 = vmatpush1.bf16.msra.mxu0 %v7316
    %7550 = vmatprep.subr.bf16.mxu0 0
    %7551 = vmatpush1.bf16.msra.mxu0 %v7317
    %7552 = vmatprep.subr.bf16.mxu0 0
    %7553 = vmatpush1.bf16.msra.mxu0 %v7318
    %7554 = vmatprep.subr.bf16.mxu0 0
    %7555 = vmatpush1.bf16.msra.mxu0 %v7319
    %7556 = vmatprep.subr.bf16.mxu0 0
    %7557 = vmatpush1.bf16.msra.mxu0 %v7320
    %7558 = vmatprep.subr.bf16.mxu0 0
    %7559 = vmatpush1.bf16.msra.mxu0 %v7321
    %7560 = vmatprep.subr.bf16.mxu0 0
    %7561 = vmatpush1.bf16.msra.mxu0 %v7322
    %7562 = vmatprep.subr.bf16.mxu0 0
    %7563 = vmatpush1.bf16.msra.mxu0 %v7323
    %7564 = vmatprep.mubr.bf16.mxu0 %v6909
    %7565 = vmatmul.mubr.bf16.gmra.mrb[0].mxu0 %v6908
    %v7566 = vpop.f32.mrb[0].mxu0
    %v7567 = vadd.f32 %v7527, %v7566
    %v7568 = vpop.f32.mrb[0].mxu0
    %v7569 = vpop.f32.mrb[0].mxu0
    %v7570 = vpop.f32.mrb[0].mxu0
    %7571 = vdwg.mxu0
    %7572 = vmatprep.subr.bf16.mxu0 0
    %7573 = vmatpush1.bf16.msra.mxu0 %v7324
    %7574 = vmatprep.subr.bf16.mxu0 0
    %7575 = vmatpush1.bf16.msra.mxu0 %v7325
    %7576 = vmatprep.subr.bf16.mxu0 0
    %7577 = vmatpush1.bf16.msra.mxu0 %v7326
    %7578 = vmatprep.subr.bf16.mxu0 0
    %7579 = vmatpush1.bf16.msra.mxu0 %v7327
    %7580 = vmatprep.subr.bf16.mxu0 0
    %7581 = vmatpush1.bf16.msra.mxu0 %v7328
    %7582 = vmatprep.subr.bf16.mxu0 0
    %7583 = vmatpush1.bf16.msra.mxu0 %v7329
    %7584 = vmatprep.subr.bf16.mxu0 0
    %7585 = vmatpush1.bf16.msra.mxu0 %v7330
    %7586 = vmatprep.subr.bf16.mxu0 0
    %7587 = vmatpush1.bf16.msra.mxu0 %v7331
    %7588 = vmatprep.subr.bf16.mxu0 0
    %7589 = vmatpush1.bf16.msra.mxu0 %v7332
    %7590 = vmatprep.subr.bf16.mxu0 0
    %7591 = vmatpush1.bf16.msra.mxu0 %v7333
    %7592 = vmatprep.subr.bf16.mxu0 0
    %7593 = vmatpush1.bf16.msra.mxu0 %v7334
    %7594 = vmatprep.subr.bf16.mxu0 0
    %7595 = vmatpush1.bf16.msra.mxu0 %v7335
    %7596 = vmatprep.subr.bf16.mxu0 0
    %7597 = vmatpush1.bf16.msra.mxu0 %v7336
    %7598 = vmatprep.subr.bf16.mxu0 0
    %7599 = vmatpush1.bf16.msra.mxu0 %v7337
    %7600 = vmatprep.subr.bf16.mxu0 0
    %7601 = vmatpush1.bf16.msra.mxu0 %v7338
    %7602 = vmatprep.subr.bf16.mxu0 0
    %7603 = vmatpush1.bf16.msra.mxu0 %v7339
    %7604 = vmatprep.mubr.bf16.mxu0 %v6911
    %7605 = vmatmul.mubr.bf16.gmra.mrb[0].mxu0 %v6910
    %v7606 = vpop.f32.mrb[0].mxu0
    %v7607 = vadd.f32 %v7567, %v7606
    %v7608 = vpop.f32.mrb[0].mxu0
    %v7609 = vpop.f32.mrb[0].mxu0
    %v7610 = vpop.f32.mrb[0].mxu0
    %7611 = vdwg.mxu0
    %7612 = vmatprep.subr.bf16.mxu0 0
    %7613 = vmatpush1.bf16.msra.mxu0 %v7340
    %7614 = vmatprep.subr.bf16.mxu0 0
    %7615 = vmatpush1.bf16.msra.mxu0 %v7341
    %7616 = vmatprep.subr.bf16.mxu0 0
    %7617 = vmatpush1.bf16.msra.mxu0 %v7342
    %7618 = vmatprep.subr.bf16.mxu0 0
    %7619 = vmatpush1.bf16.msra.mxu0 %v7343
    %7620 = vmatprep.subr.bf16.mxu0 0
    %7621 = vmatpush1.bf16.msra.mxu0 %v7344
    %7622 = vmatprep.subr.bf16.mxu0 0
    %7623 = vmatpush1.bf16.msra.mxu0 %v7345
    %7624 = vmatprep.subr.bf16.mxu0 0
    %7625 = vmatpush1.bf16.msra.mxu0 %v7346
    %7626 = vmatprep.subr.bf16.mxu0 0
    %7627 = vmatpush1.bf16.msra.mxu0 %v7347
    %7628 = vmatprep.subr.bf16.mxu0 0
    %7629 = vmatpush1.bf16.msra.mxu0 %v7348
    %7630 = vmatprep.subr.bf16.mxu0 0
    %7631 = vmatpush1.bf16.msra.mxu0 %v7349
    %7632 = vmatprep.subr.bf16.mxu0 0
    %7633 = vmatpush1.bf16.msra.mxu0 %v7350
    %7634 = vmatprep.subr.bf16.mxu0 0
    %7635 = vmatpush1.bf16.msra.mxu0 %v7351
    %7636 = vmatprep.subr.bf16.mxu0 0
    %7637 = vmatpush1.bf16.msra.mxu0 %v7352
    %7638 = vmatprep.subr.bf16.mxu0 0
    %7639 = vmatpush1.bf16.msra.mxu0 %v7353
    %7640 = vmatprep.subr.bf16.mxu0 0
    %7641 = vmatpush1.bf16.msra.mxu0 %v7354
    %7642 = vmatprep.subr.bf16.mxu0 0
    %7643 = vmatpush1.bf16.msra.mxu0 %v7355
    %7644 = vmatprep.mubr.bf16.mxu0 %v6913
    %7645 = vmatmul.mubr.bf16.gmra.mrb[0].mxu0 %v6912
    %v7646 = vpop.f32.mrb[0].mxu0
    %v7647 = vadd.f32 %v7607, %v7646
    %v7648 = vpop.f32.mrb[0].mxu0
    %v7649 = vpop.f32.mrb[0].mxu0
    %v7650 = vpop.f32.mrb[0].mxu0
    %7651 = vdwg.mxu0
    %7652 = vmatprep.subr.bf16.mxu0 0
    %7653 = vmatpush1.bf16.msra.mxu0 %v7356
    %7654 = vmatprep.subr.bf16.mxu0 0
    %7655 = vmatpush1.bf16.msra.mxu0 %v7357
    %7656 = vmatprep.subr.bf16.mxu0 0
    %7657 = vmatpush1.bf16.msra.mxu0 %v7358
    %7658 = vmatprep.subr.bf16.mxu0 0
    %7659 = vmatpush1.bf16.msra.mxu0 %v7359
    %7660 = vmatprep.subr.bf16.mxu0 0
    %7661 = vmatpush1.bf16.msra.mxu0 %v7360
    %7662 = vmatprep.subr.bf16.mxu0 0
    %7663 = vmatpush1.bf16.msra.mxu0 %v7361
    %7664 = vmatprep.subr.bf16.mxu0 0
    %7665 = vmatpush1.bf16.msra.mxu0 %v7362
    %7666 = vmatprep.subr.bf16.mxu0 0
    %7667 = vmatpush1.bf16.msra.mxu0 %v7363
    %7668 = vmatprep.subr.bf16.mxu0 0
    %7669 = vmatpush1.bf16.msra.mxu0 %v7364
    %7670 = vmatprep.subr.bf16.mxu0 0
    %7671 = vmatpush1.bf16.msra.mxu0 %v7365
    %7672 = vmatprep.subr.bf16.mxu0 0
    %7673 = vmatpush1.bf16.msra.mxu0 %v7366
    %7674 = vmatprep.subr.bf16.mxu0 0
    %7675 = vmatpush1.bf16.msra.mxu0 %v7367
    %7676 = vmatprep.subr.bf16.mxu0 0
    %7677 = vmatpush1.bf16.msra.mxu0 %v7368
    %7678 = vmatprep.subr.bf16.mxu0 0
    %7679 = vmatpush1.bf16.msra.mxu0 %v7369
    %7680 = vmatprep.subr.bf16.mxu0 0
    %7681 = vmatpush1.bf16.msra.mxu0 %v7370
    %7682 = vmatprep.subr.bf16.mxu0 0
    %7683 = vmatpush1.bf16.msra.mxu0 %v7371
    %7684 = vmatprep.mubr.bf16.mxu0 %v6915
    %7685 = vmatmul.mubr.bf16.gmra.mrb[0].mxu0 %v6914
    %v7686 = vpop.f32.mrb[0].mxu0
    %v7687 = vadd.f32 %v7647, %v7686
    %v7688 = vpop.f32.mrb[0].mxu0
    %v7689 = vpop.f32.mrb[0].mxu0
    %v7690 = vpop.f32.mrb[0].mxu0
    %7691 = vdwg.mxu0
    %v7692 = vld [vmem:[#allocation23] sm:$0x1]
    %v7694 = vlaneseq
    %v7695 = vshrl.u32 %v7694, 7
    %v7696 = vsub.s32 0, %v7695
    %v7697 = vrot.slane %v7692, %v7696
    %v7699 = vmul.f32 %v7687, %v7697
    %v7700 = vld [vmem:[#allocation25] sm:$0x1]
    %v7702 = vlaneseq
    %v7703 = vshrl.u32 %v7702, 7
    %v7704 = vsub.s32 0, %v7703
    %v7705 = vrot.slane %v7700, %v7704
    %v7707 = vadd.f32 %v7699, %v7705
    %v7708 = vpack.c.bf16 %v7707, %v7707
    %7709 = vst [vmem:[#allocation26] sm:$0xf] %v7708
    // Predicated region
    $region110: #{tpu_custom_call.1} parent=1 // pred_check
      _
    $region111: #{tpu_custom_call.1} parent=1 // pred_check_branch
      %7711 = sbr.rel (0) target = $region113
    $region112: #{tpu_custom_call.1} parent=1 // pred_region
      %s7713 = ssub.s32 64, 64
      %7714 = vsyncadd [#allocation13], %s7713
      %s7716 = sshll.u32 [#allocation26], 4
      %s7717 = int_to_ptr.vmem [resolvable:$true] %s7716
      %7719 = dma.vmem_to_hbm [thread:$0]  %s7717, 64, %s13, [#allocation13]
    $region113: #{tpu_custom_call.1} parent=1 // pred_fallthru
      _
    // Predicated region
    $region114: #{tpu_custom_call.1} parent=1 // pred_check
      _
    $region115: #{tpu_custom_call.1} parent=1 // pred_check_branch
      %7721 = sbr.rel (0) target = $region117
    $region116: #{tpu_custom_call.1} parent=1 // pred_region
      %7722 = dma.done [#allocation13], 64
    $region117: #{tpu_custom_call.1} parent=1 // pred_fallthru
      _
    %7723 = vsyncpa [#allocation12], 1
    %7724 = vsyncpa [#allocation15], 1
    %7725 = vsyncpa [#allocation18], 1
    %7726 = vsyncpa [#allocation21], 1
    %7727 = vsyncpa [#allocation24], 1
    %7728 = vsyncpa [#allocation13], 1
  %7729 = vsyncmov [#allocation10]
  %s7730 = vpop.sfrf %7729
  %p7731 = scmp.eq.s32.totalorder %s7730, 0
  %p7732 = pneg %p7731
  %7734 = shalt.err (%p7732)
  %s7735 = scalar_lea.sflag [#allocation10], 1
  %7736 = vsyncmov %s7735
  %s7737 = vpop.sfrf %7736
  %p7738 = scmp.eq.s32.totalorder %s7737, 0
  %p7739 = pneg %p7738
  %7741 = shalt.err (%p7739)
  %s7742 = scalar_lea.sflag [#allocation10], 2
  %7743 = vsyncmov %s7742
  %s7744 = vpop.sfrf %7743
  %p7745 = scmp.eq.s32.totalorder %s7744, 0
  %p7746 = pneg %p7745
  %7748 = shalt.err (%p7746)
  %s7749 = scalar_lea.sflag [#allocation10], 3
  %7750 = vsyncmov %s7749
  %s7751 = vpop.sfrf %7750
  %p7752 = scmp.eq.s32.totalorder %s7751, 0
  %p7753 = pneg %p7752
  %7755 = shalt.err (%p7753)

</llo_original>
